<compile_context>
chip_gen: v6e
topology: v6e:2x2x1
jax: 0.10.0
libtpu: 0.0.40
codegen_flags: <defaults>
</compile_context>

<pallas_src>
import functools

import jax
import jax.numpy as jnp
from jax.experimental import pallas as pl
from jax.experimental.pallas import tpu as pltpu


# ---------------------------------------------------------------------------
# Fused Pallas kernel: conv1 + IN + ReLU + conv2 + IN + residual, per image
# ---------------------------------------------------------------------------
def _residual_block_kernel(x_ref, w1_ref, w2_ref, o_ref, xp_ref, yp_ref, *, eps):
    # x_ref : (H, W, C)      input image block (caller dtype; residual path)
    # w*_ref: (9, C, C)      per-tap weight slabs, compute dtype
    # o_ref : (H, W, C)      output block
    # xp_ref, yp_ref: (H+2, W+2, C) VMEM scratch (compute dtype) = halo buffers
    H, W, C = x_ref.shape
    HW = H * W
    cdt = xp_ref.dtype

    def reflect_pad_into(dst_ref, img):
        # ReflectionPad2d(1): pad[0] = orig[1], pad[H+1] = orig[H-2], same for cols.
        dst_ref[1:H + 1, 1:W + 1, :] = img                     # interior
        dst_ref[0:1, 1:W + 1, :] = img[1:2]                    # top    <- row 1
        dst_ref[H + 1:H + 2, 1:W + 1, :] = img[H - 2:H - 1]    # bottom <- row H-2
        dst_ref[:, 0:1, :] = dst_ref[:, 2:3, :]                # left   <- padded col 2
        dst_ref[:, W + 1:W + 2, :] = dst_ref[:, W - 1:W, :]    # right  <- padded col W-1

    def conv3x3(src_ref, w_ref):
        # 9 accumulating MXU dots over shifted (H, W, C) views of the padded
        # scratch; accumulate in f32.
        acc = None
        for k in range(9):
            dh, dw = divmod(k, 3)
            p = src_ref[dh:dh + H, dw:dw + W, :].reshape(HW, C)
            d = jnp.dot(p, w_ref[k], preferred_element_type=jnp.float32)
            acc = d if acc is None else acc + d
        return acc                                             # (HW, C) f32

    def instance_norm(y):
        # Affine-free InstanceNorm2d: biased variance, single-pass stats (f32).
        mean = jnp.mean(y, axis=0, keepdims=True)
        var = jnp.mean(y * y, axis=0, keepdims=True) - mean * mean
        return (y - mean) * jax.lax.rsqrt(var + eps)

    x = x_ref[...]                                             # (H, W, C), caller dtype

    # ---- stage 1: reflect-pad(x) -> conv1 -> IN -> ReLU (all VMEM-resident) --
    reflect_pad_into(xp_ref, x.astype(cdt))
    y1 = jnp.maximum(instance_norm(conv3x3(xp_ref, w1_ref)), 0.0)

    # ---- stage 2: reflect-pad(y1) -> conv2 -> IN -> residual add -------------
    reflect_pad_into(yp_ref, y1.reshape(H, W, C).astype(cdt))
    y2 = instance_norm(conv3x3(yp_ref, w2_ref))
    o_ref[...] = (x.astype(jnp.float32) + y2.reshape(H, W, C)).astype(o_ref.dtype)


# ---------------------------------------------------------------------------
# Wrappers
# ---------------------------------------------------------------------------
def _weight_to_taps(w):
    # PyTorch conv weight (C_out, C_in, 3, 3) -> (9, C_in, C_out); tap k = dh*3+dw.
    c_out, c_in, _, _ = w.shape
    return jnp.transpose(w, (2, 3, 1, 0)).reshape(9, c_in, c_out)


def residual_block_nhwc(x_nhwc, w1, b1, w2, b2, eps=1e-5,
                        compute_dtype=jnp.bfloat16):
    # b1/b2 are accepted for interface parity but unused: a per-channel conv
    # bias cancels exactly under affine-free InstanceNorm (mean subtraction).
    del b1, b2
    B, H, W, C = x_nhwc.shape
    Hp, Wp = H + 2, W + 2

    w1m = _weight_to_taps(w1).astype(compute_dtype)
    w2m = _weight_to_taps(w2).astype(compute_dtype)

    kernel = functools.partial(_residual_block_kernel, eps=eps)
    return pl.pallas_call(
        kernel,
        out_shape=jax.ShapeDtypeStruct((B, H, W, C), x_nhwc.dtype),
        grid=(B,),
        in_specs=[
            pl.BlockSpec((None, H, W, C), lambda b: (b, 0, 0, 0)),   # x (squeezed B)
            pl.BlockSpec((9, C, C), lambda b: (0, 0, 0)),            # conv1 taps
            pl.BlockSpec((9, C, C), lambda b: (0, 0, 0)),            # conv2 taps
        ],
        out_specs=pl.BlockSpec((None, H, W, C), lambda b: (b, 0, 0, 0)),
        scratch_shapes=[
            pltpu.VMEM((Hp, Wp, C), compute_dtype),   # reflection-padded x
            pltpu.VMEM((Hp, Wp, C), compute_dtype),   # reflection-padded y1
        ],
        compiler_params=pltpu.CompilerParams(
            dimension_semantics=("parallel",)),
    )(x_nhwc, w1m, w2m)


def residual_block(x_nchw, w1, b1, w2, b2, eps=1e-5, compute_dtype=jnp.bfloat16):
    # NCHW interface matching the PyTorch module.  Prefer residual_block_nhwc
    # in an NHWC pipeline to avoid the two extra HBM passes of the transposes.
    x_nhwc = jnp.transpose(x_nchw, (0, 2, 3, 1))
    out = residual_block_nhwc(x_nhwc, w1, b1, w2, b2, eps=eps,
                              compute_dtype=compute_dtype)
    return jnp.transpose(out, (0, 3, 1, 2))


# ---------------------------------------------------------------------------
# Pure-JAX reference (for correctness check)
# ---------------------------------------------------------------------------
def residual_block_ref(x, w1, b1, w2, b2, eps=1e-5):
    def conv(x, w, b):
        xp = jnp.pad(x, ((0, 0), (0, 0), (1, 1), (1, 1)), mode="reflect")
        y = jax.lax.conv_general_dilated(
            xp, w, (1, 1), "VALID", dimension_numbers=("NCHW", "OIHW", "NCHW"))
        return y + b[None, :, None, None]

    def inorm(y):
        m = jnp.mean(y, axis=(2, 3), keepdims=True)
        v = jnp.mean((y - m) ** 2, axis=(2, 3), keepdims=True)
        return (y - m) / jnp.sqrt(v + eps)

    h = jnp.maximum(inorm(conv(x, w1, b1)), 0.0)
    return x + inorm(conv(h, w2, b2))


# ---------------------------------------------------------------------------
if __name__ == "__main__":
    B, C, H, W = 2, 4, 16, 16
    key = jax.random.PRNGKey(0)
    kx, kw1, kb1, kw2, kb2 = jax.random.split(key, 5)

    fan_in = C * 3 * 3
    bound = 1.0 / jnp.sqrt(fan_in)
    x = jax.random.normal(kx, (B, C, H, W), dtype=jnp.float32)
    w1 = jax.random.uniform(kw1, (C, C, 3, 3), jnp.float32, -bound, bound)
    b1 = jax.random.uniform(kb1, (C,), jnp.float32, -bound, bound)
    w2 = jax.random.uniform(kw2, (C, C, 3, 3), jnp.float32, -bound, bound)
    b2 = jax.random.uniform(kb2, (C,), jnp.float32, -bound, bound)

    ref = residual_block_ref(x, w1, b1, w2, b2)

    # Strict correctness check: f32 MXU operands.
    f32_fn = jax.jit(functools.partial(residual_block, compute_dtype=jnp.float32))
    out_f32 = jax.block_until_ready(f32_fn(x, w1, b1, w2, b2))
    assert out_f32.shape == (B, C, H, W)
    err_f32 = float(jnp.max(jnp.abs(out_f32 - ref)))
    assert jnp.allclose(out_f32, ref, rtol=2e-4, atol=2e-4), \
        f"f32 path max abs err {err_f32}"

    # Production path (default: bf16 MXU operands, f32 stats/residual).
    # Low-precision matmul -> looser smoke tolerance; strict check is above.
    bf16_fn = jax.jit(residual_block)
    out_bf16 = jax.block_until_ready(bf16_fn(x, w1, b1, w2, b2))
    err_bf16 = float(jnp.max(jnp.abs(out_bf16.astype(jnp.float32) - ref)))
    assert jnp.allclose(out_bf16.astype(jnp.float32), ref, rtol=1e-1, atol=1e-1), \
        f"bf16 path max abs err {err_bf16}"

    print("KERNEL_OK")
</pallas_src>

<mosaic_0001>
module attributes {stable_mosaic.version = 11 : i64} {
  func.func @_residual_block_kernel(%arg0: i32, %arg1: memref<1x16x16x4xf32, #tpu.memory_space<vmem>>, %arg2: memref<9x4x4xf32, #tpu.memory_space<vmem>>, %arg3: memref<9x4x4xf32, #tpu.memory_space<vmem>>, %arg4: memref<1x16x16x4xf32, #tpu.memory_space<vmem>>, %arg5: memref<18x18x4xf32, #tpu.memory_space<vmem>>, %arg6: memref<18x18x4xf32, #tpu.memory_space<vmem>>) attributes {dimension_semantics = [#tpu.dimension_semantics<parallel>], iteration_bounds = array<i64: 2>, scalar_prefetch = 0 : i64, scratch_operands = 2 : i64, tpu.core_type = #tpu.core_type<tc>, window_params = [{transform_indices = @transform_0, window_bounds = array<i64: 1, 16, 16, 4>}, {pipeline_mode = #tpu.pipeline_mode<synchronous>, transform_indices = @transform_1, window_bounds = array<i64: 9, 4, 4>}, {pipeline_mode = #tpu.pipeline_mode<synchronous>, transform_indices = @transform_2, window_bounds = array<i64: 9, 4, 4>}, {transform_indices = @transform_3, window_bounds = array<i64: 1, 16, 16, 4>}]} {
    %c0 = arith.constant 0 : index
    %c0_0 = arith.constant 0 : index
    %c0_1 = arith.constant 0 : index
    %c0_2 = arith.constant 0 : index
    %0 = vector.load %arg1[%c0, %c0_0, %c0_1, %c0_2] : memref<1x16x16x4xf32, #tpu.memory_space<vmem>>, vector<1x16x16x4xf32>
    %1 = vector.shape_cast %0 : vector<1x16x16x4xf32> to vector<16x16x4xf32>
    %c1 = arith.constant 1 : index
    %c1_3 = arith.constant 1 : index
    %c0_4 = arith.constant 0 : index
    %2 = vector.load %arg5[%c1, %c1_3, %c0_4] : memref<18x18x4xf32, #tpu.memory_space<vmem>>, vector<16x16x4xf32>
    tpu.vector_store %arg5[%c1, %c1_3, %c0_4], %1 {strides = array<i32>} : memref<18x18x4xf32, #tpu.memory_space<vmem>>, vector<16x16x4xf32>,
    %3 = vector.extract_strided_slice %1 {offsets = [1, 0, 0], sizes = [1, 16, 4], strides = [1, 1, 1]} : vector<16x16x4xf32> to vector<1x16x4xf32>
    %c0_5 = arith.constant 0 : index
    %c1_6 = arith.constant 1 : index
    %c0_7 = arith.constant 0 : index
    %4 = vector.load %arg5[%c0_5, %c1_6, %c0_7] : memref<18x18x4xf32, #tpu.memory_space<vmem>>, vector<1x16x4xf32>
    tpu.vector_store %arg5[%c0_5, %c1_6, %c0_7], %3 {strides = array<i32>} : memref<18x18x4xf32, #tpu.memory_space<vmem>>, vector<1x16x4xf32>,
    %5 = vector.extract_strided_slice %1 {offsets = [14, 0, 0], sizes = [1, 16, 4], strides = [1, 1, 1]} : vector<16x16x4xf32> to vector<1x16x4xf32>
    %c17 = arith.constant 17 : index
    %c1_8 = arith.constant 1 : index
    %c0_9 = arith.constant 0 : index
    %6 = vector.load %arg5[%c17, %c1_8, %c0_9] : memref<18x18x4xf32, #tpu.memory_space<vmem>>, vector<1x16x4xf32>
    tpu.vector_store %arg5[%c17, %c1_8, %c0_9], %5 {strides = array<i32>} : memref<18x18x4xf32, #tpu.memory_space<vmem>>, vector<1x16x4xf32>,
    %c0_10 = arith.constant 0 : index
    %c2 = arith.constant 2 : index
    %c0_11 = arith.constant 0 : index
    %7 = vector.load %arg5[%c0_10, %c2, %c0_11] : memref<18x18x4xf32, #tpu.memory_space<vmem>>, vector<18x1x4xf32>
    %c0_12 = arith.constant 0 : index
    %c0_13 = arith.constant 0 : index
    %c0_14 = arith.constant 0 : index
    %8 = vector.load %arg5[%c0_12, %c0_13, %c0_14] : memref<18x18x4xf32, #tpu.memory_space<vmem>>, vector<18x1x4xf32>
    tpu.vector_store %arg5[%c0_12, %c0_13, %c0_14], %7 {strides = array<i32>} : memref<18x18x4xf32, #tpu.memory_space<vmem>>, vector<18x1x4xf32>,
    %c0_15 = arith.constant 0 : index
    %c15 = arith.constant 15 : index
    %c0_16 = arith.constant 0 : index
    %9 = vector.load %arg5[%c0_15, %c15, %c0_16] : memref<18x18x4xf32, #tpu.memory_space<vmem>>, vector<18x1x4xf32>
    %c0_17 = arith.constant 0 : index
    %c17_18 = arith.constant 17 : index
    %c0_19 = arith.constant 0 : index
    %10 = vector.load %arg5[%c0_17, %c17_18, %c0_19] : memref<18x18x4xf32, #tpu.memory_space<vmem>>, vector<18x1x4xf32>
    tpu.vector_store %arg5[%c0_17, %c17_18, %c0_19], %9 {strides = array<i32>} : memref<18x18x4xf32, #tpu.memory_space<vmem>>, vector<18x1x4xf32>,
    %c0_20 = arith.constant 0 : index
    %c0_21 = arith.constant 0 : index
    %c0_22 = arith.constant 0 : index
    %11 = vector.load %arg5[%c0_20, %c0_21, %c0_22] : memref<18x18x4xf32, #tpu.memory_space<vmem>>, vector<16x16x4xf32>
    %12 = vector.shape_cast %11 : vector<16x16x4xf32> to vector<256x4xf32>
    %c0_23 = arith.constant 0 : index
    %c0_24 = arith.constant 0 : index
    %c0_25 = arith.constant 0 : index
    %13 = vector.load %arg2[%c0_23, %c0_24, %c0_25] : memref<9x4x4xf32, #tpu.memory_space<vmem>>, vector<1x4x4xf32>
    %14 = vector.shape_cast %13 : vector<1x4x4xf32> to vector<4x4xf32>
    %cst = arith.constant dense<0.000000e+00> : vector<256x4xf32>
    %15 = tpu.matmul %12, %14, %cst {dimension_numbers = #tpu.dot_dimension_numbers<[1], [0], [0], [1], [0, 0, 1, 1], [], []>} : vector<256x4xf32>, vector<4x4xf32>, vector<256x4xf32> -> vector<256x4xf32>
    %c0_26 = arith.constant 0 : index
    %c1_27 = arith.constant 1 : index
    %c0_28 = arith.constant 0 : index
    %16 = vector.load %arg5[%c0_26, %c1_27, %c0_28] : memref<18x18x4xf32, #tpu.memory_space<vmem>>, vector<16x16x4xf32>
    %17 = vector.shape_cast %16 : vector<16x16x4xf32> to vector<256x4xf32>
    %c1_29 = arith.constant 1 : index
    %c0_30 = arith.constant 0 : index
    %c0_31 = arith.constant 0 : index
    %18 = vector.load %arg2[%c1_29, %c0_30, %c0_31] : memref<9x4x4xf32, #tpu.memory_space<vmem>>, vector<1x4x4xf32>
    %19 = vector.shape_cast %18 : vector<1x4x4xf32> to vector<4x4xf32>
    %cst_32 = arith.constant dense<0.000000e+00> : vector<256x4xf32>
    %20 = tpu.matmul %17, %19, %cst_32 {dimension_numbers = #tpu.dot_dimension_numbers<[1], [0], [0], [1], [0, 0, 1, 1], [], []>} : vector<256x4xf32>, vector<4x4xf32>, vector<256x4xf32> -> vector<256x4xf32>
    %21 = arith.addf %15, %20 : vector<256x4xf32>
    %c0_33 = arith.constant 0 : index
    %c2_34 = arith.constant 2 : index
    %c0_35 = arith.constant 0 : index
    %22 = vector.load %arg5[%c0_33, %c2_34, %c0_35] : memref<18x18x4xf32, #tpu.memory_space<vmem>>, vector<16x16x4xf32>
    %23 = vector.shape_cast %22 : vector<16x16x4xf32> to vector<256x4xf32>
    %c2_36 = arith.constant 2 : index
    %c0_37 = arith.constant 0 : index
    %c0_38 = arith.constant 0 : index
    %24 = vector.load %arg2[%c2_36, %c0_37, %c0_38] : memref<9x4x4xf32, #tpu.memory_space<vmem>>, vector<1x4x4xf32>
    %25 = vector.shape_cast %24 : vector<1x4x4xf32> to vector<4x4xf32>
    %cst_39 = arith.constant dense<0.000000e+00> : vector<256x4xf32>
    %26 = tpu.matmul %23, %25, %cst_39 {dimension_numbers = #tpu.dot_dimension_numbers<[1], [0], [0], [1], [0, 0, 1, 1], [], []>} : vector<256x4xf32>, vector<4x4xf32>, vector<256x4xf32> -> vector<256x4xf32>
    %27 = arith.addf %21, %26 : vector<256x4xf32>
    %c1_40 = arith.constant 1 : index
    %c0_41 = arith.constant 0 : index
    %c0_42 = arith.constant 0 : index
    %28 = vector.load %arg5[%c1_40, %c0_41, %c0_42] : memref<18x18x4xf32, #tpu.memory_space<vmem>>, vector<16x16x4xf32>
    %29 = vector.shape_cast %28 : vector<16x16x4xf32> to vector<256x4xf32>
    %c3 = arith.constant 3 : index
    %c0_43 = arith.constant 0 : index
    %c0_44 = arith.constant 0 : index
    %30 = vector.load %arg2[%c3, %c0_43, %c0_44] : memref<9x4x4xf32, #tpu.memory_space<vmem>>, vector<1x4x4xf32>
    %31 = vector.shape_cast %30 : vector<1x4x4xf32> to vector<4x4xf32>
    %cst_45 = arith.constant dense<0.000000e+00> : vector<256x4xf32>
    %32 = tpu.matmul %29, %31, %cst_45 {dimension_numbers = #tpu.dot_dimension_numbers<[1], [0], [0], [1], [0, 0, 1, 1], [], []>} : vector<256x4xf32>, vector<4x4xf32>, vector<256x4xf32> -> vector<256x4xf32>
    %33 = arith.addf %27, %32 : vector<256x4xf32>
    %c1_46 = arith.constant 1 : index
    %c1_47 = arith.constant 1 : index
    %c0_48 = arith.constant 0 : index
    %34 = vector.load %arg5[%c1_46, %c1_47, %c0_48] : memref<18x18x4xf32, #tpu.memory_space<vmem>>, vector<16x16x4xf32>
    %35 = vector.shape_cast %34 : vector<16x16x4xf32> to vector<256x4xf32>
    %c4 = arith.constant 4 : index
    %c0_49 = arith.constant 0 : index
    %c0_50 = arith.constant 0 : index
    %36 = vector.load %arg2[%c4, %c0_49, %c0_50] : memref<9x4x4xf32, #tpu.memory_space<vmem>>, vector<1x4x4xf32>
    %37 = vector.shape_cast %36 : vector<1x4x4xf32> to vector<4x4xf32>
    %cst_51 = arith.constant dense<0.000000e+00> : vector<256x4xf32>
    %38 = tpu.matmul %35, %37, %cst_51 {dimension_numbers = #tpu.dot_dimension_numbers<[1], [0], [0], [1], [0, 0, 1, 1], [], []>} : vector<256x4xf32>, vector<4x4xf32>, vector<256x4xf32> -> vector<256x4xf32>
    %39 = arith.addf %33, %38 : vector<256x4xf32>
    %c1_52 = arith.constant 1 : index
    %c2_53 = arith.constant 2 : index
    %c0_54 = arith.constant 0 : index
    %40 = vector.load %arg5[%c1_52, %c2_53, %c0_54] : memref<18x18x4xf32, #tpu.memory_space<vmem>>, vector<16x16x4xf32>
    %41 = vector.shape_cast %40 : vector<16x16x4xf32> to vector<256x4xf32>
    %c5 = arith.constant 5 : index
    %c0_55 = arith.constant 0 : index
    %c0_56 = arith.constant 0 : index
    %42 = vector.load %arg2[%c5, %c0_55, %c0_56] : memref<9x4x4xf32, #tpu.memory_space<vmem>>, vector<1x4x4xf32>
    %43 = vector.shape_cast %42 : vector<1x4x4xf32> to vector<4x4xf32>
    %cst_57 = arith.constant dense<0.000000e+00> : vector<256x4xf32>
    %44 = tpu.matmul %41, %43, %cst_57 {dimension_numbers = #tpu.dot_dimension_numbers<[1], [0], [0], [1], [0, 0, 1, 1], [], []>} : vector<256x4xf32>, vector<4x4xf32>, vector<256x4xf32> -> vector<256x4xf32>
    %45 = arith.addf %39, %44 : vector<256x4xf32>
    %c2_58 = arith.constant 2 : index
    %c0_59 = arith.constant 0 : index
    %c0_60 = arith.constant 0 : index
    %46 = vector.load %arg5[%c2_58, %c0_59, %c0_60] : memref<18x18x4xf32, #tpu.memory_space<vmem>>, vector<16x16x4xf32>
    %47 = vector.shape_cast %46 : vector<16x16x4xf32> to vector<256x4xf32>
    %c6 = arith.constant 6 : index
    %c0_61 = arith.constant 0 : index
    %c0_62 = arith.constant 0 : index
    %48 = vector.load %arg2[%c6, %c0_61, %c0_62] : memref<9x4x4xf32, #tpu.memory_space<vmem>>, vector<1x4x4xf32>
    %49 = vector.shape_cast %48 : vector<1x4x4xf32> to vector<4x4xf32>
    %cst_63 = arith.constant dense<0.000000e+00> : vector<256x4xf32>
    %50 = tpu.matmul %47, %49, %cst_63 {dimension_numbers = #tpu.dot_dimension_numbers<[1], [0], [0], [1], [0, 0, 1, 1], [], []>} : vector<256x4xf32>, vector<4x4xf32>, vector<256x4xf32> -> vector<256x4xf32>
    %51 = arith.addf %45, %50 : vector<256x4xf32>
    %c2_64 = arith.constant 2 : index
    %c1_65 = arith.constant 1 : index
    %c0_66 = arith.constant 0 : index
    %52 = vector.load %arg5[%c2_64, %c1_65, %c0_66] : memref<18x18x4xf32, #tpu.memory_space<vmem>>, vector<16x16x4xf32>
    %53 = vector.shape_cast %52 : vector<16x16x4xf32> to vector<256x4xf32>
    %c7 = arith.constant 7 : index
    %c0_67 = arith.constant 0 : index
    %c0_68 = arith.constant 0 : index
    %54 = vector.load %arg2[%c7, %c0_67, %c0_68] : memref<9x4x4xf32, #tpu.memory_space<vmem>>, vector<1x4x4xf32>
    %55 = vector.shape_cast %54 : vector<1x4x4xf32> to vector<4x4xf32>
    %cst_69 = arith.constant dense<0.000000e+00> : vector<256x4xf32>
    %56 = tpu.matmul %53, %55, %cst_69 {dimension_numbers = #tpu.dot_dimension_numbers<[1], [0], [0], [1], [0, 0, 1, 1], [], []>} : vector<256x4xf32>, vector<4x4xf32>, vector<256x4xf32> -> vector<256x4xf32>
    %57 = arith.addf %51, %56 : vector<256x4xf32>
    %c2_70 = arith.constant 2 : index
    %c2_71 = arith.constant 2 : index
    %c0_72 = arith.constant 0 : index
    %58 = vector.load %arg5[%c2_70, %c2_71, %c0_72] : memref<18x18x4xf32, #tpu.memory_space<vmem>>, vector<16x16x4xf32>
    %59 = vector.shape_cast %58 : vector<16x16x4xf32> to vector<256x4xf32>
    %c8 = arith.constant 8 : index
    %c0_73 = arith.constant 0 : index
    %c0_74 = arith.constant 0 : index
    %60 = vector.load %arg2[%c8, %c0_73, %c0_74] : memref<9x4x4xf32, #tpu.memory_space<vmem>>, vector<1x4x4xf32>
    %61 = vector.shape_cast %60 : vector<1x4x4xf32> to vector<4x4xf32>
    %cst_75 = arith.constant dense<0.000000e+00> : vector<256x4xf32>
    %62 = tpu.matmul %59, %61, %cst_75 {dimension_numbers = #tpu.dot_dimension_numbers<[1], [0], [0], [1], [0, 0, 1, 1], [], []>} : vector<256x4xf32>, vector<4x4xf32>, vector<256x4xf32> -> vector<256x4xf32>
    %63 = arith.addf %57, %62 : vector<256x4xf32>
    %cst_76 = arith.constant dense<0.000000e+00> : vector<4xf32>
    %64 = vector.multi_reduction <add>, %63, %cst_76 [0] : vector<256x4xf32> to vector<4xf32>
    %65 = vector.shape_cast %64 : vector<4xf32> to vector<1x4xf32>
    %cst_77 = arith.constant 2.560000e+02 : f32
    %66 = vector.broadcast %cst_77 : f32 to vector<1x4xf32>
    %67 = arith.divf %65, %66 : vector<1x4xf32>
    %68 = arith.mulf %63, %63 : vector<256x4xf32>
    %cst_78 = arith.constant dense<0.000000e+00> : vector<4xf32>
    %69 = vector.multi_reduction <add>, %68, %cst_78 [0] : vector<256x4xf32> to vector<4xf32>
    %70 = vector.shape_cast %69 : vector<4xf32> to vector<1x4xf32>
    %cst_79 = arith.constant 2.560000e+02 : f32
    %71 = vector.broadcast %cst_79 : f32 to vector<1x4xf32>
    %72 = arith.divf %70, %71 : vector<1x4xf32>
    %73 = arith.mulf %67, %67 : vector<1x4xf32>
    %74 = arith.subf %72, %73 : vector<1x4xf32>
    %75 = vector.broadcast %67 : vector<1x4xf32> to vector<256x4xf32>
    %76 = arith.subf %63, %75 : vector<256x4xf32>
    %cst_80 = arith.constant 9.99999974E-6 : f32
    %77 = vector.broadcast %cst_80 : f32 to vector<1x4xf32>
    %78 = arith.addf %74, %77 : vector<1x4xf32>
    %79 = math.rsqrt %78 : vector<1x4xf32>
    %80 = vector.broadcast %79 : vector<1x4xf32> to vector<256x4xf32>
    %81 = arith.mulf %76, %80 : vector<256x4xf32>
    %cst_81 = arith.constant 0.000000e+00 : f32
    %82 = vector.broadcast %cst_81 : f32 to vector<256x4xf32>
    %83 = arith.maximumf %81, %82 : vector<256x4xf32>
    %84 = vector.shape_cast %83 : vector<256x4xf32> to vector<16x16x4xf32>
    %c1_82 = arith.constant 1 : index
    %c1_83 = arith.constant 1 : index
    %c0_84 = arith.constant 0 : index
    %85 = vector.load %arg6[%c1_82, %c1_83, %c0_84] : memref<18x18x4xf32, #tpu.memory_space<vmem>>, vector<16x16x4xf32>
    tpu.vector_store %arg6[%c1_82, %c1_83, %c0_84], %84 {strides = array<i32>} : memref<18x18x4xf32, #tpu.memory_space<vmem>>, vector<16x16x4xf32>,
    %86 = vector.extract_strided_slice %84 {offsets = [1, 0, 0], sizes = [1, 16, 4], strides = [1, 1, 1]} : vector<16x16x4xf32> to vector<1x16x4xf32>
    %c0_85 = arith.constant 0 : index
    %c1_86 = arith.constant 1 : index
    %c0_87 = arith.constant 0 : index
    %87 = vector.load %arg6[%c0_85, %c1_86, %c0_87] : memref<18x18x4xf32, #tpu.memory_space<vmem>>, vector<1x16x4xf32>
    tpu.vector_store %arg6[%c0_85, %c1_86, %c0_87], %86 {strides = array<i32>} : memref<18x18x4xf32, #tpu.memory_space<vmem>>, vector<1x16x4xf32>,
    %88 = vector.extract_strided_slice %84 {offsets = [14, 0, 0], sizes = [1, 16, 4], strides = [1, 1, 1]} : vector<16x16x4xf32> to vector<1x16x4xf32>
    %c17_88 = arith.constant 17 : index
    %c1_89 = arith.constant 1 : index
    %c0_90 = arith.constant 0 : index
    %89 = vector.load %arg6[%c17_88, %c1_89, %c0_90] : memref<18x18x4xf32, #tpu.memory_space<vmem>>, vector<1x16x4xf32>
    tpu.vector_store %arg6[%c17_88, %c1_89, %c0_90], %88 {strides = array<i32>} : memref<18x18x4xf32, #tpu.memory_space<vmem>>, vector<1x16x4xf32>,
    %c0_91 = arith.constant 0 : index
    %c2_92 = arith.constant 2 : index
    %c0_93 = arith.constant 0 : index
    %90 = vector.load %arg6[%c0_91, %c2_92, %c0_93] : memref<18x18x4xf32, #tpu.memory_space<vmem>>, vector<18x1x4xf32>
    %c0_94 = arith.constant 0 : index
    %c0_95 = arith.constant 0 : index
    %c0_96 = arith.constant 0 : index
    %91 = vector.load %arg6[%c0_94, %c0_95, %c0_96] : memref<18x18x4xf32, #tpu.memory_space<vmem>>, vector<18x1x4xf32>
    tpu.vector_store %arg6[%c0_94, %c0_95, %c0_96], %90 {strides = array<i32>} : memref<18x18x4xf32, #tpu.memory_space<vmem>>, vector<18x1x4xf32>,
    %c0_97 = arith.constant 0 : index
    %c15_98 = arith.constant 15 : index
    %c0_99 = arith.constant 0 : index
    %92 = vector.load %arg6[%c0_97, %c15_98, %c0_99] : memref<18x18x4xf32, #tpu.memory_space<vmem>>, vector<18x1x4xf32>
    %c0_100 = arith.constant 0 : index
    %c17_101 = arith.constant 17 : index
    %c0_102 = arith.constant 0 : index
    %93 = vector.load %arg6[%c0_100, %c17_101, %c0_102] : memref<18x18x4xf32, #tpu.memory_space<vmem>>, vector<18x1x4xf32>
    tpu.vector_store %arg6[%c0_100, %c17_101, %c0_102], %92 {strides = array<i32>} : memref<18x18x4xf32, #tpu.memory_space<vmem>>, vector<18x1x4xf32>,
    %c0_103 = arith.constant 0 : index
    %c0_104 = arith.constant 0 : index
    %c0_105 = arith.constant 0 : index
    %94 = vector.load %arg6[%c0_103, %c0_104, %c0_105] : memref<18x18x4xf32, #tpu.memory_space<vmem>>, vector<16x16x4xf32>
    %95 = vector.shape_cast %94 : vector<16x16x4xf32> to vector<256x4xf32>
    %c0_106 = arith.constant 0 : index
    %c0_107 = arith.constant 0 : index
    %c0_108 = arith.constant 0 : index
    %96 = vector.load %arg3[%c0_106, %c0_107, %c0_108] : memref<9x4x4xf32, #tpu.memory_space<vmem>>, vector<1x4x4xf32>
    %97 = vector.shape_cast %96 : vector<1x4x4xf32> to vector<4x4xf32>
    %cst_109 = arith.constant dense<0.000000e+00> : vector<256x4xf32>
    %98 = tpu.matmul %95, %97, %cst_109 {dimension_numbers = #tpu.dot_dimension_numbers<[1], [0], [0], [1], [0, 0, 1, 1], [], []>} : vector<256x4xf32>, vector<4x4xf32>, vector<256x4xf32> -> vector<256x4xf32>
    %c0_110 = arith.constant 0 : index
    %c1_111 = arith.constant 1 : index
    %c0_112 = arith.constant 0 : index
    %99 = vector.load %arg6[%c0_110, %c1_111, %c0_112] : memref<18x18x4xf32, #tpu.memory_space<vmem>>, vector<16x16x4xf32>
    %100 = vector.shape_cast %99 : vector<16x16x4xf32> to vector<256x4xf32>
    %c1_113 = arith.constant 1 : index
    %c0_114 = arith.constant 0 : index
    %c0_115 = arith.constant 0 : index
    %101 = vector.load %arg3[%c1_113, %c0_114, %c0_115] : memref<9x4x4xf32, #tpu.memory_space<vmem>>, vector<1x4x4xf32>
    %102 = vector.shape_cast %101 : vector<1x4x4xf32> to vector<4x4xf32>
    %cst_116 = arith.constant dense<0.000000e+00> : vector<256x4xf32>
    %103 = tpu.matmul %100, %102, %cst_116 {dimension_numbers = #tpu.dot_dimension_numbers<[1], [0], [0], [1], [0, 0, 1, 1], [], []>} : vector<256x4xf32>, vector<4x4xf32>, vector<256x4xf32> -> vector<256x4xf32>
    %104 = arith.addf %98, %103 : vector<256x4xf32>
    %c0_117 = arith.constant 0 : index
    %c2_118 = arith.constant 2 : index
    %c0_119 = arith.constant 0 : index
    %105 = vector.load %arg6[%c0_117, %c2_118, %c0_119] : memref<18x18x4xf32, #tpu.memory_space<vmem>>, vector<16x16x4xf32>
    %106 = vector.shape_cast %105 : vector<16x16x4xf32> to vector<256x4xf32>
    %c2_120 = arith.constant 2 : index
    %c0_121 = arith.constant 0 : index
    %c0_122 = arith.constant 0 : index
    %107 = vector.load %arg3[%c2_120, %c0_121, %c0_122] : memref<9x4x4xf32, #tpu.memory_space<vmem>>, vector<1x4x4xf32>
    %108 = vector.shape_cast %107 : vector<1x4x4xf32> to vector<4x4xf32>
    %cst_123 = arith.constant dense<0.000000e+00> : vector<256x4xf32>
    %109 = tpu.matmul %106, %108, %cst_123 {dimension_numbers = #tpu.dot_dimension_numbers<[1], [0], [0], [1], [0, 0, 1, 1], [], []>} : vector<256x4xf32>, vector<4x4xf32>, vector<256x4xf32> -> vector<256x4xf32>
    %110 = arith.addf %104, %109 : vector<256x4xf32>
    %c1_124 = arith.constant 1 : index
    %c0_125 = arith.constant 0 : index
    %c0_126 = arith.constant 0 : index
    %111 = vector.load %arg6[%c1_124, %c0_125, %c0_126] : memref<18x18x4xf32, #tpu.memory_space<vmem>>, vector<16x16x4xf32>
    %112 = vector.shape_cast %111 : vector<16x16x4xf32> to vector<256x4xf32>
    %c3_127 = arith.constant 3 : index
    %c0_128 = arith.constant 0 : index
    %c0_129 = arith.constant 0 : index
    %113 = vector.load %arg3[%c3_127, %c0_128, %c0_129] : memref<9x4x4xf32, #tpu.memory_space<vmem>>, vector<1x4x4xf32>
    %114 = vector.shape_cast %113 : vector<1x4x4xf32> to vector<4x4xf32>
    %cst_130 = arith.constant dense<0.000000e+00> : vector<256x4xf32>
    %115 = tpu.matmul %112, %114, %cst_130 {dimension_numbers = #tpu.dot_dimension_numbers<[1], [0], [0], [1], [0, 0, 1, 1], [], []>} : vector<256x4xf32>, vector<4x4xf32>, vector<256x4xf32> -> vector<256x4xf32>
    %116 = arith.addf %110, %115 : vector<256x4xf32>
    %c1_131 = arith.constant 1 : index
    %c1_132 = arith.constant 1 : index
    %c0_133 = arith.constant 0 : index
    %117 = vector.load %arg6[%c1_131, %c1_132, %c0_133] : memref<18x18x4xf32, #tpu.memory_space<vmem>>, vector<16x16x4xf32>
    %118 = vector.shape_cast %117 : vector<16x16x4xf32> to vector<256x4xf32>
    %c4_134 = arith.constant 4 : index
    %c0_135 = arith.constant 0 : index
    %c0_136 = arith.constant 0 : index
    %119 = vector.load %arg3[%c4_134, %c0_135, %c0_136] : memref<9x4x4xf32, #tpu.memory_space<vmem>>, vector<1x4x4xf32>
    %120 = vector.shape_cast %119 : vector<1x4x4xf32> to vector<4x4xf32>
    %cst_137 = arith.constant dense<0.000000e+00> : vector<256x4xf32>
    %121 = tpu.matmul %118, %120, %cst_137 {dimension_numbers = #tpu.dot_dimension_numbers<[1], [0], [0], [1], [0, 0, 1, 1], [], []>} : vector<256x4xf32>, vector<4x4xf32>, vector<256x4xf32> -> vector<256x4xf32>
    %122 = arith.addf %116, %121 : vector<256x4xf32>
    %c1_138 = arith.constant 1 : index
    %c2_139 = arith.constant 2 : index
    %c0_140 = arith.constant 0 : index
    %123 = vector.load %arg6[%c1_138, %c2_139, %c0_140] : memref<18x18x4xf32, #tpu.memory_space<vmem>>, vector<16x16x4xf32>
    %124 = vector.shape_cast %123 : vector<16x16x4xf32> to vector<256x4xf32>
    %c5_141 = arith.constant 5 : index
    %c0_142 = arith.constant 0 : index
    %c0_143 = arith.constant 0 : index
    %125 = vector.load %arg3[%c5_141, %c0_142, %c0_143] : memref<9x4x4xf32, #tpu.memory_space<vmem>>, vector<1x4x4xf32>
    %126 = vector.shape_cast %125 : vector<1x4x4xf32> to vector<4x4xf32>
    %cst_144 = arith.constant dense<0.000000e+00> : vector<256x4xf32>
    %127 = tpu.matmul %124, %126, %cst_144 {dimension_numbers = #tpu.dot_dimension_numbers<[1], [0], [0], [1], [0, 0, 1, 1], [], []>} : vector<256x4xf32>, vector<4x4xf32>, vector<256x4xf32> -> vector<256x4xf32>
    %128 = arith.addf %122, %127 : vector<256x4xf32>
    %c2_145 = arith.constant 2 : index
    %c0_146 = arith.constant 0 : index
    %c0_147 = arith.constant 0 : index
    %129 = vector.load %arg6[%c2_145, %c0_146, %c0_147] : memref<18x18x4xf32, #tpu.memory_space<vmem>>, vector<16x16x4xf32>
    %130 = vector.shape_cast %129 : vector<16x16x4xf32> to vector<256x4xf32>
    %c6_148 = arith.constant 6 : index
    %c0_149 = arith.constant 0 : index
    %c0_150 = arith.constant 0 : index
    %131 = vector.load %arg3[%c6_148, %c0_149, %c0_150] : memref<9x4x4xf32, #tpu.memory_space<vmem>>, vector<1x4x4xf32>
    %132 = vector.shape_cast %131 : vector<1x4x4xf32> to vector<4x4xf32>
    %cst_151 = arith.constant dense<0.000000e+00> : vector<256x4xf32>
    %133 = tpu.matmul %130, %132, %cst_151 {dimension_numbers = #tpu.dot_dimension_numbers<[1], [0], [0], [1], [0, 0, 1, 1], [], []>} : vector<256x4xf32>, vector<4x4xf32>, vector<256x4xf32> -> vector<256x4xf32>
    %134 = arith.addf %128, %133 : vector<256x4xf32>
    %c2_152 = arith.constant 2 : index
    %c1_153 = arith.constant 1 : index
    %c0_154 = arith.constant 0 : index
    %135 = vector.load %arg6[%c2_152, %c1_153, %c0_154] : memref<18x18x4xf32, #tpu.memory_space<vmem>>, vector<16x16x4xf32>
    %136 = vector.shape_cast %135 : vector<16x16x4xf32> to vector<256x4xf32>
    %c7_155 = arith.constant 7 : index
    %c0_156 = arith.constant 0 : index
    %c0_157 = arith.constant 0 : index
    %137 = vector.load %arg3[%c7_155, %c0_156, %c0_157] : memref<9x4x4xf32, #tpu.memory_space<vmem>>, vector<1x4x4xf32>
    %138 = vector.shape_cast %137 : vector<1x4x4xf32> to vector<4x4xf32>
    %cst_158 = arith.constant dense<0.000000e+00> : vector<256x4xf32>
    %139 = tpu.matmul %136, %138, %cst_158 {dimension_numbers = #tpu.dot_dimension_numbers<[1], [0], [0], [1], [0, 0, 1, 1], [], []>} : vector<256x4xf32>, vector<4x4xf32>, vector<256x4xf32> -> vector<256x4xf32>
    %140 = arith.addf %134, %139 : vector<256x4xf32>
    %c2_159 = arith.constant 2 : index
    %c2_160 = arith.constant 2 : index
    %c0_161 = arith.constant 0 : index
    %141 = vector.load %arg6[%c2_159, %c2_160, %c0_161] : memref<18x18x4xf32, #tpu.memory_space<vmem>>, vector<16x16x4xf32>
    %142 = vector.shape_cast %141 : vector<16x16x4xf32> to vector<256x4xf32>
    %c8_162 = arith.constant 8 : index
    %c0_163 = arith.constant 0 : index
    %c0_164 = arith.constant 0 : index
    %143 = vector.load %arg3[%c8_162, %c0_163, %c0_164] : memref<9x4x4xf32, #tpu.memory_space<vmem>>, vector<1x4x4xf32>
    %144 = vector.shape_cast %143 : vector<1x4x4xf32> to vector<4x4xf32>
    %cst_165 = arith.constant dense<0.000000e+00> : vector<256x4xf32>
    %145 = tpu.matmul %142, %144, %cst_165 {dimension_numbers = #tpu.dot_dimension_numbers<[1], [0], [0], [1], [0, 0, 1, 1], [], []>} : vector<256x4xf32>, vector<4x4xf32>, vector<256x4xf32> -> vector<256x4xf32>
    %146 = arith.addf %140, %145 : vector<256x4xf32>
    %cst_166 = arith.constant dense<0.000000e+00> : vector<4xf32>
    %147 = vector.multi_reduction <add>, %146, %cst_166 [0] : vector<256x4xf32> to vector<4xf32>
    %148 = vector.shape_cast %147 : vector<4xf32> to vector<1x4xf32>
    %cst_167 = arith.constant 2.560000e+02 : f32
    %149 = vector.broadcast %cst_167 : f32 to vector<1x4xf32>
    %150 = arith.divf %148, %149 : vector<1x4xf32>
    %151 = arith.mulf %146, %146 : vector<256x4xf32>
    %cst_168 = arith.constant dense<0.000000e+00> : vector<4xf32>
    %152 = vector.multi_reduction <add>, %151, %cst_168 [0] : vector<256x4xf32> to vector<4xf32>
    %153 = vector.shape_cast %152 : vector<4xf32> to vector<1x4xf32>
    %cst_169 = arith.constant 2.560000e+02 : f32
    %154 = vector.broadcast %cst_169 : f32 to vector<1x4xf32>
    %155 = arith.divf %153, %154 : vector<1x4xf32>
    %156 = arith.mulf %150, %150 : vector<1x4xf32>
    %157 = arith.subf %155, %156 : vector<1x4xf32>
    %158 = vector.broadcast %150 : vector<1x4xf32> to vector<256x4xf32>
    %159 = arith.subf %146, %158 : vector<256x4xf32>
    %cst_170 = arith.constant 9.99999974E-6 : f32
    %160 = vector.broadcast %cst_170 : f32 to vector<1x4xf32>
    %161 = arith.addf %157, %160 : vector<1x4xf32>
    %162 = math.rsqrt %161 : vector<1x4xf32>
    %163 = vector.broadcast %162 : vector<1x4xf32> to vector<256x4xf32>
    %164 = arith.mulf %159, %163 : vector<256x4xf32>
    %165 = vector.shape_cast %164 : vector<256x4xf32> to vector<16x16x4xf32>
    %166 = arith.addf %1, %165 : vector<16x16x4xf32>
    %c0_171 = arith.constant 0 : index
    %c0_172 = arith.constant 0 : index
    %c0_173 = arith.constant 0 : index
    %c0_174 = arith.constant 0 : index
    %167 = vector.load %arg4[%c0_171, %c0_172, %c0_173, %c0_174] : memref<1x16x16x4xf32, #tpu.memory_space<vmem>>, vector<1x16x16x4xf32>
    %168 = vector.shape_cast %167 : vector<1x16x16x4xf32> to vector<16x16x4xf32>
    %169 = vector.shape_cast %166 : vector<16x16x4xf32> to vector<1x16x16x4xf32>
    tpu.vector_store %arg4[%c0_171, %c0_172, %c0_173, %c0_174], %169 {strides = array<i32>} : memref<1x16x16x4xf32, #tpu.memory_space<vmem>>, vector<1x16x16x4xf32>,
    return
  }
  func.func @transform_0(%arg0: i32) -> (i32, i32, i32, i32) {
    %c0_i32 = arith.constant 0 : i32
    %c0_i32_0 = arith.constant 0 : i32
    %c0_i32_1 = arith.constant 0 : i32
    %c0_i32_2 = arith.constant 0 : i32
    return %arg0, %c0_i32, %c0_i32_0, %c0_i32_1 : i32, i32, i32, i32
  }
  func.func @transform_1(%arg0: i32) -> (i32, i32, i32) {
    %c0_i32 = arith.constant 0 : i32
    %c0_i32_0 = arith.constant 0 : i32
    %c0_i32_1 = arith.constant 0 : i32
    %c0_i32_2 = arith.constant 0 : i32
    return %c0_i32, %c0_i32_0, %c0_i32_1 : i32, i32, i32
  }
  func.func @transform_2(%arg0: i32) -> (i32, i32, i32) {
    %c0_i32 = arith.constant 0 : i32
    %c0_i32_0 = arith.constant 0 : i32
    %c0_i32_1 = arith.constant 0 : i32
    %c0_i32_2 = arith.constant 0 : i32
    return %c0_i32, %c0_i32_0, %c0_i32_1 : i32, i32, i32
  }
  func.func @transform_3(%arg0: i32) -> (i32, i32, i32, i32) {
    %c0_i32 = arith.constant 0 : i32
    %c0_i32_0 = arith.constant 0 : i32
    %c0_i32_1 = arith.constant 0 : i32
    %c0_i32_2 = arith.constant 0 : i32
    return %arg0, %c0_i32, %c0_i32_0, %c0_i32_1 : i32, i32, i32, i32
  }
}

</mosaic_0001>

<llo_original>
// kernel: residual_block.1
$region0: #{residual_block.1}
  #allocation0 [shape = 'u32[]', space=smem, size = 0x4, offset = 0x4, fixed_abs, tag = 'smem constant byte address 0x4 - core index']
  #allocation1 [shape = 'u32[144,128]{1,0:T(1,128)}', space=vmem, size = 0x12000, scoped, tag = 'internal scratch']
  #allocation2 [shape = 'f32[18,18,4]{2,1,0:T(8,128)}', space=vmem, size = 0x36000, scoped, tag = 'scratch operand']
  #allocation3 [shape = 'f32[18,18,4]{2,1,0:T(8,128)}', space=vmem, size = 0x36000, scoped, tag = 'scratch operand']
  %s0 = inlined_call_operand.vmem [shape: f32[2,16,16,4], index: 0, kind: input, shape index: {}]
  %s1 = inlined_call_operand.vmem [shape: f32[9,4,4], index: 1, kind: input, shape index: {}]
  %s2 = inlined_call_operand.vmem [shape: f32[9,4,4], index: 2, kind: input, shape index: {}]
  %s3 = inlined_call_operand.vmem [shape: f32[2,16,16,4], index: 3, kind: output, shape index: {}]
  %s4 = sld [smem:[#allocation0]]
  $region45: #{residual_block.1} parent=0
    _
  %s6 = ssub.s32 1, %s4
  %s7 = scalar_select 0, %s6, %s4
  loop: start=0, step=1, limit=4
  $region2: #{residual_block.1} parent=0 // loop_pre_header
    _
  $region3: #{residual_block.1} parent=0 // loop_header
    %s9 = sphi 0, %s13
    %p10 = scmp.ge.s32.totalorder %s9, 4
    %s19 = sphi 0, %s21
    %s22 = sphi 0, %s19
    %s23 = sphi 0, %s22
    %s39 = sphi 0, %s23
    %s43 = sphi 0, %s43
    %s45 = sphi 0, %s43
    %s46 = sphi 0, %s45
    %s60 = sphi 0, %s46
    %s64 = sphi 0, %s64
    %s66 = sphi 0, %s64
    %s67 = sphi 0, %s66
    %s81 = sphi 0, %s67
    %s87 = sphi 0, %s89
    %s90 = sphi 0, %s87
    %s91 = sphi 0, %s90
    %s107 = sphi 0, %s91
  $region4: #{residual_block.1} parent=0 // loop_header_branch
    %12 = sbr.rel (%p10) target = $region8
  $region5: #{residual_block.1} parent=0 // loop_body
    %s14 = ssub.s32 %s9, 1
    %s15 = ssub.s32 %s9, 2
    %s16 = sadd.s32 %s9, 1
    %s17 = ssub.s32 %s9, %s16
    %p18 = scmp.eq.s32.totalorder %s17, 0
    %s20 = sadd.s32 %s19, 1
    %s21 = scalar_select %p18, %s19, %s20
    %p24 = pneg %p18
    %p25 = scmp.eq.s32.totalorder %s9, 1
    %p26 = por %p24, %p25
    %p27 = scmp.ne.s32.totalorder %s19, %s22
    %p28 = scmp.eq.s32.totalorder %s9, 0
    %p29 = por %p27, %p28
    %p30 = scmp.ne.s32.totalorder %s19, %s22
    %p31 = scmp.eq.s32.totalorder %s14, 1
    %p32 = por %p30, %p31
    %p33 = scmp.ne.s32.totalorder %s22, %s23
    %p34 = scmp.eq.s32.totalorder %s14, 0
    %p35 = por %p33, %p34
    %p36 = scmp.ne.s32.totalorder %s22, %s23
    %p37 = scmp.eq.s32.totalorder %s15, 1
    %p38 = por %p36, %p37
    %p40 = scmp.ne.s32.totalorder %s23, %s39
    %p41 = scmp.eq.s32.totalorder %s15, 0
    %p42 = por %p40, %p41
    %s44 = sadd.s32 %s43, 1
    %p47 = scmp.eq.s32.totalorder %s9, 1
    %p48 = scmp.ne.s32.totalorder %s43, %s45
    %p49 = scmp.eq.s32.totalorder %s9, 0
    %p50 = por %p48, %p49
    %p51 = scmp.ne.s32.totalorder %s43, %s45
    %p52 = scmp.eq.s32.totalorder %s14, 1
    %p53 = por %p51, %p52
    %p54 = scmp.ne.s32.totalorder %s45, %s46
    %p55 = scmp.eq.s32.totalorder %s14, 0
    %p56 = por %p54, %p55
    %p57 = scmp.ne.s32.totalorder %s45, %s46
    %p58 = scmp.eq.s32.totalorder %s15, 1
    %p59 = por %p57, %p58
    %p61 = scmp.ne.s32.totalorder %s46, %s60
    %p62 = scmp.eq.s32.totalorder %s15, 0
    %p63 = por %p61, %p62
    %s65 = sadd.s32 %s64, 1
    %p68 = scmp.eq.s32.totalorder %s9, 1
    %p69 = scmp.ne.s32.totalorder %s64, %s66
    %p70 = scmp.eq.s32.totalorder %s9, 0
    %p71 = por %p69, %p70
    %p72 = scmp.ne.s32.totalorder %s64, %s66
    %p73 = scmp.eq.s32.totalorder %s14, 1
    %p74 = por %p72, %p73
    %p75 = scmp.ne.s32.totalorder %s66, %s67
    %p76 = scmp.eq.s32.totalorder %s14, 0
    %p77 = por %p75, %p76
    %p78 = scmp.ne.s32.totalorder %s66, %s67
    %p79 = scmp.eq.s32.totalorder %s15, 1
    %p80 = por %p78, %p79
    %p82 = scmp.ne.s32.totalorder %s67, %s81
    %p83 = scmp.eq.s32.totalorder %s15, 0
    %p84 = por %p82, %p83
    %s85 = ssub.s32 %s9, %s16
    %p86 = scmp.eq.s32.totalorder %s85, 0
    %s88 = sadd.s32 %s87, 1
    %s89 = scalar_select %p86, %s87, %s88
    %p92 = pneg %p86
    %p93 = scmp.eq.s32.totalorder %s9, 1
    %p94 = por %p92, %p93
    %p95 = scmp.ne.s32.totalorder %s87, %s90
    %p96 = scmp.eq.s32.totalorder %s9, 0
    %p97 = por %p95, %p96
    %p98 = scmp.ne.s32.totalorder %s87, %s90
    %p99 = scmp.eq.s32.totalorder %s14, 1
    %p100 = por %p98, %p99
    %p101 = scmp.ne.s32.totalorder %s90, %s91
    %p102 = scmp.eq.s32.totalorder %s14, 0
    %p103 = por %p101, %p102
    %p104 = scmp.ne.s32.totalorder %s90, %s91
    %p105 = scmp.eq.s32.totalorder %s15, 1
    %p106 = por %p104, %p105
    %p108 = scmp.ne.s32.totalorder %s91, %s107
    %p109 = scmp.eq.s32.totalorder %s15, 0
    %p110 = por %p108, %p109
    %p111 = scmp.le.s32.totalorder 1, %s9
    %p112 = scmp.lt.s32.totalorder %s9, 3
    %p113 = pnand %p111, %p112
    %p114 = pneg %p113
    // Predicated region
    $region9: #{residual_block.1} parent=5 // pred_check
      _
    $region10: #{residual_block.1} parent=5 // pred_check_branch
      %116 = sbr.rel (%p113) target = $region12
    $region11: #{residual_block.1} parent=5 // pred_region
      %s117 = ssub.s32 %s9, 1
      // Predicated region
      $region13: #{residual_block.1} parent=11 // pred_check
        %p118 = pneg %p56
      $region14: #{residual_block.1} parent=11 // pred_check_branch
        %120 = sbr.rel (%p118) target = $region16
      $region15: #{residual_block.1} parent=11 // pred_region
        _
      $region16: #{residual_block.1} parent=11 // pred_fallthru
        _
      // Predicated region
      $region17: #{residual_block.1} parent=11 // pred_check
        %p121 = pneg %p77
      $region18: #{residual_block.1} parent=11 // pred_check_branch
        %123 = sbr.rel (%p121) target = $region20
      $region19: #{residual_block.1} parent=11 // pred_region
        _
      $region20: #{residual_block.1} parent=11 // pred_fallthru
        _
    $region12: #{residual_block.1} parent=5 // pred_fallthru
      _
    %p124 = scmp.lt.s32.totalorder %s9, 2
    // Predicated region
    $region21: #{residual_block.1} parent=5 // pred_check
      %p125 = pneg %p124
    $region22: #{residual_block.1} parent=5 // pred_check_branch
      %127 = sbr.rel (%p125) target = $region24
    $region23: #{residual_block.1} parent=5 // pred_region
      // Predicated region
      $region25: #{residual_block.1} parent=23 // pred_check
        %p128 = pneg %p29
      $region26: #{residual_block.1} parent=23 // pred_check_branch
        %130 = sbr.rel (%p128) target = $region28
      $region27: #{residual_block.1} parent=23 // pred_region
        %p131 = scmp.lt.s32.totalorder %s9, 1
        %s132 = scalar_select %p131, %s9, 1
        %s133 = smul.addr %s132, 32
        %s134 = smul.addr %s133, 8
        %s135 = scalar_lea.vmem %s0, %s134
      $region28: #{residual_block.1} parent=23 // pred_fallthru
        _
    $region24: #{residual_block.1} parent=5 // pred_fallthru
      _
    %p136 = scmp.le.s32.totalorder 1, %s9
    %p137 = scmp.lt.s32.totalorder %s9, 3
    %p138 = pnand %p136, %p137
    %p139 = pneg %p138
    // Predicated region
    $region29: #{residual_block.1} parent=5 // pred_check
      _
    $region30: #{residual_block.1} parent=5 // pred_check_branch
      %141 = sbr.rel (%p138) target = $region32
    $region31: #{residual_block.1} parent=5 // pred_region
      %s142 = ssub.s32 %s9, 1
      %p143 = scmp.lt.s32.totalorder %s14, 1
      %s144 = scalar_select %p143, %s14, 1
      %s145 = smul.addr %s144, 32
      %s146 = smul.addr %s145, 8
      %s147 = scalar_lea.vmem %s0, %s146
      %p148 = pneg %p35
      %p149 = pneg %p32
      %p150 = pneg %p56
      %p151 = pneg %p53
      %p152 = pneg %p77
      %p153 = pneg %p74
      %p154 = pneg %p103
      %p155 = pneg %p100
      %p156 = scmp.lt.s32.totalorder %s14, 1
      %s157 = scalar_select %p156, %s14, 1
      %s158 = smul.addr %s157, 32
      %s159 = smul.addr %s158, 8
      %s160 = scalar_lea.vmem %s3, %s159
      %p161 = scmp.lt.s32.totalorder %s14, 1
      %s162 = scalar_select %p161, %s14, 1
      %s163 = smul.addr %s162, 32
      %s164 = smul.addr %s163, 8
      %s165 = scalar_lea.vmem %s0, %s164
      %p166 = scmp.lt.s32.totalorder %s14, 1
      %s167 = scalar_select %p166, %s14, 1
      %s168 = smul.addr %s167, 32
      %s169 = smul.addr %s168, 8
      %s170 = scalar_lea.vmem %s3, %s169
      %v171 = vld [vmem:[%s165] sm:$0xff]
      %v172 = vld [vmem:[%s165 + $0x8] sm:$0xff]
      %v173 = vld [vmem:[%s165 + $0x10] sm:$0xff]
      %v174 = vld [vmem:[%s165 + $0x18] sm:$0xff]
      %v175 = vld [vmem:[%s165 + $0x20] sm:$0xff]
      %v176 = vld [vmem:[%s165 + $0x28] sm:$0xff]
      %v177 = vld [vmem:[%s165 + $0x30] sm:$0xff]
      %v178 = vld [vmem:[%s165 + $0x38] sm:$0xff]
      %v179 = vld [vmem:[%s165 + $0x40] sm:$0xff]
      %v180 = vld [vmem:[%s165 + $0x48] sm:$0xff]
      %v181 = vld [vmem:[%s165 + $0x50] sm:$0xff]
      %v182 = vld [vmem:[%s165 + $0x58] sm:$0xff]
      %v183 = vld [vmem:[%s165 + $0x60] sm:$0xff]
      %v184 = vld [vmem:[%s165 + $0x68] sm:$0xff]
      %v185 = vld [vmem:[%s165 + $0x70] sm:$0xff]
      %v186 = vld [vmem:[%s165 + $0x78] sm:$0xff]
      %v187 = vld [vmem:[%s165 + $0x80] sm:$0xff]
      %v188 = vld [vmem:[%s165 + $0x88] sm:$0xff]
      %v189 = vld [vmem:[%s165 + $0x90] sm:$0xff]
      %v190 = vld [vmem:[%s165 + $0x98] sm:$0xff]
      %v191 = vld [vmem:[%s165 + $0xa0] sm:$0xff]
      %v192 = vld [vmem:[%s165 + $0xa8] sm:$0xff]
      %v193 = vld [vmem:[%s165 + $0xb0] sm:$0xff]
      %v194 = vld [vmem:[%s165 + $0xb8] sm:$0xff]
      %v195 = vld [vmem:[%s165 + $0xc0] sm:$0xff]
      %v196 = vld [vmem:[%s165 + $0xc8] sm:$0xff]
      %v197 = vld [vmem:[%s165 + $0xd0] sm:$0xff]
      %v198 = vld [vmem:[%s165 + $0xd8] sm:$0xff]
      %v199 = vld [vmem:[%s165 + $0xe0] sm:$0xff]
      %v200 = vld [vmem:[%s165 + $0xe8] sm:$0xff]
      %v201 = vld [vmem:[%s165 + $0xf0] sm:$0xff]
      %v202 = vld [vmem:[%s165 + $0xf8] sm:$0xff]
      %s203 = scalar_lea.vmem [#allocation2], 24
      %vm204 = vcmask 31744
      %205 = vst.msk [vmem:[%s203 + $0x1] sm:$0xff] %vm204, %v171
      %206 = vst.msk [vmem:[%s203 + $0x9] sm:$0xff] %vm204, %v172
      %207 = vst.msk [vmem:[%s203 + $0x19] sm:$0xff] %vm204, %v173
      %208 = vst.msk [vmem:[%s203 + $0x21] sm:$0xff] %vm204, %v174
      %209 = vst.msk [vmem:[%s203 + $0x31] sm:$0xff] %vm204, %v175
      %210 = vst.msk [vmem:[%s203 + $0x39] sm:$0xff] %vm204, %v176
      %211 = vst.msk [vmem:[%s203 + $0x49] sm:$0xff] %vm204, %v177
      %212 = vst.msk [vmem:[%s203 + $0x51] sm:$0xff] %vm204, %v178
      %213 = vst.msk [vmem:[%s203 + $0x61] sm:$0xff] %vm204, %v179
      %214 = vst.msk [vmem:[%s203 + $0x69] sm:$0xff] %vm204, %v180
      %215 = vst.msk [vmem:[%s203 + $0x79] sm:$0xff] %vm204, %v181
      %216 = vst.msk [vmem:[%s203 + $0x81] sm:$0xff] %vm204, %v182
      %217 = vst.msk [vmem:[%s203 + $0x91] sm:$0xff] %vm204, %v183
      %218 = vst.msk [vmem:[%s203 + $0x99] sm:$0xff] %vm204, %v184
      %219 = vst.msk [vmem:[%s203 + $0xa9] sm:$0xff] %vm204, %v185
      %220 = vst.msk [vmem:[%s203 + $0xb1] sm:$0xff] %vm204, %v186
      %221 = vst.msk [vmem:[%s203 + $0xc1] sm:$0xff] %vm204, %v187
      %222 = vst.msk [vmem:[%s203 + $0xc9] sm:$0xff] %vm204, %v188
      %223 = vst.msk [vmem:[%s203 + $0xd9] sm:$0xff] %vm204, %v189
      %224 = vst.msk [vmem:[%s203 + $0xe1] sm:$0xff] %vm204, %v190
      %225 = vst.msk [vmem:[%s203 + $0xf1] sm:$0xff] %vm204, %v191
      %226 = vst.msk [vmem:[%s203 + $0xf9] sm:$0xff] %vm204, %v192
      %227 = vst.msk [vmem:[%s203 + $0x109] sm:$0xff] %vm204, %v193
      %228 = vst.msk [vmem:[%s203 + $0x111] sm:$0xff] %vm204, %v194
      %229 = vst.msk [vmem:[%s203 + $0x121] sm:$0xff] %vm204, %v195
      %230 = vst.msk [vmem:[%s203 + $0x129] sm:$0xff] %vm204, %v196
      %231 = vst.msk [vmem:[%s203 + $0x139] sm:$0xff] %vm204, %v197
      %232 = vst.msk [vmem:[%s203 + $0x141] sm:$0xff] %vm204, %v198
      %233 = vst.msk [vmem:[%s203 + $0x151] sm:$0xff] %vm204, %v199
      %234 = vst.msk [vmem:[%s203 + $0x159] sm:$0xff] %vm204, %v200
      %235 = vst.msk [vmem:[%s203 + $0x169] sm:$0xff] %vm204, %v201
      %236 = vst.msk [vmem:[%s203 + $0x171] sm:$0xff] %vm204, %v202
      %237 = vst.msk [vmem:[#allocation2 + $0x1] sm:$0xff] %vm204, %v173
      %238 = vst.msk [vmem:[#allocation2 + $0x9] sm:$0xff] %vm204, %v174
      %s239 = scalar_lea.vmem [#allocation2], 408
      %240 = vst.msk [vmem:[%s239 + $0x1] sm:$0xff] %vm204, %v199
      %241 = vst.msk [vmem:[%s239 + $0x9] sm:$0xff] %vm204, %v200
      %v242 = vld [vmem:[#allocation2 + $0x2] sm:$0x1]
      %v243 = vld [vmem:[#allocation2 + $0x1a] sm:$0x1]
      %v244 = vld [vmem:[#allocation2 + $0x32] sm:$0x1]
      %v245 = vld [vmem:[#allocation2 + $0x4a] sm:$0x1]
      %v246 = vld [vmem:[#allocation2 + $0x62] sm:$0x1]
      %v247 = vld [vmem:[#allocation2 + $0x7a] sm:$0x1]
      %v248 = vld [vmem:[#allocation2 + $0x92] sm:$0x1]
      %v249 = vld [vmem:[#allocation2 + $0xaa] sm:$0x1]
      %v250 = vld [vmem:[#allocation2 + $0xc2] sm:$0x1]
      %v251 = vld [vmem:[#allocation2 + $0xda] sm:$0x1]
      %v252 = vld [vmem:[#allocation2 + $0xf2] sm:$0x1]
      %v253 = vld [vmem:[#allocation2 + $0x10a] sm:$0x1]
      %v254 = vld [vmem:[#allocation2 + $0x122] sm:$0x1]
      %v255 = vld [vmem:[#allocation2 + $0x13a] sm:$0x1]
      %v256 = vld [vmem:[#allocation2 + $0x152] sm:$0x1]
      %v257 = vld [vmem:[#allocation2 + $0x16a] sm:$0x1]
      %v258 = vld [vmem:[#allocation2 + $0x182] sm:$0x1]
      %v259 = vld [vmem:[#allocation2 + $0x19a] sm:$0x1]
      %vm260 = vcmask 24576
      %261 = vst.msk [vmem:[#allocation2] sm:$0x1] %vm260, %v242
      %262 = vst.msk [vmem:[#allocation2 + $0x18] sm:$0x1] %vm260, %v243
      %263 = vst.msk [vmem:[#allocation2 + $0x30] sm:$0x1] %vm260, %v244
      %264 = vst.msk [vmem:[#allocation2 + $0x48] sm:$0x1] %vm260, %v245
      %265 = vst.msk [vmem:[#allocation2 + $0x60] sm:$0x1] %vm260, %v246
      %266 = vst.msk [vmem:[#allocation2 + $0x78] sm:$0x1] %vm260, %v247
      %267 = vst.msk [vmem:[#allocation2 + $0x90] sm:$0x1] %vm260, %v248
      %268 = vst.msk [vmem:[#allocation2 + $0xa8] sm:$0x1] %vm260, %v249
      %269 = vst.msk [vmem:[#allocation2 + $0xc0] sm:$0x1] %vm260, %v250
      %270 = vst.msk [vmem:[#allocation2 + $0xd8] sm:$0x1] %vm260, %v251
      %271 = vst.msk [vmem:[#allocation2 + $0xf0] sm:$0x1] %vm260, %v252
      %272 = vst.msk [vmem:[#allocation2 + $0x108] sm:$0x1] %vm260, %v253
      %273 = vst.msk [vmem:[#allocation2 + $0x120] sm:$0x1] %vm260, %v254
      %274 = vst.msk [vmem:[#allocation2 + $0x138] sm:$0x1] %vm260, %v255
      %275 = vst.msk [vmem:[#allocation2 + $0x150] sm:$0x1] %vm260, %v256
      %276 = vst.msk [vmem:[#allocation2 + $0x168] sm:$0x1] %vm260, %v257
      %277 = vst.msk [vmem:[#allocation2 + $0x180] sm:$0x1] %vm260, %v258
      %278 = vst.msk [vmem:[#allocation2 + $0x198] sm:$0x1] %vm260, %v259
      %v279 = vld [vmem:[#allocation2 + $0xf] sm:$0x1]
      %v280 = vld [vmem:[#allocation2 + $0x27] sm:$0x1]
      %v281 = vld [vmem:[#allocation2 + $0x3f] sm:$0x1]
      %v282 = vld [vmem:[#allocation2 + $0x57] sm:$0x1]
      %v283 = vld [vmem:[#allocation2 + $0x6f] sm:$0x1]
      %v284 = vld [vmem:[#allocation2 + $0x87] sm:$0x1]
      %v285 = vld [vmem:[#allocation2 + $0x9f] sm:$0x1]
      %v286 = vld [vmem:[#allocation2 + $0xb7] sm:$0x1]
      %v287 = vld [vmem:[#allocation2 + $0xcf] sm:$0x1]
      %v288 = vld [vmem:[#allocation2 + $0xe7] sm:$0x1]
      %v289 = vld [vmem:[#allocation2 + $0xff] sm:$0x1]
      %v290 = vld [vmem:[#allocation2 + $0x117] sm:$0x1]
      %v291 = vld [vmem:[#allocation2 + $0x12f] sm:$0x1]
      %v292 = vld [vmem:[#allocation2 + $0x147] sm:$0x1]
      %v293 = vld [vmem:[#allocation2 + $0x15f] sm:$0x1]
      %v294 = vld [vmem:[#allocation2 + $0x177] sm:$0x1]
      %v295 = vld [vmem:[#allocation2 + $0x18f] sm:$0x1]
      %v296 = vld [vmem:[#allocation2 + $0x1a7] sm:$0x1]
      %297 = vst.msk [vmem:[#allocation2 + $0x11] sm:$0x1] %vm260, %v279
      %298 = vst.msk [vmem:[#allocation2 + $0x29] sm:$0x1] %vm260, %v280
      %299 = vst.msk [vmem:[#allocation2 + $0x41] sm:$0x1] %vm260, %v281
      %300 = vst.msk [vmem:[#allocation2 + $0x59] sm:$0x1] %vm260, %v282
      %301 = vst.msk [vmem:[#allocation2 + $0x71] sm:$0x1] %vm260, %v283
      %302 = vst.msk [vmem:[#allocation2 + $0x89] sm:$0x1] %vm260, %v284
      %303 = vst.msk [vmem:[#allocation2 + $0xa1] sm:$0x1] %vm260, %v285
      %304 = vst.msk [vmem:[#allocation2 + $0xb9] sm:$0x1] %vm260, %v286
      %305 = vst.msk [vmem:[#allocation2 + $0xd1] sm:$0x1] %vm260, %v287
      %306 = vst.msk [vmem:[#allocation2 + $0xe9] sm:$0x1] %vm260, %v288
      %307 = vst.msk [vmem:[#allocation2 + $0x101] sm:$0x1] %vm260, %v289
      %308 = vst.msk [vmem:[#allocation2 + $0x119] sm:$0x1] %vm260, %v290
      %309 = vst.msk [vmem:[#allocation2 + $0x131] sm:$0x1] %vm260, %v291
      %310 = vst.msk [vmem:[#allocation2 + $0x149] sm:$0x1] %vm260, %v292
      %311 = vst.msk [vmem:[#allocation2 + $0x161] sm:$0x1] %vm260, %v293
      %312 = vst.msk [vmem:[#allocation2 + $0x179] sm:$0x1] %vm260, %v294
      %313 = vst.msk [vmem:[#allocation2 + $0x191] sm:$0x1] %vm260, %v295
      %314 = vst.msk [vmem:[#allocation2 + $0x1a9] sm:$0x1] %vm260, %v296
      %v315 = vld [vmem:[#allocation2] sm:$0xff]
      %v316 = vld [vmem:[#allocation2 + $0x8] sm:$0xff]
      %v317 = vld [vmem:[#allocation2 + $0x18] sm:$0xff]
      %v318 = vld [vmem:[#allocation2 + $0x20] sm:$0xff]
      %v319 = vld [vmem:[#allocation2 + $0x30] sm:$0xff]
      %v320 = vld [vmem:[#allocation2 + $0x38] sm:$0xff]
      %v321 = vld [vmem:[#allocation2 + $0x48] sm:$0xff]
      %v322 = vld [vmem:[#allocation2 + $0x50] sm:$0xff]
      %v323 = vld [vmem:[#allocation2 + $0x60] sm:$0xff]
      %v324 = vld [vmem:[#allocation2 + $0x68] sm:$0xff]
      %v325 = vld [vmem:[#allocation2 + $0x78] sm:$0xff]
      %v326 = vld [vmem:[#allocation2 + $0x80] sm:$0xff]
      %v327 = vld [vmem:[#allocation2 + $0x90] sm:$0xff]
      %v328 = vld [vmem:[#allocation2 + $0x98] sm:$0xff]
      %v329 = vld [vmem:[#allocation2 + $0xa8] sm:$0xff]
      %v330 = vld [vmem:[#allocation2 + $0xb0] sm:$0xff]
      %v331 = vld [vmem:[#allocation2 + $0xc0] sm:$0xff]
      %v332 = vld [vmem:[#allocation2 + $0xc8] sm:$0xff]
      %v333 = vld [vmem:[#allocation2 + $0xd8] sm:$0xff]
      %v334 = vld [vmem:[#allocation2 + $0xe0] sm:$0xff]
      %v335 = vld [vmem:[#allocation2 + $0xf0] sm:$0xff]
      %v336 = vld [vmem:[#allocation2 + $0xf8] sm:$0xff]
      %v337 = vld [vmem:[#allocation2 + $0x108] sm:$0xff]
      %v338 = vld [vmem:[#allocation2 + $0x110] sm:$0xff]
      %v339 = vld [vmem:[#allocation2 + $0x120] sm:$0xff]
      %v340 = vld [vmem:[#allocation2 + $0x128] sm:$0xff]
      %v341 = vld [vmem:[#allocation2 + $0x138] sm:$0xff]
      %v342 = vld [vmem:[#allocation2 + $0x140] sm:$0xff]
      %v343 = vld [vmem:[#allocation2 + $0x150] sm:$0xff]
      %v344 = vld [vmem:[#allocation2 + $0x158] sm:$0xff]
      %v345 = vld [vmem:[#allocation2 + $0x168] sm:$0xff]
      %v346 = vld [vmem:[#allocation2 + $0x170] sm:$0xff]
      %v347 = vld [vmem:[%s1] sm:$0xf]
      %v348 = vld [vmem:[#allocation2 + $0x1] sm:$0xff]
      %v349 = vld [vmem:[#allocation2 + $0x9] sm:$0xff]
      %v350 = vld [vmem:[#allocation2 + $0x19] sm:$0xff]
      %v351 = vld [vmem:[#allocation2 + $0x21] sm:$0xff]
      %v352 = vld [vmem:[#allocation2 + $0x31] sm:$0xff]
      %v353 = vld [vmem:[#allocation2 + $0x39] sm:$0xff]
      %v354 = vld [vmem:[#allocation2 + $0x49] sm:$0xff]
      %v355 = vld [vmem:[#allocation2 + $0x51] sm:$0xff]
      %v356 = vld [vmem:[#allocation2 + $0x61] sm:$0xff]
      %v357 = vld [vmem:[#allocation2 + $0x69] sm:$0xff]
      %v358 = vld [vmem:[#allocation2 + $0x79] sm:$0xff]
      %v359 = vld [vmem:[#allocation2 + $0x81] sm:$0xff]
      %v360 = vld [vmem:[#allocation2 + $0x91] sm:$0xff]
      %v361 = vld [vmem:[#allocation2 + $0x99] sm:$0xff]
      %v362 = vld [vmem:[#allocation2 + $0xa9] sm:$0xff]
      %v363 = vld [vmem:[#allocation2 + $0xb1] sm:$0xff]
      %v364 = vld [vmem:[#allocation2 + $0xc1] sm:$0xff]
      %v365 = vld [vmem:[#allocation2 + $0xc9] sm:$0xff]
      %v366 = vld [vmem:[#allocation2 + $0xd9] sm:$0xff]
      %v367 = vld [vmem:[#allocation2 + $0xe1] sm:$0xff]
      %v368 = vld [vmem:[#allocation2 + $0xf1] sm:$0xff]
      %v369 = vld [vmem:[#allocation2 + $0xf9] sm:$0xff]
      %v370 = vld [vmem:[#allocation2 + $0x109] sm:$0xff]
      %v371 = vld [vmem:[#allocation2 + $0x111] sm:$0xff]
      %v372 = vld [vmem:[#allocation2 + $0x121] sm:$0xff]
      %v373 = vld [vmem:[#allocation2 + $0x129] sm:$0xff]
      %v374 = vld [vmem:[#allocation2 + $0x139] sm:$0xff]
      %v375 = vld [vmem:[#allocation2 + $0x141] sm:$0xff]
      %v376 = vld [vmem:[#allocation2 + $0x151] sm:$0xff]
      %v377 = vld [vmem:[#allocation2 + $0x159] sm:$0xff]
      %v378 = vld [vmem:[#allocation2 + $0x169] sm:$0xff]
      %v379 = vld [vmem:[#allocation2 + $0x171] sm:$0xff]
      %s380 = scalar_lea.vmem %s1, 4
      %v381 = vld [vmem:[%s380] sm:$0xf]
      %v383 = vsel %vm204, %v348, 0
      %v386 = vsel %vm204, %v349, 0
      %v389 = vsel %vm204, %v350, 0
      %v392 = vsel %vm204, %v351, 0
      %v395 = vsel %vm204, %v352, 0
      %v398 = vsel %vm204, %v353, 0
      %v401 = vsel %vm204, %v354, 0
      %v404 = vsel %vm204, %v355, 0
      %v407 = vsel %vm204, %v356, 0
      %v410 = vsel %vm204, %v357, 0
      %v413 = vsel %vm204, %v358, 0
      %v416 = vsel %vm204, %v359, 0
      %v419 = vsel %vm204, %v360, 0
      %v422 = vsel %vm204, %v361, 0
      %v425 = vsel %vm204, %v362, 0
      %v428 = vsel %vm204, %v363, 0
      %v431 = vsel %vm204, %v364, 0
      %v434 = vsel %vm204, %v365, 0
      %v437 = vsel %vm204, %v366, 0
      %v440 = vsel %vm204, %v367, 0
      %v443 = vsel %vm204, %v368, 0
      %v446 = vsel %vm204, %v369, 0
      %v449 = vsel %vm204, %v370, 0
      %v452 = vsel %vm204, %v371, 0
      %v455 = vsel %vm204, %v372, 0
      %v458 = vsel %vm204, %v373, 0
      %v461 = vsel %vm204, %v374, 0
      %v464 = vsel %vm204, %v375, 0
      %v467 = vsel %vm204, %v376, 0
      %v470 = vsel %vm204, %v377, 0
      %v473 = vsel %vm204, %v378, 0
      %v476 = vsel %vm204, %v379, 0
      %vm478 = vcmask 1043456
      %v480 = vsel %vm478, %v381, 0
      %482 = vmatprep.subr.mxu0 0.0
      %483 = vmatpush1.msra.mxu0 0.0
      %484 = vmatprep.subr.mxu0 0.0
      %485 = vmatpush1.msra.mxu0 0.0
      %486 = vmatprep.subr.mxu0 0.0
      %487 = vmatpush1.msra.mxu0 0.0
      %488 = vmatprep.subr.mxu0 0.0
      %489 = vmatpush1.msra.mxu0 0.0
      %490 = vmatprep.subr.mxu0 0.0
      %491 = vmatpush1.msra.mxu0 0.0
      %492 = vmatprep.subr.mxu0 0.0
      %493 = vmatpush1.msra.mxu0 0.0
      %494 = vmatprep.subr.mxu0 0.0
      %495 = vmatpush1.msra.mxu0 0.0
      %496 = vmatprep.subr.mxu0 0.0
      %497 = vmatpush1.msra.mxu0 0.0
      %498 = vmatprep.subr.mxu0 0.0
      %499 = vmatpush1.msra.mxu0 0.0
      %500 = vmatprep.subr.mxu0 0.0
      %501 = vmatpush1.msra.mxu0 0.0
      %502 = vmatprep.subr.mxu0 0.0
      %503 = vmatpush1.msra.mxu0 0.0
      %504 = vmatprep.subr.mxu0 0.0
      %505 = vmatpush1.msra.mxu0 0.0
      %506 = vmatprep.subr.mxu0 0.0
      %507 = vmatpush1.msra.mxu0 0.0
      %508 = vmatprep.subr.mxu0 0.0
      %509 = vmatpush1.msra.mxu0 0.0
      %510 = vmatprep.subr.mxu0 0.0
      %511 = vmatpush1.msra.mxu0 0.0
      %512 = vmatprep.subr.mxu0 0.0
      %513 = vmatpush1.msra.mxu0 %v480
      %514 = vmatprep.subr.mxu0 0.0
      %515 = vmatpush2.msra.mxu0 0.0
      %516 = vmatprep.subr.mxu0 0.0
      %517 = vmatpush2.msra.mxu0 0.0
      %518 = vmatprep.subr.mxu0 0.0
      %519 = vmatpush2.msra.mxu0 0.0
      %520 = vmatprep.subr.mxu0 0.0
      %521 = vmatpush2.msra.mxu0 0.0
      %522 = vmatprep.subr.mxu0 0.0
      %523 = vmatpush2.msra.mxu0 0.0
      %524 = vmatprep.subr.mxu0 0.0
      %525 = vmatpush2.msra.mxu0 0.0
      %526 = vmatprep.subr.mxu0 0.0
      %527 = vmatpush2.msra.mxu0 0.0
      %528 = vmatprep.subr.mxu0 0.0
      %529 = vmatpush2.msra.mxu0 0.0
      %530 = vmatprep.subr.mxu0 0.0
      %531 = vmatpush2.msra.mxu0 0.0
      %532 = vmatprep.subr.mxu0 0.0
      %533 = vmatpush2.msra.mxu0 0.0
      %534 = vmatprep.subr.mxu0 0.0
      %535 = vmatpush2.msra.mxu0 0.0
      %536 = vmatprep.subr.mxu0 0.0
      %537 = vmatpush2.msra.mxu0 0.0
      %538 = vmatprep.subr.mxu0 0.0
      %539 = vmatpush2.msra.mxu0 0.0
      %540 = vmatprep.subr.mxu0 0.0
      %541 = vmatpush2.msra.mxu0 0.0
      %542 = vmatprep.subr.mxu0 0.0
      %543 = vmatpush2.msra.mxu0 0.0
      %544 = vmatprep.subr.mxu0 0.0
      %545 = vmatpush2.msra.mxu0 0.0
      %546 = vmatprep.mubr.f32.mxu0 0.0
      %547 = vmatmul.mubr.f32.gmra.mxu0 %v383
      %v548 = vpop.f32.mrf.mxu0
      %v549 = vadd.f32 0.0, %v548
      %v550 = vpop.f32.mrf.mxu0
      %551 = vmatprep.mubr.f32.mxu0 0.0
      %552 = vmatmul.mubr.f32.gmra.mxu0 %v386
      %v553 = vpop.f32.mrf.mxu0
      %v554 = vadd.f32 0.0, %v553
      %v555 = vpop.f32.mrf.mxu0
      %556 = vmatprep.mubr.f32.mxu0 0.0
      %557 = vmatmul.mubr.f32.gmra.mxu0 %v389
      %v558 = vpop.f32.mrf.mxu0
      %v559 = vadd.f32 0.0, %v558
      %v560 = vpop.f32.mrf.mxu0
      %561 = vmatprep.mubr.f32.mxu0 0.0
      %562 = vmatmul.mubr.f32.gmra.mxu0 %v392
      %v563 = vpop.f32.mrf.mxu0
      %v564 = vadd.f32 0.0, %v563
      %v565 = vpop.f32.mrf.mxu0
      %566 = vmatprep.mubr.f32.mxu0 0.0
      %567 = vmatmul.mubr.f32.gmra.mxu0 %v395
      %v568 = vpop.f32.mrf.mxu0
      %v569 = vadd.f32 0.0, %v568
      %v570 = vpop.f32.mrf.mxu0
      %571 = vmatprep.mubr.f32.mxu0 0.0
      %572 = vmatmul.mubr.f32.gmra.mxu0 %v398
      %v573 = vpop.f32.mrf.mxu0
      %v574 = vadd.f32 0.0, %v573
      %v575 = vpop.f32.mrf.mxu0
      %576 = vmatprep.mubr.f32.mxu0 0.0
      %577 = vmatmul.mubr.f32.gmra.mxu0 %v401
      %v578 = vpop.f32.mrf.mxu0
      %v579 = vadd.f32 0.0, %v578
      %v580 = vpop.f32.mrf.mxu0
      %581 = vmatprep.mubr.f32.mxu0 0.0
      %582 = vmatmul.mubr.f32.gmra.mxu0 %v404
      %v583 = vpop.f32.mrf.mxu0
      %v584 = vadd.f32 0.0, %v583
      %v585 = vpop.f32.mrf.mxu0
      %586 = vmatprep.mubr.f32.mxu0 0.0
      %587 = vmatmul.mubr.f32.gmra.mxu0 %v407
      %v588 = vpop.f32.mrf.mxu0
      %v589 = vadd.f32 0.0, %v588
      %v590 = vpop.f32.mrf.mxu0
      %591 = vmatprep.mubr.f32.mxu0 0.0
      %592 = vmatmul.mubr.f32.gmra.mxu0 %v410
      %v593 = vpop.f32.mrf.mxu0
      %v594 = vadd.f32 0.0, %v593
      %v595 = vpop.f32.mrf.mxu0
      %596 = vmatprep.mubr.f32.mxu0 0.0
      %597 = vmatmul.mubr.f32.gmra.mxu0 %v413
      %v598 = vpop.f32.mrf.mxu0
      %v599 = vadd.f32 0.0, %v598
      %v600 = vpop.f32.mrf.mxu0
      %601 = vmatprep.mubr.f32.mxu0 0.0
      %602 = vmatmul.mubr.f32.gmra.mxu0 %v416
      %v603 = vpop.f32.mrf.mxu0
      %v604 = vadd.f32 0.0, %v603
      %v605 = vpop.f32.mrf.mxu0
      %606 = vmatprep.mubr.f32.mxu0 0.0
      %607 = vmatmul.mubr.f32.gmra.mxu0 %v419
      %v608 = vpop.f32.mrf.mxu0
      %v609 = vadd.f32 0.0, %v608
      %v610 = vpop.f32.mrf.mxu0
      %611 = vmatprep.mubr.f32.mxu0 0.0
      %612 = vmatmul.mubr.f32.gmra.mxu0 %v422
      %v613 = vpop.f32.mrf.mxu0
      %v614 = vadd.f32 0.0, %v613
      %v615 = vpop.f32.mrf.mxu0
      %616 = vmatprep.mubr.f32.mxu0 0.0
      %617 = vmatmul.mubr.f32.gmra.mxu0 %v425
      %v618 = vpop.f32.mrf.mxu0
      %v619 = vadd.f32 0.0, %v618
      %v620 = vpop.f32.mrf.mxu0
      %621 = vmatprep.mubr.f32.mxu0 0.0
      %622 = vmatmul.mubr.f32.gmra.mxu0 %v428
      %v623 = vpop.f32.mrf.mxu0
      %v624 = vadd.f32 0.0, %v623
      %v625 = vpop.f32.mrf.mxu0
      %626 = vmatprep.mubr.f32.mxu0 0.0
      %627 = vmatmul.mubr.f32.gmra.mxu0 %v431
      %v628 = vpop.f32.mrf.mxu0
      %v629 = vadd.f32 0.0, %v628
      %v630 = vpop.f32.mrf.mxu0
      %631 = vmatprep.mubr.f32.mxu0 0.0
      %632 = vmatmul.mubr.f32.gmra.mxu0 %v434
      %v633 = vpop.f32.mrf.mxu0
      %v634 = vadd.f32 0.0, %v633
      %v635 = vpop.f32.mrf.mxu0
      %636 = vmatprep.mubr.f32.mxu0 0.0
      %637 = vmatmul.mubr.f32.gmra.mxu0 %v437
      %v638 = vpop.f32.mrf.mxu0
      %v639 = vadd.f32 0.0, %v638
      %v640 = vpop.f32.mrf.mxu0
      %641 = vmatprep.mubr.f32.mxu0 0.0
      %642 = vmatmul.mubr.f32.gmra.mxu0 %v440
      %v643 = vpop.f32.mrf.mxu0
      %v644 = vadd.f32 0.0, %v643
      %v645 = vpop.f32.mrf.mxu0
      %646 = vmatprep.mubr.f32.mxu0 0.0
      %647 = vmatmul.mubr.f32.gmra.mxu0 %v443
      %v648 = vpop.f32.mrf.mxu0
      %v649 = vadd.f32 0.0, %v648
      %v650 = vpop.f32.mrf.mxu0
      %651 = vmatprep.mubr.f32.mxu0 0.0
      %652 = vmatmul.mubr.f32.gmra.mxu0 %v446
      %v653 = vpop.f32.mrf.mxu0
      %v654 = vadd.f32 0.0, %v653
      %v655 = vpop.f32.mrf.mxu0
      %656 = vmatprep.mubr.f32.mxu0 0.0
      %657 = vmatmul.mubr.f32.gmra.mxu0 %v449
      %v658 = vpop.f32.mrf.mxu0
      %v659 = vadd.f32 0.0, %v658
      %v660 = vpop.f32.mrf.mxu0
      %661 = vmatprep.mubr.f32.mxu0 0.0
      %662 = vmatmul.mubr.f32.gmra.mxu0 %v452
      %v663 = vpop.f32.mrf.mxu0
      %v664 = vadd.f32 0.0, %v663
      %v665 = vpop.f32.mrf.mxu0
      %666 = vmatprep.mubr.f32.mxu0 0.0
      %667 = vmatmul.mubr.f32.gmra.mxu0 %v455
      %v668 = vpop.f32.mrf.mxu0
      %v669 = vadd.f32 0.0, %v668
      %v670 = vpop.f32.mrf.mxu0
      %671 = vmatprep.mubr.f32.mxu0 0.0
      %672 = vmatmul.mubr.f32.gmra.mxu0 %v458
      %v673 = vpop.f32.mrf.mxu0
      %v674 = vadd.f32 0.0, %v673
      %v675 = vpop.f32.mrf.mxu0
      %676 = vmatprep.mubr.f32.mxu0 0.0
      %677 = vmatmul.mubr.f32.gmra.mxu0 %v461
      %v678 = vpop.f32.mrf.mxu0
      %v679 = vadd.f32 0.0, %v678
      %v680 = vpop.f32.mrf.mxu0
      %681 = vmatprep.mubr.f32.mxu0 0.0
      %682 = vmatmul.mubr.f32.gmra.mxu0 %v464
      %v683 = vpop.f32.mrf.mxu0
      %v684 = vadd.f32 0.0, %v683
      %v685 = vpop.f32.mrf.mxu0
      %686 = vmatprep.mubr.f32.mxu0 0.0
      %687 = vmatmul.mubr.f32.gmra.mxu0 %v467
      %v688 = vpop.f32.mrf.mxu0
      %v689 = vadd.f32 0.0, %v688
      %v690 = vpop.f32.mrf.mxu0
      %691 = vmatprep.mubr.f32.mxu0 0.0
      %692 = vmatmul.mubr.f32.gmra.mxu0 %v470
      %v693 = vpop.f32.mrf.mxu0
      %v694 = vadd.f32 0.0, %v693
      %v695 = vpop.f32.mrf.mxu0
      %696 = vmatprep.mubr.f32.mxu0 0.0
      %697 = vmatmul.mubr.f32.gmra.mxu0 %v473
      %v698 = vpop.f32.mrf.mxu0
      %v699 = vadd.f32 0.0, %v698
      %v700 = vpop.f32.mrf.mxu0
      %701 = vmatprep.mubr.f32.mxu0 0.0
      %702 = vmatmul.mubr.f32.gmra.mxu0 %v476
      %v703 = vpop.f32.mrf.mxu0
      %v704 = vadd.f32 0.0, %v703
      %v705 = vpop.f32.mrf.mxu0
      %706 = vdwg.mxu0
      %v708 = vsel %vm204, %v315, 0
      %v711 = vsel %vm204, %v316, 0
      %v714 = vsel %vm204, %v317, 0
      %v717 = vsel %vm204, %v318, 0
      %v720 = vsel %vm204, %v319, 0
      %v723 = vsel %vm204, %v320, 0
      %v726 = vsel %vm204, %v321, 0
      %v729 = vsel %vm204, %v322, 0
      %v732 = vsel %vm204, %v323, 0
      %v735 = vsel %vm204, %v324, 0
      %v738 = vsel %vm204, %v325, 0
      %v741 = vsel %vm204, %v326, 0
      %v744 = vsel %vm204, %v327, 0
      %v747 = vsel %vm204, %v328, 0
      %v750 = vsel %vm204, %v329, 0
      %v753 = vsel %vm204, %v330, 0
      %v756 = vsel %vm204, %v331, 0
      %v759 = vsel %vm204, %v332, 0
      %v762 = vsel %vm204, %v333, 0
      %v765 = vsel %vm204, %v334, 0
      %v768 = vsel %vm204, %v335, 0
      %v771 = vsel %vm204, %v336, 0
      %v774 = vsel %vm204, %v337, 0
      %v777 = vsel %vm204, %v338, 0
      %v780 = vsel %vm204, %v339, 0
      %v783 = vsel %vm204, %v340, 0
      %v786 = vsel %vm204, %v341, 0
      %v789 = vsel %vm204, %v342, 0
      %v792 = vsel %vm204, %v343, 0
      %v795 = vsel %vm204, %v344, 0
      %v798 = vsel %vm204, %v345, 0
      %v801 = vsel %vm204, %v346, 0
      %v804 = vsel %vm478, %v347, 0
      %806 = vmatprep.subr.mxu0 0.0
      %807 = vmatpush1.msra.mxu0 0.0
      %808 = vmatprep.subr.mxu0 0.0
      %809 = vmatpush1.msra.mxu0 0.0
      %810 = vmatprep.subr.mxu0 0.0
      %811 = vmatpush1.msra.mxu0 0.0
      %812 = vmatprep.subr.mxu0 0.0
      %813 = vmatpush1.msra.mxu0 0.0
      %814 = vmatprep.subr.mxu0 0.0
      %815 = vmatpush1.msra.mxu0 0.0
      %816 = vmatprep.subr.mxu0 0.0
      %817 = vmatpush1.msra.mxu0 0.0
      %818 = vmatprep.subr.mxu0 0.0
      %819 = vmatpush1.msra.mxu0 0.0
      %820 = vmatprep.subr.mxu0 0.0
      %821 = vmatpush1.msra.mxu0 0.0
      %822 = vmatprep.subr.mxu0 0.0
      %823 = vmatpush1.msra.mxu0 0.0
      %824 = vmatprep.subr.mxu0 0.0
      %825 = vmatpush1.msra.mxu0 0.0
      %826 = vmatprep.subr.mxu0 0.0
      %827 = vmatpush1.msra.mxu0 0.0
      %828 = vmatprep.subr.mxu0 0.0
      %829 = vmatpush1.msra.mxu0 0.0
      %830 = vmatprep.subr.mxu0 0.0
      %831 = vmatpush1.msra.mxu0 0.0
      %832 = vmatprep.subr.mxu0 0.0
      %833 = vmatpush1.msra.mxu0 0.0
      %834 = vmatprep.subr.mxu0 0.0
      %835 = vmatpush1.msra.mxu0 0.0
      %836 = vmatprep.subr.mxu0 0.0
      %837 = vmatpush1.msra.mxu0 %v804
      %838 = vmatprep.subr.mxu0 0.0
      %839 = vmatpush2.msra.mxu0 0.0
      %840 = vmatprep.subr.mxu0 0.0
      %841 = vmatpush2.msra.mxu0 0.0
      %842 = vmatprep.subr.mxu0 0.0
      %843 = vmatpush2.msra.mxu0 0.0
      %844 = vmatprep.subr.mxu0 0.0
      %845 = vmatpush2.msra.mxu0 0.0
      %846 = vmatprep.subr.mxu0 0.0
      %847 = vmatpush2.msra.mxu0 0.0
      %848 = vmatprep.subr.mxu0 0.0
      %849 = vmatpush2.msra.mxu0 0.0
      %850 = vmatprep.subr.mxu0 0.0
      %851 = vmatpush2.msra.mxu0 0.0
      %852 = vmatprep.subr.mxu0 0.0
      %853 = vmatpush2.msra.mxu0 0.0
      %854 = vmatprep.subr.mxu0 0.0
      %855 = vmatpush2.msra.mxu0 0.0
      %856 = vmatprep.subr.mxu0 0.0
      %857 = vmatpush2.msra.mxu0 0.0
      %858 = vmatprep.subr.mxu0 0.0
      %859 = vmatpush2.msra.mxu0 0.0
      %860 = vmatprep.subr.mxu0 0.0
      %861 = vmatpush2.msra.mxu0 0.0
      %862 = vmatprep.subr.mxu0 0.0
      %863 = vmatpush2.msra.mxu0 0.0
      %864 = vmatprep.subr.mxu0 0.0
      %865 = vmatpush2.msra.mxu0 0.0
      %866 = vmatprep.subr.mxu0 0.0
      %867 = vmatpush2.msra.mxu0 0.0
      %868 = vmatprep.subr.mxu0 0.0
      %869 = vmatpush2.msra.mxu0 0.0
      %870 = vmatprep.mubr.f32.mxu0 0.0
      %871 = vmatmul.mubr.f32.gmra.mxu0 %v708
      %v872 = vpop.f32.mrf.mxu0
      %v873 = vadd.f32 %v549, %v872
      %v874 = vpop.f32.mrf.mxu0
      %875 = vmatprep.mubr.f32.mxu0 0.0
      %876 = vmatmul.mubr.f32.gmra.mxu0 %v711
      %v877 = vpop.f32.mrf.mxu0
      %v878 = vadd.f32 %v554, %v877
      %v879 = vpop.f32.mrf.mxu0
      %880 = vmatprep.mubr.f32.mxu0 0.0
      %881 = vmatmul.mubr.f32.gmra.mxu0 %v714
      %v882 = vpop.f32.mrf.mxu0
      %v883 = vadd.f32 %v559, %v882
      %v884 = vpop.f32.mrf.mxu0
      %885 = vmatprep.mubr.f32.mxu0 0.0
      %886 = vmatmul.mubr.f32.gmra.mxu0 %v717
      %v887 = vpop.f32.mrf.mxu0
      %v888 = vadd.f32 %v564, %v887
      %v889 = vpop.f32.mrf.mxu0
      %890 = vmatprep.mubr.f32.mxu0 0.0
      %891 = vmatmul.mubr.f32.gmra.mxu0 %v720
      %v892 = vpop.f32.mrf.mxu0
      %v893 = vadd.f32 %v569, %v892
      %v894 = vpop.f32.mrf.mxu0
      %895 = vmatprep.mubr.f32.mxu0 0.0
      %896 = vmatmul.mubr.f32.gmra.mxu0 %v723
      %v897 = vpop.f32.mrf.mxu0
      %v898 = vadd.f32 %v574, %v897
      %v899 = vpop.f32.mrf.mxu0
      %900 = vmatprep.mubr.f32.mxu0 0.0
      %901 = vmatmul.mubr.f32.gmra.mxu0 %v726
      %v902 = vpop.f32.mrf.mxu0
      %v903 = vadd.f32 %v579, %v902
      %v904 = vpop.f32.mrf.mxu0
      %905 = vmatprep.mubr.f32.mxu0 0.0
      %906 = vmatmul.mubr.f32.gmra.mxu0 %v729
      %v907 = vpop.f32.mrf.mxu0
      %v908 = vadd.f32 %v584, %v907
      %v909 = vpop.f32.mrf.mxu0
      %910 = vmatprep.mubr.f32.mxu0 0.0
      %911 = vmatmul.mubr.f32.gmra.mxu0 %v732
      %v912 = vpop.f32.mrf.mxu0
      %v913 = vadd.f32 %v589, %v912
      %v914 = vpop.f32.mrf.mxu0
      %915 = vmatprep.mubr.f32.mxu0 0.0
      %916 = vmatmul.mubr.f32.gmra.mxu0 %v735
      %v917 = vpop.f32.mrf.mxu0
      %v918 = vadd.f32 %v594, %v917
      %v919 = vpop.f32.mrf.mxu0
      %920 = vmatprep.mubr.f32.mxu0 0.0
      %921 = vmatmul.mubr.f32.gmra.mxu0 %v738
      %v922 = vpop.f32.mrf.mxu0
      %v923 = vadd.f32 %v599, %v922
      %v924 = vpop.f32.mrf.mxu0
      %925 = vmatprep.mubr.f32.mxu0 0.0
      %926 = vmatmul.mubr.f32.gmra.mxu0 %v741
      %v927 = vpop.f32.mrf.mxu0
      %v928 = vadd.f32 %v604, %v927
      %v929 = vpop.f32.mrf.mxu0
      %930 = vmatprep.mubr.f32.mxu0 0.0
      %931 = vmatmul.mubr.f32.gmra.mxu0 %v744
      %v932 = vpop.f32.mrf.mxu0
      %v933 = vadd.f32 %v609, %v932
      %v934 = vpop.f32.mrf.mxu0
      %935 = vmatprep.mubr.f32.mxu0 0.0
      %936 = vmatmul.mubr.f32.gmra.mxu0 %v747
      %v937 = vpop.f32.mrf.mxu0
      %v938 = vadd.f32 %v614, %v937
      %v939 = vpop.f32.mrf.mxu0
      %940 = vmatprep.mubr.f32.mxu0 0.0
      %941 = vmatmul.mubr.f32.gmra.mxu0 %v750
      %v942 = vpop.f32.mrf.mxu0
      %v943 = vadd.f32 %v619, %v942
      %v944 = vpop.f32.mrf.mxu0
      %945 = vmatprep.mubr.f32.mxu0 0.0
      %946 = vmatmul.mubr.f32.gmra.mxu0 %v753
      %v947 = vpop.f32.mrf.mxu0
      %v948 = vadd.f32 %v624, %v947
      %v949 = vpop.f32.mrf.mxu0
      %950 = vmatprep.mubr.f32.mxu0 0.0
      %951 = vmatmul.mubr.f32.gmra.mxu0 %v756
      %v952 = vpop.f32.mrf.mxu0
      %v953 = vadd.f32 %v629, %v952
      %v954 = vpop.f32.mrf.mxu0
      %955 = vmatprep.mubr.f32.mxu0 0.0
      %956 = vmatmul.mubr.f32.gmra.mxu0 %v759
      %v957 = vpop.f32.mrf.mxu0
      %v958 = vadd.f32 %v634, %v957
      %v959 = vpop.f32.mrf.mxu0
      %960 = vmatprep.mubr.f32.mxu0 0.0
      %961 = vmatmul.mubr.f32.gmra.mxu0 %v762
      %v962 = vpop.f32.mrf.mxu0
      %v963 = vadd.f32 %v639, %v962
      %v964 = vpop.f32.mrf.mxu0
      %965 = vmatprep.mubr.f32.mxu0 0.0
      %966 = vmatmul.mubr.f32.gmra.mxu0 %v765
      %v967 = vpop.f32.mrf.mxu0
      %v968 = vadd.f32 %v644, %v967
      %v969 = vpop.f32.mrf.mxu0
      %970 = vmatprep.mubr.f32.mxu0 0.0
      %971 = vmatmul.mubr.f32.gmra.mxu0 %v768
      %v972 = vpop.f32.mrf.mxu0
      %v973 = vadd.f32 %v649, %v972
      %v974 = vpop.f32.mrf.mxu0
      %975 = vmatprep.mubr.f32.mxu0 0.0
      %976 = vmatmul.mubr.f32.gmra.mxu0 %v771
      %v977 = vpop.f32.mrf.mxu0
      %v978 = vadd.f32 %v654, %v977
      %v979 = vpop.f32.mrf.mxu0
      %980 = vmatprep.mubr.f32.mxu0 0.0
      %981 = vmatmul.mubr.f32.gmra.mxu0 %v774
      %v982 = vpop.f32.mrf.mxu0
      %v983 = vadd.f32 %v659, %v982
      %v984 = vpop.f32.mrf.mxu0
      %985 = vmatprep.mubr.f32.mxu0 0.0
      %986 = vmatmul.mubr.f32.gmra.mxu0 %v777
      %v987 = vpop.f32.mrf.mxu0
      %v988 = vadd.f32 %v664, %v987
      %v989 = vpop.f32.mrf.mxu0
      %990 = vmatprep.mubr.f32.mxu0 0.0
      %991 = vmatmul.mubr.f32.gmra.mxu0 %v780
      %v992 = vpop.f32.mrf.mxu0
      %v993 = vadd.f32 %v669, %v992
      %v994 = vpop.f32.mrf.mxu0
      %995 = vmatprep.mubr.f32.mxu0 0.0
      %996 = vmatmul.mubr.f32.gmra.mxu0 %v783
      %v997 = vpop.f32.mrf.mxu0
      %v998 = vadd.f32 %v674, %v997
      %v999 = vpop.f32.mrf.mxu0
      %1000 = vmatprep.mubr.f32.mxu0 0.0
      %1001 = vmatmul.mubr.f32.gmra.mxu0 %v786
      %v1002 = vpop.f32.mrf.mxu0
      %v1003 = vadd.f32 %v679, %v1002
      %v1004 = vpop.f32.mrf.mxu0
      %1005 = vmatprep.mubr.f32.mxu0 0.0
      %1006 = vmatmul.mubr.f32.gmra.mxu0 %v789
      %v1007 = vpop.f32.mrf.mxu0
      %v1008 = vadd.f32 %v684, %v1007
      %v1009 = vpop.f32.mrf.mxu0
      %1010 = vmatprep.mubr.f32.mxu0 0.0
      %1011 = vmatmul.mubr.f32.gmra.mxu0 %v792
      %v1012 = vpop.f32.mrf.mxu0
      %v1013 = vadd.f32 %v689, %v1012
      %v1014 = vpop.f32.mrf.mxu0
      %1015 = vmatprep.mubr.f32.mxu0 0.0
      %1016 = vmatmul.mubr.f32.gmra.mxu0 %v795
      %v1017 = vpop.f32.mrf.mxu0
      %v1018 = vadd.f32 %v694, %v1017
      %v1019 = vpop.f32.mrf.mxu0
      %1020 = vmatprep.mubr.f32.mxu0 0.0
      %1021 = vmatmul.mubr.f32.gmra.mxu0 %v798
      %v1022 = vpop.f32.mrf.mxu0
      %v1023 = vadd.f32 %v699, %v1022
      %v1024 = vpop.f32.mrf.mxu0
      %1025 = vmatprep.mubr.f32.mxu0 0.0
      %1026 = vmatmul.mubr.f32.gmra.mxu0 %v801
      %v1027 = vpop.f32.mrf.mxu0
      %v1028 = vadd.f32 %v704, %v1027
      %v1029 = vpop.f32.mrf.mxu0
      %1030 = vdwg.mxu0
      %v1031 = vld [vmem:[#allocation2 + $0x2] sm:$0xff]
      %v1032 = vld [vmem:[#allocation2 + $0xa] sm:$0xff]
      %v1033 = vld [vmem:[#allocation2 + $0x1a] sm:$0xff]
      %v1034 = vld [vmem:[#allocation2 + $0x22] sm:$0xff]
      %v1035 = vld [vmem:[#allocation2 + $0x32] sm:$0xff]
      %v1036 = vld [vmem:[#allocation2 + $0x3a] sm:$0xff]
      %v1037 = vld [vmem:[#allocation2 + $0x4a] sm:$0xff]
      %v1038 = vld [vmem:[#allocation2 + $0x52] sm:$0xff]
      %v1039 = vld [vmem:[#allocation2 + $0x62] sm:$0xff]
      %v1040 = vld [vmem:[#allocation2 + $0x6a] sm:$0xff]
      %v1041 = vld [vmem:[#allocation2 + $0x7a] sm:$0xff]
      %v1042 = vld [vmem:[#allocation2 + $0x82] sm:$0xff]
      %v1043 = vld [vmem:[#allocation2 + $0x92] sm:$0xff]
      %v1044 = vld [vmem:[#allocation2 + $0x9a] sm:$0xff]
      %v1045 = vld [vmem:[#allocation2 + $0xaa] sm:$0xff]
      %v1046 = vld [vmem:[#allocation2 + $0xb2] sm:$0xff]
      %v1047 = vld [vmem:[#allocation2 + $0xc2] sm:$0xff]
      %v1048 = vld [vmem:[#allocation2 + $0xca] sm:$0xff]
      %v1049 = vld [vmem:[#allocation2 + $0xda] sm:$0xff]
      %v1050 = vld [vmem:[#allocation2 + $0xe2] sm:$0xff]
      %v1051 = vld [vmem:[#allocation2 + $0xf2] sm:$0xff]
      %v1052 = vld [vmem:[#allocation2 + $0xfa] sm:$0xff]
      %v1053 = vld [vmem:[#allocation2 + $0x10a] sm:$0xff]
      %v1054 = vld [vmem:[#allocation2 + $0x112] sm:$0xff]
      %v1055 = vld [vmem:[#allocation2 + $0x122] sm:$0xff]
      %v1056 = vld [vmem:[#allocation2 + $0x12a] sm:$0xff]
      %v1057 = vld [vmem:[#allocation2 + $0x13a] sm:$0xff]
      %v1058 = vld [vmem:[#allocation2 + $0x142] sm:$0xff]
      %v1059 = vld [vmem:[#allocation2 + $0x152] sm:$0xff]
      %v1060 = vld [vmem:[#allocation2 + $0x15a] sm:$0xff]
      %v1061 = vld [vmem:[#allocation2 + $0x16a] sm:$0xff]
      %v1062 = vld [vmem:[#allocation2 + $0x172] sm:$0xff]
      %s1063 = scalar_lea.vmem %s1, 8
      %v1064 = vld [vmem:[%s1063] sm:$0xf]
      %v1066 = vsel %vm204, %v1031, 0
      %v1069 = vsel %vm204, %v1032, 0
      %v1072 = vsel %vm204, %v1033, 0
      %v1075 = vsel %vm204, %v1034, 0
      %v1078 = vsel %vm204, %v1035, 0
      %v1081 = vsel %vm204, %v1036, 0
      %v1084 = vsel %vm204, %v1037, 0
      %v1087 = vsel %vm204, %v1038, 0
      %v1090 = vsel %vm204, %v1039, 0
      %v1093 = vsel %vm204, %v1040, 0
      %v1096 = vsel %vm204, %v1041, 0
      %v1099 = vsel %vm204, %v1042, 0
      %v1102 = vsel %vm204, %v1043, 0
      %v1105 = vsel %vm204, %v1044, 0
      %v1108 = vsel %vm204, %v1045, 0
      %v1111 = vsel %vm204, %v1046, 0
      %v1114 = vsel %vm204, %v1047, 0
      %v1117 = vsel %vm204, %v1048, 0
      %v1120 = vsel %vm204, %v1049, 0
      %v1123 = vsel %vm204, %v1050, 0
      %v1126 = vsel %vm204, %v1051, 0
      %v1129 = vsel %vm204, %v1052, 0
      %v1132 = vsel %vm204, %v1053, 0
      %v1135 = vsel %vm204, %v1054, 0
      %v1138 = vsel %vm204, %v1055, 0
      %v1141 = vsel %vm204, %v1056, 0
      %v1144 = vsel %vm204, %v1057, 0
      %v1147 = vsel %vm204, %v1058, 0
      %v1150 = vsel %vm204, %v1059, 0
      %v1153 = vsel %vm204, %v1060, 0
      %v1156 = vsel %vm204, %v1061, 0
      %v1159 = vsel %vm204, %v1062, 0
      %v1162 = vsel %vm478, %v1064, 0
      %1164 = vmatprep.subr.mxu0 0.0
      %1165 = vmatpush1.msra.mxu0 0.0
      %1166 = vmatprep.subr.mxu0 0.0
      %1167 = vmatpush1.msra.mxu0 0.0
      %1168 = vmatprep.subr.mxu0 0.0
      %1169 = vmatpush1.msra.mxu0 0.0
      %1170 = vmatprep.subr.mxu0 0.0
      %1171 = vmatpush1.msra.mxu0 0.0
      %1172 = vmatprep.subr.mxu0 0.0
      %1173 = vmatpush1.msra.mxu0 0.0
      %1174 = vmatprep.subr.mxu0 0.0
      %1175 = vmatpush1.msra.mxu0 0.0
      %1176 = vmatprep.subr.mxu0 0.0
      %1177 = vmatpush1.msra.mxu0 0.0
      %1178 = vmatprep.subr.mxu0 0.0
      %1179 = vmatpush1.msra.mxu0 0.0
      %1180 = vmatprep.subr.mxu0 0.0
      %1181 = vmatpush1.msra.mxu0 0.0
      %1182 = vmatprep.subr.mxu0 0.0
      %1183 = vmatpush1.msra.mxu0 0.0
      %1184 = vmatprep.subr.mxu0 0.0
      %1185 = vmatpush1.msra.mxu0 0.0
      %1186 = vmatprep.subr.mxu0 0.0
      %1187 = vmatpush1.msra.mxu0 0.0
      %1188 = vmatprep.subr.mxu0 0.0
      %1189 = vmatpush1.msra.mxu0 0.0
      %1190 = vmatprep.subr.mxu0 0.0
      %1191 = vmatpush1.msra.mxu0 0.0
      %1192 = vmatprep.subr.mxu0 0.0
      %1193 = vmatpush1.msra.mxu0 0.0
      %1194 = vmatprep.subr.mxu0 0.0
      %1195 = vmatpush1.msra.mxu0 %v1162
      %1196 = vmatprep.subr.mxu0 0.0
      %1197 = vmatpush2.msra.mxu0 0.0
      %1198 = vmatprep.subr.mxu0 0.0
      %1199 = vmatpush2.msra.mxu0 0.0
      %1200 = vmatprep.subr.mxu0 0.0
      %1201 = vmatpush2.msra.mxu0 0.0
      %1202 = vmatprep.subr.mxu0 0.0
      %1203 = vmatpush2.msra.mxu0 0.0
      %1204 = vmatprep.subr.mxu0 0.0
      %1205 = vmatpush2.msra.mxu0 0.0
      %1206 = vmatprep.subr.mxu0 0.0
      %1207 = vmatpush2.msra.mxu0 0.0
      %1208 = vmatprep.subr.mxu0 0.0
      %1209 = vmatpush2.msra.mxu0 0.0
      %1210 = vmatprep.subr.mxu0 0.0
      %1211 = vmatpush2.msra.mxu0 0.0
      %1212 = vmatprep.subr.mxu0 0.0
      %1213 = vmatpush2.msra.mxu0 0.0
      %1214 = vmatprep.subr.mxu0 0.0
      %1215 = vmatpush2.msra.mxu0 0.0
      %1216 = vmatprep.subr.mxu0 0.0
      %1217 = vmatpush2.msra.mxu0 0.0
      %1218 = vmatprep.subr.mxu0 0.0
      %1219 = vmatpush2.msra.mxu0 0.0
      %1220 = vmatprep.subr.mxu0 0.0
      %1221 = vmatpush2.msra.mxu0 0.0
      %1222 = vmatprep.subr.mxu0 0.0
      %1223 = vmatpush2.msra.mxu0 0.0
      %1224 = vmatprep.subr.mxu0 0.0
      %1225 = vmatpush2.msra.mxu0 0.0
      %1226 = vmatprep.subr.mxu0 0.0
      %1227 = vmatpush2.msra.mxu0 0.0
      %1228 = vmatprep.mubr.f32.mxu0 0.0
      %1229 = vmatmul.mubr.f32.gmra.mxu0 %v1066
      %v1230 = vpop.f32.mrf.mxu0
      %v1231 = vadd.f32 0.0, %v1230
      %v1232 = vpop.f32.mrf.mxu0
      %1233 = vmatprep.mubr.f32.mxu0 0.0
      %1234 = vmatmul.mubr.f32.gmra.mxu0 %v1069
      %v1235 = vpop.f32.mrf.mxu0
      %v1236 = vadd.f32 0.0, %v1235
      %v1237 = vpop.f32.mrf.mxu0
      %1238 = vmatprep.mubr.f32.mxu0 0.0
      %1239 = vmatmul.mubr.f32.gmra.mxu0 %v1072
      %v1240 = vpop.f32.mrf.mxu0
      %v1241 = vadd.f32 0.0, %v1240
      %v1242 = vpop.f32.mrf.mxu0
      %1243 = vmatprep.mubr.f32.mxu0 0.0
      %1244 = vmatmul.mubr.f32.gmra.mxu0 %v1075
      %v1245 = vpop.f32.mrf.mxu0
      %v1246 = vadd.f32 0.0, %v1245
      %v1247 = vpop.f32.mrf.mxu0
      %1248 = vmatprep.mubr.f32.mxu0 0.0
      %1249 = vmatmul.mubr.f32.gmra.mxu0 %v1078
      %v1250 = vpop.f32.mrf.mxu0
      %v1251 = vadd.f32 0.0, %v1250
      %v1252 = vpop.f32.mrf.mxu0
      %1253 = vmatprep.mubr.f32.mxu0 0.0
      %1254 = vmatmul.mubr.f32.gmra.mxu0 %v1081
      %v1255 = vpop.f32.mrf.mxu0
      %v1256 = vadd.f32 0.0, %v1255
      %v1257 = vpop.f32.mrf.mxu0
      %1258 = vmatprep.mubr.f32.mxu0 0.0
      %1259 = vmatmul.mubr.f32.gmra.mxu0 %v1084
      %v1260 = vpop.f32.mrf.mxu0
      %v1261 = vadd.f32 0.0, %v1260
      %v1262 = vpop.f32.mrf.mxu0
      %1263 = vmatprep.mubr.f32.mxu0 0.0
      %1264 = vmatmul.mubr.f32.gmra.mxu0 %v1087
      %v1265 = vpop.f32.mrf.mxu0
      %v1266 = vadd.f32 0.0, %v1265
      %v1267 = vpop.f32.mrf.mxu0
      %1268 = vmatprep.mubr.f32.mxu0 0.0
      %1269 = vmatmul.mubr.f32.gmra.mxu0 %v1090
      %v1270 = vpop.f32.mrf.mxu0
      %v1271 = vadd.f32 0.0, %v1270
      %v1272 = vpop.f32.mrf.mxu0
      %1273 = vmatprep.mubr.f32.mxu0 0.0
      %1274 = vmatmul.mubr.f32.gmra.mxu0 %v1093
      %v1275 = vpop.f32.mrf.mxu0
      %v1276 = vadd.f32 0.0, %v1275
      %v1277 = vpop.f32.mrf.mxu0
      %1278 = vmatprep.mubr.f32.mxu0 0.0
      %1279 = vmatmul.mubr.f32.gmra.mxu0 %v1096
      %v1280 = vpop.f32.mrf.mxu0
      %v1281 = vadd.f32 0.0, %v1280
      %v1282 = vpop.f32.mrf.mxu0
      %1283 = vmatprep.mubr.f32.mxu0 0.0
      %1284 = vmatmul.mubr.f32.gmra.mxu0 %v1099
      %v1285 = vpop.f32.mrf.mxu0
      %v1286 = vadd.f32 0.0, %v1285
      %v1287 = vpop.f32.mrf.mxu0
      %1288 = vmatprep.mubr.f32.mxu0 0.0
      %1289 = vmatmul.mubr.f32.gmra.mxu0 %v1102
      %v1290 = vpop.f32.mrf.mxu0
      %v1291 = vadd.f32 0.0, %v1290
      %v1292 = vpop.f32.mrf.mxu0
      %1293 = vmatprep.mubr.f32.mxu0 0.0
      %1294 = vmatmul.mubr.f32.gmra.mxu0 %v1105
      %v1295 = vpop.f32.mrf.mxu0
      %v1296 = vadd.f32 0.0, %v1295
      %v1297 = vpop.f32.mrf.mxu0
      %1298 = vmatprep.mubr.f32.mxu0 0.0
      %1299 = vmatmul.mubr.f32.gmra.mxu0 %v1108
      %v1300 = vpop.f32.mrf.mxu0
      %v1301 = vadd.f32 0.0, %v1300
      %v1302 = vpop.f32.mrf.mxu0
      %1303 = vmatprep.mubr.f32.mxu0 0.0
      %1304 = vmatmul.mubr.f32.gmra.mxu0 %v1111
      %v1305 = vpop.f32.mrf.mxu0
      %v1306 = vadd.f32 0.0, %v1305
      %v1307 = vpop.f32.mrf.mxu0
      %1308 = vmatprep.mubr.f32.mxu0 0.0
      %1309 = vmatmul.mubr.f32.gmra.mxu0 %v1114
      %v1310 = vpop.f32.mrf.mxu0
      %v1311 = vadd.f32 0.0, %v1310
      %v1312 = vpop.f32.mrf.mxu0
      %1313 = vmatprep.mubr.f32.mxu0 0.0
      %1314 = vmatmul.mubr.f32.gmra.mxu0 %v1117
      %v1315 = vpop.f32.mrf.mxu0
      %v1316 = vadd.f32 0.0, %v1315
      %v1317 = vpop.f32.mrf.mxu0
      %1318 = vmatprep.mubr.f32.mxu0 0.0
      %1319 = vmatmul.mubr.f32.gmra.mxu0 %v1120
      %v1320 = vpop.f32.mrf.mxu0
      %v1321 = vadd.f32 0.0, %v1320
      %v1322 = vpop.f32.mrf.mxu0
      %1323 = vmatprep.mubr.f32.mxu0 0.0
      %1324 = vmatmul.mubr.f32.gmra.mxu0 %v1123
      %v1325 = vpop.f32.mrf.mxu0
      %v1326 = vadd.f32 0.0, %v1325
      %v1327 = vpop.f32.mrf.mxu0
      %1328 = vmatprep.mubr.f32.mxu0 0.0
      %1329 = vmatmul.mubr.f32.gmra.mxu0 %v1126
      %v1330 = vpop.f32.mrf.mxu0
      %v1331 = vadd.f32 0.0, %v1330
      %v1332 = vpop.f32.mrf.mxu0
      %1333 = vmatprep.mubr.f32.mxu0 0.0
      %1334 = vmatmul.mubr.f32.gmra.mxu0 %v1129
      %v1335 = vpop.f32.mrf.mxu0
      %v1336 = vadd.f32 0.0, %v1335
      %v1337 = vpop.f32.mrf.mxu0
      %1338 = vmatprep.mubr.f32.mxu0 0.0
      %1339 = vmatmul.mubr.f32.gmra.mxu0 %v1132
      %v1340 = vpop.f32.mrf.mxu0
      %v1341 = vadd.f32 0.0, %v1340
      %v1342 = vpop.f32.mrf.mxu0
      %1343 = vmatprep.mubr.f32.mxu0 0.0
      %1344 = vmatmul.mubr.f32.gmra.mxu0 %v1135
      %v1345 = vpop.f32.mrf.mxu0
      %v1346 = vadd.f32 0.0, %v1345
      %v1347 = vpop.f32.mrf.mxu0
      %1348 = vmatprep.mubr.f32.mxu0 0.0
      %1349 = vmatmul.mubr.f32.gmra.mxu0 %v1138
      %v1350 = vpop.f32.mrf.mxu0
      %v1351 = vadd.f32 0.0, %v1350
      %v1352 = vpop.f32.mrf.mxu0
      %1353 = vmatprep.mubr.f32.mxu0 0.0
      %1354 = vmatmul.mubr.f32.gmra.mxu0 %v1141
      %v1355 = vpop.f32.mrf.mxu0
      %v1356 = vadd.f32 0.0, %v1355
      %v1357 = vpop.f32.mrf.mxu0
      %1358 = vmatprep.mubr.f32.mxu0 0.0
      %1359 = vmatmul.mubr.f32.gmra.mxu0 %v1144
      %v1360 = vpop.f32.mrf.mxu0
      %v1361 = vadd.f32 0.0, %v1360
      %v1362 = vpop.f32.mrf.mxu0
      %1363 = vmatprep.mubr.f32.mxu0 0.0
      %1364 = vmatmul.mubr.f32.gmra.mxu0 %v1147
      %v1365 = vpop.f32.mrf.mxu0
      %v1366 = vadd.f32 0.0, %v1365
      %v1367 = vpop.f32.mrf.mxu0
      %1368 = vmatprep.mubr.f32.mxu0 0.0
      %1369 = vmatmul.mubr.f32.gmra.mxu0 %v1150
      %v1370 = vpop.f32.mrf.mxu0
      %v1371 = vadd.f32 0.0, %v1370
      %v1372 = vpop.f32.mrf.mxu0
      %1373 = vmatprep.mubr.f32.mxu0 0.0
      %1374 = vmatmul.mubr.f32.gmra.mxu0 %v1153
      %v1375 = vpop.f32.mrf.mxu0
      %v1376 = vadd.f32 0.0, %v1375
      %v1377 = vpop.f32.mrf.mxu0
      %1378 = vmatprep.mubr.f32.mxu0 0.0
      %1379 = vmatmul.mubr.f32.gmra.mxu0 %v1156
      %v1380 = vpop.f32.mrf.mxu0
      %v1381 = vadd.f32 0.0, %v1380
      %v1382 = vpop.f32.mrf.mxu0
      %1383 = vmatprep.mubr.f32.mxu0 0.0
      %1384 = vmatmul.mubr.f32.gmra.mxu0 %v1159
      %v1385 = vpop.f32.mrf.mxu0
      %v1386 = vadd.f32 0.0, %v1385
      %v1387 = vpop.f32.mrf.mxu0
      %1388 = vdwg.mxu0
      %v1389 = vadd.f32 %v873, %v1231
      %v1390 = vadd.f32 %v878, %v1236
      %v1391 = vadd.f32 %v883, %v1241
      %v1392 = vadd.f32 %v888, %v1246
      %v1393 = vadd.f32 %v893, %v1251
      %v1394 = vadd.f32 %v898, %v1256
      %v1395 = vadd.f32 %v903, %v1261
      %v1396 = vadd.f32 %v908, %v1266
      %v1397 = vadd.f32 %v913, %v1271
      %v1398 = vadd.f32 %v918, %v1276
      %v1399 = vadd.f32 %v923, %v1281
      %v1400 = vadd.f32 %v928, %v1286
      %v1401 = vadd.f32 %v933, %v1291
      %v1402 = vadd.f32 %v938, %v1296
      %v1403 = vadd.f32 %v943, %v1301
      %v1404 = vadd.f32 %v948, %v1306
      %v1405 = vadd.f32 %v953, %v1311
      %v1406 = vadd.f32 %v958, %v1316
      %v1407 = vadd.f32 %v963, %v1321
      %v1408 = vadd.f32 %v968, %v1326
      %v1409 = vadd.f32 %v973, %v1331
      %v1410 = vadd.f32 %v978, %v1336
      %v1411 = vadd.f32 %v983, %v1341
      %v1412 = vadd.f32 %v988, %v1346
      %v1413 = vadd.f32 %v993, %v1351
      %v1414 = vadd.f32 %v998, %v1356
      %v1415 = vadd.f32 %v1003, %v1361
      %v1416 = vadd.f32 %v1008, %v1366
      %v1417 = vadd.f32 %v1013, %v1371
      %v1418 = vadd.f32 %v1018, %v1376
      %v1419 = vadd.f32 %v1023, %v1381
      %v1420 = vadd.f32 %v1028, %v1386
      %v1421 = vld [vmem:[%s203] sm:$0xff]
      %v1422 = vld [vmem:[%s203 + $0x8] sm:$0xff]
      %v1423 = vld [vmem:[%s203 + $0x18] sm:$0xff]
      %v1424 = vld [vmem:[%s203 + $0x20] sm:$0xff]
      %v1425 = vld [vmem:[%s203 + $0x30] sm:$0xff]
      %v1426 = vld [vmem:[%s203 + $0x38] sm:$0xff]
      %v1427 = vld [vmem:[%s203 + $0x48] sm:$0xff]
      %v1428 = vld [vmem:[%s203 + $0x50] sm:$0xff]
      %v1429 = vld [vmem:[%s203 + $0x60] sm:$0xff]
      %v1430 = vld [vmem:[%s203 + $0x68] sm:$0xff]
      %v1431 = vld [vmem:[%s203 + $0x78] sm:$0xff]
      %v1432 = vld [vmem:[%s203 + $0x80] sm:$0xff]
      %v1433 = vld [vmem:[%s203 + $0x90] sm:$0xff]
      %v1434 = vld [vmem:[%s203 + $0x98] sm:$0xff]
      %v1435 = vld [vmem:[%s203 + $0xa8] sm:$0xff]
      %v1436 = vld [vmem:[%s203 + $0xb0] sm:$0xff]
      %v1437 = vld [vmem:[%s203 + $0xc0] sm:$0xff]
      %v1438 = vld [vmem:[%s203 + $0xc8] sm:$0xff]
      %v1439 = vld [vmem:[%s203 + $0xd8] sm:$0xff]
      %v1440 = vld [vmem:[%s203 + $0xe0] sm:$0xff]
      %v1441 = vld [vmem:[%s203 + $0xf0] sm:$0xff]
      %v1442 = vld [vmem:[%s203 + $0xf8] sm:$0xff]
      %v1443 = vld [vmem:[%s203 + $0x108] sm:$0xff]
      %v1444 = vld [vmem:[%s203 + $0x110] sm:$0xff]
      %v1445 = vld [vmem:[%s203 + $0x120] sm:$0xff]
      %v1446 = vld [vmem:[%s203 + $0x128] sm:$0xff]
      %v1447 = vld [vmem:[%s203 + $0x138] sm:$0xff]
      %v1448 = vld [vmem:[%s203 + $0x140] sm:$0xff]
      %v1449 = vld [vmem:[%s203 + $0x150] sm:$0xff]
      %v1450 = vld [vmem:[%s203 + $0x158] sm:$0xff]
      %v1451 = vld [vmem:[%s203 + $0x168] sm:$0xff]
      %v1452 = vld [vmem:[%s203 + $0x170] sm:$0xff]
      %s1453 = scalar_lea.vmem %s1, 12
      %v1454 = vld [vmem:[%s1453] sm:$0xf]
      %v1456 = vsel %vm204, %v1421, 0
      %v1459 = vsel %vm204, %v1422, 0
      %v1462 = vsel %vm204, %v1423, 0
      %v1465 = vsel %vm204, %v1424, 0
      %v1468 = vsel %vm204, %v1425, 0
      %v1471 = vsel %vm204, %v1426, 0
      %v1474 = vsel %vm204, %v1427, 0
      %v1477 = vsel %vm204, %v1428, 0
      %v1480 = vsel %vm204, %v1429, 0
      %v1483 = vsel %vm204, %v1430, 0
      %v1486 = vsel %vm204, %v1431, 0
      %v1489 = vsel %vm204, %v1432, 0
      %v1492 = vsel %vm204, %v1433, 0
      %v1495 = vsel %vm204, %v1434, 0
      %v1498 = vsel %vm204, %v1435, 0
      %v1501 = vsel %vm204, %v1436, 0
      %v1504 = vsel %vm204, %v1437, 0
      %v1507 = vsel %vm204, %v1438, 0
      %v1510 = vsel %vm204, %v1439, 0
      %v1513 = vsel %vm204, %v1440, 0
      %v1516 = vsel %vm204, %v1441, 0
      %v1519 = vsel %vm204, %v1442, 0
      %v1522 = vsel %vm204, %v1443, 0
      %v1525 = vsel %vm204, %v1444, 0
      %v1528 = vsel %vm204, %v1445, 0
      %v1531 = vsel %vm204, %v1446, 0
      %v1534 = vsel %vm204, %v1447, 0
      %v1537 = vsel %vm204, %v1448, 0
      %v1540 = vsel %vm204, %v1449, 0
      %v1543 = vsel %vm204, %v1450, 0
      %v1546 = vsel %vm204, %v1451, 0
      %v1549 = vsel %vm204, %v1452, 0
      %v1552 = vsel %vm478, %v1454, 0
      %1554 = vmatprep.subr.mxu0 0.0
      %1555 = vmatpush1.msra.mxu0 0.0
      %1556 = vmatprep.subr.mxu0 0.0
      %1557 = vmatpush1.msra.mxu0 0.0
      %1558 = vmatprep.subr.mxu0 0.0
      %1559 = vmatpush1.msra.mxu0 0.0
      %1560 = vmatprep.subr.mxu0 0.0
      %1561 = vmatpush1.msra.mxu0 0.0
      %1562 = vmatprep.subr.mxu0 0.0
      %1563 = vmatpush1.msra.mxu0 0.0
      %1564 = vmatprep.subr.mxu0 0.0
      %1565 = vmatpush1.msra.mxu0 0.0
      %1566 = vmatprep.subr.mxu0 0.0
      %1567 = vmatpush1.msra.mxu0 0.0
      %1568 = vmatprep.subr.mxu0 0.0
      %1569 = vmatpush1.msra.mxu0 0.0
      %1570 = vmatprep.subr.mxu0 0.0
      %1571 = vmatpush1.msra.mxu0 0.0
      %1572 = vmatprep.subr.mxu0 0.0
      %1573 = vmatpush1.msra.mxu0 0.0
      %1574 = vmatprep.subr.mxu0 0.0
      %1575 = vmatpush1.msra.mxu0 0.0
      %1576 = vmatprep.subr.mxu0 0.0
      %1577 = vmatpush1.msra.mxu0 0.0
      %1578 = vmatprep.subr.mxu0 0.0
      %1579 = vmatpush1.msra.mxu0 0.0
      %1580 = vmatprep.subr.mxu0 0.0
      %1581 = vmatpush1.msra.mxu0 0.0
      %1582 = vmatprep.subr.mxu0 0.0
      %1583 = vmatpush1.msra.mxu0 0.0
      %1584 = vmatprep.subr.mxu0 0.0
      %1585 = vmatpush1.msra.mxu0 %v1552
      %1586 = vmatprep.subr.mxu0 0.0
      %1587 = vmatpush2.msra.mxu0 0.0
      %1588 = vmatprep.subr.mxu0 0.0
      %1589 = vmatpush2.msra.mxu0 0.0
      %1590 = vmatprep.subr.mxu0 0.0
      %1591 = vmatpush2.msra.mxu0 0.0
      %1592 = vmatprep.subr.mxu0 0.0
      %1593 = vmatpush2.msra.mxu0 0.0
      %1594 = vmatprep.subr.mxu0 0.0
      %1595 = vmatpush2.msra.mxu0 0.0
      %1596 = vmatprep.subr.mxu0 0.0
      %1597 = vmatpush2.msra.mxu0 0.0
      %1598 = vmatprep.subr.mxu0 0.0
      %1599 = vmatpush2.msra.mxu0 0.0
      %1600 = vmatprep.subr.mxu0 0.0
      %1601 = vmatpush2.msra.mxu0 0.0
      %1602 = vmatprep.subr.mxu0 0.0
      %1603 = vmatpush2.msra.mxu0 0.0
      %1604 = vmatprep.subr.mxu0 0.0
      %1605 = vmatpush2.msra.mxu0 0.0
      %1606 = vmatprep.subr.mxu0 0.0
      %1607 = vmatpush2.msra.mxu0 0.0
      %1608 = vmatprep.subr.mxu0 0.0
      %1609 = vmatpush2.msra.mxu0 0.0
      %1610 = vmatprep.subr.mxu0 0.0
      %1611 = vmatpush2.msra.mxu0 0.0
      %1612 = vmatprep.subr.mxu0 0.0
      %1613 = vmatpush2.msra.mxu0 0.0
      %1614 = vmatprep.subr.mxu0 0.0
      %1615 = vmatpush2.msra.mxu0 0.0
      %1616 = vmatprep.subr.mxu0 0.0
      %1617 = vmatpush2.msra.mxu0 0.0
      %1618 = vmatprep.mubr.f32.mxu0 0.0
      %1619 = vmatmul.mubr.f32.gmra.mxu0 %v1456
      %v1620 = vpop.f32.mrf.mxu0
      %v1621 = vadd.f32 0.0, %v1620
      %v1622 = vpop.f32.mrf.mxu0
      %1623 = vmatprep.mubr.f32.mxu0 0.0
      %1624 = vmatmul.mubr.f32.gmra.mxu0 %v1459
      %v1625 = vpop.f32.mrf.mxu0
      %v1626 = vadd.f32 0.0, %v1625
      %v1627 = vpop.f32.mrf.mxu0
      %1628 = vmatprep.mubr.f32.mxu0 0.0
      %1629 = vmatmul.mubr.f32.gmra.mxu0 %v1462
      %v1630 = vpop.f32.mrf.mxu0
      %v1631 = vadd.f32 0.0, %v1630
      %v1632 = vpop.f32.mrf.mxu0
      %1633 = vmatprep.mubr.f32.mxu0 0.0
      %1634 = vmatmul.mubr.f32.gmra.mxu0 %v1465
      %v1635 = vpop.f32.mrf.mxu0
      %v1636 = vadd.f32 0.0, %v1635
      %v1637 = vpop.f32.mrf.mxu0
      %1638 = vmatprep.mubr.f32.mxu0 0.0
      %1639 = vmatmul.mubr.f32.gmra.mxu0 %v1468
      %v1640 = vpop.f32.mrf.mxu0
      %v1641 = vadd.f32 0.0, %v1640
      %v1642 = vpop.f32.mrf.mxu0
      %1643 = vmatprep.mubr.f32.mxu0 0.0
      %1644 = vmatmul.mubr.f32.gmra.mxu0 %v1471
      %v1645 = vpop.f32.mrf.mxu0
      %v1646 = vadd.f32 0.0, %v1645
      %v1647 = vpop.f32.mrf.mxu0
      %1648 = vmatprep.mubr.f32.mxu0 0.0
      %1649 = vmatmul.mubr.f32.gmra.mxu0 %v1474
      %v1650 = vpop.f32.mrf.mxu0
      %v1651 = vadd.f32 0.0, %v1650
      %v1652 = vpop.f32.mrf.mxu0
      %1653 = vmatprep.mubr.f32.mxu0 0.0
      %1654 = vmatmul.mubr.f32.gmra.mxu0 %v1477
      %v1655 = vpop.f32.mrf.mxu0
      %v1656 = vadd.f32 0.0, %v1655
      %v1657 = vpop.f32.mrf.mxu0
      %1658 = vmatprep.mubr.f32.mxu0 0.0
      %1659 = vmatmul.mubr.f32.gmra.mxu0 %v1480
      %v1660 = vpop.f32.mrf.mxu0
      %v1661 = vadd.f32 0.0, %v1660
      %v1662 = vpop.f32.mrf.mxu0
      %1663 = vmatprep.mubr.f32.mxu0 0.0
      %1664 = vmatmul.mubr.f32.gmra.mxu0 %v1483
      %v1665 = vpop.f32.mrf.mxu0
      %v1666 = vadd.f32 0.0, %v1665
      %v1667 = vpop.f32.mrf.mxu0
      %1668 = vmatprep.mubr.f32.mxu0 0.0
      %1669 = vmatmul.mubr.f32.gmra.mxu0 %v1486
      %v1670 = vpop.f32.mrf.mxu0
      %v1671 = vadd.f32 0.0, %v1670
      %v1672 = vpop.f32.mrf.mxu0
      %1673 = vmatprep.mubr.f32.mxu0 0.0
      %1674 = vmatmul.mubr.f32.gmra.mxu0 %v1489
      %v1675 = vpop.f32.mrf.mxu0
      %v1676 = vadd.f32 0.0, %v1675
      %v1677 = vpop.f32.mrf.mxu0
      %1678 = vmatprep.mubr.f32.mxu0 0.0
      %1679 = vmatmul.mubr.f32.gmra.mxu0 %v1492
      %v1680 = vpop.f32.mrf.mxu0
      %v1681 = vadd.f32 0.0, %v1680
      %v1682 = vpop.f32.mrf.mxu0
      %1683 = vmatprep.mubr.f32.mxu0 0.0
      %1684 = vmatmul.mubr.f32.gmra.mxu0 %v1495
      %v1685 = vpop.f32.mrf.mxu0
      %v1686 = vadd.f32 0.0, %v1685
      %v1687 = vpop.f32.mrf.mxu0
      %1688 = vmatprep.mubr.f32.mxu0 0.0
      %1689 = vmatmul.mubr.f32.gmra.mxu0 %v1498
      %v1690 = vpop.f32.mrf.mxu0
      %v1691 = vadd.f32 0.0, %v1690
      %v1692 = vpop.f32.mrf.mxu0
      %1693 = vmatprep.mubr.f32.mxu0 0.0
      %1694 = vmatmul.mubr.f32.gmra.mxu0 %v1501
      %v1695 = vpop.f32.mrf.mxu0
      %v1696 = vadd.f32 0.0, %v1695
      %v1697 = vpop.f32.mrf.mxu0
      %1698 = vmatprep.mubr.f32.mxu0 0.0
      %1699 = vmatmul.mubr.f32.gmra.mxu0 %v1504
      %v1700 = vpop.f32.mrf.mxu0
      %v1701 = vadd.f32 0.0, %v1700
      %v1702 = vpop.f32.mrf.mxu0
      %1703 = vmatprep.mubr.f32.mxu0 0.0
      %1704 = vmatmul.mubr.f32.gmra.mxu0 %v1507
      %v1705 = vpop.f32.mrf.mxu0
      %v1706 = vadd.f32 0.0, %v1705
      %v1707 = vpop.f32.mrf.mxu0
      %1708 = vmatprep.mubr.f32.mxu0 0.0
      %1709 = vmatmul.mubr.f32.gmra.mxu0 %v1510
      %v1710 = vpop.f32.mrf.mxu0
      %v1711 = vadd.f32 0.0, %v1710
      %v1712 = vpop.f32.mrf.mxu0
      %1713 = vmatprep.mubr.f32.mxu0 0.0
      %1714 = vmatmul.mubr.f32.gmra.mxu0 %v1513
      %v1715 = vpop.f32.mrf.mxu0
      %v1716 = vadd.f32 0.0, %v1715
      %v1717 = vpop.f32.mrf.mxu0
      %1718 = vmatprep.mubr.f32.mxu0 0.0
      %1719 = vmatmul.mubr.f32.gmra.mxu0 %v1516
      %v1720 = vpop.f32.mrf.mxu0
      %v1721 = vadd.f32 0.0, %v1720
      %v1722 = vpop.f32.mrf.mxu0
      %1723 = vmatprep.mubr.f32.mxu0 0.0
      %1724 = vmatmul.mubr.f32.gmra.mxu0 %v1519
      %v1725 = vpop.f32.mrf.mxu0
      %v1726 = vadd.f32 0.0, %v1725
      %v1727 = vpop.f32.mrf.mxu0
      %1728 = vmatprep.mubr.f32.mxu0 0.0
      %1729 = vmatmul.mubr.f32.gmra.mxu0 %v1522
      %v1730 = vpop.f32.mrf.mxu0
      %v1731 = vadd.f32 0.0, %v1730
      %v1732 = vpop.f32.mrf.mxu0
      %1733 = vmatprep.mubr.f32.mxu0 0.0
      %1734 = vmatmul.mubr.f32.gmra.mxu0 %v1525
      %v1735 = vpop.f32.mrf.mxu0
      %v1736 = vadd.f32 0.0, %v1735
      %v1737 = vpop.f32.mrf.mxu0
      %1738 = vmatprep.mubr.f32.mxu0 0.0
      %1739 = vmatmul.mubr.f32.gmra.mxu0 %v1528
      %v1740 = vpop.f32.mrf.mxu0
      %v1741 = vadd.f32 0.0, %v1740
      %v1742 = vpop.f32.mrf.mxu0
      %1743 = vmatprep.mubr.f32.mxu0 0.0
      %1744 = vmatmul.mubr.f32.gmra.mxu0 %v1531
      %v1745 = vpop.f32.mrf.mxu0
      %v1746 = vadd.f32 0.0, %v1745
      %v1747 = vpop.f32.mrf.mxu0
      %1748 = vmatprep.mubr.f32.mxu0 0.0
      %1749 = vmatmul.mubr.f32.gmra.mxu0 %v1534
      %v1750 = vpop.f32.mrf.mxu0
      %v1751 = vadd.f32 0.0, %v1750
      %v1752 = vpop.f32.mrf.mxu0
      %1753 = vmatprep.mubr.f32.mxu0 0.0
      %1754 = vmatmul.mubr.f32.gmra.mxu0 %v1537
      %v1755 = vpop.f32.mrf.mxu0
      %v1756 = vadd.f32 0.0, %v1755
      %v1757 = vpop.f32.mrf.mxu0
      %1758 = vmatprep.mubr.f32.mxu0 0.0
      %1759 = vmatmul.mubr.f32.gmra.mxu0 %v1540
      %v1760 = vpop.f32.mrf.mxu0
      %v1761 = vadd.f32 0.0, %v1760
      %v1762 = vpop.f32.mrf.mxu0
      %1763 = vmatprep.mubr.f32.mxu0 0.0
      %1764 = vmatmul.mubr.f32.gmra.mxu0 %v1543
      %v1765 = vpop.f32.mrf.mxu0
      %v1766 = vadd.f32 0.0, %v1765
      %v1767 = vpop.f32.mrf.mxu0
      %1768 = vmatprep.mubr.f32.mxu0 0.0
      %1769 = vmatmul.mubr.f32.gmra.mxu0 %v1546
      %v1770 = vpop.f32.mrf.mxu0
      %v1771 = vadd.f32 0.0, %v1770
      %v1772 = vpop.f32.mrf.mxu0
      %1773 = vmatprep.mubr.f32.mxu0 0.0
      %1774 = vmatmul.mubr.f32.gmra.mxu0 %v1549
      %v1775 = vpop.f32.mrf.mxu0
      %v1776 = vadd.f32 0.0, %v1775
      %v1777 = vpop.f32.mrf.mxu0
      %1778 = vdwg.mxu0
      %v1779 = vadd.f32 %v1389, %v1621
      %v1780 = vadd.f32 %v1390, %v1626
      %v1781 = vadd.f32 %v1391, %v1631
      %v1782 = vadd.f32 %v1392, %v1636
      %v1783 = vadd.f32 %v1393, %v1641
      %v1784 = vadd.f32 %v1394, %v1646
      %v1785 = vadd.f32 %v1395, %v1651
      %v1786 = vadd.f32 %v1396, %v1656
      %v1787 = vadd.f32 %v1397, %v1661
      %v1788 = vadd.f32 %v1398, %v1666
      %v1789 = vadd.f32 %v1399, %v1671
      %v1790 = vadd.f32 %v1400, %v1676
      %v1791 = vadd.f32 %v1401, %v1681
      %v1792 = vadd.f32 %v1402, %v1686
      %v1793 = vadd.f32 %v1403, %v1691
      %v1794 = vadd.f32 %v1404, %v1696
      %v1795 = vadd.f32 %v1405, %v1701
      %v1796 = vadd.f32 %v1406, %v1706
      %v1797 = vadd.f32 %v1407, %v1711
      %v1798 = vadd.f32 %v1408, %v1716
      %v1799 = vadd.f32 %v1409, %v1721
      %v1800 = vadd.f32 %v1410, %v1726
      %v1801 = vadd.f32 %v1411, %v1731
      %v1802 = vadd.f32 %v1412, %v1736
      %v1803 = vadd.f32 %v1413, %v1741
      %v1804 = vadd.f32 %v1414, %v1746
      %v1805 = vadd.f32 %v1415, %v1751
      %v1806 = vadd.f32 %v1416, %v1756
      %v1807 = vadd.f32 %v1417, %v1761
      %v1808 = vadd.f32 %v1418, %v1766
      %v1809 = vadd.f32 %v1419, %v1771
      %v1810 = vadd.f32 %v1420, %v1776
      %v1811 = vld [vmem:[%s203 + $0x1] sm:$0xff]
      %v1812 = vld [vmem:[%s203 + $0x9] sm:$0xff]
      %v1813 = vld [vmem:[%s203 + $0x19] sm:$0xff]
      %v1814 = vld [vmem:[%s203 + $0x21] sm:$0xff]
      %v1815 = vld [vmem:[%s203 + $0x31] sm:$0xff]
      %v1816 = vld [vmem:[%s203 + $0x39] sm:$0xff]
      %v1817 = vld [vmem:[%s203 + $0x49] sm:$0xff]
      %v1818 = vld [vmem:[%s203 + $0x51] sm:$0xff]
      %v1819 = vld [vmem:[%s203 + $0x61] sm:$0xff]
      %v1820 = vld [vmem:[%s203 + $0x69] sm:$0xff]
      %v1821 = vld [vmem:[%s203 + $0x79] sm:$0xff]
      %v1822 = vld [vmem:[%s203 + $0x81] sm:$0xff]
      %v1823 = vld [vmem:[%s203 + $0x91] sm:$0xff]
      %v1824 = vld [vmem:[%s203 + $0x99] sm:$0xff]
      %v1825 = vld [vmem:[%s203 + $0xa9] sm:$0xff]
      %v1826 = vld [vmem:[%s203 + $0xb1] sm:$0xff]
      %v1827 = vld [vmem:[%s203 + $0xc1] sm:$0xff]
      %v1828 = vld [vmem:[%s203 + $0xc9] sm:$0xff]
      %v1829 = vld [vmem:[%s203 + $0xd9] sm:$0xff]
      %v1830 = vld [vmem:[%s203 + $0xe1] sm:$0xff]
      %v1831 = vld [vmem:[%s203 + $0xf1] sm:$0xff]
      %v1832 = vld [vmem:[%s203 + $0xf9] sm:$0xff]
      %v1833 = vld [vmem:[%s203 + $0x109] sm:$0xff]
      %v1834 = vld [vmem:[%s203 + $0x111] sm:$0xff]
      %v1835 = vld [vmem:[%s203 + $0x121] sm:$0xff]
      %v1836 = vld [vmem:[%s203 + $0x129] sm:$0xff]
      %v1837 = vld [vmem:[%s203 + $0x139] sm:$0xff]
      %v1838 = vld [vmem:[%s203 + $0x141] sm:$0xff]
      %v1839 = vld [vmem:[%s203 + $0x151] sm:$0xff]
      %v1840 = vld [vmem:[%s203 + $0x159] sm:$0xff]
      %v1841 = vld [vmem:[%s203 + $0x169] sm:$0xff]
      %v1842 = vld [vmem:[%s203 + $0x171] sm:$0xff]
      %s1843 = scalar_lea.vmem %s1, 16
      %v1844 = vld [vmem:[%s1843] sm:$0xf]
      %v1846 = vsel %vm204, %v1811, 0
      %v1849 = vsel %vm204, %v1812, 0
      %v1852 = vsel %vm204, %v1813, 0
      %v1855 = vsel %vm204, %v1814, 0
      %v1858 = vsel %vm204, %v1815, 0
      %v1861 = vsel %vm204, %v1816, 0
      %v1864 = vsel %vm204, %v1817, 0
      %v1867 = vsel %vm204, %v1818, 0
      %v1870 = vsel %vm204, %v1819, 0
      %v1873 = vsel %vm204, %v1820, 0
      %v1876 = vsel %vm204, %v1821, 0
      %v1879 = vsel %vm204, %v1822, 0
      %v1882 = vsel %vm204, %v1823, 0
      %v1885 = vsel %vm204, %v1824, 0
      %v1888 = vsel %vm204, %v1825, 0
      %v1891 = vsel %vm204, %v1826, 0
      %v1894 = vsel %vm204, %v1827, 0
      %v1897 = vsel %vm204, %v1828, 0
      %v1900 = vsel %vm204, %v1829, 0
      %v1903 = vsel %vm204, %v1830, 0
      %v1906 = vsel %vm204, %v1831, 0
      %v1909 = vsel %vm204, %v1832, 0
      %v1912 = vsel %vm204, %v1833, 0
      %v1915 = vsel %vm204, %v1834, 0
      %v1918 = vsel %vm204, %v1835, 0
      %v1921 = vsel %vm204, %v1836, 0
      %v1924 = vsel %vm204, %v1837, 0
      %v1927 = vsel %vm204, %v1838, 0
      %v1930 = vsel %vm204, %v1839, 0
      %v1933 = vsel %vm204, %v1840, 0
      %v1936 = vsel %vm204, %v1841, 0
      %v1939 = vsel %vm204, %v1842, 0
      %v1942 = vsel %vm478, %v1844, 0
      %1944 = vmatprep.subr.mxu0 0.0
      %1945 = vmatpush1.msra.mxu0 0.0
      %1946 = vmatprep.subr.mxu0 0.0
      %1947 = vmatpush1.msra.mxu0 0.0
      %1948 = vmatprep.subr.mxu0 0.0
      %1949 = vmatpush1.msra.mxu0 0.0
      %1950 = vmatprep.subr.mxu0 0.0
      %1951 = vmatpush1.msra.mxu0 0.0
      %1952 = vmatprep.subr.mxu0 0.0
      %1953 = vmatpush1.msra.mxu0 0.0
      %1954 = vmatprep.subr.mxu0 0.0
      %1955 = vmatpush1.msra.mxu0 0.0
      %1956 = vmatprep.subr.mxu0 0.0
      %1957 = vmatpush1.msra.mxu0 0.0
      %1958 = vmatprep.subr.mxu0 0.0
      %1959 = vmatpush1.msra.mxu0 0.0
      %1960 = vmatprep.subr.mxu0 0.0
      %1961 = vmatpush1.msra.mxu0 0.0
      %1962 = vmatprep.subr.mxu0 0.0
      %1963 = vmatpush1.msra.mxu0 0.0
      %1964 = vmatprep.subr.mxu0 0.0
      %1965 = vmatpush1.msra.mxu0 0.0
      %1966 = vmatprep.subr.mxu0 0.0
      %1967 = vmatpush1.msra.mxu0 0.0
      %1968 = vmatprep.subr.mxu0 0.0
      %1969 = vmatpush1.msra.mxu0 0.0
      %1970 = vmatprep.subr.mxu0 0.0
      %1971 = vmatpush1.msra.mxu0 0.0
      %1972 = vmatprep.subr.mxu0 0.0
      %1973 = vmatpush1.msra.mxu0 0.0
      %1974 = vmatprep.subr.mxu0 0.0
      %1975 = vmatpush1.msra.mxu0 %v1942
      %1976 = vmatprep.subr.mxu0 0.0
      %1977 = vmatpush2.msra.mxu0 0.0
      %1978 = vmatprep.subr.mxu0 0.0
      %1979 = vmatpush2.msra.mxu0 0.0
      %1980 = vmatprep.subr.mxu0 0.0
      %1981 = vmatpush2.msra.mxu0 0.0
      %1982 = vmatprep.subr.mxu0 0.0
      %1983 = vmatpush2.msra.mxu0 0.0
      %1984 = vmatprep.subr.mxu0 0.0
      %1985 = vmatpush2.msra.mxu0 0.0
      %1986 = vmatprep.subr.mxu0 0.0
      %1987 = vmatpush2.msra.mxu0 0.0
      %1988 = vmatprep.subr.mxu0 0.0
      %1989 = vmatpush2.msra.mxu0 0.0
      %1990 = vmatprep.subr.mxu0 0.0
      %1991 = vmatpush2.msra.mxu0 0.0
      %1992 = vmatprep.subr.mxu0 0.0
      %1993 = vmatpush2.msra.mxu0 0.0
      %1994 = vmatprep.subr.mxu0 0.0
      %1995 = vmatpush2.msra.mxu0 0.0
      %1996 = vmatprep.subr.mxu0 0.0
      %1997 = vmatpush2.msra.mxu0 0.0
      %1998 = vmatprep.subr.mxu0 0.0
      %1999 = vmatpush2.msra.mxu0 0.0
      %2000 = vmatprep.subr.mxu0 0.0
      %2001 = vmatpush2.msra.mxu0 0.0
      %2002 = vmatprep.subr.mxu0 0.0
      %2003 = vmatpush2.msra.mxu0 0.0
      %2004 = vmatprep.subr.mxu0 0.0
      %2005 = vmatpush2.msra.mxu0 0.0
      %2006 = vmatprep.subr.mxu0 0.0
      %2007 = vmatpush2.msra.mxu0 0.0
      %2008 = vmatprep.mubr.f32.mxu0 0.0
      %2009 = vmatmul.mubr.f32.gmra.mxu0 %v1846
      %v2010 = vpop.f32.mrf.mxu0
      %v2011 = vadd.f32 0.0, %v2010
      %v2012 = vpop.f32.mrf.mxu0
      %2013 = vmatprep.mubr.f32.mxu0 0.0
      %2014 = vmatmul.mubr.f32.gmra.mxu0 %v1849
      %v2015 = vpop.f32.mrf.mxu0
      %v2016 = vadd.f32 0.0, %v2015
      %v2017 = vpop.f32.mrf.mxu0
      %2018 = vmatprep.mubr.f32.mxu0 0.0
      %2019 = vmatmul.mubr.f32.gmra.mxu0 %v1852
      %v2020 = vpop.f32.mrf.mxu0
      %v2021 = vadd.f32 0.0, %v2020
      %v2022 = vpop.f32.mrf.mxu0
      %2023 = vmatprep.mubr.f32.mxu0 0.0
      %2024 = vmatmul.mubr.f32.gmra.mxu0 %v1855
      %v2025 = vpop.f32.mrf.mxu0
      %v2026 = vadd.f32 0.0, %v2025
      %v2027 = vpop.f32.mrf.mxu0
      %2028 = vmatprep.mubr.f32.mxu0 0.0
      %2029 = vmatmul.mubr.f32.gmra.mxu0 %v1858
      %v2030 = vpop.f32.mrf.mxu0
      %v2031 = vadd.f32 0.0, %v2030
      %v2032 = vpop.f32.mrf.mxu0
      %2033 = vmatprep.mubr.f32.mxu0 0.0
      %2034 = vmatmul.mubr.f32.gmra.mxu0 %v1861
      %v2035 = vpop.f32.mrf.mxu0
      %v2036 = vadd.f32 0.0, %v2035
      %v2037 = vpop.f32.mrf.mxu0
      %2038 = vmatprep.mubr.f32.mxu0 0.0
      %2039 = vmatmul.mubr.f32.gmra.mxu0 %v1864
      %v2040 = vpop.f32.mrf.mxu0
      %v2041 = vadd.f32 0.0, %v2040
      %v2042 = vpop.f32.mrf.mxu0
      %2043 = vmatprep.mubr.f32.mxu0 0.0
      %2044 = vmatmul.mubr.f32.gmra.mxu0 %v1867
      %v2045 = vpop.f32.mrf.mxu0
      %v2046 = vadd.f32 0.0, %v2045
      %v2047 = vpop.f32.mrf.mxu0
      %2048 = vmatprep.mubr.f32.mxu0 0.0
      %2049 = vmatmul.mubr.f32.gmra.mxu0 %v1870
      %v2050 = vpop.f32.mrf.mxu0
      %v2051 = vadd.f32 0.0, %v2050
      %v2052 = vpop.f32.mrf.mxu0
      %2053 = vmatprep.mubr.f32.mxu0 0.0
      %2054 = vmatmul.mubr.f32.gmra.mxu0 %v1873
      %v2055 = vpop.f32.mrf.mxu0
      %v2056 = vadd.f32 0.0, %v2055
      %v2057 = vpop.f32.mrf.mxu0
      %2058 = vmatprep.mubr.f32.mxu0 0.0
      %2059 = vmatmul.mubr.f32.gmra.mxu0 %v1876
      %v2060 = vpop.f32.mrf.mxu0
      %v2061 = vadd.f32 0.0, %v2060
      %v2062 = vpop.f32.mrf.mxu0
      %2063 = vmatprep.mubr.f32.mxu0 0.0
      %2064 = vmatmul.mubr.f32.gmra.mxu0 %v1879
      %v2065 = vpop.f32.mrf.mxu0
      %v2066 = vadd.f32 0.0, %v2065
      %v2067 = vpop.f32.mrf.mxu0
      %2068 = vmatprep.mubr.f32.mxu0 0.0
      %2069 = vmatmul.mubr.f32.gmra.mxu0 %v1882
      %v2070 = vpop.f32.mrf.mxu0
      %v2071 = vadd.f32 0.0, %v2070
      %v2072 = vpop.f32.mrf.mxu0
      %2073 = vmatprep.mubr.f32.mxu0 0.0
      %2074 = vmatmul.mubr.f32.gmra.mxu0 %v1885
      %v2075 = vpop.f32.mrf.mxu0
      %v2076 = vadd.f32 0.0, %v2075
      %v2077 = vpop.f32.mrf.mxu0
      %2078 = vmatprep.mubr.f32.mxu0 0.0
      %2079 = vmatmul.mubr.f32.gmra.mxu0 %v1888
      %v2080 = vpop.f32.mrf.mxu0
      %v2081 = vadd.f32 0.0, %v2080
      %v2082 = vpop.f32.mrf.mxu0
      %2083 = vmatprep.mubr.f32.mxu0 0.0
      %2084 = vmatmul.mubr.f32.gmra.mxu0 %v1891
      %v2085 = vpop.f32.mrf.mxu0
      %v2086 = vadd.f32 0.0, %v2085
      %v2087 = vpop.f32.mrf.mxu0
      %2088 = vmatprep.mubr.f32.mxu0 0.0
      %2089 = vmatmul.mubr.f32.gmra.mxu0 %v1894
      %v2090 = vpop.f32.mrf.mxu0
      %v2091 = vadd.f32 0.0, %v2090
      %v2092 = vpop.f32.mrf.mxu0
      %2093 = vmatprep.mubr.f32.mxu0 0.0
      %2094 = vmatmul.mubr.f32.gmra.mxu0 %v1897
      %v2095 = vpop.f32.mrf.mxu0
      %v2096 = vadd.f32 0.0, %v2095
      %v2097 = vpop.f32.mrf.mxu0
      %2098 = vmatprep.mubr.f32.mxu0 0.0
      %2099 = vmatmul.mubr.f32.gmra.mxu0 %v1900
      %v2100 = vpop.f32.mrf.mxu0
      %v2101 = vadd.f32 0.0, %v2100
      %v2102 = vpop.f32.mrf.mxu0
      %2103 = vmatprep.mubr.f32.mxu0 0.0
      %2104 = vmatmul.mubr.f32.gmra.mxu0 %v1903
      %v2105 = vpop.f32.mrf.mxu0
      %v2106 = vadd.f32 0.0, %v2105
      %v2107 = vpop.f32.mrf.mxu0
      %2108 = vmatprep.mubr.f32.mxu0 0.0
      %2109 = vmatmul.mubr.f32.gmra.mxu0 %v1906
      %v2110 = vpop.f32.mrf.mxu0
      %v2111 = vadd.f32 0.0, %v2110
      %v2112 = vpop.f32.mrf.mxu0
      %2113 = vmatprep.mubr.f32.mxu0 0.0
      %2114 = vmatmul.mubr.f32.gmra.mxu0 %v1909
      %v2115 = vpop.f32.mrf.mxu0
      %v2116 = vadd.f32 0.0, %v2115
      %v2117 = vpop.f32.mrf.mxu0
      %2118 = vmatprep.mubr.f32.mxu0 0.0
      %2119 = vmatmul.mubr.f32.gmra.mxu0 %v1912
      %v2120 = vpop.f32.mrf.mxu0
      %v2121 = vadd.f32 0.0, %v2120
      %v2122 = vpop.f32.mrf.mxu0
      %2123 = vmatprep.mubr.f32.mxu0 0.0
      %2124 = vmatmul.mubr.f32.gmra.mxu0 %v1915
      %v2125 = vpop.f32.mrf.mxu0
      %v2126 = vadd.f32 0.0, %v2125
      %v2127 = vpop.f32.mrf.mxu0
      %2128 = vmatprep.mubr.f32.mxu0 0.0
      %2129 = vmatmul.mubr.f32.gmra.mxu0 %v1918
      %v2130 = vpop.f32.mrf.mxu0
      %v2131 = vadd.f32 0.0, %v2130
      %v2132 = vpop.f32.mrf.mxu0
      %2133 = vmatprep.mubr.f32.mxu0 0.0
      %2134 = vmatmul.mubr.f32.gmra.mxu0 %v1921
      %v2135 = vpop.f32.mrf.mxu0
      %v2136 = vadd.f32 0.0, %v2135
      %v2137 = vpop.f32.mrf.mxu0
      %2138 = vmatprep.mubr.f32.mxu0 0.0
      %2139 = vmatmul.mubr.f32.gmra.mxu0 %v1924
      %v2140 = vpop.f32.mrf.mxu0
      %v2141 = vadd.f32 0.0, %v2140
      %v2142 = vpop.f32.mrf.mxu0
      %2143 = vmatprep.mubr.f32.mxu0 0.0
      %2144 = vmatmul.mubr.f32.gmra.mxu0 %v1927
      %v2145 = vpop.f32.mrf.mxu0
      %v2146 = vadd.f32 0.0, %v2145
      %v2147 = vpop.f32.mrf.mxu0
      %2148 = vmatprep.mubr.f32.mxu0 0.0
      %2149 = vmatmul.mubr.f32.gmra.mxu0 %v1930
      %v2150 = vpop.f32.mrf.mxu0
      %v2151 = vadd.f32 0.0, %v2150
      %v2152 = vpop.f32.mrf.mxu0
      %2153 = vmatprep.mubr.f32.mxu0 0.0
      %2154 = vmatmul.mubr.f32.gmra.mxu0 %v1933
      %v2155 = vpop.f32.mrf.mxu0
      %v2156 = vadd.f32 0.0, %v2155
      %v2157 = vpop.f32.mrf.mxu0
      %2158 = vmatprep.mubr.f32.mxu0 0.0
      %2159 = vmatmul.mubr.f32.gmra.mxu0 %v1936
      %v2160 = vpop.f32.mrf.mxu0
      %v2161 = vadd.f32 0.0, %v2160
      %v2162 = vpop.f32.mrf.mxu0
      %2163 = vmatprep.mubr.f32.mxu0 0.0
      %2164 = vmatmul.mubr.f32.gmra.mxu0 %v1939
      %v2165 = vpop.f32.mrf.mxu0
      %v2166 = vadd.f32 0.0, %v2165
      %v2167 = vpop.f32.mrf.mxu0
      %2168 = vdwg.mxu0
      %v2169 = vadd.f32 %v1779, %v2011
      %v2170 = vadd.f32 %v1780, %v2016
      %v2171 = vadd.f32 %v1781, %v2021
      %v2172 = vadd.f32 %v1782, %v2026
      %v2173 = vadd.f32 %v1783, %v2031
      %v2174 = vadd.f32 %v1784, %v2036
      %v2175 = vadd.f32 %v1785, %v2041
      %v2176 = vadd.f32 %v1786, %v2046
      %v2177 = vadd.f32 %v1787, %v2051
      %v2178 = vadd.f32 %v1788, %v2056
      %v2179 = vadd.f32 %v1789, %v2061
      %v2180 = vadd.f32 %v1790, %v2066
      %v2181 = vadd.f32 %v1791, %v2071
      %v2182 = vadd.f32 %v1792, %v2076
      %v2183 = vadd.f32 %v1793, %v2081
      %v2184 = vadd.f32 %v1794, %v2086
      %v2185 = vadd.f32 %v1795, %v2091
      %v2186 = vadd.f32 %v1796, %v2096
      %v2187 = vadd.f32 %v1797, %v2101
      %v2188 = vadd.f32 %v1798, %v2106
      %v2189 = vadd.f32 %v1799, %v2111
      %v2190 = vadd.f32 %v1800, %v2116
      %v2191 = vadd.f32 %v1801, %v2121
      %v2192 = vadd.f32 %v1802, %v2126
      %v2193 = vadd.f32 %v1803, %v2131
      %v2194 = vadd.f32 %v1804, %v2136
      %v2195 = vadd.f32 %v1805, %v2141
      %v2196 = vadd.f32 %v1806, %v2146
      %v2197 = vadd.f32 %v1807, %v2151
      %v2198 = vadd.f32 %v1808, %v2156
      %v2199 = vadd.f32 %v1809, %v2161
      %v2200 = vadd.f32 %v1810, %v2166
      %v2201 = vld [vmem:[%s203 + $0x2] sm:$0xff]
      %v2202 = vld [vmem:[%s203 + $0xa] sm:$0xff]
      %v2203 = vld [vmem:[%s203 + $0x1a] sm:$0xff]
      %v2204 = vld [vmem:[%s203 + $0x22] sm:$0xff]
      %v2205 = vld [vmem:[%s203 + $0x32] sm:$0xff]
      %v2206 = vld [vmem:[%s203 + $0x3a] sm:$0xff]
      %v2207 = vld [vmem:[%s203 + $0x4a] sm:$0xff]
      %v2208 = vld [vmem:[%s203 + $0x52] sm:$0xff]
      %v2209 = vld [vmem:[%s203 + $0x62] sm:$0xff]
      %v2210 = vld [vmem:[%s203 + $0x6a] sm:$0xff]
      %v2211 = vld [vmem:[%s203 + $0x7a] sm:$0xff]
      %v2212 = vld [vmem:[%s203 + $0x82] sm:$0xff]
      %v2213 = vld [vmem:[%s203 + $0x92] sm:$0xff]
      %v2214 = vld [vmem:[%s203 + $0x9a] sm:$0xff]
      %v2215 = vld [vmem:[%s203 + $0xaa] sm:$0xff]
      %v2216 = vld [vmem:[%s203 + $0xb2] sm:$0xff]
      %v2217 = vld [vmem:[%s203 + $0xc2] sm:$0xff]
      %v2218 = vld [vmem:[%s203 + $0xca] sm:$0xff]
      %v2219 = vld [vmem:[%s203 + $0xda] sm:$0xff]
      %v2220 = vld [vmem:[%s203 + $0xe2] sm:$0xff]
      %v2221 = vld [vmem:[%s203 + $0xf2] sm:$0xff]
      %v2222 = vld [vmem:[%s203 + $0xfa] sm:$0xff]
      %v2223 = vld [vmem:[%s203 + $0x10a] sm:$0xff]
      %v2224 = vld [vmem:[%s203 + $0x112] sm:$0xff]
      %v2225 = vld [vmem:[%s203 + $0x122] sm:$0xff]
      %v2226 = vld [vmem:[%s203 + $0x12a] sm:$0xff]
      %v2227 = vld [vmem:[%s203 + $0x13a] sm:$0xff]
      %v2228 = vld [vmem:[%s203 + $0x142] sm:$0xff]
      %v2229 = vld [vmem:[%s203 + $0x152] sm:$0xff]
      %v2230 = vld [vmem:[%s203 + $0x15a] sm:$0xff]
      %v2231 = vld [vmem:[%s203 + $0x16a] sm:$0xff]
      %v2232 = vld [vmem:[%s203 + $0x172] sm:$0xff]
      %s2233 = scalar_lea.vmem %s1, 20
      %v2234 = vld [vmem:[%s2233] sm:$0xf]
      %v2236 = vsel %vm204, %v2201, 0
      %v2239 = vsel %vm204, %v2202, 0
      %v2242 = vsel %vm204, %v2203, 0
      %v2245 = vsel %vm204, %v2204, 0
      %v2248 = vsel %vm204, %v2205, 0
      %v2251 = vsel %vm204, %v2206, 0
      %v2254 = vsel %vm204, %v2207, 0
      %v2257 = vsel %vm204, %v2208, 0
      %v2260 = vsel %vm204, %v2209, 0
      %v2263 = vsel %vm204, %v2210, 0
      %v2266 = vsel %vm204, %v2211, 0
      %v2269 = vsel %vm204, %v2212, 0
      %v2272 = vsel %vm204, %v2213, 0
      %v2275 = vsel %vm204, %v2214, 0
      %v2278 = vsel %vm204, %v2215, 0
      %v2281 = vsel %vm204, %v2216, 0
      %v2284 = vsel %vm204, %v2217, 0
      %v2287 = vsel %vm204, %v2218, 0
      %v2290 = vsel %vm204, %v2219, 0
      %v2293 = vsel %vm204, %v2220, 0
      %v2296 = vsel %vm204, %v2221, 0
      %v2299 = vsel %vm204, %v2222, 0
      %v2302 = vsel %vm204, %v2223, 0
      %v2305 = vsel %vm204, %v2224, 0
      %v2308 = vsel %vm204, %v2225, 0
      %v2311 = vsel %vm204, %v2226, 0
      %v2314 = vsel %vm204, %v2227, 0
      %v2317 = vsel %vm204, %v2228, 0
      %v2320 = vsel %vm204, %v2229, 0
      %v2323 = vsel %vm204, %v2230, 0
      %v2326 = vsel %vm204, %v2231, 0
      %v2329 = vsel %vm204, %v2232, 0
      %v2332 = vsel %vm478, %v2234, 0
      %2334 = vmatprep.subr.mxu0 0.0
      %2335 = vmatpush1.msra.mxu0 0.0
      %2336 = vmatprep.subr.mxu0 0.0
      %2337 = vmatpush1.msra.mxu0 0.0
      %2338 = vmatprep.subr.mxu0 0.0
      %2339 = vmatpush1.msra.mxu0 0.0
      %2340 = vmatprep.subr.mxu0 0.0
      %2341 = vmatpush1.msra.mxu0 0.0
      %2342 = vmatprep.subr.mxu0 0.0
      %2343 = vmatpush1.msra.mxu0 0.0
      %2344 = vmatprep.subr.mxu0 0.0
      %2345 = vmatpush1.msra.mxu0 0.0
      %2346 = vmatprep.subr.mxu0 0.0
      %2347 = vmatpush1.msra.mxu0 0.0
      %2348 = vmatprep.subr.mxu0 0.0
      %2349 = vmatpush1.msra.mxu0 0.0
      %2350 = vmatprep.subr.mxu0 0.0
      %2351 = vmatpush1.msra.mxu0 0.0
      %2352 = vmatprep.subr.mxu0 0.0
      %2353 = vmatpush1.msra.mxu0 0.0
      %2354 = vmatprep.subr.mxu0 0.0
      %2355 = vmatpush1.msra.mxu0 0.0
      %2356 = vmatprep.subr.mxu0 0.0
      %2357 = vmatpush1.msra.mxu0 0.0
      %2358 = vmatprep.subr.mxu0 0.0
      %2359 = vmatpush1.msra.mxu0 0.0
      %2360 = vmatprep.subr.mxu0 0.0
      %2361 = vmatpush1.msra.mxu0 0.0
      %2362 = vmatprep.subr.mxu0 0.0
      %2363 = vmatpush1.msra.mxu0 0.0
      %2364 = vmatprep.subr.mxu0 0.0
      %2365 = vmatpush1.msra.mxu0 %v2332
      %2366 = vmatprep.subr.mxu0 0.0
      %2367 = vmatpush2.msra.mxu0 0.0
      %2368 = vmatprep.subr.mxu0 0.0
      %2369 = vmatpush2.msra.mxu0 0.0
      %2370 = vmatprep.subr.mxu0 0.0
      %2371 = vmatpush2.msra.mxu0 0.0
      %2372 = vmatprep.subr.mxu0 0.0
      %2373 = vmatpush2.msra.mxu0 0.0
      %2374 = vmatprep.subr.mxu0 0.0
      %2375 = vmatpush2.msra.mxu0 0.0
      %2376 = vmatprep.subr.mxu0 0.0
      %2377 = vmatpush2.msra.mxu0 0.0
      %2378 = vmatprep.subr.mxu0 0.0
      %2379 = vmatpush2.msra.mxu0 0.0
      %2380 = vmatprep.subr.mxu0 0.0
      %2381 = vmatpush2.msra.mxu0 0.0
      %2382 = vmatprep.subr.mxu0 0.0
      %2383 = vmatpush2.msra.mxu0 0.0
      %2384 = vmatprep.subr.mxu0 0.0
      %2385 = vmatpush2.msra.mxu0 0.0
      %2386 = vmatprep.subr.mxu0 0.0
      %2387 = vmatpush2.msra.mxu0 0.0
      %2388 = vmatprep.subr.mxu0 0.0
      %2389 = vmatpush2.msra.mxu0 0.0
      %2390 = vmatprep.subr.mxu0 0.0
      %2391 = vmatpush2.msra.mxu0 0.0
      %2392 = vmatprep.subr.mxu0 0.0
      %2393 = vmatpush2.msra.mxu0 0.0
      %2394 = vmatprep.subr.mxu0 0.0
      %2395 = vmatpush2.msra.mxu0 0.0
      %2396 = vmatprep.subr.mxu0 0.0
      %2397 = vmatpush2.msra.mxu0 0.0
      %2398 = vmatprep.mubr.f32.mxu0 0.0
      %2399 = vmatmul.mubr.f32.gmra.mxu0 %v2236
      %v2400 = vpop.f32.mrf.mxu0
      %v2401 = vadd.f32 0.0, %v2400
      %v2402 = vpop.f32.mrf.mxu0
      %2403 = vmatprep.mubr.f32.mxu0 0.0
      %2404 = vmatmul.mubr.f32.gmra.mxu0 %v2239
      %v2405 = vpop.f32.mrf.mxu0
      %v2406 = vadd.f32 0.0, %v2405
      %v2407 = vpop.f32.mrf.mxu0
      %2408 = vmatprep.mubr.f32.mxu0 0.0
      %2409 = vmatmul.mubr.f32.gmra.mxu0 %v2242
      %v2410 = vpop.f32.mrf.mxu0
      %v2411 = vadd.f32 0.0, %v2410
      %v2412 = vpop.f32.mrf.mxu0
      %2413 = vmatprep.mubr.f32.mxu0 0.0
      %2414 = vmatmul.mubr.f32.gmra.mxu0 %v2245
      %v2415 = vpop.f32.mrf.mxu0
      %v2416 = vadd.f32 0.0, %v2415
      %v2417 = vpop.f32.mrf.mxu0
      %2418 = vmatprep.mubr.f32.mxu0 0.0
      %2419 = vmatmul.mubr.f32.gmra.mxu0 %v2248
      %v2420 = vpop.f32.mrf.mxu0
      %v2421 = vadd.f32 0.0, %v2420
      %v2422 = vpop.f32.mrf.mxu0
      %2423 = vmatprep.mubr.f32.mxu0 0.0
      %2424 = vmatmul.mubr.f32.gmra.mxu0 %v2251
      %v2425 = vpop.f32.mrf.mxu0
      %v2426 = vadd.f32 0.0, %v2425
      %v2427 = vpop.f32.mrf.mxu0
      %2428 = vmatprep.mubr.f32.mxu0 0.0
      %2429 = vmatmul.mubr.f32.gmra.mxu0 %v2254
      %v2430 = vpop.f32.mrf.mxu0
      %v2431 = vadd.f32 0.0, %v2430
      %v2432 = vpop.f32.mrf.mxu0
      %2433 = vmatprep.mubr.f32.mxu0 0.0
      %2434 = vmatmul.mubr.f32.gmra.mxu0 %v2257
      %v2435 = vpop.f32.mrf.mxu0
      %v2436 = vadd.f32 0.0, %v2435
      %v2437 = vpop.f32.mrf.mxu0
      %2438 = vmatprep.mubr.f32.mxu0 0.0
      %2439 = vmatmul.mubr.f32.gmra.mxu0 %v2260
      %v2440 = vpop.f32.mrf.mxu0
      %v2441 = vadd.f32 0.0, %v2440
      %v2442 = vpop.f32.mrf.mxu0
      %2443 = vmatprep.mubr.f32.mxu0 0.0
      %2444 = vmatmul.mubr.f32.gmra.mxu0 %v2263
      %v2445 = vpop.f32.mrf.mxu0
      %v2446 = vadd.f32 0.0, %v2445
      %v2447 = vpop.f32.mrf.mxu0
      %2448 = vmatprep.mubr.f32.mxu0 0.0
      %2449 = vmatmul.mubr.f32.gmra.mxu0 %v2266
      %v2450 = vpop.f32.mrf.mxu0
      %v2451 = vadd.f32 0.0, %v2450
      %v2452 = vpop.f32.mrf.mxu0
      %2453 = vmatprep.mubr.f32.mxu0 0.0
      %2454 = vmatmul.mubr.f32.gmra.mxu0 %v2269
      %v2455 = vpop.f32.mrf.mxu0
      %v2456 = vadd.f32 0.0, %v2455
      %v2457 = vpop.f32.mrf.mxu0
      %2458 = vmatprep.mubr.f32.mxu0 0.0
      %2459 = vmatmul.mubr.f32.gmra.mxu0 %v2272
      %v2460 = vpop.f32.mrf.mxu0
      %v2461 = vadd.f32 0.0, %v2460
      %v2462 = vpop.f32.mrf.mxu0
      %2463 = vmatprep.mubr.f32.mxu0 0.0
      %2464 = vmatmul.mubr.f32.gmra.mxu0 %v2275
      %v2465 = vpop.f32.mrf.mxu0
      %v2466 = vadd.f32 0.0, %v2465
      %v2467 = vpop.f32.mrf.mxu0
      %2468 = vmatprep.mubr.f32.mxu0 0.0
      %2469 = vmatmul.mubr.f32.gmra.mxu0 %v2278
      %v2470 = vpop.f32.mrf.mxu0
      %v2471 = vadd.f32 0.0, %v2470
      %v2472 = vpop.f32.mrf.mxu0
      %2473 = vmatprep.mubr.f32.mxu0 0.0
      %2474 = vmatmul.mubr.f32.gmra.mxu0 %v2281
      %v2475 = vpop.f32.mrf.mxu0
      %v2476 = vadd.f32 0.0, %v2475
      %v2477 = vpop.f32.mrf.mxu0
      %2478 = vmatprep.mubr.f32.mxu0 0.0
      %2479 = vmatmul.mubr.f32.gmra.mxu0 %v2284
      %v2480 = vpop.f32.mrf.mxu0
      %v2481 = vadd.f32 0.0, %v2480
      %v2482 = vpop.f32.mrf.mxu0
      %2483 = vmatprep.mubr.f32.mxu0 0.0
      %2484 = vmatmul.mubr.f32.gmra.mxu0 %v2287
      %v2485 = vpop.f32.mrf.mxu0
      %v2486 = vadd.f32 0.0, %v2485
      %v2487 = vpop.f32.mrf.mxu0
      %2488 = vmatprep.mubr.f32.mxu0 0.0
      %2489 = vmatmul.mubr.f32.gmra.mxu0 %v2290
      %v2490 = vpop.f32.mrf.mxu0
      %v2491 = vadd.f32 0.0, %v2490
      %v2492 = vpop.f32.mrf.mxu0
      %2493 = vmatprep.mubr.f32.mxu0 0.0
      %2494 = vmatmul.mubr.f32.gmra.mxu0 %v2293
      %v2495 = vpop.f32.mrf.mxu0
      %v2496 = vadd.f32 0.0, %v2495
      %v2497 = vpop.f32.mrf.mxu0
      %2498 = vmatprep.mubr.f32.mxu0 0.0
      %2499 = vmatmul.mubr.f32.gmra.mxu0 %v2296
      %v2500 = vpop.f32.mrf.mxu0
      %v2501 = vadd.f32 0.0, %v2500
      %v2502 = vpop.f32.mrf.mxu0
      %2503 = vmatprep.mubr.f32.mxu0 0.0
      %2504 = vmatmul.mubr.f32.gmra.mxu0 %v2299
      %v2505 = vpop.f32.mrf.mxu0
      %v2506 = vadd.f32 0.0, %v2505
      %v2507 = vpop.f32.mrf.mxu0
      %2508 = vmatprep.mubr.f32.mxu0 0.0
      %2509 = vmatmul.mubr.f32.gmra.mxu0 %v2302
      %v2510 = vpop.f32.mrf.mxu0
      %v2511 = vadd.f32 0.0, %v2510
      %v2512 = vpop.f32.mrf.mxu0
      %2513 = vmatprep.mubr.f32.mxu0 0.0
      %2514 = vmatmul.mubr.f32.gmra.mxu0 %v2305
      %v2515 = vpop.f32.mrf.mxu0
      %v2516 = vadd.f32 0.0, %v2515
      %v2517 = vpop.f32.mrf.mxu0
      %2518 = vmatprep.mubr.f32.mxu0 0.0
      %2519 = vmatmul.mubr.f32.gmra.mxu0 %v2308
      %v2520 = vpop.f32.mrf.mxu0
      %v2521 = vadd.f32 0.0, %v2520
      %v2522 = vpop.f32.mrf.mxu0
      %2523 = vmatprep.mubr.f32.mxu0 0.0
      %2524 = vmatmul.mubr.f32.gmra.mxu0 %v2311
      %v2525 = vpop.f32.mrf.mxu0
      %v2526 = vadd.f32 0.0, %v2525
      %v2527 = vpop.f32.mrf.mxu0
      %2528 = vmatprep.mubr.f32.mxu0 0.0
      %2529 = vmatmul.mubr.f32.gmra.mxu0 %v2314
      %v2530 = vpop.f32.mrf.mxu0
      %v2531 = vadd.f32 0.0, %v2530
      %v2532 = vpop.f32.mrf.mxu0
      %2533 = vmatprep.mubr.f32.mxu0 0.0
      %2534 = vmatmul.mubr.f32.gmra.mxu0 %v2317
      %v2535 = vpop.f32.mrf.mxu0
      %v2536 = vadd.f32 0.0, %v2535
      %v2537 = vpop.f32.mrf.mxu0
      %2538 = vmatprep.mubr.f32.mxu0 0.0
      %2539 = vmatmul.mubr.f32.gmra.mxu0 %v2320
      %v2540 = vpop.f32.mrf.mxu0
      %v2541 = vadd.f32 0.0, %v2540
      %v2542 = vpop.f32.mrf.mxu0
      %2543 = vmatprep.mubr.f32.mxu0 0.0
      %2544 = vmatmul.mubr.f32.gmra.mxu0 %v2323
      %v2545 = vpop.f32.mrf.mxu0
      %v2546 = vadd.f32 0.0, %v2545
      %v2547 = vpop.f32.mrf.mxu0
      %2548 = vmatprep.mubr.f32.mxu0 0.0
      %2549 = vmatmul.mubr.f32.gmra.mxu0 %v2326
      %v2550 = vpop.f32.mrf.mxu0
      %v2551 = vadd.f32 0.0, %v2550
      %v2552 = vpop.f32.mrf.mxu0
      %2553 = vmatprep.mubr.f32.mxu0 0.0
      %2554 = vmatmul.mubr.f32.gmra.mxu0 %v2329
      %v2555 = vpop.f32.mrf.mxu0
      %v2556 = vadd.f32 0.0, %v2555
      %v2557 = vpop.f32.mrf.mxu0
      %2558 = vdwg.mxu0
      %v2559 = vadd.f32 %v2169, %v2401
      %v2560 = vadd.f32 %v2170, %v2406
      %v2561 = vadd.f32 %v2171, %v2411
      %v2562 = vadd.f32 %v2172, %v2416
      %v2563 = vadd.f32 %v2173, %v2421
      %v2564 = vadd.f32 %v2174, %v2426
      %v2565 = vadd.f32 %v2175, %v2431
      %v2566 = vadd.f32 %v2176, %v2436
      %v2567 = vadd.f32 %v2177, %v2441
      %v2568 = vadd.f32 %v2178, %v2446
      %v2569 = vadd.f32 %v2179, %v2451
      %v2570 = vadd.f32 %v2180, %v2456
      %v2571 = vadd.f32 %v2181, %v2461
      %v2572 = vadd.f32 %v2182, %v2466
      %v2573 = vadd.f32 %v2183, %v2471
      %v2574 = vadd.f32 %v2184, %v2476
      %v2575 = vadd.f32 %v2185, %v2481
      %v2576 = vadd.f32 %v2186, %v2486
      %v2577 = vadd.f32 %v2187, %v2491
      %v2578 = vadd.f32 %v2188, %v2496
      %v2579 = vadd.f32 %v2189, %v2501
      %v2580 = vadd.f32 %v2190, %v2506
      %v2581 = vadd.f32 %v2191, %v2511
      %v2582 = vadd.f32 %v2192, %v2516
      %v2583 = vadd.f32 %v2193, %v2521
      %v2584 = vadd.f32 %v2194, %v2526
      %v2585 = vadd.f32 %v2195, %v2531
      %v2586 = vadd.f32 %v2196, %v2536
      %v2587 = vadd.f32 %v2197, %v2541
      %v2588 = vadd.f32 %v2198, %v2546
      %v2589 = vadd.f32 %v2199, %v2551
      %v2590 = vadd.f32 %v2200, %v2556
      %s2591 = scalar_lea.vmem [#allocation2], 48
      %v2592 = vld [vmem:[%s2591] sm:$0xff]
      %v2593 = vld [vmem:[%s2591 + $0x8] sm:$0xff]
      %v2594 = vld [vmem:[%s2591 + $0x18] sm:$0xff]
      %v2595 = vld [vmem:[%s2591 + $0x20] sm:$0xff]
      %v2596 = vld [vmem:[%s2591 + $0x30] sm:$0xff]
      %v2597 = vld [vmem:[%s2591 + $0x38] sm:$0xff]
      %v2598 = vld [vmem:[%s2591 + $0x48] sm:$0xff]
      %v2599 = vld [vmem:[%s2591 + $0x50] sm:$0xff]
      %v2600 = vld [vmem:[%s2591 + $0x60] sm:$0xff]
      %v2601 = vld [vmem:[%s2591 + $0x68] sm:$0xff]
      %v2602 = vld [vmem:[%s2591 + $0x78] sm:$0xff]
      %v2603 = vld [vmem:[%s2591 + $0x80] sm:$0xff]
      %v2604 = vld [vmem:[%s2591 + $0x90] sm:$0xff]
      %v2605 = vld [vmem:[%s2591 + $0x98] sm:$0xff]
      %v2606 = vld [vmem:[%s2591 + $0xa8] sm:$0xff]
      %v2607 = vld [vmem:[%s2591 + $0xb0] sm:$0xff]
      %v2608 = vld [vmem:[%s2591 + $0xc0] sm:$0xff]
      %v2609 = vld [vmem:[%s2591 + $0xc8] sm:$0xff]
      %v2610 = vld [vmem:[%s2591 + $0xd8] sm:$0xff]
      %v2611 = vld [vmem:[%s2591 + $0xe0] sm:$0xff]
      %v2612 = vld [vmem:[%s2591 + $0xf0] sm:$0xff]
      %v2613 = vld [vmem:[%s2591 + $0xf8] sm:$0xff]
      %v2614 = vld [vmem:[%s2591 + $0x108] sm:$0xff]
      %v2615 = vld [vmem:[%s2591 + $0x110] sm:$0xff]
      %v2616 = vld [vmem:[%s2591 + $0x120] sm:$0xff]
      %v2617 = vld [vmem:[%s2591 + $0x128] sm:$0xff]
      %v2618 = vld [vmem:[%s2591 + $0x138] sm:$0xff]
      %v2619 = vld [vmem:[%s2591 + $0x140] sm:$0xff]
      %v2620 = vld [vmem:[%s2591 + $0x150] sm:$0xff]
      %v2621 = vld [vmem:[%s2591 + $0x158] sm:$0xff]
      %v2622 = vld [vmem:[%s2591 + $0x168] sm:$0xff]
      %v2623 = vld [vmem:[%s2591 + $0x170] sm:$0xff]
      %s2624 = scalar_lea.vmem %s1, 24
      %v2625 = vld [vmem:[%s2624] sm:$0xf]
      %v2627 = vsel %vm204, %v2592, 0
      %v2630 = vsel %vm204, %v2593, 0
      %v2633 = vsel %vm204, %v2594, 0
      %v2636 = vsel %vm204, %v2595, 0
      %v2639 = vsel %vm204, %v2596, 0
      %v2642 = vsel %vm204, %v2597, 0
      %v2645 = vsel %vm204, %v2598, 0
      %v2648 = vsel %vm204, %v2599, 0
      %v2651 = vsel %vm204, %v2600, 0
      %v2654 = vsel %vm204, %v2601, 0
      %v2657 = vsel %vm204, %v2602, 0
      %v2660 = vsel %vm204, %v2603, 0
      %v2663 = vsel %vm204, %v2604, 0
      %v2666 = vsel %vm204, %v2605, 0
      %v2669 = vsel %vm204, %v2606, 0
      %v2672 = vsel %vm204, %v2607, 0
      %v2675 = vsel %vm204, %v2608, 0
      %v2678 = vsel %vm204, %v2609, 0
      %v2681 = vsel %vm204, %v2610, 0
      %v2684 = vsel %vm204, %v2611, 0
      %v2687 = vsel %vm204, %v2612, 0
      %v2690 = vsel %vm204, %v2613, 0
      %v2693 = vsel %vm204, %v2614, 0
      %v2696 = vsel %vm204, %v2615, 0
      %v2699 = vsel %vm204, %v2616, 0
      %v2702 = vsel %vm204, %v2617, 0
      %v2705 = vsel %vm204, %v2618, 0
      %v2708 = vsel %vm204, %v2619, 0
      %v2711 = vsel %vm204, %v2620, 0
      %v2714 = vsel %vm204, %v2621, 0
      %v2717 = vsel %vm204, %v2622, 0
      %v2720 = vsel %vm204, %v2623, 0
      %v2723 = vsel %vm478, %v2625, 0
      %2725 = vmatprep.subr.mxu0 0.0
      %2726 = vmatpush1.msra.mxu0 0.0
      %2727 = vmatprep.subr.mxu0 0.0
      %2728 = vmatpush1.msra.mxu0 0.0
      %2729 = vmatprep.subr.mxu0 0.0
      %2730 = vmatpush1.msra.mxu0 0.0
      %2731 = vmatprep.subr.mxu0 0.0
      %2732 = vmatpush1.msra.mxu0 0.0
      %2733 = vmatprep.subr.mxu0 0.0
      %2734 = vmatpush1.msra.mxu0 0.0
      %2735 = vmatprep.subr.mxu0 0.0
      %2736 = vmatpush1.msra.mxu0 0.0
      %2737 = vmatprep.subr.mxu0 0.0
      %2738 = vmatpush1.msra.mxu0 0.0
      %2739 = vmatprep.subr.mxu0 0.0
      %2740 = vmatpush1.msra.mxu0 0.0
      %2741 = vmatprep.subr.mxu0 0.0
      %2742 = vmatpush1.msra.mxu0 0.0
      %2743 = vmatprep.subr.mxu0 0.0
      %2744 = vmatpush1.msra.mxu0 0.0
      %2745 = vmatprep.subr.mxu0 0.0
      %2746 = vmatpush1.msra.mxu0 0.0
      %2747 = vmatprep.subr.mxu0 0.0
      %2748 = vmatpush1.msra.mxu0 0.0
      %2749 = vmatprep.subr.mxu0 0.0
      %2750 = vmatpush1.msra.mxu0 0.0
      %2751 = vmatprep.subr.mxu0 0.0
      %2752 = vmatpush1.msra.mxu0 0.0
      %2753 = vmatprep.subr.mxu0 0.0
      %2754 = vmatpush1.msra.mxu0 0.0
      %2755 = vmatprep.subr.mxu0 0.0
      %2756 = vmatpush1.msra.mxu0 %v2723
      %2757 = vmatprep.subr.mxu0 0.0
      %2758 = vmatpush2.msra.mxu0 0.0
      %2759 = vmatprep.subr.mxu0 0.0
      %2760 = vmatpush2.msra.mxu0 0.0
      %2761 = vmatprep.subr.mxu0 0.0
      %2762 = vmatpush2.msra.mxu0 0.0
      %2763 = vmatprep.subr.mxu0 0.0
      %2764 = vmatpush2.msra.mxu0 0.0
      %2765 = vmatprep.subr.mxu0 0.0
      %2766 = vmatpush2.msra.mxu0 0.0
      %2767 = vmatprep.subr.mxu0 0.0
      %2768 = vmatpush2.msra.mxu0 0.0
      %2769 = vmatprep.subr.mxu0 0.0
      %2770 = vmatpush2.msra.mxu0 0.0
      %2771 = vmatprep.subr.mxu0 0.0
      %2772 = vmatpush2.msra.mxu0 0.0
      %2773 = vmatprep.subr.mxu0 0.0
      %2774 = vmatpush2.msra.mxu0 0.0
      %2775 = vmatprep.subr.mxu0 0.0
      %2776 = vmatpush2.msra.mxu0 0.0
      %2777 = vmatprep.subr.mxu0 0.0
      %2778 = vmatpush2.msra.mxu0 0.0
      %2779 = vmatprep.subr.mxu0 0.0
      %2780 = vmatpush2.msra.mxu0 0.0
      %2781 = vmatprep.subr.mxu0 0.0
      %2782 = vmatpush2.msra.mxu0 0.0
      %2783 = vmatprep.subr.mxu0 0.0
      %2784 = vmatpush2.msra.mxu0 0.0
      %2785 = vmatprep.subr.mxu0 0.0
      %2786 = vmatpush2.msra.mxu0 0.0
      %2787 = vmatprep.subr.mxu0 0.0
      %2788 = vmatpush2.msra.mxu0 0.0
      %2789 = vmatprep.mubr.f32.mxu0 0.0
      %2790 = vmatmul.mubr.f32.gmra.mxu0 %v2627
      %v2791 = vpop.f32.mrf.mxu0
      %v2792 = vadd.f32 0.0, %v2791
      %v2793 = vpop.f32.mrf.mxu0
      %2794 = vmatprep.mubr.f32.mxu0 0.0
      %2795 = vmatmul.mubr.f32.gmra.mxu0 %v2630
      %v2796 = vpop.f32.mrf.mxu0
      %v2797 = vadd.f32 0.0, %v2796
      %v2798 = vpop.f32.mrf.mxu0
      %2799 = vmatprep.mubr.f32.mxu0 0.0
      %2800 = vmatmul.mubr.f32.gmra.mxu0 %v2633
      %v2801 = vpop.f32.mrf.mxu0
      %v2802 = vadd.f32 0.0, %v2801
      %v2803 = vpop.f32.mrf.mxu0
      %2804 = vmatprep.mubr.f32.mxu0 0.0
      %2805 = vmatmul.mubr.f32.gmra.mxu0 %v2636
      %v2806 = vpop.f32.mrf.mxu0
      %v2807 = vadd.f32 0.0, %v2806
      %v2808 = vpop.f32.mrf.mxu0
      %2809 = vmatprep.mubr.f32.mxu0 0.0
      %2810 = vmatmul.mubr.f32.gmra.mxu0 %v2639
      %v2811 = vpop.f32.mrf.mxu0
      %v2812 = vadd.f32 0.0, %v2811
      %v2813 = vpop.f32.mrf.mxu0
      %2814 = vmatprep.mubr.f32.mxu0 0.0
      %2815 = vmatmul.mubr.f32.gmra.mxu0 %v2642
      %v2816 = vpop.f32.mrf.mxu0
      %v2817 = vadd.f32 0.0, %v2816
      %v2818 = vpop.f32.mrf.mxu0
      %2819 = vmatprep.mubr.f32.mxu0 0.0
      %2820 = vmatmul.mubr.f32.gmra.mxu0 %v2645
      %v2821 = vpop.f32.mrf.mxu0
      %v2822 = vadd.f32 0.0, %v2821
      %v2823 = vpop.f32.mrf.mxu0
      %2824 = vmatprep.mubr.f32.mxu0 0.0
      %2825 = vmatmul.mubr.f32.gmra.mxu0 %v2648
      %v2826 = vpop.f32.mrf.mxu0
      %v2827 = vadd.f32 0.0, %v2826
      %v2828 = vpop.f32.mrf.mxu0
      %2829 = vmatprep.mubr.f32.mxu0 0.0
      %2830 = vmatmul.mubr.f32.gmra.mxu0 %v2651
      %v2831 = vpop.f32.mrf.mxu0
      %v2832 = vadd.f32 0.0, %v2831
      %v2833 = vpop.f32.mrf.mxu0
      %2834 = vmatprep.mubr.f32.mxu0 0.0
      %2835 = vmatmul.mubr.f32.gmra.mxu0 %v2654
      %v2836 = vpop.f32.mrf.mxu0
      %v2837 = vadd.f32 0.0, %v2836
      %v2838 = vpop.f32.mrf.mxu0
      %2839 = vmatprep.mubr.f32.mxu0 0.0
      %2840 = vmatmul.mubr.f32.gmra.mxu0 %v2657
      %v2841 = vpop.f32.mrf.mxu0
      %v2842 = vadd.f32 0.0, %v2841
      %v2843 = vpop.f32.mrf.mxu0
      %2844 = vmatprep.mubr.f32.mxu0 0.0
      %2845 = vmatmul.mubr.f32.gmra.mxu0 %v2660
      %v2846 = vpop.f32.mrf.mxu0
      %v2847 = vadd.f32 0.0, %v2846
      %v2848 = vpop.f32.mrf.mxu0
      %2849 = vmatprep.mubr.f32.mxu0 0.0
      %2850 = vmatmul.mubr.f32.gmra.mxu0 %v2663
      %v2851 = vpop.f32.mrf.mxu0
      %v2852 = vadd.f32 0.0, %v2851
      %v2853 = vpop.f32.mrf.mxu0
      %2854 = vmatprep.mubr.f32.mxu0 0.0
      %2855 = vmatmul.mubr.f32.gmra.mxu0 %v2666
      %v2856 = vpop.f32.mrf.mxu0
      %v2857 = vadd.f32 0.0, %v2856
      %v2858 = vpop.f32.mrf.mxu0
      %2859 = vmatprep.mubr.f32.mxu0 0.0
      %2860 = vmatmul.mubr.f32.gmra.mxu0 %v2669
      %v2861 = vpop.f32.mrf.mxu0
      %v2862 = vadd.f32 0.0, %v2861
      %v2863 = vpop.f32.mrf.mxu0
      %2864 = vmatprep.mubr.f32.mxu0 0.0
      %2865 = vmatmul.mubr.f32.gmra.mxu0 %v2672
      %v2866 = vpop.f32.mrf.mxu0
      %v2867 = vadd.f32 0.0, %v2866
      %v2868 = vpop.f32.mrf.mxu0
      %2869 = vmatprep.mubr.f32.mxu0 0.0
      %2870 = vmatmul.mubr.f32.gmra.mxu0 %v2675
      %v2871 = vpop.f32.mrf.mxu0
      %v2872 = vadd.f32 0.0, %v2871
      %v2873 = vpop.f32.mrf.mxu0
      %2874 = vmatprep.mubr.f32.mxu0 0.0
      %2875 = vmatmul.mubr.f32.gmra.mxu0 %v2678
      %v2876 = vpop.f32.mrf.mxu0
      %v2877 = vadd.f32 0.0, %v2876
      %v2878 = vpop.f32.mrf.mxu0
      %2879 = vmatprep.mubr.f32.mxu0 0.0
      %2880 = vmatmul.mubr.f32.gmra.mxu0 %v2681
      %v2881 = vpop.f32.mrf.mxu0
      %v2882 = vadd.f32 0.0, %v2881
      %v2883 = vpop.f32.mrf.mxu0
      %2884 = vmatprep.mubr.f32.mxu0 0.0
      %2885 = vmatmul.mubr.f32.gmra.mxu0 %v2684
      %v2886 = vpop.f32.mrf.mxu0
      %v2887 = vadd.f32 0.0, %v2886
      %v2888 = vpop.f32.mrf.mxu0
      %2889 = vmatprep.mubr.f32.mxu0 0.0
      %2890 = vmatmul.mubr.f32.gmra.mxu0 %v2687
      %v2891 = vpop.f32.mrf.mxu0
      %v2892 = vadd.f32 0.0, %v2891
      %v2893 = vpop.f32.mrf.mxu0
      %2894 = vmatprep.mubr.f32.mxu0 0.0
      %2895 = vmatmul.mubr.f32.gmra.mxu0 %v2690
      %v2896 = vpop.f32.mrf.mxu0
      %v2897 = vadd.f32 0.0, %v2896
      %v2898 = vpop.f32.mrf.mxu0
      %2899 = vmatprep.mubr.f32.mxu0 0.0
      %2900 = vmatmul.mubr.f32.gmra.mxu0 %v2693
      %v2901 = vpop.f32.mrf.mxu0
      %v2902 = vadd.f32 0.0, %v2901
      %v2903 = vpop.f32.mrf.mxu0
      %2904 = vmatprep.mubr.f32.mxu0 0.0
      %2905 = vmatmul.mubr.f32.gmra.mxu0 %v2696
      %v2906 = vpop.f32.mrf.mxu0
      %v2907 = vadd.f32 0.0, %v2906
      %v2908 = vpop.f32.mrf.mxu0
      %2909 = vmatprep.mubr.f32.mxu0 0.0
      %2910 = vmatmul.mubr.f32.gmra.mxu0 %v2699
      %v2911 = vpop.f32.mrf.mxu0
      %v2912 = vadd.f32 0.0, %v2911
      %v2913 = vpop.f32.mrf.mxu0
      %2914 = vmatprep.mubr.f32.mxu0 0.0
      %2915 = vmatmul.mubr.f32.gmra.mxu0 %v2702
      %v2916 = vpop.f32.mrf.mxu0
      %v2917 = vadd.f32 0.0, %v2916
      %v2918 = vpop.f32.mrf.mxu0
      %2919 = vmatprep.mubr.f32.mxu0 0.0
      %2920 = vmatmul.mubr.f32.gmra.mxu0 %v2705
      %v2921 = vpop.f32.mrf.mxu0
      %v2922 = vadd.f32 0.0, %v2921
      %v2923 = vpop.f32.mrf.mxu0
      %2924 = vmatprep.mubr.f32.mxu0 0.0
      %2925 = vmatmul.mubr.f32.gmra.mxu0 %v2708
      %v2926 = vpop.f32.mrf.mxu0
      %v2927 = vadd.f32 0.0, %v2926
      %v2928 = vpop.f32.mrf.mxu0
      %2929 = vmatprep.mubr.f32.mxu0 0.0
      %2930 = vmatmul.mubr.f32.gmra.mxu0 %v2711
      %v2931 = vpop.f32.mrf.mxu0
      %v2932 = vadd.f32 0.0, %v2931
      %v2933 = vpop.f32.mrf.mxu0
      %2934 = vmatprep.mubr.f32.mxu0 0.0
      %2935 = vmatmul.mubr.f32.gmra.mxu0 %v2714
      %v2936 = vpop.f32.mrf.mxu0
      %v2937 = vadd.f32 0.0, %v2936
      %v2938 = vpop.f32.mrf.mxu0
      %2939 = vmatprep.mubr.f32.mxu0 0.0
      %2940 = vmatmul.mubr.f32.gmra.mxu0 %v2717
      %v2941 = vpop.f32.mrf.mxu0
      %v2942 = vadd.f32 0.0, %v2941
      %v2943 = vpop.f32.mrf.mxu0
      %2944 = vmatprep.mubr.f32.mxu0 0.0
      %2945 = vmatmul.mubr.f32.gmra.mxu0 %v2720
      %v2946 = vpop.f32.mrf.mxu0
      %v2947 = vadd.f32 0.0, %v2946
      %v2948 = vpop.f32.mrf.mxu0
      %2949 = vdwg.mxu0
      %v2950 = vadd.f32 %v2559, %v2792
      %v2951 = vadd.f32 %v2560, %v2797
      %v2952 = vadd.f32 %v2561, %v2802
      %v2953 = vadd.f32 %v2562, %v2807
      %v2954 = vadd.f32 %v2563, %v2812
      %v2955 = vadd.f32 %v2564, %v2817
      %v2956 = vadd.f32 %v2565, %v2822
      %v2957 = vadd.f32 %v2566, %v2827
      %v2958 = vadd.f32 %v2567, %v2832
      %v2959 = vadd.f32 %v2568, %v2837
      %v2960 = vadd.f32 %v2569, %v2842
      %v2961 = vadd.f32 %v2570, %v2847
      %v2962 = vadd.f32 %v2571, %v2852
      %v2963 = vadd.f32 %v2572, %v2857
      %v2964 = vadd.f32 %v2573, %v2862
      %v2965 = vadd.f32 %v2574, %v2867
      %v2966 = vadd.f32 %v2575, %v2872
      %v2967 = vadd.f32 %v2576, %v2877
      %v2968 = vadd.f32 %v2577, %v2882
      %v2969 = vadd.f32 %v2578, %v2887
      %v2970 = vadd.f32 %v2579, %v2892
      %v2971 = vadd.f32 %v2580, %v2897
      %v2972 = vadd.f32 %v2581, %v2902
      %v2973 = vadd.f32 %v2582, %v2907
      %v2974 = vadd.f32 %v2583, %v2912
      %v2975 = vadd.f32 %v2584, %v2917
      %v2976 = vadd.f32 %v2585, %v2922
      %v2977 = vadd.f32 %v2586, %v2927
      %v2978 = vadd.f32 %v2587, %v2932
      %v2979 = vadd.f32 %v2588, %v2937
      %v2980 = vadd.f32 %v2589, %v2942
      %v2981 = vadd.f32 %v2590, %v2947
      %v2982 = vld [vmem:[%s2591 + $0x1] sm:$0xff]
      %v2983 = vld [vmem:[%s2591 + $0x9] sm:$0xff]
      %v2984 = vld [vmem:[%s2591 + $0x19] sm:$0xff]
      %v2985 = vld [vmem:[%s2591 + $0x21] sm:$0xff]
      %v2986 = vld [vmem:[%s2591 + $0x31] sm:$0xff]
      %v2987 = vld [vmem:[%s2591 + $0x39] sm:$0xff]
      %v2988 = vld [vmem:[%s2591 + $0x49] sm:$0xff]
      %v2989 = vld [vmem:[%s2591 + $0x51] sm:$0xff]
      %v2990 = vld [vmem:[%s2591 + $0x61] sm:$0xff]
      %v2991 = vld [vmem:[%s2591 + $0x69] sm:$0xff]
      %v2992 = vld [vmem:[%s2591 + $0x79] sm:$0xff]
      %v2993 = vld [vmem:[%s2591 + $0x81] sm:$0xff]
      %v2994 = vld [vmem:[%s2591 + $0x91] sm:$0xff]
      %v2995 = vld [vmem:[%s2591 + $0x99] sm:$0xff]
      %v2996 = vld [vmem:[%s2591 + $0xa9] sm:$0xff]
      %v2997 = vld [vmem:[%s2591 + $0xb1] sm:$0xff]
      %v2998 = vld [vmem:[%s2591 + $0xc1] sm:$0xff]
      %v2999 = vld [vmem:[%s2591 + $0xc9] sm:$0xff]
      %v3000 = vld [vmem:[%s2591 + $0xd9] sm:$0xff]
      %v3001 = vld [vmem:[%s2591 + $0xe1] sm:$0xff]
      %v3002 = vld [vmem:[%s2591 + $0xf1] sm:$0xff]
      %v3003 = vld [vmem:[%s2591 + $0xf9] sm:$0xff]
      %v3004 = vld [vmem:[%s2591 + $0x109] sm:$0xff]
      %v3005 = vld [vmem:[%s2591 + $0x111] sm:$0xff]
      %v3006 = vld [vmem:[%s2591 + $0x121] sm:$0xff]
      %v3007 = vld [vmem:[%s2591 + $0x129] sm:$0xff]
      %v3008 = vld [vmem:[%s2591 + $0x139] sm:$0xff]
      %v3009 = vld [vmem:[%s2591 + $0x141] sm:$0xff]
      %v3010 = vld [vmem:[%s2591 + $0x151] sm:$0xff]
      %v3011 = vld [vmem:[%s2591 + $0x159] sm:$0xff]
      %v3012 = vld [vmem:[%s2591 + $0x169] sm:$0xff]
      %v3013 = vld [vmem:[%s2591 + $0x171] sm:$0xff]
      %s3014 = scalar_lea.vmem %s1, 28
      %v3015 = vld [vmem:[%s3014] sm:$0xf]
      %v3017 = vsel %vm204, %v2982, 0
      %v3020 = vsel %vm204, %v2983, 0
      %v3023 = vsel %vm204, %v2984, 0
      %v3026 = vsel %vm204, %v2985, 0
      %v3029 = vsel %vm204, %v2986, 0
      %v3032 = vsel %vm204, %v2987, 0
      %v3035 = vsel %vm204, %v2988, 0
      %v3038 = vsel %vm204, %v2989, 0
      %v3041 = vsel %vm204, %v2990, 0
      %v3044 = vsel %vm204, %v2991, 0
      %v3047 = vsel %vm204, %v2992, 0
      %v3050 = vsel %vm204, %v2993, 0
      %v3053 = vsel %vm204, %v2994, 0
      %v3056 = vsel %vm204, %v2995, 0
      %v3059 = vsel %vm204, %v2996, 0
      %v3062 = vsel %vm204, %v2997, 0
      %v3065 = vsel %vm204, %v2998, 0
      %v3068 = vsel %vm204, %v2999, 0
      %v3071 = vsel %vm204, %v3000, 0
      %v3074 = vsel %vm204, %v3001, 0
      %v3077 = vsel %vm204, %v3002, 0
      %v3080 = vsel %vm204, %v3003, 0
      %v3083 = vsel %vm204, %v3004, 0
      %v3086 = vsel %vm204, %v3005, 0
      %v3089 = vsel %vm204, %v3006, 0
      %v3092 = vsel %vm204, %v3007, 0
      %v3095 = vsel %vm204, %v3008, 0
      %v3098 = vsel %vm204, %v3009, 0
      %v3101 = vsel %vm204, %v3010, 0
      %v3104 = vsel %vm204, %v3011, 0
      %v3107 = vsel %vm204, %v3012, 0
      %v3110 = vsel %vm204, %v3013, 0
      %v3113 = vsel %vm478, %v3015, 0
      %3115 = vmatprep.subr.mxu0 0.0
      %3116 = vmatpush1.msra.mxu0 0.0
      %3117 = vmatprep.subr.mxu0 0.0
      %3118 = vmatpush1.msra.mxu0 0.0
      %3119 = vmatprep.subr.mxu0 0.0
      %3120 = vmatpush1.msra.mxu0 0.0
      %3121 = vmatprep.subr.mxu0 0.0
      %3122 = vmatpush1.msra.mxu0 0.0
      %3123 = vmatprep.subr.mxu0 0.0
      %3124 = vmatpush1.msra.mxu0 0.0
      %3125 = vmatprep.subr.mxu0 0.0
      %3126 = vmatpush1.msra.mxu0 0.0
      %3127 = vmatprep.subr.mxu0 0.0
      %3128 = vmatpush1.msra.mxu0 0.0
      %3129 = vmatprep.subr.mxu0 0.0
      %3130 = vmatpush1.msra.mxu0 0.0
      %3131 = vmatprep.subr.mxu0 0.0
      %3132 = vmatpush1.msra.mxu0 0.0
      %3133 = vmatprep.subr.mxu0 0.0
      %3134 = vmatpush1.msra.mxu0 0.0
      %3135 = vmatprep.subr.mxu0 0.0
      %3136 = vmatpush1.msra.mxu0 0.0
      %3137 = vmatprep.subr.mxu0 0.0
      %3138 = vmatpush1.msra.mxu0 0.0
      %3139 = vmatprep.subr.mxu0 0.0
      %3140 = vmatpush1.msra.mxu0 0.0
      %3141 = vmatprep.subr.mxu0 0.0
      %3142 = vmatpush1.msra.mxu0 0.0
      %3143 = vmatprep.subr.mxu0 0.0
      %3144 = vmatpush1.msra.mxu0 0.0
      %3145 = vmatprep.subr.mxu0 0.0
      %3146 = vmatpush1.msra.mxu0 %v3113
      %3147 = vmatprep.subr.mxu0 0.0
      %3148 = vmatpush2.msra.mxu0 0.0
      %3149 = vmatprep.subr.mxu0 0.0
      %3150 = vmatpush2.msra.mxu0 0.0
      %3151 = vmatprep.subr.mxu0 0.0
      %3152 = vmatpush2.msra.mxu0 0.0
      %3153 = vmatprep.subr.mxu0 0.0
      %3154 = vmatpush2.msra.mxu0 0.0
      %3155 = vmatprep.subr.mxu0 0.0
      %3156 = vmatpush2.msra.mxu0 0.0
      %3157 = vmatprep.subr.mxu0 0.0
      %3158 = vmatpush2.msra.mxu0 0.0
      %3159 = vmatprep.subr.mxu0 0.0
      %3160 = vmatpush2.msra.mxu0 0.0
      %3161 = vmatprep.subr.mxu0 0.0
      %3162 = vmatpush2.msra.mxu0 0.0
      %3163 = vmatprep.subr.mxu0 0.0
      %3164 = vmatpush2.msra.mxu0 0.0
      %3165 = vmatprep.subr.mxu0 0.0
      %3166 = vmatpush2.msra.mxu0 0.0
      %3167 = vmatprep.subr.mxu0 0.0
      %3168 = vmatpush2.msra.mxu0 0.0
      %3169 = vmatprep.subr.mxu0 0.0
      %3170 = vmatpush2.msra.mxu0 0.0
      %3171 = vmatprep.subr.mxu0 0.0
      %3172 = vmatpush2.msra.mxu0 0.0
      %3173 = vmatprep.subr.mxu0 0.0
      %3174 = vmatpush2.msra.mxu0 0.0
      %3175 = vmatprep.subr.mxu0 0.0
      %3176 = vmatpush2.msra.mxu0 0.0
      %3177 = vmatprep.subr.mxu0 0.0
      %3178 = vmatpush2.msra.mxu0 0.0
      %3179 = vmatprep.mubr.f32.mxu0 0.0
      %3180 = vmatmul.mubr.f32.gmra.mxu0 %v3017
      %v3181 = vpop.f32.mrf.mxu0
      %v3182 = vadd.f32 0.0, %v3181
      %v3183 = vpop.f32.mrf.mxu0
      %3184 = vmatprep.mubr.f32.mxu0 0.0
      %3185 = vmatmul.mubr.f32.gmra.mxu0 %v3020
      %v3186 = vpop.f32.mrf.mxu0
      %v3187 = vadd.f32 0.0, %v3186
      %v3188 = vpop.f32.mrf.mxu0
      %3189 = vmatprep.mubr.f32.mxu0 0.0
      %3190 = vmatmul.mubr.f32.gmra.mxu0 %v3023
      %v3191 = vpop.f32.mrf.mxu0
      %v3192 = vadd.f32 0.0, %v3191
      %v3193 = vpop.f32.mrf.mxu0
      %3194 = vmatprep.mubr.f32.mxu0 0.0
      %3195 = vmatmul.mubr.f32.gmra.mxu0 %v3026
      %v3196 = vpop.f32.mrf.mxu0
      %v3197 = vadd.f32 0.0, %v3196
      %v3198 = vpop.f32.mrf.mxu0
      %3199 = vmatprep.mubr.f32.mxu0 0.0
      %3200 = vmatmul.mubr.f32.gmra.mxu0 %v3029
      %v3201 = vpop.f32.mrf.mxu0
      %v3202 = vadd.f32 0.0, %v3201
      %v3203 = vpop.f32.mrf.mxu0
      %3204 = vmatprep.mubr.f32.mxu0 0.0
      %3205 = vmatmul.mubr.f32.gmra.mxu0 %v3032
      %v3206 = vpop.f32.mrf.mxu0
      %v3207 = vadd.f32 0.0, %v3206
      %v3208 = vpop.f32.mrf.mxu0
      %3209 = vmatprep.mubr.f32.mxu0 0.0
      %3210 = vmatmul.mubr.f32.gmra.mxu0 %v3035
      %v3211 = vpop.f32.mrf.mxu0
      %v3212 = vadd.f32 0.0, %v3211
      %v3213 = vpop.f32.mrf.mxu0
      %3214 = vmatprep.mubr.f32.mxu0 0.0
      %3215 = vmatmul.mubr.f32.gmra.mxu0 %v3038
      %v3216 = vpop.f32.mrf.mxu0
      %v3217 = vadd.f32 0.0, %v3216
      %v3218 = vpop.f32.mrf.mxu0
      %3219 = vmatprep.mubr.f32.mxu0 0.0
      %3220 = vmatmul.mubr.f32.gmra.mxu0 %v3041
      %v3221 = vpop.f32.mrf.mxu0
      %v3222 = vadd.f32 0.0, %v3221
      %v3223 = vpop.f32.mrf.mxu0
      %3224 = vmatprep.mubr.f32.mxu0 0.0
      %3225 = vmatmul.mubr.f32.gmra.mxu0 %v3044
      %v3226 = vpop.f32.mrf.mxu0
      %v3227 = vadd.f32 0.0, %v3226
      %v3228 = vpop.f32.mrf.mxu0
      %3229 = vmatprep.mubr.f32.mxu0 0.0
      %3230 = vmatmul.mubr.f32.gmra.mxu0 %v3047
      %v3231 = vpop.f32.mrf.mxu0
      %v3232 = vadd.f32 0.0, %v3231
      %v3233 = vpop.f32.mrf.mxu0
      %3234 = vmatprep.mubr.f32.mxu0 0.0
      %3235 = vmatmul.mubr.f32.gmra.mxu0 %v3050
      %v3236 = vpop.f32.mrf.mxu0
      %v3237 = vadd.f32 0.0, %v3236
      %v3238 = vpop.f32.mrf.mxu0
      %3239 = vmatprep.mubr.f32.mxu0 0.0
      %3240 = vmatmul.mubr.f32.gmra.mxu0 %v3053
      %v3241 = vpop.f32.mrf.mxu0
      %v3242 = vadd.f32 0.0, %v3241
      %v3243 = vpop.f32.mrf.mxu0
      %3244 = vmatprep.mubr.f32.mxu0 0.0
      %3245 = vmatmul.mubr.f32.gmra.mxu0 %v3056
      %v3246 = vpop.f32.mrf.mxu0
      %v3247 = vadd.f32 0.0, %v3246
      %v3248 = vpop.f32.mrf.mxu0
      %3249 = vmatprep.mubr.f32.mxu0 0.0
      %3250 = vmatmul.mubr.f32.gmra.mxu0 %v3059
      %v3251 = vpop.f32.mrf.mxu0
      %v3252 = vadd.f32 0.0, %v3251
      %v3253 = vpop.f32.mrf.mxu0
      %3254 = vmatprep.mubr.f32.mxu0 0.0
      %3255 = vmatmul.mubr.f32.gmra.mxu0 %v3062
      %v3256 = vpop.f32.mrf.mxu0
      %v3257 = vadd.f32 0.0, %v3256
      %v3258 = vpop.f32.mrf.mxu0
      %3259 = vmatprep.mubr.f32.mxu0 0.0
      %3260 = vmatmul.mubr.f32.gmra.mxu0 %v3065
      %v3261 = vpop.f32.mrf.mxu0
      %v3262 = vadd.f32 0.0, %v3261
      %v3263 = vpop.f32.mrf.mxu0
      %3264 = vmatprep.mubr.f32.mxu0 0.0
      %3265 = vmatmul.mubr.f32.gmra.mxu0 %v3068
      %v3266 = vpop.f32.mrf.mxu0
      %v3267 = vadd.f32 0.0, %v3266
      %v3268 = vpop.f32.mrf.mxu0
      %3269 = vmatprep.mubr.f32.mxu0 0.0
      %3270 = vmatmul.mubr.f32.gmra.mxu0 %v3071
      %v3271 = vpop.f32.mrf.mxu0
      %v3272 = vadd.f32 0.0, %v3271
      %v3273 = vpop.f32.mrf.mxu0
      %3274 = vmatprep.mubr.f32.mxu0 0.0
      %3275 = vmatmul.mubr.f32.gmra.mxu0 %v3074
      %v3276 = vpop.f32.mrf.mxu0
      %v3277 = vadd.f32 0.0, %v3276
      %v3278 = vpop.f32.mrf.mxu0
      %3279 = vmatprep.mubr.f32.mxu0 0.0
      %3280 = vmatmul.mubr.f32.gmra.mxu0 %v3077
      %v3281 = vpop.f32.mrf.mxu0
      %v3282 = vadd.f32 0.0, %v3281
      %v3283 = vpop.f32.mrf.mxu0
      %3284 = vmatprep.mubr.f32.mxu0 0.0
      %3285 = vmatmul.mubr.f32.gmra.mxu0 %v3080
      %v3286 = vpop.f32.mrf.mxu0
      %v3287 = vadd.f32 0.0, %v3286
      %v3288 = vpop.f32.mrf.mxu0
      %3289 = vmatprep.mubr.f32.mxu0 0.0
      %3290 = vmatmul.mubr.f32.gmra.mxu0 %v3083
      %v3291 = vpop.f32.mrf.mxu0
      %v3292 = vadd.f32 0.0, %v3291
      %v3293 = vpop.f32.mrf.mxu0
      %3294 = vmatprep.mubr.f32.mxu0 0.0
      %3295 = vmatmul.mubr.f32.gmra.mxu0 %v3086
      %v3296 = vpop.f32.mrf.mxu0
      %v3297 = vadd.f32 0.0, %v3296
      %v3298 = vpop.f32.mrf.mxu0
      %3299 = vmatprep.mubr.f32.mxu0 0.0
      %3300 = vmatmul.mubr.f32.gmra.mxu0 %v3089
      %v3301 = vpop.f32.mrf.mxu0
      %v3302 = vadd.f32 0.0, %v3301
      %v3303 = vpop.f32.mrf.mxu0
      %3304 = vmatprep.mubr.f32.mxu0 0.0
      %3305 = vmatmul.mubr.f32.gmra.mxu0 %v3092
      %v3306 = vpop.f32.mrf.mxu0
      %v3307 = vadd.f32 0.0, %v3306
      %v3308 = vpop.f32.mrf.mxu0
      %3309 = vmatprep.mubr.f32.mxu0 0.0
      %3310 = vmatmul.mubr.f32.gmra.mxu0 %v3095
      %v3311 = vpop.f32.mrf.mxu0
      %v3312 = vadd.f32 0.0, %v3311
      %v3313 = vpop.f32.mrf.mxu0
      %3314 = vmatprep.mubr.f32.mxu0 0.0
      %3315 = vmatmul.mubr.f32.gmra.mxu0 %v3098
      %v3316 = vpop.f32.mrf.mxu0
      %v3317 = vadd.f32 0.0, %v3316
      %v3318 = vpop.f32.mrf.mxu0
      %3319 = vmatprep.mubr.f32.mxu0 0.0
      %3320 = vmatmul.mubr.f32.gmra.mxu0 %v3101
      %v3321 = vpop.f32.mrf.mxu0
      %v3322 = vadd.f32 0.0, %v3321
      %v3323 = vpop.f32.mrf.mxu0
      %3324 = vmatprep.mubr.f32.mxu0 0.0
      %3325 = vmatmul.mubr.f32.gmra.mxu0 %v3104
      %v3326 = vpop.f32.mrf.mxu0
      %v3327 = vadd.f32 0.0, %v3326
      %v3328 = vpop.f32.mrf.mxu0
      %3329 = vmatprep.mubr.f32.mxu0 0.0
      %3330 = vmatmul.mubr.f32.gmra.mxu0 %v3107
      %v3331 = vpop.f32.mrf.mxu0
      %v3332 = vadd.f32 0.0, %v3331
      %v3333 = vpop.f32.mrf.mxu0
      %3334 = vmatprep.mubr.f32.mxu0 0.0
      %3335 = vmatmul.mubr.f32.gmra.mxu0 %v3110
      %v3336 = vpop.f32.mrf.mxu0
      %v3337 = vadd.f32 0.0, %v3336
      %v3338 = vpop.f32.mrf.mxu0
      %3339 = vdwg.mxu0
      %v3340 = vadd.f32 %v2950, %v3182
      %v3341 = vadd.f32 %v2951, %v3187
      %v3342 = vadd.f32 %v2952, %v3192
      %v3343 = vadd.f32 %v2953, %v3197
      %v3344 = vadd.f32 %v2954, %v3202
      %v3345 = vadd.f32 %v2955, %v3207
      %v3346 = vadd.f32 %v2956, %v3212
      %v3347 = vadd.f32 %v2957, %v3217
      %v3348 = vadd.f32 %v2958, %v3222
      %v3349 = vadd.f32 %v2959, %v3227
      %v3350 = vadd.f32 %v2960, %v3232
      %v3351 = vadd.f32 %v2961, %v3237
      %v3352 = vadd.f32 %v2962, %v3242
      %v3353 = vadd.f32 %v2963, %v3247
      %v3354 = vadd.f32 %v2964, %v3252
      %v3355 = vadd.f32 %v2965, %v3257
      %v3356 = vadd.f32 %v2966, %v3262
      %v3357 = vadd.f32 %v2967, %v3267
      %v3358 = vadd.f32 %v2968, %v3272
      %v3359 = vadd.f32 %v2969, %v3277
      %v3360 = vadd.f32 %v2970, %v3282
      %v3361 = vadd.f32 %v2971, %v3287
      %v3362 = vadd.f32 %v2972, %v3292
      %v3363 = vadd.f32 %v2973, %v3297
      %v3364 = vadd.f32 %v2974, %v3302
      %v3365 = vadd.f32 %v2975, %v3307
      %v3366 = vadd.f32 %v2976, %v3312
      %v3367 = vadd.f32 %v2977, %v3317
      %v3368 = vadd.f32 %v2978, %v3322
      %v3369 = vadd.f32 %v2979, %v3327
      %v3370 = vadd.f32 %v2980, %v3332
      %v3371 = vadd.f32 %v2981, %v3337
      %v3372 = vld [vmem:[%s2591 + $0x2] sm:$0xff]
      %v3373 = vld [vmem:[%s2591 + $0xa] sm:$0xff]
      %v3374 = vld [vmem:[%s2591 + $0x1a] sm:$0xff]
      %v3375 = vld [vmem:[%s2591 + $0x22] sm:$0xff]
      %v3376 = vld [vmem:[%s2591 + $0x32] sm:$0xff]
      %v3377 = vld [vmem:[%s2591 + $0x3a] sm:$0xff]
      %v3378 = vld [vmem:[%s2591 + $0x4a] sm:$0xff]
      %v3379 = vld [vmem:[%s2591 + $0x52] sm:$0xff]
      %v3380 = vld [vmem:[%s2591 + $0x62] sm:$0xff]
      %v3381 = vld [vmem:[%s2591 + $0x6a] sm:$0xff]
      %v3382 = vld [vmem:[%s2591 + $0x7a] sm:$0xff]
      %v3383 = vld [vmem:[%s2591 + $0x82] sm:$0xff]
      %v3384 = vld [vmem:[%s2591 + $0x92] sm:$0xff]
      %v3385 = vld [vmem:[%s2591 + $0x9a] sm:$0xff]
      %v3386 = vld [vmem:[%s2591 + $0xaa] sm:$0xff]
      %v3387 = vld [vmem:[%s2591 + $0xb2] sm:$0xff]
      %v3388 = vld [vmem:[%s2591 + $0xc2] sm:$0xff]
      %v3389 = vld [vmem:[%s2591 + $0xca] sm:$0xff]
      %v3390 = vld [vmem:[%s2591 + $0xda] sm:$0xff]
      %v3391 = vld [vmem:[%s2591 + $0xe2] sm:$0xff]
      %v3392 = vld [vmem:[%s2591 + $0xf2] sm:$0xff]
      %v3393 = vld [vmem:[%s2591 + $0xfa] sm:$0xff]
      %v3394 = vld [vmem:[%s2591 + $0x10a] sm:$0xff]
      %v3395 = vld [vmem:[%s2591 + $0x112] sm:$0xff]
      %v3396 = vld [vmem:[%s2591 + $0x122] sm:$0xff]
      %v3397 = vld [vmem:[%s2591 + $0x12a] sm:$0xff]
      %v3398 = vld [vmem:[%s2591 + $0x13a] sm:$0xff]
      %v3399 = vld [vmem:[%s2591 + $0x142] sm:$0xff]
      %v3400 = vld [vmem:[%s2591 + $0x152] sm:$0xff]
      %v3401 = vld [vmem:[%s2591 + $0x15a] sm:$0xff]
      %v3402 = vld [vmem:[%s2591 + $0x16a] sm:$0xff]
      %v3403 = vld [vmem:[%s2591 + $0x172] sm:$0xff]
      %s3404 = scalar_lea.vmem %s1, 32
      %v3405 = vld [vmem:[%s3404] sm:$0xf]
      %v3407 = vsel %vm204, %v3372, 0
      %v3410 = vsel %vm204, %v3373, 0
      %v3413 = vsel %vm204, %v3374, 0
      %v3416 = vsel %vm204, %v3375, 0
      %v3419 = vsel %vm204, %v3376, 0
      %v3422 = vsel %vm204, %v3377, 0
      %v3425 = vsel %vm204, %v3378, 0
      %v3428 = vsel %vm204, %v3379, 0
      %v3431 = vsel %vm204, %v3380, 0
      %v3434 = vsel %vm204, %v3381, 0
      %v3437 = vsel %vm204, %v3382, 0
      %v3440 = vsel %vm204, %v3383, 0
      %v3443 = vsel %vm204, %v3384, 0
      %v3446 = vsel %vm204, %v3385, 0
      %v3449 = vsel %vm204, %v3386, 0
      %v3452 = vsel %vm204, %v3387, 0
      %v3455 = vsel %vm204, %v3388, 0
      %v3458 = vsel %vm204, %v3389, 0
      %v3461 = vsel %vm204, %v3390, 0
      %v3464 = vsel %vm204, %v3391, 0
      %v3467 = vsel %vm204, %v3392, 0
      %v3470 = vsel %vm204, %v3393, 0
      %v3473 = vsel %vm204, %v3394, 0
      %v3476 = vsel %vm204, %v3395, 0
      %v3479 = vsel %vm204, %v3396, 0
      %v3482 = vsel %vm204, %v3397, 0
      %v3485 = vsel %vm204, %v3398, 0
      %v3488 = vsel %vm204, %v3399, 0
      %v3491 = vsel %vm204, %v3400, 0
      %v3494 = vsel %vm204, %v3401, 0
      %v3497 = vsel %vm204, %v3402, 0
      %v3500 = vsel %vm204, %v3403, 0
      %v3503 = vsel %vm478, %v3405, 0
      %3505 = vmatprep.subr.mxu0 0.0
      %3506 = vmatpush1.msra.mxu0 0.0
      %3507 = vmatprep.subr.mxu0 0.0
      %3508 = vmatpush1.msra.mxu0 0.0
      %3509 = vmatprep.subr.mxu0 0.0
      %3510 = vmatpush1.msra.mxu0 0.0
      %3511 = vmatprep.subr.mxu0 0.0
      %3512 = vmatpush1.msra.mxu0 0.0
      %3513 = vmatprep.subr.mxu0 0.0
      %3514 = vmatpush1.msra.mxu0 0.0
      %3515 = vmatprep.subr.mxu0 0.0
      %3516 = vmatpush1.msra.mxu0 0.0
      %3517 = vmatprep.subr.mxu0 0.0
      %3518 = vmatpush1.msra.mxu0 0.0
      %3519 = vmatprep.subr.mxu0 0.0
      %3520 = vmatpush1.msra.mxu0 0.0
      %3521 = vmatprep.subr.mxu0 0.0
      %3522 = vmatpush1.msra.mxu0 0.0
      %3523 = vmatprep.subr.mxu0 0.0
      %3524 = vmatpush1.msra.mxu0 0.0
      %3525 = vmatprep.subr.mxu0 0.0
      %3526 = vmatpush1.msra.mxu0 0.0
      %3527 = vmatprep.subr.mxu0 0.0
      %3528 = vmatpush1.msra.mxu0 0.0
      %3529 = vmatprep.subr.mxu0 0.0
      %3530 = vmatpush1.msra.mxu0 0.0
      %3531 = vmatprep.subr.mxu0 0.0
      %3532 = vmatpush1.msra.mxu0 0.0
      %3533 = vmatprep.subr.mxu0 0.0
      %3534 = vmatpush1.msra.mxu0 0.0
      %3535 = vmatprep.subr.mxu0 0.0
      %3536 = vmatpush1.msra.mxu0 %v3503
      %3537 = vmatprep.subr.mxu0 0.0
      %3538 = vmatpush2.msra.mxu0 0.0
      %3539 = vmatprep.subr.mxu0 0.0
      %3540 = vmatpush2.msra.mxu0 0.0
      %3541 = vmatprep.subr.mxu0 0.0
      %3542 = vmatpush2.msra.mxu0 0.0
      %3543 = vmatprep.subr.mxu0 0.0
      %3544 = vmatpush2.msra.mxu0 0.0
      %3545 = vmatprep.subr.mxu0 0.0
      %3546 = vmatpush2.msra.mxu0 0.0
      %3547 = vmatprep.subr.mxu0 0.0
      %3548 = vmatpush2.msra.mxu0 0.0
      %3549 = vmatprep.subr.mxu0 0.0
      %3550 = vmatpush2.msra.mxu0 0.0
      %3551 = vmatprep.subr.mxu0 0.0
      %3552 = vmatpush2.msra.mxu0 0.0
      %3553 = vmatprep.subr.mxu0 0.0
      %3554 = vmatpush2.msra.mxu0 0.0
      %3555 = vmatprep.subr.mxu0 0.0
      %3556 = vmatpush2.msra.mxu0 0.0
      %3557 = vmatprep.subr.mxu0 0.0
      %3558 = vmatpush2.msra.mxu0 0.0
      %3559 = vmatprep.subr.mxu0 0.0
      %3560 = vmatpush2.msra.mxu0 0.0
      %3561 = vmatprep.subr.mxu0 0.0
      %3562 = vmatpush2.msra.mxu0 0.0
      %3563 = vmatprep.subr.mxu0 0.0
      %3564 = vmatpush2.msra.mxu0 0.0
      %3565 = vmatprep.subr.mxu0 0.0
      %3566 = vmatpush2.msra.mxu0 0.0
      %3567 = vmatprep.subr.mxu0 0.0
      %3568 = vmatpush2.msra.mxu0 0.0
      %3569 = vmatprep.mubr.f32.mxu0 0.0
      %3570 = vmatmul.mubr.f32.gmra.mxu0 %v3407
      %v3571 = vpop.f32.mrf.mxu0
      %v3572 = vadd.f32 0.0, %v3571
      %v3573 = vpop.f32.mrf.mxu0
      %3574 = vmatprep.mubr.f32.mxu0 0.0
      %3575 = vmatmul.mubr.f32.gmra.mxu0 %v3410
      %v3576 = vpop.f32.mrf.mxu0
      %v3577 = vadd.f32 0.0, %v3576
      %v3578 = vpop.f32.mrf.mxu0
      %3579 = vmatprep.mubr.f32.mxu0 0.0
      %3580 = vmatmul.mubr.f32.gmra.mxu0 %v3413
      %v3581 = vpop.f32.mrf.mxu0
      %v3582 = vadd.f32 0.0, %v3581
      %v3583 = vpop.f32.mrf.mxu0
      %3584 = vmatprep.mubr.f32.mxu0 0.0
      %3585 = vmatmul.mubr.f32.gmra.mxu0 %v3416
      %v3586 = vpop.f32.mrf.mxu0
      %v3587 = vadd.f32 0.0, %v3586
      %v3588 = vpop.f32.mrf.mxu0
      %3589 = vmatprep.mubr.f32.mxu0 0.0
      %3590 = vmatmul.mubr.f32.gmra.mxu0 %v3419
      %v3591 = vpop.f32.mrf.mxu0
      %v3592 = vadd.f32 0.0, %v3591
      %v3593 = vpop.f32.mrf.mxu0
      %3594 = vmatprep.mubr.f32.mxu0 0.0
      %3595 = vmatmul.mubr.f32.gmra.mxu0 %v3422
      %v3596 = vpop.f32.mrf.mxu0
      %v3597 = vadd.f32 0.0, %v3596
      %v3598 = vpop.f32.mrf.mxu0
      %3599 = vmatprep.mubr.f32.mxu0 0.0
      %3600 = vmatmul.mubr.f32.gmra.mxu0 %v3425
      %v3601 = vpop.f32.mrf.mxu0
      %v3602 = vadd.f32 0.0, %v3601
      %v3603 = vpop.f32.mrf.mxu0
      %3604 = vmatprep.mubr.f32.mxu0 0.0
      %3605 = vmatmul.mubr.f32.gmra.mxu0 %v3428
      %v3606 = vpop.f32.mrf.mxu0
      %v3607 = vadd.f32 0.0, %v3606
      %v3608 = vpop.f32.mrf.mxu0
      %3609 = vmatprep.mubr.f32.mxu0 0.0
      %3610 = vmatmul.mubr.f32.gmra.mxu0 %v3431
      %v3611 = vpop.f32.mrf.mxu0
      %v3612 = vadd.f32 0.0, %v3611
      %v3613 = vpop.f32.mrf.mxu0
      %3614 = vmatprep.mubr.f32.mxu0 0.0
      %3615 = vmatmul.mubr.f32.gmra.mxu0 %v3434
      %v3616 = vpop.f32.mrf.mxu0
      %v3617 = vadd.f32 0.0, %v3616
      %v3618 = vpop.f32.mrf.mxu0
      %3619 = vmatprep.mubr.f32.mxu0 0.0
      %3620 = vmatmul.mubr.f32.gmra.mxu0 %v3437
      %v3621 = vpop.f32.mrf.mxu0
      %v3622 = vadd.f32 0.0, %v3621
      %v3623 = vpop.f32.mrf.mxu0
      %3624 = vmatprep.mubr.f32.mxu0 0.0
      %3625 = vmatmul.mubr.f32.gmra.mxu0 %v3440
      %v3626 = vpop.f32.mrf.mxu0
      %v3627 = vadd.f32 0.0, %v3626
      %v3628 = vpop.f32.mrf.mxu0
      %3629 = vmatprep.mubr.f32.mxu0 0.0
      %3630 = vmatmul.mubr.f32.gmra.mxu0 %v3443
      %v3631 = vpop.f32.mrf.mxu0
      %v3632 = vadd.f32 0.0, %v3631
      %v3633 = vpop.f32.mrf.mxu0
      %3634 = vmatprep.mubr.f32.mxu0 0.0
      %3635 = vmatmul.mubr.f32.gmra.mxu0 %v3446
      %v3636 = vpop.f32.mrf.mxu0
      %v3637 = vadd.f32 0.0, %v3636
      %v3638 = vpop.f32.mrf.mxu0
      %3639 = vmatprep.mubr.f32.mxu0 0.0
      %3640 = vmatmul.mubr.f32.gmra.mxu0 %v3449
      %v3641 = vpop.f32.mrf.mxu0
      %v3642 = vadd.f32 0.0, %v3641
      %v3643 = vpop.f32.mrf.mxu0
      %3644 = vmatprep.mubr.f32.mxu0 0.0
      %3645 = vmatmul.mubr.f32.gmra.mxu0 %v3452
      %v3646 = vpop.f32.mrf.mxu0
      %v3647 = vadd.f32 0.0, %v3646
      %v3648 = vpop.f32.mrf.mxu0
      %3649 = vmatprep.mubr.f32.mxu0 0.0
      %3650 = vmatmul.mubr.f32.gmra.mxu0 %v3455
      %v3651 = vpop.f32.mrf.mxu0
      %v3652 = vadd.f32 0.0, %v3651
      %v3653 = vpop.f32.mrf.mxu0
      %3654 = vmatprep.mubr.f32.mxu0 0.0
      %3655 = vmatmul.mubr.f32.gmra.mxu0 %v3458
      %v3656 = vpop.f32.mrf.mxu0
      %v3657 = vadd.f32 0.0, %v3656
      %v3658 = vpop.f32.mrf.mxu0
      %3659 = vmatprep.mubr.f32.mxu0 0.0
      %3660 = vmatmul.mubr.f32.gmra.mxu0 %v3461
      %v3661 = vpop.f32.mrf.mxu0
      %v3662 = vadd.f32 0.0, %v3661
      %v3663 = vpop.f32.mrf.mxu0
      %3664 = vmatprep.mubr.f32.mxu0 0.0
      %3665 = vmatmul.mubr.f32.gmra.mxu0 %v3464
      %v3666 = vpop.f32.mrf.mxu0
      %v3667 = vadd.f32 0.0, %v3666
      %v3668 = vpop.f32.mrf.mxu0
      %3669 = vmatprep.mubr.f32.mxu0 0.0
      %3670 = vmatmul.mubr.f32.gmra.mxu0 %v3467
      %v3671 = vpop.f32.mrf.mxu0
      %v3672 = vadd.f32 0.0, %v3671
      %v3673 = vpop.f32.mrf.mxu0
      %3674 = vmatprep.mubr.f32.mxu0 0.0
      %3675 = vmatmul.mubr.f32.gmra.mxu0 %v3470
      %v3676 = vpop.f32.mrf.mxu0
      %v3677 = vadd.f32 0.0, %v3676
      %v3678 = vpop.f32.mrf.mxu0
      %3679 = vmatprep.mubr.f32.mxu0 0.0
      %3680 = vmatmul.mubr.f32.gmra.mxu0 %v3473
      %v3681 = vpop.f32.mrf.mxu0
      %v3682 = vadd.f32 0.0, %v3681
      %v3683 = vpop.f32.mrf.mxu0
      %3684 = vmatprep.mubr.f32.mxu0 0.0
      %3685 = vmatmul.mubr.f32.gmra.mxu0 %v3476
      %v3686 = vpop.f32.mrf.mxu0
      %v3687 = vadd.f32 0.0, %v3686
      %v3688 = vpop.f32.mrf.mxu0
      %3689 = vmatprep.mubr.f32.mxu0 0.0
      %3690 = vmatmul.mubr.f32.gmra.mxu0 %v3479
      %v3691 = vpop.f32.mrf.mxu0
      %v3692 = vadd.f32 0.0, %v3691
      %v3693 = vpop.f32.mrf.mxu0
      %3694 = vmatprep.mubr.f32.mxu0 0.0
      %3695 = vmatmul.mubr.f32.gmra.mxu0 %v3482
      %v3696 = vpop.f32.mrf.mxu0
      %v3697 = vadd.f32 0.0, %v3696
      %v3698 = vpop.f32.mrf.mxu0
      %3699 = vmatprep.mubr.f32.mxu0 0.0
      %3700 = vmatmul.mubr.f32.gmra.mxu0 %v3485
      %v3701 = vpop.f32.mrf.mxu0
      %v3702 = vadd.f32 0.0, %v3701
      %v3703 = vpop.f32.mrf.mxu0
      %3704 = vmatprep.mubr.f32.mxu0 0.0
      %3705 = vmatmul.mubr.f32.gmra.mxu0 %v3488
      %v3706 = vpop.f32.mrf.mxu0
      %v3707 = vadd.f32 0.0, %v3706
      %v3708 = vpop.f32.mrf.mxu0
      %3709 = vmatprep.mubr.f32.mxu0 0.0
      %3710 = vmatmul.mubr.f32.gmra.mxu0 %v3491
      %v3711 = vpop.f32.mrf.mxu0
      %v3712 = vadd.f32 0.0, %v3711
      %v3713 = vpop.f32.mrf.mxu0
      %3714 = vmatprep.mubr.f32.mxu0 0.0
      %3715 = vmatmul.mubr.f32.gmra.mxu0 %v3494
      %v3716 = vpop.f32.mrf.mxu0
      %v3717 = vadd.f32 0.0, %v3716
      %v3718 = vpop.f32.mrf.mxu0
      %3719 = vmatprep.mubr.f32.mxu0 0.0
      %3720 = vmatmul.mubr.f32.gmra.mxu0 %v3497
      %v3721 = vpop.f32.mrf.mxu0
      %v3722 = vadd.f32 0.0, %v3721
      %v3723 = vpop.f32.mrf.mxu0
      %3724 = vmatprep.mubr.f32.mxu0 0.0
      %3725 = vmatmul.mubr.f32.gmra.mxu0 %v3500
      %v3726 = vpop.f32.mrf.mxu0
      %v3727 = vadd.f32 0.0, %v3726
      %v3728 = vpop.f32.mrf.mxu0
      %3729 = vdwg.mxu0
      %v3730 = vadd.f32 %v3340, %v3572
      %v3731 = vadd.f32 %v3341, %v3577
      %v3732 = vadd.f32 %v3342, %v3582
      %v3733 = vadd.f32 %v3343, %v3587
      %v3734 = vadd.f32 %v3344, %v3592
      %v3735 = vadd.f32 %v3345, %v3597
      %v3736 = vadd.f32 %v3346, %v3602
      %v3737 = vadd.f32 %v3347, %v3607
      %v3738 = vadd.f32 %v3348, %v3612
      %v3739 = vadd.f32 %v3349, %v3617
      %v3740 = vadd.f32 %v3350, %v3622
      %v3741 = vadd.f32 %v3351, %v3627
      %v3742 = vadd.f32 %v3352, %v3632
      %v3743 = vadd.f32 %v3353, %v3637
      %v3744 = vadd.f32 %v3354, %v3642
      %v3745 = vadd.f32 %v3355, %v3647
      %v3746 = vadd.f32 %v3356, %v3652
      %v3747 = vadd.f32 %v3357, %v3657
      %v3748 = vadd.f32 %v3358, %v3662
      %v3749 = vadd.f32 %v3359, %v3667
      %v3750 = vadd.f32 %v3360, %v3672
      %v3751 = vadd.f32 %v3361, %v3677
      %v3752 = vadd.f32 %v3362, %v3682
      %v3753 = vadd.f32 %v3363, %v3687
      %v3754 = vadd.f32 %v3364, %v3692
      %v3755 = vadd.f32 %v3365, %v3697
      %v3756 = vadd.f32 %v3366, %v3702
      %v3757 = vadd.f32 %v3367, %v3707
      %v3758 = vadd.f32 %v3368, %v3712
      %v3759 = vadd.f32 %v3369, %v3717
      %v3760 = vadd.f32 %v3370, %v3722
      %v3761 = vadd.f32 %v3371, %v3727
      %v3762 = vsel %vm204, %v3730, 0.0
      %v3763 = vsel %vm204, %v3731, 0.0
      %v3764 = vadd.f32 %v3762, %v3763
      %v3765 = vsel %vm204, %v3732, 0.0
      %v3766 = vadd.f32 %v3764, %v3765
      %v3767 = vsel %vm204, %v3733, 0.0
      %v3768 = vadd.f32 %v3766, %v3767
      %v3769 = vsel %vm204, %v3734, 0.0
      %v3770 = vadd.f32 %v3768, %v3769
      %v3771 = vsel %vm204, %v3735, 0.0
      %v3772 = vadd.f32 %v3770, %v3771
      %v3773 = vsel %vm204, %v3736, 0.0
      %v3774 = vadd.f32 %v3772, %v3773
      %v3775 = vsel %vm204, %v3737, 0.0
      %v3776 = vadd.f32 %v3774, %v3775
      %v3777 = vsel %vm204, %v3738, 0.0
      %v3778 = vadd.f32 %v3776, %v3777
      %v3779 = vsel %vm204, %v3739, 0.0
      %v3780 = vadd.f32 %v3778, %v3779
      %v3781 = vsel %vm204, %v3740, 0.0
      %v3782 = vadd.f32 %v3780, %v3781
      %v3783 = vsel %vm204, %v3741, 0.0
      %v3784 = vadd.f32 %v3782, %v3783
      %v3785 = vsel %vm204, %v3742, 0.0
      %v3786 = vadd.f32 %v3784, %v3785
      %v3787 = vsel %vm204, %v3743, 0.0
      %v3788 = vadd.f32 %v3786, %v3787
      %v3789 = vsel %vm204, %v3744, 0.0
      %v3790 = vadd.f32 %v3788, %v3789
      %v3791 = vsel %vm204, %v3745, 0.0
      %v3792 = vadd.f32 %v3790, %v3791
      %v3793 = vsel %vm204, %v3746, 0.0
      %v3794 = vadd.f32 %v3792, %v3793
      %v3795 = vsel %vm204, %v3747, 0.0
      %v3796 = vadd.f32 %v3794, %v3795
      %v3797 = vsel %vm204, %v3748, 0.0
      %v3798 = vadd.f32 %v3796, %v3797
      %v3799 = vsel %vm204, %v3749, 0.0
      %v3800 = vadd.f32 %v3798, %v3799
      %v3801 = vsel %vm204, %v3750, 0.0
      %v3802 = vadd.f32 %v3800, %v3801
      %v3803 = vsel %vm204, %v3751, 0.0
      %v3804 = vadd.f32 %v3802, %v3803
      %v3805 = vsel %vm204, %v3752, 0.0
      %v3806 = vadd.f32 %v3804, %v3805
      %v3807 = vsel %vm204, %v3753, 0.0
      %v3808 = vadd.f32 %v3806, %v3807
      %v3809 = vsel %vm204, %v3754, 0.0
      %v3810 = vadd.f32 %v3808, %v3809
      %v3811 = vsel %vm204, %v3755, 0.0
      %v3812 = vadd.f32 %v3810, %v3811
      %v3813 = vsel %vm204, %v3756, 0.0
      %v3814 = vadd.f32 %v3812, %v3813
      %v3815 = vsel %vm204, %v3757, 0.0
      %v3816 = vadd.f32 %v3814, %v3815
      %v3817 = vsel %vm204, %v3758, 0.0
      %v3818 = vadd.f32 %v3816, %v3817
      %v3819 = vsel %vm204, %v3759, 0.0
      %v3820 = vadd.f32 %v3818, %v3819
      %v3821 = vsel %vm204, %v3760, 0.0
      %v3822 = vadd.f32 %v3820, %v3821
      %v3823 = vsel %vm204, %v3761, 0.0
      %v3824 = vadd.f32 %v3822, %v3823
      %v3825 = vrot.slane %v3824, 4
      %v3826 = vadd.f32 %v3824, %v3825
      %v3827 = vrot.slane %v3826, 2
      %v3828 = vadd.f32 %v3826, %v3827
      %v3829 = vrot.slane %v3828, 1
      %v3830 = vadd.f32 %v3828, %v3829
      %v3831 = vrcp.pop 256.0
      %v3832 = vmul.f32 %v3830, %v3831
      %v3833 = vmul.f32 %v3730, %v3730
      %v3834 = vmul.f32 %v3731, %v3731
      %v3835 = vmul.f32 %v3732, %v3732
      %v3836 = vmul.f32 %v3733, %v3733
      %v3837 = vmul.f32 %v3734, %v3734
      %v3838 = vmul.f32 %v3735, %v3735
      %v3839 = vmul.f32 %v3736, %v3736
      %v3840 = vmul.f32 %v3737, %v3737
      %v3841 = vmul.f32 %v3738, %v3738
      %v3842 = vmul.f32 %v3739, %v3739
      %v3843 = vmul.f32 %v3740, %v3740
      %v3844 = vmul.f32 %v3741, %v3741
      %v3845 = vmul.f32 %v3742, %v3742
      %v3846 = vmul.f32 %v3743, %v3743
      %v3847 = vmul.f32 %v3744, %v3744
      %v3848 = vmul.f32 %v3745, %v3745
      %v3849 = vmul.f32 %v3746, %v3746
      %v3850 = vmul.f32 %v3747, %v3747
      %v3851 = vmul.f32 %v3748, %v3748
      %v3852 = vmul.f32 %v3749, %v3749
      %v3853 = vmul.f32 %v3750, %v3750
      %v3854 = vmul.f32 %v3751, %v3751
      %v3855 = vmul.f32 %v3752, %v3752
      %v3856 = vmul.f32 %v3753, %v3753
      %v3857 = vmul.f32 %v3754, %v3754
      %v3858 = vmul.f32 %v3755, %v3755
      %v3859 = vmul.f32 %v3756, %v3756
      %v3860 = vmul.f32 %v3757, %v3757
      %v3861 = vmul.f32 %v3758, %v3758
      %v3862 = vmul.f32 %v3759, %v3759
      %v3863 = vmul.f32 %v3760, %v3760
      %v3864 = vmul.f32 %v3761, %v3761
      %v3865 = vsel %vm204, %v3833, 0.0
      %v3866 = vsel %vm204, %v3834, 0.0
      %v3867 = vadd.f32 %v3865, %v3866
      %v3868 = vsel %vm204, %v3835, 0.0
      %v3869 = vadd.f32 %v3867, %v3868
      %v3870 = vsel %vm204, %v3836, 0.0
      %v3871 = vadd.f32 %v3869, %v3870
      %v3872 = vsel %vm204, %v3837, 0.0
      %v3873 = vadd.f32 %v3871, %v3872
      %v3874 = vsel %vm204, %v3838, 0.0
      %v3875 = vadd.f32 %v3873, %v3874
      %v3876 = vsel %vm204, %v3839, 0.0
      %v3877 = vadd.f32 %v3875, %v3876
      %v3878 = vsel %vm204, %v3840, 0.0
      %v3879 = vadd.f32 %v3877, %v3878
      %v3880 = vsel %vm204, %v3841, 0.0
      %v3881 = vadd.f32 %v3879, %v3880
      %v3882 = vsel %vm204, %v3842, 0.0
      %v3883 = vadd.f32 %v3881, %v3882
      %v3884 = vsel %vm204, %v3843, 0.0
      %v3885 = vadd.f32 %v3883, %v3884
      %v3886 = vsel %vm204, %v3844, 0.0
      %v3887 = vadd.f32 %v3885, %v3886
      %v3888 = vsel %vm204, %v3845, 0.0
      %v3889 = vadd.f32 %v3887, %v3888
      %v3890 = vsel %vm204, %v3846, 0.0
      %v3891 = vadd.f32 %v3889, %v3890
      %v3892 = vsel %vm204, %v3847, 0.0
      %v3893 = vadd.f32 %v3891, %v3892
      %v3894 = vsel %vm204, %v3848, 0.0
      %v3895 = vadd.f32 %v3893, %v3894
      %v3896 = vsel %vm204, %v3849, 0.0
      %v3897 = vadd.f32 %v3895, %v3896
      %v3898 = vsel %vm204, %v3850, 0.0
      %v3899 = vadd.f32 %v3897, %v3898
      %v3900 = vsel %vm204, %v3851, 0.0
      %v3901 = vadd.f32 %v3899, %v3900
      %v3902 = vsel %vm204, %v3852, 0.0
      %v3903 = vadd.f32 %v3901, %v3902
      %v3904 = vsel %vm204, %v3853, 0.0
      %v3905 = vadd.f32 %v3903, %v3904
      %v3906 = vsel %vm204, %v3854, 0.0
      %v3907 = vadd.f32 %v3905, %v3906
      %v3908 = vsel %vm204, %v3855, 0.0
      %v3909 = vadd.f32 %v3907, %v3908
      %v3910 = vsel %vm204, %v3856, 0.0
      %v3911 = vadd.f32 %v3909, %v3910
      %v3912 = vsel %vm204, %v3857, 0.0
      %v3913 = vadd.f32 %v3911, %v3912
      %v3914 = vsel %vm204, %v3858, 0.0
      %v3915 = vadd.f32 %v3913, %v3914
      %v3916 = vsel %vm204, %v3859, 0.0
      %v3917 = vadd.f32 %v3915, %v3916
      %v3918 = vsel %vm204, %v3860, 0.0
      %v3919 = vadd.f32 %v3917, %v3918
      %v3920 = vsel %vm204, %v3861, 0.0
      %v3921 = vadd.f32 %v3919, %v3920
      %v3922 = vsel %vm204, %v3862, 0.0
      %v3923 = vadd.f32 %v3921, %v3922
      %v3924 = vsel %vm204, %v3863, 0.0
      %v3925 = vadd.f32 %v3923, %v3924
      %v3926 = vsel %vm204, %v3864, 0.0
      %v3927 = vadd.f32 %v3925, %v3926
      %v3928 = vrot.slane %v3927, 4
      %v3929 = vadd.f32 %v3927, %v3928
      %v3930 = vrot.slane %v3929, 2
      %v3931 = vadd.f32 %v3929, %v3930
      %v3932 = vrot.slane %v3931, 1
      %v3933 = vadd.f32 %v3931, %v3932
      %v3934 = vmul.f32 %v3933, %v3831
      %v3935 = vmul.f32 %v3832, %v3832
      %v3936 = vsub.f32 %v3934, %v3935
      %v3937 = vsub.f32 %v3730, %v3832
      %v3938 = vsub.f32 %v3731, %v3832
      %v3939 = vsub.f32 %v3732, %v3832
      %v3940 = vsub.f32 %v3733, %v3832
      %v3941 = vsub.f32 %v3734, %v3832
      %v3942 = vsub.f32 %v3735, %v3832
      %v3943 = vsub.f32 %v3736, %v3832
      %v3944 = vsub.f32 %v3737, %v3832
      %v3945 = vsub.f32 %v3738, %v3832
      %v3946 = vsub.f32 %v3739, %v3832
      %v3947 = vsub.f32 %v3740, %v3832
      %v3948 = vsub.f32 %v3741, %v3832
      %v3949 = vsub.f32 %v3742, %v3832
      %v3950 = vsub.f32 %v3743, %v3832
      %v3951 = vsub.f32 %v3744, %v3832
      %v3952 = vsub.f32 %v3745, %v3832
      %v3953 = vsub.f32 %v3746, %v3832
      %v3954 = vsub.f32 %v3747, %v3832
      %v3955 = vsub.f32 %v3748, %v3832
      %v3956 = vsub.f32 %v3749, %v3832
      %v3957 = vsub.f32 %v3750, %v3832
      %v3958 = vsub.f32 %v3751, %v3832
      %v3959 = vsub.f32 %v3752, %v3832
      %v3960 = vsub.f32 %v3753, %v3832
      %v3961 = vsub.f32 %v3754, %v3832
      %v3962 = vsub.f32 %v3755, %v3832
      %v3963 = vsub.f32 %v3756, %v3832
      %v3964 = vsub.f32 %v3757, %v3832
      %v3965 = vsub.f32 %v3758, %v3832
      %v3966 = vsub.f32 %v3759, %v3832
      %v3967 = vsub.f32 %v3760, %v3832
      %v3968 = vsub.f32 %v3761, %v3832
      %v3969 = vadd.f32 %v3936, 1e-05
      %v3970 = vrsqrt.pop %v3969
      %v3971 = vmul.f32 %v3937, %v3970
      %v3972 = vmul.f32 %v3938, %v3970
      %v3973 = vmul.f32 %v3939, %v3970
      %v3974 = vmul.f32 %v3940, %v3970
      %v3975 = vmul.f32 %v3941, %v3970
      %v3976 = vmul.f32 %v3942, %v3970
      %v3977 = vmul.f32 %v3943, %v3970
      %v3978 = vmul.f32 %v3944, %v3970
      %v3979 = vmul.f32 %v3945, %v3970
      %v3980 = vmul.f32 %v3946, %v3970
      %v3981 = vmul.f32 %v3947, %v3970
      %v3982 = vmul.f32 %v3948, %v3970
      %v3983 = vmul.f32 %v3949, %v3970
      %v3984 = vmul.f32 %v3950, %v3970
      %v3985 = vmul.f32 %v3951, %v3970
      %v3986 = vmul.f32 %v3952, %v3970
      %v3987 = vmul.f32 %v3953, %v3970
      %v3988 = vmul.f32 %v3954, %v3970
      %v3989 = vmul.f32 %v3955, %v3970
      %v3990 = vmul.f32 %v3956, %v3970
      %v3991 = vmul.f32 %v3957, %v3970
      %v3992 = vmul.f32 %v3958, %v3970
      %v3993 = vmul.f32 %v3959, %v3970
      %v3994 = vmul.f32 %v3960, %v3970
      %v3995 = vmul.f32 %v3961, %v3970
      %v3996 = vmul.f32 %v3962, %v3970
      %v3997 = vmul.f32 %v3963, %v3970
      %v3998 = vmul.f32 %v3964, %v3970
      %v3999 = vmul.f32 %v3965, %v3970
      %v4000 = vmul.f32 %v3966, %v3970
      %v4001 = vmul.f32 %v3967, %v3970
      %v4002 = vmul.f32 %v3968, %v3970
      %v4003 = vmax.f32 %v3971, 0.0
      %v4004 = vmax.f32 %v3972, 0.0
      %v4005 = vmax.f32 %v3973, 0.0
      %v4006 = vmax.f32 %v3974, 0.0
      %v4007 = vmax.f32 %v3975, 0.0
      %v4008 = vmax.f32 %v3976, 0.0
      %v4009 = vmax.f32 %v3977, 0.0
      %v4010 = vmax.f32 %v3978, 0.0
      %v4011 = vmax.f32 %v3979, 0.0
      %v4012 = vmax.f32 %v3980, 0.0
      %v4013 = vmax.f32 %v3981, 0.0
      %v4014 = vmax.f32 %v3982, 0.0
      %v4015 = vmax.f32 %v3983, 0.0
      %v4016 = vmax.f32 %v3984, 0.0
      %v4017 = vmax.f32 %v3985, 0.0
      %v4018 = vmax.f32 %v3986, 0.0
      %v4019 = vmax.f32 %v3987, 0.0
      %v4020 = vmax.f32 %v3988, 0.0
      %v4021 = vmax.f32 %v3989, 0.0
      %v4022 = vmax.f32 %v3990, 0.0
      %v4023 = vmax.f32 %v3991, 0.0
      %v4024 = vmax.f32 %v3992, 0.0
      %v4025 = vmax.f32 %v3993, 0.0
      %v4026 = vmax.f32 %v3994, 0.0
      %v4027 = vmax.f32 %v3995, 0.0
      %v4028 = vmax.f32 %v3996, 0.0
      %v4029 = vmax.f32 %v3997, 0.0
      %v4030 = vmax.f32 %v3998, 0.0
      %v4031 = vmax.f32 %v3999, 0.0
      %v4032 = vmax.f32 %v4000, 0.0
      %v4033 = vmax.f32 %v4001, 0.0
      %v4034 = vmax.f32 %v4002, 0.0
      %s4035 = scalar_lea.vmem [#allocation3], 24
      %4036 = vst.msk [vmem:[%s4035 + $0x1] sm:$0xff] %vm204, %v4003
      %4037 = vst.msk [vmem:[%s4035 + $0x9] sm:$0xff] %vm204, %v4004
      %4038 = vst.msk [vmem:[%s4035 + $0x19] sm:$0xff] %vm204, %v4005
      %4039 = vst.msk [vmem:[%s4035 + $0x21] sm:$0xff] %vm204, %v4006
      %4040 = vst.msk [vmem:[%s4035 + $0x31] sm:$0xff] %vm204, %v4007
      %4041 = vst.msk [vmem:[%s4035 + $0x39] sm:$0xff] %vm204, %v4008
      %4042 = vst.msk [vmem:[%s4035 + $0x49] sm:$0xff] %vm204, %v4009
      %4043 = vst.msk [vmem:[%s4035 + $0x51] sm:$0xff] %vm204, %v4010
      %4044 = vst.msk [vmem:[%s4035 + $0x61] sm:$0xff] %vm204, %v4011
      %4045 = vst.msk [vmem:[%s4035 + $0x69] sm:$0xff] %vm204, %v4012
      %4046 = vst.msk [vmem:[%s4035 + $0x79] sm:$0xff] %vm204, %v4013
      %4047 = vst.msk [vmem:[%s4035 + $0x81] sm:$0xff] %vm204, %v4014
      %4048 = vst.msk [vmem:[%s4035 + $0x91] sm:$0xff] %vm204, %v4015
      %4049 = vst.msk [vmem:[%s4035 + $0x99] sm:$0xff] %vm204, %v4016
      %4050 = vst.msk [vmem:[%s4035 + $0xa9] sm:$0xff] %vm204, %v4017
      %4051 = vst.msk [vmem:[%s4035 + $0xb1] sm:$0xff] %vm204, %v4018
      %4052 = vst.msk [vmem:[%s4035 + $0xc1] sm:$0xff] %vm204, %v4019
      %4053 = vst.msk [vmem:[%s4035 + $0xc9] sm:$0xff] %vm204, %v4020
      %4054 = vst.msk [vmem:[%s4035 + $0xd9] sm:$0xff] %vm204, %v4021
      %4055 = vst.msk [vmem:[%s4035 + $0xe1] sm:$0xff] %vm204, %v4022
      %4056 = vst.msk [vmem:[%s4035 + $0xf1] sm:$0xff] %vm204, %v4023
      %4057 = vst.msk [vmem:[%s4035 + $0xf9] sm:$0xff] %vm204, %v4024
      %4058 = vst.msk [vmem:[%s4035 + $0x109] sm:$0xff] %vm204, %v4025
      %4059 = vst.msk [vmem:[%s4035 + $0x111] sm:$0xff] %vm204, %v4026
      %4060 = vst.msk [vmem:[%s4035 + $0x121] sm:$0xff] %vm204, %v4027
      %4061 = vst.msk [vmem:[%s4035 + $0x129] sm:$0xff] %vm204, %v4028
      %4062 = vst.msk [vmem:[%s4035 + $0x139] sm:$0xff] %vm204, %v4029
      %4063 = vst.msk [vmem:[%s4035 + $0x141] sm:$0xff] %vm204, %v4030
      %4064 = vst.msk [vmem:[%s4035 + $0x151] sm:$0xff] %vm204, %v4031
      %4065 = vst.msk [vmem:[%s4035 + $0x159] sm:$0xff] %vm204, %v4032
      %4066 = vst.msk [vmem:[%s4035 + $0x169] sm:$0xff] %vm204, %v4033
      %4067 = vst.msk [vmem:[%s4035 + $0x171] sm:$0xff] %vm204, %v4034
      %4068 = vst.msk [vmem:[#allocation3 + $0x1] sm:$0xff] %vm204, %v4005
      %4069 = vst.msk [vmem:[#allocation3 + $0x9] sm:$0xff] %vm204, %v4006
      %s4070 = scalar_lea.vmem [#allocation3], 408
      %4071 = vst.msk [vmem:[%s4070 + $0x1] sm:$0xff] %vm204, %v4031
      %4072 = vst.msk [vmem:[%s4070 + $0x9] sm:$0xff] %vm204, %v4032
      %v4073 = vld [vmem:[#allocation3 + $0x2] sm:$0x1]
      %v4074 = vld [vmem:[#allocation3 + $0x1a] sm:$0x1]
      %v4075 = vld [vmem:[#allocation3 + $0x32] sm:$0x1]
      %v4076 = vld [vmem:[#allocation3 + $0x4a] sm:$0x1]
      %v4077 = vld [vmem:[#allocation3 + $0x62] sm:$0x1]
      %v4078 = vld [vmem:[#allocation3 + $0x7a] sm:$0x1]
      %v4079 = vld [vmem:[#allocation3 + $0x92] sm:$0x1]
      %v4080 = vld [vmem:[#allocation3 + $0xaa] sm:$0x1]
      %v4081 = vld [vmem:[#allocation3 + $0xc2] sm:$0x1]
      %v4082 = vld [vmem:[#allocation3 + $0xda] sm:$0x1]
      %v4083 = vld [vmem:[#allocation3 + $0xf2] sm:$0x1]
      %v4084 = vld [vmem:[#allocation3 + $0x10a] sm:$0x1]
      %v4085 = vld [vmem:[#allocation3 + $0x122] sm:$0x1]
      %v4086 = vld [vmem:[#allocation3 + $0x13a] sm:$0x1]
      %v4087 = vld [vmem:[#allocation3 + $0x152] sm:$0x1]
      %v4088 = vld [vmem:[#allocation3 + $0x16a] sm:$0x1]
      %v4089 = vld [vmem:[#allocation3 + $0x182] sm:$0x1]
      %v4090 = vld [vmem:[#allocation3 + $0x19a] sm:$0x1]
      %4091 = vst.msk [vmem:[#allocation3] sm:$0x1] %vm260, %v4073
      %4092 = vst.msk [vmem:[#allocation3 + $0x18] sm:$0x1] %vm260, %v4074
      %4093 = vst.msk [vmem:[#allocation3 + $0x30] sm:$0x1] %vm260, %v4075
      %4094 = vst.msk [vmem:[#allocation3 + $0x48] sm:$0x1] %vm260, %v4076
      %4095 = vst.msk [vmem:[#allocation3 + $0x60] sm:$0x1] %vm260, %v4077
      %4096 = vst.msk [vmem:[#allocation3 + $0x78] sm:$0x1] %vm260, %v4078
      %4097 = vst.msk [vmem:[#allocation3 + $0x90] sm:$0x1] %vm260, %v4079
      %4098 = vst.msk [vmem:[#allocation3 + $0xa8] sm:$0x1] %vm260, %v4080
      %4099 = vst.msk [vmem:[#allocation3 + $0xc0] sm:$0x1] %vm260, %v4081
      %4100 = vst.msk [vmem:[#allocation3 + $0xd8] sm:$0x1] %vm260, %v4082
      %4101 = vst.msk [vmem:[#allocation3 + $0xf0] sm:$0x1] %vm260, %v4083
      %4102 = vst.msk [vmem:[#allocation3 + $0x108] sm:$0x1] %vm260, %v4084
      %4103 = vst.msk [vmem:[#allocation3 + $0x120] sm:$0x1] %vm260, %v4085
      %4104 = vst.msk [vmem:[#allocation3 + $0x138] sm:$0x1] %vm260, %v4086
      %4105 = vst.msk [vmem:[#allocation3 + $0x150] sm:$0x1] %vm260, %v4087
      %4106 = vst.msk [vmem:[#allocation3 + $0x168] sm:$0x1] %vm260, %v4088
      %4107 = vst.msk [vmem:[#allocation3 + $0x180] sm:$0x1] %vm260, %v4089
      %4108 = vst.msk [vmem:[#allocation3 + $0x198] sm:$0x1] %vm260, %v4090
      %v4109 = vld [vmem:[#allocation3 + $0xf] sm:$0x1]
      %v4110 = vld [vmem:[#allocation3 + $0x27] sm:$0x1]
      %v4111 = vld [vmem:[#allocation3 + $0x3f] sm:$0x1]
      %v4112 = vld [vmem:[#allocation3 + $0x57] sm:$0x1]
      %v4113 = vld [vmem:[#allocation3 + $0x6f] sm:$0x1]
      %v4114 = vld [vmem:[#allocation3 + $0x87] sm:$0x1]
      %v4115 = vld [vmem:[#allocation3 + $0x9f] sm:$0x1]
      %v4116 = vld [vmem:[#allocation3 + $0xb7] sm:$0x1]
      %v4117 = vld [vmem:[#allocation3 + $0xcf] sm:$0x1]
      %v4118 = vld [vmem:[#allocation3 + $0xe7] sm:$0x1]
      %v4119 = vld [vmem:[#allocation3 + $0xff] sm:$0x1]
      %v4120 = vld [vmem:[#allocation3 + $0x117] sm:$0x1]
      %v4121 = vld [vmem:[#allocation3 + $0x12f] sm:$0x1]
      %v4122 = vld [vmem:[#allocation3 + $0x147] sm:$0x1]
      %v4123 = vld [vmem:[#allocation3 + $0x15f] sm:$0x1]
      %v4124 = vld [vmem:[#allocation3 + $0x177] sm:$0x1]
      %v4125 = vld [vmem:[#allocation3 + $0x18f] sm:$0x1]
      %v4126 = vld [vmem:[#allocation3 + $0x1a7] sm:$0x1]
      %4127 = vst.msk [vmem:[#allocation3 + $0x11] sm:$0x1] %vm260, %v4109
      %4128 = vst.msk [vmem:[#allocation3 + $0x29] sm:$0x1] %vm260, %v4110
      %4129 = vst.msk [vmem:[#allocation3 + $0x41] sm:$0x1] %vm260, %v4111
      %4130 = vst.msk [vmem:[#allocation3 + $0x59] sm:$0x1] %vm260, %v4112
      %4131 = vst.msk [vmem:[#allocation3 + $0x71] sm:$0x1] %vm260, %v4113
      %4132 = vst.msk [vmem:[#allocation3 + $0x89] sm:$0x1] %vm260, %v4114
      %4133 = vst.msk [vmem:[#allocation3 + $0xa1] sm:$0x1] %vm260, %v4115
      %4134 = vst.msk [vmem:[#allocation3 + $0xb9] sm:$0x1] %vm260, %v4116
      %4135 = vst.msk [vmem:[#allocation3 + $0xd1] sm:$0x1] %vm260, %v4117
      %4136 = vst.msk [vmem:[#allocation3 + $0xe9] sm:$0x1] %vm260, %v4118
      %4137 = vst.msk [vmem:[#allocation3 + $0x101] sm:$0x1] %vm260, %v4119
      %4138 = vst.msk [vmem:[#allocation3 + $0x119] sm:$0x1] %vm260, %v4120
      %4139 = vst.msk [vmem:[#allocation3 + $0x131] sm:$0x1] %vm260, %v4121
      %4140 = vst.msk [vmem:[#allocation3 + $0x149] sm:$0x1] %vm260, %v4122
      %4141 = vst.msk [vmem:[#allocation3 + $0x161] sm:$0x1] %vm260, %v4123
      %4142 = vst.msk [vmem:[#allocation3 + $0x179] sm:$0x1] %vm260, %v4124
      %4143 = vst.msk [vmem:[#allocation3 + $0x191] sm:$0x1] %vm260, %v4125
      %4144 = vst.msk [vmem:[#allocation3 + $0x1a9] sm:$0x1] %vm260, %v4126
      %v4145 = vld [vmem:[#allocation3] sm:$0xff]
      %v4146 = vld [vmem:[#allocation3 + $0x8] sm:$0xff]
      %v4147 = vld [vmem:[#allocation3 + $0x18] sm:$0xff]
      %v4148 = vld [vmem:[#allocation3 + $0x20] sm:$0xff]
      %v4149 = vld [vmem:[#allocation3 + $0x30] sm:$0xff]
      %v4150 = vld [vmem:[#allocation3 + $0x38] sm:$0xff]
      %v4151 = vld [vmem:[#allocation3 + $0x48] sm:$0xff]
      %v4152 = vld [vmem:[#allocation3 + $0x50] sm:$0xff]
      %v4153 = vld [vmem:[#allocation3 + $0x60] sm:$0xff]
      %v4154 = vld [vmem:[#allocation3 + $0x68] sm:$0xff]
      %v4155 = vld [vmem:[#allocation3 + $0x78] sm:$0xff]
      %v4156 = vld [vmem:[#allocation3 + $0x80] sm:$0xff]
      %v4157 = vld [vmem:[#allocation3 + $0x90] sm:$0xff]
      %v4158 = vld [vmem:[#allocation3 + $0x98] sm:$0xff]
      %v4159 = vld [vmem:[#allocation3 + $0xa8] sm:$0xff]
      %v4160 = vld [vmem:[#allocation3 + $0xb0] sm:$0xff]
      %v4161 = vld [vmem:[#allocation3 + $0xc0] sm:$0xff]
      %v4162 = vld [vmem:[#allocation3 + $0xc8] sm:$0xff]
      %v4163 = vld [vmem:[#allocation3 + $0xd8] sm:$0xff]
      %v4164 = vld [vmem:[#allocation3 + $0xe0] sm:$0xff]
      %v4165 = vld [vmem:[#allocation3 + $0xf0] sm:$0xff]
      %v4166 = vld [vmem:[#allocation3 + $0xf8] sm:$0xff]
      %v4167 = vld [vmem:[#allocation3 + $0x108] sm:$0xff]
      %v4168 = vld [vmem:[#allocation3 + $0x110] sm:$0xff]
      %v4169 = vld [vmem:[#allocation3 + $0x120] sm:$0xff]
      %v4170 = vld [vmem:[#allocation3 + $0x128] sm:$0xff]
      %v4171 = vld [vmem:[#allocation3 + $0x138] sm:$0xff]
      %v4172 = vld [vmem:[#allocation3 + $0x140] sm:$0xff]
      %v4173 = vld [vmem:[#allocation3 + $0x150] sm:$0xff]
      %v4174 = vld [vmem:[#allocation3 + $0x158] sm:$0xff]
      %v4175 = vld [vmem:[#allocation3 + $0x168] sm:$0xff]
      %v4176 = vld [vmem:[#allocation3 + $0x170] sm:$0xff]
      %v4177 = vld [vmem:[%s2] sm:$0xf]
      %v4178 = vld [vmem:[#allocation3 + $0x1] sm:$0xff]
      %v4179 = vld [vmem:[#allocation3 + $0x9] sm:$0xff]
      %v4180 = vld [vmem:[#allocation3 + $0x19] sm:$0xff]
      %v4181 = vld [vmem:[#allocation3 + $0x21] sm:$0xff]
      %v4182 = vld [vmem:[#allocation3 + $0x31] sm:$0xff]
      %v4183 = vld [vmem:[#allocation3 + $0x39] sm:$0xff]
      %v4184 = vld [vmem:[#allocation3 + $0x49] sm:$0xff]
      %v4185 = vld [vmem:[#allocation3 + $0x51] sm:$0xff]
      %v4186 = vld [vmem:[#allocation3 + $0x61] sm:$0xff]
      %v4187 = vld [vmem:[#allocation3 + $0x69] sm:$0xff]
      %v4188 = vld [vmem:[#allocation3 + $0x79] sm:$0xff]
      %v4189 = vld [vmem:[#allocation3 + $0x81] sm:$0xff]
      %v4190 = vld [vmem:[#allocation3 + $0x91] sm:$0xff]
      %v4191 = vld [vmem:[#allocation3 + $0x99] sm:$0xff]
      %v4192 = vld [vmem:[#allocation3 + $0xa9] sm:$0xff]
      %v4193 = vld [vmem:[#allocation3 + $0xb1] sm:$0xff]
      %v4194 = vld [vmem:[#allocation3 + $0xc1] sm:$0xff]
      %v4195 = vld [vmem:[#allocation3 + $0xc9] sm:$0xff]
      %v4196 = vld [vmem:[#allocation3 + $0xd9] sm:$0xff]
      %v4197 = vld [vmem:[#allocation3 + $0xe1] sm:$0xff]
      %v4198 = vld [vmem:[#allocation3 + $0xf1] sm:$0xff]
      %v4199 = vld [vmem:[#allocation3 + $0xf9] sm:$0xff]
      %v4200 = vld [vmem:[#allocation3 + $0x109] sm:$0xff]
      %v4201 = vld [vmem:[#allocation3 + $0x111] sm:$0xff]
      %v4202 = vld [vmem:[#allocation3 + $0x121] sm:$0xff]
      %v4203 = vld [vmem:[#allocation3 + $0x129] sm:$0xff]
      %v4204 = vld [vmem:[#allocation3 + $0x139] sm:$0xff]
      %v4205 = vld [vmem:[#allocation3 + $0x141] sm:$0xff]
      %v4206 = vld [vmem:[#allocation3 + $0x151] sm:$0xff]
      %v4207 = vld [vmem:[#allocation3 + $0x159] sm:$0xff]
      %v4208 = vld [vmem:[#allocation3 + $0x169] sm:$0xff]
      %v4209 = vld [vmem:[#allocation3 + $0x171] sm:$0xff]
      %s4210 = scalar_lea.vmem %s2, 4
      %v4211 = vld [vmem:[%s4210] sm:$0xf]
      %v4213 = vsel %vm204, %v4178, 0
      %v4216 = vsel %vm204, %v4179, 0
      %v4219 = vsel %vm204, %v4180, 0
      %v4222 = vsel %vm204, %v4181, 0
      %v4225 = vsel %vm204, %v4182, 0
      %v4228 = vsel %vm204, %v4183, 0
      %v4231 = vsel %vm204, %v4184, 0
      %v4234 = vsel %vm204, %v4185, 0
      %v4237 = vsel %vm204, %v4186, 0
      %v4240 = vsel %vm204, %v4187, 0
      %v4243 = vsel %vm204, %v4188, 0
      %v4246 = vsel %vm204, %v4189, 0
      %v4249 = vsel %vm204, %v4190, 0
      %v4252 = vsel %vm204, %v4191, 0
      %v4255 = vsel %vm204, %v4192, 0
      %v4258 = vsel %vm204, %v4193, 0
      %v4261 = vsel %vm204, %v4194, 0
      %v4264 = vsel %vm204, %v4195, 0
      %v4267 = vsel %vm204, %v4196, 0
      %v4270 = vsel %vm204, %v4197, 0
      %v4273 = vsel %vm204, %v4198, 0
      %v4276 = vsel %vm204, %v4199, 0
      %v4279 = vsel %vm204, %v4200, 0
      %v4282 = vsel %vm204, %v4201, 0
      %v4285 = vsel %vm204, %v4202, 0
      %v4288 = vsel %vm204, %v4203, 0
      %v4291 = vsel %vm204, %v4204, 0
      %v4294 = vsel %vm204, %v4205, 0
      %v4297 = vsel %vm204, %v4206, 0
      %v4300 = vsel %vm204, %v4207, 0
      %v4303 = vsel %vm204, %v4208, 0
      %v4306 = vsel %vm204, %v4209, 0
      %v4309 = vsel %vm478, %v4211, 0
      %4311 = vmatprep.subr.mxu0 0.0
      %4312 = vmatpush1.msra.mxu0 0.0
      %4313 = vmatprep.subr.mxu0 0.0
      %4314 = vmatpush1.msra.mxu0 0.0
      %4315 = vmatprep.subr.mxu0 0.0
      %4316 = vmatpush1.msra.mxu0 0.0
      %4317 = vmatprep.subr.mxu0 0.0
      %4318 = vmatpush1.msra.mxu0 0.0
      %4319 = vmatprep.subr.mxu0 0.0
      %4320 = vmatpush1.msra.mxu0 0.0
      %4321 = vmatprep.subr.mxu0 0.0
      %4322 = vmatpush1.msra.mxu0 0.0
      %4323 = vmatprep.subr.mxu0 0.0
      %4324 = vmatpush1.msra.mxu0 0.0
      %4325 = vmatprep.subr.mxu0 0.0
      %4326 = vmatpush1.msra.mxu0 0.0
      %4327 = vmatprep.subr.mxu0 0.0
      %4328 = vmatpush1.msra.mxu0 0.0
      %4329 = vmatprep.subr.mxu0 0.0
      %4330 = vmatpush1.msra.mxu0 0.0
      %4331 = vmatprep.subr.mxu0 0.0
      %4332 = vmatpush1.msra.mxu0 0.0
      %4333 = vmatprep.subr.mxu0 0.0
      %4334 = vmatpush1.msra.mxu0 0.0
      %4335 = vmatprep.subr.mxu0 0.0
      %4336 = vmatpush1.msra.mxu0 0.0
      %4337 = vmatprep.subr.mxu0 0.0
      %4338 = vmatpush1.msra.mxu0 0.0
      %4339 = vmatprep.subr.mxu0 0.0
      %4340 = vmatpush1.msra.mxu0 0.0
      %4341 = vmatprep.subr.mxu0 0.0
      %4342 = vmatpush1.msra.mxu0 %v4309
      %4343 = vmatprep.subr.mxu0 0.0
      %4344 = vmatpush2.msra.mxu0 0.0
      %4345 = vmatprep.subr.mxu0 0.0
      %4346 = vmatpush2.msra.mxu0 0.0
      %4347 = vmatprep.subr.mxu0 0.0
      %4348 = vmatpush2.msra.mxu0 0.0
      %4349 = vmatprep.subr.mxu0 0.0
      %4350 = vmatpush2.msra.mxu0 0.0
      %4351 = vmatprep.subr.mxu0 0.0
      %4352 = vmatpush2.msra.mxu0 0.0
      %4353 = vmatprep.subr.mxu0 0.0
      %4354 = vmatpush2.msra.mxu0 0.0
      %4355 = vmatprep.subr.mxu0 0.0
      %4356 = vmatpush2.msra.mxu0 0.0
      %4357 = vmatprep.subr.mxu0 0.0
      %4358 = vmatpush2.msra.mxu0 0.0
      %4359 = vmatprep.subr.mxu0 0.0
      %4360 = vmatpush2.msra.mxu0 0.0
      %4361 = vmatprep.subr.mxu0 0.0
      %4362 = vmatpush2.msra.mxu0 0.0
      %4363 = vmatprep.subr.mxu0 0.0
      %4364 = vmatpush2.msra.mxu0 0.0
      %4365 = vmatprep.subr.mxu0 0.0
      %4366 = vmatpush2.msra.mxu0 0.0
      %4367 = vmatprep.subr.mxu0 0.0
      %4368 = vmatpush2.msra.mxu0 0.0
      %4369 = vmatprep.subr.mxu0 0.0
      %4370 = vmatpush2.msra.mxu0 0.0
      %4371 = vmatprep.subr.mxu0 0.0
      %4372 = vmatpush2.msra.mxu0 0.0
      %4373 = vmatprep.subr.mxu0 0.0
      %4374 = vmatpush2.msra.mxu0 0.0
      %4375 = vmatprep.mubr.f32.mxu0 0.0
      %4376 = vmatmul.mubr.f32.gmra.mxu0 %v4213
      %v4377 = vpop.f32.mrf.mxu0
      %v4378 = vadd.f32 0.0, %v4377
      %v4379 = vpop.f32.mrf.mxu0
      %4380 = vmatprep.mubr.f32.mxu0 0.0
      %4381 = vmatmul.mubr.f32.gmra.mxu0 %v4216
      %v4382 = vpop.f32.mrf.mxu0
      %v4383 = vadd.f32 0.0, %v4382
      %v4384 = vpop.f32.mrf.mxu0
      %4385 = vmatprep.mubr.f32.mxu0 0.0
      %4386 = vmatmul.mubr.f32.gmra.mxu0 %v4219
      %v4387 = vpop.f32.mrf.mxu0
      %v4388 = vadd.f32 0.0, %v4387
      %v4389 = vpop.f32.mrf.mxu0
      %4390 = vmatprep.mubr.f32.mxu0 0.0
      %4391 = vmatmul.mubr.f32.gmra.mxu0 %v4222
      %v4392 = vpop.f32.mrf.mxu0
      %v4393 = vadd.f32 0.0, %v4392
      %v4394 = vpop.f32.mrf.mxu0
      %4395 = vmatprep.mubr.f32.mxu0 0.0
      %4396 = vmatmul.mubr.f32.gmra.mxu0 %v4225
      %v4397 = vpop.f32.mrf.mxu0
      %v4398 = vadd.f32 0.0, %v4397
      %v4399 = vpop.f32.mrf.mxu0
      %4400 = vmatprep.mubr.f32.mxu0 0.0
      %4401 = vmatmul.mubr.f32.gmra.mxu0 %v4228
      %v4402 = vpop.f32.mrf.mxu0
      %v4403 = vadd.f32 0.0, %v4402
      %v4404 = vpop.f32.mrf.mxu0
      %4405 = vmatprep.mubr.f32.mxu0 0.0
      %4406 = vmatmul.mubr.f32.gmra.mxu0 %v4231
      %v4407 = vpop.f32.mrf.mxu0
      %v4408 = vadd.f32 0.0, %v4407
      %v4409 = vpop.f32.mrf.mxu0
      %4410 = vmatprep.mubr.f32.mxu0 0.0
      %4411 = vmatmul.mubr.f32.gmra.mxu0 %v4234
      %v4412 = vpop.f32.mrf.mxu0
      %v4413 = vadd.f32 0.0, %v4412
      %v4414 = vpop.f32.mrf.mxu0
      %4415 = vmatprep.mubr.f32.mxu0 0.0
      %4416 = vmatmul.mubr.f32.gmra.mxu0 %v4237
      %v4417 = vpop.f32.mrf.mxu0
      %v4418 = vadd.f32 0.0, %v4417
      %v4419 = vpop.f32.mrf.mxu0
      %4420 = vmatprep.mubr.f32.mxu0 0.0
      %4421 = vmatmul.mubr.f32.gmra.mxu0 %v4240
      %v4422 = vpop.f32.mrf.mxu0
      %v4423 = vadd.f32 0.0, %v4422
      %v4424 = vpop.f32.mrf.mxu0
      %4425 = vmatprep.mubr.f32.mxu0 0.0
      %4426 = vmatmul.mubr.f32.gmra.mxu0 %v4243
      %v4427 = vpop.f32.mrf.mxu0
      %v4428 = vadd.f32 0.0, %v4427
      %v4429 = vpop.f32.mrf.mxu0
      %4430 = vmatprep.mubr.f32.mxu0 0.0
      %4431 = vmatmul.mubr.f32.gmra.mxu0 %v4246
      %v4432 = vpop.f32.mrf.mxu0
      %v4433 = vadd.f32 0.0, %v4432
      %v4434 = vpop.f32.mrf.mxu0
      %4435 = vmatprep.mubr.f32.mxu0 0.0
      %4436 = vmatmul.mubr.f32.gmra.mxu0 %v4249
      %v4437 = vpop.f32.mrf.mxu0
      %v4438 = vadd.f32 0.0, %v4437
      %v4439 = vpop.f32.mrf.mxu0
      %4440 = vmatprep.mubr.f32.mxu0 0.0
      %4441 = vmatmul.mubr.f32.gmra.mxu0 %v4252
      %v4442 = vpop.f32.mrf.mxu0
      %v4443 = vadd.f32 0.0, %v4442
      %v4444 = vpop.f32.mrf.mxu0
      %4445 = vmatprep.mubr.f32.mxu0 0.0
      %4446 = vmatmul.mubr.f32.gmra.mxu0 %v4255
      %v4447 = vpop.f32.mrf.mxu0
      %v4448 = vadd.f32 0.0, %v4447
      %v4449 = vpop.f32.mrf.mxu0
      %4450 = vmatprep.mubr.f32.mxu0 0.0
      %4451 = vmatmul.mubr.f32.gmra.mxu0 %v4258
      %v4452 = vpop.f32.mrf.mxu0
      %v4453 = vadd.f32 0.0, %v4452
      %v4454 = vpop.f32.mrf.mxu0
      %4455 = vmatprep.mubr.f32.mxu0 0.0
      %4456 = vmatmul.mubr.f32.gmra.mxu0 %v4261
      %v4457 = vpop.f32.mrf.mxu0
      %v4458 = vadd.f32 0.0, %v4457
      %v4459 = vpop.f32.mrf.mxu0
      %4460 = vmatprep.mubr.f32.mxu0 0.0
      %4461 = vmatmul.mubr.f32.gmra.mxu0 %v4264
      %v4462 = vpop.f32.mrf.mxu0
      %v4463 = vadd.f32 0.0, %v4462
      %v4464 = vpop.f32.mrf.mxu0
      %4465 = vmatprep.mubr.f32.mxu0 0.0
      %4466 = vmatmul.mubr.f32.gmra.mxu0 %v4267
      %v4467 = vpop.f32.mrf.mxu0
      %v4468 = vadd.f32 0.0, %v4467
      %v4469 = vpop.f32.mrf.mxu0
      %4470 = vmatprep.mubr.f32.mxu0 0.0
      %4471 = vmatmul.mubr.f32.gmra.mxu0 %v4270
      %v4472 = vpop.f32.mrf.mxu0
      %v4473 = vadd.f32 0.0, %v4472
      %v4474 = vpop.f32.mrf.mxu0
      %4475 = vmatprep.mubr.f32.mxu0 0.0
      %4476 = vmatmul.mubr.f32.gmra.mxu0 %v4273
      %v4477 = vpop.f32.mrf.mxu0
      %v4478 = vadd.f32 0.0, %v4477
      %v4479 = vpop.f32.mrf.mxu0
      %4480 = vmatprep.mubr.f32.mxu0 0.0
      %4481 = vmatmul.mubr.f32.gmra.mxu0 %v4276
      %v4482 = vpop.f32.mrf.mxu0
      %v4483 = vadd.f32 0.0, %v4482
      %v4484 = vpop.f32.mrf.mxu0
      %4485 = vmatprep.mubr.f32.mxu0 0.0
      %4486 = vmatmul.mubr.f32.gmra.mxu0 %v4279
      %v4487 = vpop.f32.mrf.mxu0
      %v4488 = vadd.f32 0.0, %v4487
      %v4489 = vpop.f32.mrf.mxu0
      %4490 = vmatprep.mubr.f32.mxu0 0.0
      %4491 = vmatmul.mubr.f32.gmra.mxu0 %v4282
      %v4492 = vpop.f32.mrf.mxu0
      %v4493 = vadd.f32 0.0, %v4492
      %v4494 = vpop.f32.mrf.mxu0
      %4495 = vmatprep.mubr.f32.mxu0 0.0
      %4496 = vmatmul.mubr.f32.gmra.mxu0 %v4285
      %v4497 = vpop.f32.mrf.mxu0
      %v4498 = vadd.f32 0.0, %v4497
      %v4499 = vpop.f32.mrf.mxu0
      %4500 = vmatprep.mubr.f32.mxu0 0.0
      %4501 = vmatmul.mubr.f32.gmra.mxu0 %v4288
      %v4502 = vpop.f32.mrf.mxu0
      %v4503 = vadd.f32 0.0, %v4502
      %v4504 = vpop.f32.mrf.mxu0
      %4505 = vmatprep.mubr.f32.mxu0 0.0
      %4506 = vmatmul.mubr.f32.gmra.mxu0 %v4291
      %v4507 = vpop.f32.mrf.mxu0
      %v4508 = vadd.f32 0.0, %v4507
      %v4509 = vpop.f32.mrf.mxu0
      %4510 = vmatprep.mubr.f32.mxu0 0.0
      %4511 = vmatmul.mubr.f32.gmra.mxu0 %v4294
      %v4512 = vpop.f32.mrf.mxu0
      %v4513 = vadd.f32 0.0, %v4512
      %v4514 = vpop.f32.mrf.mxu0
      %4515 = vmatprep.mubr.f32.mxu0 0.0
      %4516 = vmatmul.mubr.f32.gmra.mxu0 %v4297
      %v4517 = vpop.f32.mrf.mxu0
      %v4518 = vadd.f32 0.0, %v4517
      %v4519 = vpop.f32.mrf.mxu0
      %4520 = vmatprep.mubr.f32.mxu0 0.0
      %4521 = vmatmul.mubr.f32.gmra.mxu0 %v4300
      %v4522 = vpop.f32.mrf.mxu0
      %v4523 = vadd.f32 0.0, %v4522
      %v4524 = vpop.f32.mrf.mxu0
      %4525 = vmatprep.mubr.f32.mxu0 0.0
      %4526 = vmatmul.mubr.f32.gmra.mxu0 %v4303
      %v4527 = vpop.f32.mrf.mxu0
      %v4528 = vadd.f32 0.0, %v4527
      %v4529 = vpop.f32.mrf.mxu0
      %4530 = vmatprep.mubr.f32.mxu0 0.0
      %4531 = vmatmul.mubr.f32.gmra.mxu0 %v4306
      %v4532 = vpop.f32.mrf.mxu0
      %v4533 = vadd.f32 0.0, %v4532
      %v4534 = vpop.f32.mrf.mxu0
      %4535 = vdwg.mxu0
      %v4537 = vsel %vm204, %v4145, 0
      %v4540 = vsel %vm204, %v4146, 0
      %v4543 = vsel %vm204, %v4147, 0
      %v4546 = vsel %vm204, %v4148, 0
      %v4549 = vsel %vm204, %v4149, 0
      %v4552 = vsel %vm204, %v4150, 0
      %v4555 = vsel %vm204, %v4151, 0
      %v4558 = vsel %vm204, %v4152, 0
      %v4561 = vsel %vm204, %v4153, 0
      %v4564 = vsel %vm204, %v4154, 0
      %v4567 = vsel %vm204, %v4155, 0
      %v4570 = vsel %vm204, %v4156, 0
      %v4573 = vsel %vm204, %v4157, 0
      %v4576 = vsel %vm204, %v4158, 0
      %v4579 = vsel %vm204, %v4159, 0
      %v4582 = vsel %vm204, %v4160, 0
      %v4585 = vsel %vm204, %v4161, 0
      %v4588 = vsel %vm204, %v4162, 0
      %v4591 = vsel %vm204, %v4163, 0
      %v4594 = vsel %vm204, %v4164, 0
      %v4597 = vsel %vm204, %v4165, 0
      %v4600 = vsel %vm204, %v4166, 0
      %v4603 = vsel %vm204, %v4167, 0
      %v4606 = vsel %vm204, %v4168, 0
      %v4609 = vsel %vm204, %v4169, 0
      %v4612 = vsel %vm204, %v4170, 0
      %v4615 = vsel %vm204, %v4171, 0
      %v4618 = vsel %vm204, %v4172, 0
      %v4621 = vsel %vm204, %v4173, 0
      %v4624 = vsel %vm204, %v4174, 0
      %v4627 = vsel %vm204, %v4175, 0
      %v4630 = vsel %vm204, %v4176, 0
      %v4633 = vsel %vm478, %v4177, 0
      %4635 = vmatprep.subr.mxu0 0.0
      %4636 = vmatpush1.msra.mxu0 0.0
      %4637 = vmatprep.subr.mxu0 0.0
      %4638 = vmatpush1.msra.mxu0 0.0
      %4639 = vmatprep.subr.mxu0 0.0
      %4640 = vmatpush1.msra.mxu0 0.0
      %4641 = vmatprep.subr.mxu0 0.0
      %4642 = vmatpush1.msra.mxu0 0.0
      %4643 = vmatprep.subr.mxu0 0.0
      %4644 = vmatpush1.msra.mxu0 0.0
      %4645 = vmatprep.subr.mxu0 0.0
      %4646 = vmatpush1.msra.mxu0 0.0
      %4647 = vmatprep.subr.mxu0 0.0
      %4648 = vmatpush1.msra.mxu0 0.0
      %4649 = vmatprep.subr.mxu0 0.0
      %4650 = vmatpush1.msra.mxu0 0.0
      %4651 = vmatprep.subr.mxu0 0.0
      %4652 = vmatpush1.msra.mxu0 0.0
      %4653 = vmatprep.subr.mxu0 0.0
      %4654 = vmatpush1.msra.mxu0 0.0
      %4655 = vmatprep.subr.mxu0 0.0
      %4656 = vmatpush1.msra.mxu0 0.0
      %4657 = vmatprep.subr.mxu0 0.0
      %4658 = vmatpush1.msra.mxu0 0.0
      %4659 = vmatprep.subr.mxu0 0.0
      %4660 = vmatpush1.msra.mxu0 0.0
      %4661 = vmatprep.subr.mxu0 0.0
      %4662 = vmatpush1.msra.mxu0 0.0
      %4663 = vmatprep.subr.mxu0 0.0
      %4664 = vmatpush1.msra.mxu0 0.0
      %4665 = vmatprep.subr.mxu0 0.0
      %4666 = vmatpush1.msra.mxu0 %v4633
      %4667 = vmatprep.subr.mxu0 0.0
      %4668 = vmatpush2.msra.mxu0 0.0
      %4669 = vmatprep.subr.mxu0 0.0
      %4670 = vmatpush2.msra.mxu0 0.0
      %4671 = vmatprep.subr.mxu0 0.0
      %4672 = vmatpush2.msra.mxu0 0.0
      %4673 = vmatprep.subr.mxu0 0.0
      %4674 = vmatpush2.msra.mxu0 0.0
      %4675 = vmatprep.subr.mxu0 0.0
      %4676 = vmatpush2.msra.mxu0 0.0
      %4677 = vmatprep.subr.mxu0 0.0
      %4678 = vmatpush2.msra.mxu0 0.0
      %4679 = vmatprep.subr.mxu0 0.0
      %4680 = vmatpush2.msra.mxu0 0.0
      %4681 = vmatprep.subr.mxu0 0.0
      %4682 = vmatpush2.msra.mxu0 0.0
      %4683 = vmatprep.subr.mxu0 0.0
      %4684 = vmatpush2.msra.mxu0 0.0
      %4685 = vmatprep.subr.mxu0 0.0
      %4686 = vmatpush2.msra.mxu0 0.0
      %4687 = vmatprep.subr.mxu0 0.0
      %4688 = vmatpush2.msra.mxu0 0.0
      %4689 = vmatprep.subr.mxu0 0.0
      %4690 = vmatpush2.msra.mxu0 0.0
      %4691 = vmatprep.subr.mxu0 0.0
      %4692 = vmatpush2.msra.mxu0 0.0
      %4693 = vmatprep.subr.mxu0 0.0
      %4694 = vmatpush2.msra.mxu0 0.0
      %4695 = vmatprep.subr.mxu0 0.0
      %4696 = vmatpush2.msra.mxu0 0.0
      %4697 = vmatprep.subr.mxu0 0.0
      %4698 = vmatpush2.msra.mxu0 0.0
      %4699 = vmatprep.mubr.f32.mxu0 0.0
      %4700 = vmatmul.mubr.f32.gmra.mxu0 %v4537
      %v4701 = vpop.f32.mrf.mxu0
      %v4702 = vadd.f32 %v4378, %v4701
      %v4703 = vpop.f32.mrf.mxu0
      %4704 = vmatprep.mubr.f32.mxu0 0.0
      %4705 = vmatmul.mubr.f32.gmra.mxu0 %v4540
      %v4706 = vpop.f32.mrf.mxu0
      %v4707 = vadd.f32 %v4383, %v4706
      %v4708 = vpop.f32.mrf.mxu0
      %4709 = vmatprep.mubr.f32.mxu0 0.0
      %4710 = vmatmul.mubr.f32.gmra.mxu0 %v4543
      %v4711 = vpop.f32.mrf.mxu0
      %v4712 = vadd.f32 %v4388, %v4711
      %v4713 = vpop.f32.mrf.mxu0
      %4714 = vmatprep.mubr.f32.mxu0 0.0
      %4715 = vmatmul.mubr.f32.gmra.mxu0 %v4546
      %v4716 = vpop.f32.mrf.mxu0
      %v4717 = vadd.f32 %v4393, %v4716
      %v4718 = vpop.f32.mrf.mxu0
      %4719 = vmatprep.mubr.f32.mxu0 0.0
      %4720 = vmatmul.mubr.f32.gmra.mxu0 %v4549
      %v4721 = vpop.f32.mrf.mxu0
      %v4722 = vadd.f32 %v4398, %v4721
      %v4723 = vpop.f32.mrf.mxu0
      %4724 = vmatprep.mubr.f32.mxu0 0.0
      %4725 = vmatmul.mubr.f32.gmra.mxu0 %v4552
      %v4726 = vpop.f32.mrf.mxu0
      %v4727 = vadd.f32 %v4403, %v4726
      %v4728 = vpop.f32.mrf.mxu0
      %4729 = vmatprep.mubr.f32.mxu0 0.0
      %4730 = vmatmul.mubr.f32.gmra.mxu0 %v4555
      %v4731 = vpop.f32.mrf.mxu0
      %v4732 = vadd.f32 %v4408, %v4731
      %v4733 = vpop.f32.mrf.mxu0
      %4734 = vmatprep.mubr.f32.mxu0 0.0
      %4735 = vmatmul.mubr.f32.gmra.mxu0 %v4558
      %v4736 = vpop.f32.mrf.mxu0
      %v4737 = vadd.f32 %v4413, %v4736
      %v4738 = vpop.f32.mrf.mxu0
      %4739 = vmatprep.mubr.f32.mxu0 0.0
      %4740 = vmatmul.mubr.f32.gmra.mxu0 %v4561
      %v4741 = vpop.f32.mrf.mxu0
      %v4742 = vadd.f32 %v4418, %v4741
      %v4743 = vpop.f32.mrf.mxu0
      %4744 = vmatprep.mubr.f32.mxu0 0.0
      %4745 = vmatmul.mubr.f32.gmra.mxu0 %v4564
      %v4746 = vpop.f32.mrf.mxu0
      %v4747 = vadd.f32 %v4423, %v4746
      %v4748 = vpop.f32.mrf.mxu0
      %4749 = vmatprep.mubr.f32.mxu0 0.0
      %4750 = vmatmul.mubr.f32.gmra.mxu0 %v4567
      %v4751 = vpop.f32.mrf.mxu0
      %v4752 = vadd.f32 %v4428, %v4751
      %v4753 = vpop.f32.mrf.mxu0
      %4754 = vmatprep.mubr.f32.mxu0 0.0
      %4755 = vmatmul.mubr.f32.gmra.mxu0 %v4570
      %v4756 = vpop.f32.mrf.mxu0
      %v4757 = vadd.f32 %v4433, %v4756
      %v4758 = vpop.f32.mrf.mxu0
      %4759 = vmatprep.mubr.f32.mxu0 0.0
      %4760 = vmatmul.mubr.f32.gmra.mxu0 %v4573
      %v4761 = vpop.f32.mrf.mxu0
      %v4762 = vadd.f32 %v4438, %v4761
      %v4763 = vpop.f32.mrf.mxu0
      %4764 = vmatprep.mubr.f32.mxu0 0.0
      %4765 = vmatmul.mubr.f32.gmra.mxu0 %v4576
      %v4766 = vpop.f32.mrf.mxu0
      %v4767 = vadd.f32 %v4443, %v4766
      %v4768 = vpop.f32.mrf.mxu0
      %4769 = vmatprep.mubr.f32.mxu0 0.0
      %4770 = vmatmul.mubr.f32.gmra.mxu0 %v4579
      %v4771 = vpop.f32.mrf.mxu0
      %v4772 = vadd.f32 %v4448, %v4771
      %v4773 = vpop.f32.mrf.mxu0
      %4774 = vmatprep.mubr.f32.mxu0 0.0
      %4775 = vmatmul.mubr.f32.gmra.mxu0 %v4582
      %v4776 = vpop.f32.mrf.mxu0
      %v4777 = vadd.f32 %v4453, %v4776
      %v4778 = vpop.f32.mrf.mxu0
      %4779 = vmatprep.mubr.f32.mxu0 0.0
      %4780 = vmatmul.mubr.f32.gmra.mxu0 %v4585
      %v4781 = vpop.f32.mrf.mxu0
      %v4782 = vadd.f32 %v4458, %v4781
      %v4783 = vpop.f32.mrf.mxu0
      %4784 = vmatprep.mubr.f32.mxu0 0.0
      %4785 = vmatmul.mubr.f32.gmra.mxu0 %v4588
      %v4786 = vpop.f32.mrf.mxu0
      %v4787 = vadd.f32 %v4463, %v4786
      %v4788 = vpop.f32.mrf.mxu0
      %4789 = vmatprep.mubr.f32.mxu0 0.0
      %4790 = vmatmul.mubr.f32.gmra.mxu0 %v4591
      %v4791 = vpop.f32.mrf.mxu0
      %v4792 = vadd.f32 %v4468, %v4791
      %v4793 = vpop.f32.mrf.mxu0
      %4794 = vmatprep.mubr.f32.mxu0 0.0
      %4795 = vmatmul.mubr.f32.gmra.mxu0 %v4594
      %v4796 = vpop.f32.mrf.mxu0
      %v4797 = vadd.f32 %v4473, %v4796
      %v4798 = vpop.f32.mrf.mxu0
      %4799 = vmatprep.mubr.f32.mxu0 0.0
      %4800 = vmatmul.mubr.f32.gmra.mxu0 %v4597
      %v4801 = vpop.f32.mrf.mxu0
      %v4802 = vadd.f32 %v4478, %v4801
      %v4803 = vpop.f32.mrf.mxu0
      %4804 = vmatprep.mubr.f32.mxu0 0.0
      %4805 = vmatmul.mubr.f32.gmra.mxu0 %v4600
      %v4806 = vpop.f32.mrf.mxu0
      %v4807 = vadd.f32 %v4483, %v4806
      %v4808 = vpop.f32.mrf.mxu0
      %4809 = vmatprep.mubr.f32.mxu0 0.0
      %4810 = vmatmul.mubr.f32.gmra.mxu0 %v4603
      %v4811 = vpop.f32.mrf.mxu0
      %v4812 = vadd.f32 %v4488, %v4811
      %v4813 = vpop.f32.mrf.mxu0
      %4814 = vmatprep.mubr.f32.mxu0 0.0
      %4815 = vmatmul.mubr.f32.gmra.mxu0 %v4606
      %v4816 = vpop.f32.mrf.mxu0
      %v4817 = vadd.f32 %v4493, %v4816
      %v4818 = vpop.f32.mrf.mxu0
      %4819 = vmatprep.mubr.f32.mxu0 0.0
      %4820 = vmatmul.mubr.f32.gmra.mxu0 %v4609
      %v4821 = vpop.f32.mrf.mxu0
      %v4822 = vadd.f32 %v4498, %v4821
      %v4823 = vpop.f32.mrf.mxu0
      %4824 = vmatprep.mubr.f32.mxu0 0.0
      %4825 = vmatmul.mubr.f32.gmra.mxu0 %v4612
      %v4826 = vpop.f32.mrf.mxu0
      %v4827 = vadd.f32 %v4503, %v4826
      %v4828 = vpop.f32.mrf.mxu0
      %4829 = vmatprep.mubr.f32.mxu0 0.0
      %4830 = vmatmul.mubr.f32.gmra.mxu0 %v4615
      %v4831 = vpop.f32.mrf.mxu0
      %v4832 = vadd.f32 %v4508, %v4831
      %v4833 = vpop.f32.mrf.mxu0
      %4834 = vmatprep.mubr.f32.mxu0 0.0
      %4835 = vmatmul.mubr.f32.gmra.mxu0 %v4618
      %v4836 = vpop.f32.mrf.mxu0
      %v4837 = vadd.f32 %v4513, %v4836
      %v4838 = vpop.f32.mrf.mxu0
      %4839 = vmatprep.mubr.f32.mxu0 0.0
      %4840 = vmatmul.mubr.f32.gmra.mxu0 %v4621
      %v4841 = vpop.f32.mrf.mxu0
      %v4842 = vadd.f32 %v4518, %v4841
      %v4843 = vpop.f32.mrf.mxu0
      %4844 = vmatprep.mubr.f32.mxu0 0.0
      %4845 = vmatmul.mubr.f32.gmra.mxu0 %v4624
      %v4846 = vpop.f32.mrf.mxu0
      %v4847 = vadd.f32 %v4523, %v4846
      %v4848 = vpop.f32.mrf.mxu0
      %4849 = vmatprep.mubr.f32.mxu0 0.0
      %4850 = vmatmul.mubr.f32.gmra.mxu0 %v4627
      %v4851 = vpop.f32.mrf.mxu0
      %v4852 = vadd.f32 %v4528, %v4851
      %v4853 = vpop.f32.mrf.mxu0
      %4854 = vmatprep.mubr.f32.mxu0 0.0
      %4855 = vmatmul.mubr.f32.gmra.mxu0 %v4630
      %v4856 = vpop.f32.mrf.mxu0
      %v4857 = vadd.f32 %v4533, %v4856
      %v4858 = vpop.f32.mrf.mxu0
      %4859 = vdwg.mxu0
      %v4860 = vld [vmem:[#allocation3 + $0x2] sm:$0xff]
      %v4861 = vld [vmem:[#allocation3 + $0xa] sm:$0xff]
      %v4862 = vld [vmem:[#allocation3 + $0x1a] sm:$0xff]
      %v4863 = vld [vmem:[#allocation3 + $0x22] sm:$0xff]
      %v4864 = vld [vmem:[#allocation3 + $0x32] sm:$0xff]
      %v4865 = vld [vmem:[#allocation3 + $0x3a] sm:$0xff]
      %v4866 = vld [vmem:[#allocation3 + $0x4a] sm:$0xff]
      %v4867 = vld [vmem:[#allocation3 + $0x52] sm:$0xff]
      %v4868 = vld [vmem:[#allocation3 + $0x62] sm:$0xff]
      %v4869 = vld [vmem:[#allocation3 + $0x6a] sm:$0xff]
      %v4870 = vld [vmem:[#allocation3 + $0x7a] sm:$0xff]
      %v4871 = vld [vmem:[#allocation3 + $0x82] sm:$0xff]
      %v4872 = vld [vmem:[#allocation3 + $0x92] sm:$0xff]
      %v4873 = vld [vmem:[#allocation3 + $0x9a] sm:$0xff]
      %v4874 = vld [vmem:[#allocation3 + $0xaa] sm:$0xff]
      %v4875 = vld [vmem:[#allocation3 + $0xb2] sm:$0xff]
      %v4876 = vld [vmem:[#allocation3 + $0xc2] sm:$0xff]
      %v4877 = vld [vmem:[#allocation3 + $0xca] sm:$0xff]
      %v4878 = vld [vmem:[#allocation3 + $0xda] sm:$0xff]
      %v4879 = vld [vmem:[#allocation3 + $0xe2] sm:$0xff]
      %v4880 = vld [vmem:[#allocation3 + $0xf2] sm:$0xff]
      %v4881 = vld [vmem:[#allocation3 + $0xfa] sm:$0xff]
      %v4882 = vld [vmem:[#allocation3 + $0x10a] sm:$0xff]
      %v4883 = vld [vmem:[#allocation3 + $0x112] sm:$0xff]
      %v4884 = vld [vmem:[#allocation3 + $0x122] sm:$0xff]
      %v4885 = vld [vmem:[#allocation3 + $0x12a] sm:$0xff]
      %v4886 = vld [vmem:[#allocation3 + $0x13a] sm:$0xff]
      %v4887 = vld [vmem:[#allocation3 + $0x142] sm:$0xff]
      %v4888 = vld [vmem:[#allocation3 + $0x152] sm:$0xff]
      %v4889 = vld [vmem:[#allocation3 + $0x15a] sm:$0xff]
      %v4890 = vld [vmem:[#allocation3 + $0x16a] sm:$0xff]
      %v4891 = vld [vmem:[#allocation3 + $0x172] sm:$0xff]
      %s4892 = scalar_lea.vmem %s2, 8
      %v4893 = vld [vmem:[%s4892] sm:$0xf]
      %v4895 = vsel %vm204, %v4860, 0
      %v4898 = vsel %vm204, %v4861, 0
      %v4901 = vsel %vm204, %v4862, 0
      %v4904 = vsel %vm204, %v4863, 0
      %v4907 = vsel %vm204, %v4864, 0
      %v4910 = vsel %vm204, %v4865, 0
      %v4913 = vsel %vm204, %v4866, 0
      %v4916 = vsel %vm204, %v4867, 0
      %v4919 = vsel %vm204, %v4868, 0
      %v4922 = vsel %vm204, %v4869, 0
      %v4925 = vsel %vm204, %v4870, 0
      %v4928 = vsel %vm204, %v4871, 0
      %v4931 = vsel %vm204, %v4872, 0
      %v4934 = vsel %vm204, %v4873, 0
      %v4937 = vsel %vm204, %v4874, 0
      %v4940 = vsel %vm204, %v4875, 0
      %v4943 = vsel %vm204, %v4876, 0
      %v4946 = vsel %vm204, %v4877, 0
      %v4949 = vsel %vm204, %v4878, 0
      %v4952 = vsel %vm204, %v4879, 0
      %v4955 = vsel %vm204, %v4880, 0
      %v4958 = vsel %vm204, %v4881, 0
      %v4961 = vsel %vm204, %v4882, 0
      %v4964 = vsel %vm204, %v4883, 0
      %v4967 = vsel %vm204, %v4884, 0
      %v4970 = vsel %vm204, %v4885, 0
      %v4973 = vsel %vm204, %v4886, 0
      %v4976 = vsel %vm204, %v4887, 0
      %v4979 = vsel %vm204, %v4888, 0
      %v4982 = vsel %vm204, %v4889, 0
      %v4985 = vsel %vm204, %v4890, 0
      %v4988 = vsel %vm204, %v4891, 0
      %v4991 = vsel %vm478, %v4893, 0
      %4993 = vmatprep.subr.mxu0 0.0
      %4994 = vmatpush1.msra.mxu0 0.0
      %4995 = vmatprep.subr.mxu0 0.0
      %4996 = vmatpush1.msra.mxu0 0.0
      %4997 = vmatprep.subr.mxu0 0.0
      %4998 = vmatpush1.msra.mxu0 0.0
      %4999 = vmatprep.subr.mxu0 0.0
      %5000 = vmatpush1.msra.mxu0 0.0
      %5001 = vmatprep.subr.mxu0 0.0
      %5002 = vmatpush1.msra.mxu0 0.0
      %5003 = vmatprep.subr.mxu0 0.0
      %5004 = vmatpush1.msra.mxu0 0.0
      %5005 = vmatprep.subr.mxu0 0.0
      %5006 = vmatpush1.msra.mxu0 0.0
      %5007 = vmatprep.subr.mxu0 0.0
      %5008 = vmatpush1.msra.mxu0 0.0
      %5009 = vmatprep.subr.mxu0 0.0
      %5010 = vmatpush1.msra.mxu0 0.0
      %5011 = vmatprep.subr.mxu0 0.0
      %5012 = vmatpush1.msra.mxu0 0.0
      %5013 = vmatprep.subr.mxu0 0.0
      %5014 = vmatpush1.msra.mxu0 0.0
      %5015 = vmatprep.subr.mxu0 0.0
      %5016 = vmatpush1.msra.mxu0 0.0
      %5017 = vmatprep.subr.mxu0 0.0
      %5018 = vmatpush1.msra.mxu0 0.0
      %5019 = vmatprep.subr.mxu0 0.0
      %5020 = vmatpush1.msra.mxu0 0.0
      %5021 = vmatprep.subr.mxu0 0.0
      %5022 = vmatpush1.msra.mxu0 0.0
      %5023 = vmatprep.subr.mxu0 0.0
      %5024 = vmatpush1.msra.mxu0 %v4991
      %5025 = vmatprep.subr.mxu0 0.0
      %5026 = vmatpush2.msra.mxu0 0.0
      %5027 = vmatprep.subr.mxu0 0.0
      %5028 = vmatpush2.msra.mxu0 0.0
      %5029 = vmatprep.subr.mxu0 0.0
      %5030 = vmatpush2.msra.mxu0 0.0
      %5031 = vmatprep.subr.mxu0 0.0
      %5032 = vmatpush2.msra.mxu0 0.0
      %5033 = vmatprep.subr.mxu0 0.0
      %5034 = vmatpush2.msra.mxu0 0.0
      %5035 = vmatprep.subr.mxu0 0.0
      %5036 = vmatpush2.msra.mxu0 0.0
      %5037 = vmatprep.subr.mxu0 0.0
      %5038 = vmatpush2.msra.mxu0 0.0
      %5039 = vmatprep.subr.mxu0 0.0
      %5040 = vmatpush2.msra.mxu0 0.0
      %5041 = vmatprep.subr.mxu0 0.0
      %5042 = vmatpush2.msra.mxu0 0.0
      %5043 = vmatprep.subr.mxu0 0.0
      %5044 = vmatpush2.msra.mxu0 0.0
      %5045 = vmatprep.subr.mxu0 0.0
      %5046 = vmatpush2.msra.mxu0 0.0
      %5047 = vmatprep.subr.mxu0 0.0
      %5048 = vmatpush2.msra.mxu0 0.0
      %5049 = vmatprep.subr.mxu0 0.0
      %5050 = vmatpush2.msra.mxu0 0.0
      %5051 = vmatprep.subr.mxu0 0.0
      %5052 = vmatpush2.msra.mxu0 0.0
      %5053 = vmatprep.subr.mxu0 0.0
      %5054 = vmatpush2.msra.mxu0 0.0
      %5055 = vmatprep.subr.mxu0 0.0
      %5056 = vmatpush2.msra.mxu0 0.0
      %5057 = vmatprep.mubr.f32.mxu0 0.0
      %5058 = vmatmul.mubr.f32.gmra.mxu0 %v4895
      %v5059 = vpop.f32.mrf.mxu0
      %v5060 = vadd.f32 0.0, %v5059
      %v5061 = vpop.f32.mrf.mxu0
      %5062 = vmatprep.mubr.f32.mxu0 0.0
      %5063 = vmatmul.mubr.f32.gmra.mxu0 %v4898
      %v5064 = vpop.f32.mrf.mxu0
      %v5065 = vadd.f32 0.0, %v5064
      %v5066 = vpop.f32.mrf.mxu0
      %5067 = vmatprep.mubr.f32.mxu0 0.0
      %5068 = vmatmul.mubr.f32.gmra.mxu0 %v4901
      %v5069 = vpop.f32.mrf.mxu0
      %v5070 = vadd.f32 0.0, %v5069
      %v5071 = vpop.f32.mrf.mxu0
      %5072 = vmatprep.mubr.f32.mxu0 0.0
      %5073 = vmatmul.mubr.f32.gmra.mxu0 %v4904
      %v5074 = vpop.f32.mrf.mxu0
      %v5075 = vadd.f32 0.0, %v5074
      %v5076 = vpop.f32.mrf.mxu0
      %5077 = vmatprep.mubr.f32.mxu0 0.0
      %5078 = vmatmul.mubr.f32.gmra.mxu0 %v4907
      %v5079 = vpop.f32.mrf.mxu0
      %v5080 = vadd.f32 0.0, %v5079
      %v5081 = vpop.f32.mrf.mxu0
      %5082 = vmatprep.mubr.f32.mxu0 0.0
      %5083 = vmatmul.mubr.f32.gmra.mxu0 %v4910
      %v5084 = vpop.f32.mrf.mxu0
      %v5085 = vadd.f32 0.0, %v5084
      %v5086 = vpop.f32.mrf.mxu0
      %5087 = vmatprep.mubr.f32.mxu0 0.0
      %5088 = vmatmul.mubr.f32.gmra.mxu0 %v4913
      %v5089 = vpop.f32.mrf.mxu0
      %v5090 = vadd.f32 0.0, %v5089
      %v5091 = vpop.f32.mrf.mxu0
      %5092 = vmatprep.mubr.f32.mxu0 0.0
      %5093 = vmatmul.mubr.f32.gmra.mxu0 %v4916
      %v5094 = vpop.f32.mrf.mxu0
      %v5095 = vadd.f32 0.0, %v5094
      %v5096 = vpop.f32.mrf.mxu0
      %5097 = vmatprep.mubr.f32.mxu0 0.0
      %5098 = vmatmul.mubr.f32.gmra.mxu0 %v4919
      %v5099 = vpop.f32.mrf.mxu0
      %v5100 = vadd.f32 0.0, %v5099
      %v5101 = vpop.f32.mrf.mxu0
      %5102 = vmatprep.mubr.f32.mxu0 0.0
      %5103 = vmatmul.mubr.f32.gmra.mxu0 %v4922
      %v5104 = vpop.f32.mrf.mxu0
      %v5105 = vadd.f32 0.0, %v5104
      %v5106 = vpop.f32.mrf.mxu0
      %5107 = vmatprep.mubr.f32.mxu0 0.0
      %5108 = vmatmul.mubr.f32.gmra.mxu0 %v4925
      %v5109 = vpop.f32.mrf.mxu0
      %v5110 = vadd.f32 0.0, %v5109
      %v5111 = vpop.f32.mrf.mxu0
      %5112 = vmatprep.mubr.f32.mxu0 0.0
      %5113 = vmatmul.mubr.f32.gmra.mxu0 %v4928
      %v5114 = vpop.f32.mrf.mxu0
      %v5115 = vadd.f32 0.0, %v5114
      %v5116 = vpop.f32.mrf.mxu0
      %5117 = vmatprep.mubr.f32.mxu0 0.0
      %5118 = vmatmul.mubr.f32.gmra.mxu0 %v4931
      %v5119 = vpop.f32.mrf.mxu0
      %v5120 = vadd.f32 0.0, %v5119
      %v5121 = vpop.f32.mrf.mxu0
      %5122 = vmatprep.mubr.f32.mxu0 0.0
      %5123 = vmatmul.mubr.f32.gmra.mxu0 %v4934
      %v5124 = vpop.f32.mrf.mxu0
      %v5125 = vadd.f32 0.0, %v5124
      %v5126 = vpop.f32.mrf.mxu0
      %5127 = vmatprep.mubr.f32.mxu0 0.0
      %5128 = vmatmul.mubr.f32.gmra.mxu0 %v4937
      %v5129 = vpop.f32.mrf.mxu0
      %v5130 = vadd.f32 0.0, %v5129
      %v5131 = vpop.f32.mrf.mxu0
      %5132 = vmatprep.mubr.f32.mxu0 0.0
      %5133 = vmatmul.mubr.f32.gmra.mxu0 %v4940
      %v5134 = vpop.f32.mrf.mxu0
      %v5135 = vadd.f32 0.0, %v5134
      %v5136 = vpop.f32.mrf.mxu0
      %5137 = vmatprep.mubr.f32.mxu0 0.0
      %5138 = vmatmul.mubr.f32.gmra.mxu0 %v4943
      %v5139 = vpop.f32.mrf.mxu0
      %v5140 = vadd.f32 0.0, %v5139
      %v5141 = vpop.f32.mrf.mxu0
      %5142 = vmatprep.mubr.f32.mxu0 0.0
      %5143 = vmatmul.mubr.f32.gmra.mxu0 %v4946
      %v5144 = vpop.f32.mrf.mxu0
      %v5145 = vadd.f32 0.0, %v5144
      %v5146 = vpop.f32.mrf.mxu0
      %5147 = vmatprep.mubr.f32.mxu0 0.0
      %5148 = vmatmul.mubr.f32.gmra.mxu0 %v4949
      %v5149 = vpop.f32.mrf.mxu0
      %v5150 = vadd.f32 0.0, %v5149
      %v5151 = vpop.f32.mrf.mxu0
      %5152 = vmatprep.mubr.f32.mxu0 0.0
      %5153 = vmatmul.mubr.f32.gmra.mxu0 %v4952
      %v5154 = vpop.f32.mrf.mxu0
      %v5155 = vadd.f32 0.0, %v5154
      %v5156 = vpop.f32.mrf.mxu0
      %5157 = vmatprep.mubr.f32.mxu0 0.0
      %5158 = vmatmul.mubr.f32.gmra.mxu0 %v4955
      %v5159 = vpop.f32.mrf.mxu0
      %v5160 = vadd.f32 0.0, %v5159
      %v5161 = vpop.f32.mrf.mxu0
      %5162 = vmatprep.mubr.f32.mxu0 0.0
      %5163 = vmatmul.mubr.f32.gmra.mxu0 %v4958
      %v5164 = vpop.f32.mrf.mxu0
      %v5165 = vadd.f32 0.0, %v5164
      %v5166 = vpop.f32.mrf.mxu0
      %5167 = vmatprep.mubr.f32.mxu0 0.0
      %5168 = vmatmul.mubr.f32.gmra.mxu0 %v4961
      %v5169 = vpop.f32.mrf.mxu0
      %v5170 = vadd.f32 0.0, %v5169
      %v5171 = vpop.f32.mrf.mxu0
      %5172 = vmatprep.mubr.f32.mxu0 0.0
      %5173 = vmatmul.mubr.f32.gmra.mxu0 %v4964
      %v5174 = vpop.f32.mrf.mxu0
      %v5175 = vadd.f32 0.0, %v5174
      %v5176 = vpop.f32.mrf.mxu0
      %5177 = vmatprep.mubr.f32.mxu0 0.0
      %5178 = vmatmul.mubr.f32.gmra.mxu0 %v4967
      %v5179 = vpop.f32.mrf.mxu0
      %v5180 = vadd.f32 0.0, %v5179
      %v5181 = vpop.f32.mrf.mxu0
      %5182 = vmatprep.mubr.f32.mxu0 0.0
      %5183 = vmatmul.mubr.f32.gmra.mxu0 %v4970
      %v5184 = vpop.f32.mrf.mxu0
      %v5185 = vadd.f32 0.0, %v5184
      %v5186 = vpop.f32.mrf.mxu0
      %5187 = vmatprep.mubr.f32.mxu0 0.0
      %5188 = vmatmul.mubr.f32.gmra.mxu0 %v4973
      %v5189 = vpop.f32.mrf.mxu0
      %v5190 = vadd.f32 0.0, %v5189
      %v5191 = vpop.f32.mrf.mxu0
      %5192 = vmatprep.mubr.f32.mxu0 0.0
      %5193 = vmatmul.mubr.f32.gmra.mxu0 %v4976
      %v5194 = vpop.f32.mrf.mxu0
      %v5195 = vadd.f32 0.0, %v5194
      %v5196 = vpop.f32.mrf.mxu0
      %5197 = vmatprep.mubr.f32.mxu0 0.0
      %5198 = vmatmul.mubr.f32.gmra.mxu0 %v4979
      %v5199 = vpop.f32.mrf.mxu0
      %v5200 = vadd.f32 0.0, %v5199
      %v5201 = vpop.f32.mrf.mxu0
      %5202 = vmatprep.mubr.f32.mxu0 0.0
      %5203 = vmatmul.mubr.f32.gmra.mxu0 %v4982
      %v5204 = vpop.f32.mrf.mxu0
      %v5205 = vadd.f32 0.0, %v5204
      %v5206 = vpop.f32.mrf.mxu0
      %5207 = vmatprep.mubr.f32.mxu0 0.0
      %5208 = vmatmul.mubr.f32.gmra.mxu0 %v4985
      %v5209 = vpop.f32.mrf.mxu0
      %v5210 = vadd.f32 0.0, %v5209
      %v5211 = vpop.f32.mrf.mxu0
      %5212 = vmatprep.mubr.f32.mxu0 0.0
      %5213 = vmatmul.mubr.f32.gmra.mxu0 %v4988
      %v5214 = vpop.f32.mrf.mxu0
      %v5215 = vadd.f32 0.0, %v5214
      %v5216 = vpop.f32.mrf.mxu0
      %5217 = vdwg.mxu0
      %v5218 = vadd.f32 %v4702, %v5060
      %v5219 = vadd.f32 %v4707, %v5065
      %v5220 = vadd.f32 %v4712, %v5070
      %v5221 = vadd.f32 %v4717, %v5075
      %v5222 = vadd.f32 %v4722, %v5080
      %v5223 = vadd.f32 %v4727, %v5085
      %v5224 = vadd.f32 %v4732, %v5090
      %v5225 = vadd.f32 %v4737, %v5095
      %v5226 = vadd.f32 %v4742, %v5100
      %v5227 = vadd.f32 %v4747, %v5105
      %v5228 = vadd.f32 %v4752, %v5110
      %v5229 = vadd.f32 %v4757, %v5115
      %v5230 = vadd.f32 %v4762, %v5120
      %v5231 = vadd.f32 %v4767, %v5125
      %v5232 = vadd.f32 %v4772, %v5130
      %v5233 = vadd.f32 %v4777, %v5135
      %v5234 = vadd.f32 %v4782, %v5140
      %v5235 = vadd.f32 %v4787, %v5145
      %v5236 = vadd.f32 %v4792, %v5150
      %v5237 = vadd.f32 %v4797, %v5155
      %v5238 = vadd.f32 %v4802, %v5160
      %v5239 = vadd.f32 %v4807, %v5165
      %v5240 = vadd.f32 %v4812, %v5170
      %v5241 = vadd.f32 %v4817, %v5175
      %v5242 = vadd.f32 %v4822, %v5180
      %v5243 = vadd.f32 %v4827, %v5185
      %v5244 = vadd.f32 %v4832, %v5190
      %v5245 = vadd.f32 %v4837, %v5195
      %v5246 = vadd.f32 %v4842, %v5200
      %v5247 = vadd.f32 %v4847, %v5205
      %v5248 = vadd.f32 %v4852, %v5210
      %v5249 = vadd.f32 %v4857, %v5215
      %v5250 = vld [vmem:[%s4035] sm:$0xff]
      %v5251 = vld [vmem:[%s4035 + $0x8] sm:$0xff]
      %v5252 = vld [vmem:[%s4035 + $0x18] sm:$0xff]
      %v5253 = vld [vmem:[%s4035 + $0x20] sm:$0xff]
      %v5254 = vld [vmem:[%s4035 + $0x30] sm:$0xff]
      %v5255 = vld [vmem:[%s4035 + $0x38] sm:$0xff]
      %v5256 = vld [vmem:[%s4035 + $0x48] sm:$0xff]
      %v5257 = vld [vmem:[%s4035 + $0x50] sm:$0xff]
      %v5258 = vld [vmem:[%s4035 + $0x60] sm:$0xff]
      %v5259 = vld [vmem:[%s4035 + $0x68] sm:$0xff]
      %v5260 = vld [vmem:[%s4035 + $0x78] sm:$0xff]
      %v5261 = vld [vmem:[%s4035 + $0x80] sm:$0xff]
      %v5262 = vld [vmem:[%s4035 + $0x90] sm:$0xff]
      %v5263 = vld [vmem:[%s4035 + $0x98] sm:$0xff]
      %v5264 = vld [vmem:[%s4035 + $0xa8] sm:$0xff]
      %v5265 = vld [vmem:[%s4035 + $0xb0] sm:$0xff]
      %v5266 = vld [vmem:[%s4035 + $0xc0] sm:$0xff]
      %v5267 = vld [vmem:[%s4035 + $0xc8] sm:$0xff]
      %v5268 = vld [vmem:[%s4035 + $0xd8] sm:$0xff]
      %v5269 = vld [vmem:[%s4035 + $0xe0] sm:$0xff]
      %v5270 = vld [vmem:[%s4035 + $0xf0] sm:$0xff]
      %v5271 = vld [vmem:[%s4035 + $0xf8] sm:$0xff]
      %v5272 = vld [vmem:[%s4035 + $0x108] sm:$0xff]
      %v5273 = vld [vmem:[%s4035 + $0x110] sm:$0xff]
      %v5274 = vld [vmem:[%s4035 + $0x120] sm:$0xff]
      %v5275 = vld [vmem:[%s4035 + $0x128] sm:$0xff]
      %v5276 = vld [vmem:[%s4035 + $0x138] sm:$0xff]
      %v5277 = vld [vmem:[%s4035 + $0x140] sm:$0xff]
      %v5278 = vld [vmem:[%s4035 + $0x150] sm:$0xff]
      %v5279 = vld [vmem:[%s4035 + $0x158] sm:$0xff]
      %v5280 = vld [vmem:[%s4035 + $0x168] sm:$0xff]
      %v5281 = vld [vmem:[%s4035 + $0x170] sm:$0xff]
      %s5282 = scalar_lea.vmem %s2, 12
      %v5283 = vld [vmem:[%s5282] sm:$0xf]
      %v5285 = vsel %vm204, %v5250, 0
      %v5288 = vsel %vm204, %v5251, 0
      %v5291 = vsel %vm204, %v5252, 0
      %v5294 = vsel %vm204, %v5253, 0
      %v5297 = vsel %vm204, %v5254, 0
      %v5300 = vsel %vm204, %v5255, 0
      %v5303 = vsel %vm204, %v5256, 0
      %v5306 = vsel %vm204, %v5257, 0
      %v5309 = vsel %vm204, %v5258, 0
      %v5312 = vsel %vm204, %v5259, 0
      %v5315 = vsel %vm204, %v5260, 0
      %v5318 = vsel %vm204, %v5261, 0
      %v5321 = vsel %vm204, %v5262, 0
      %v5324 = vsel %vm204, %v5263, 0
      %v5327 = vsel %vm204, %v5264, 0
      %v5330 = vsel %vm204, %v5265, 0
      %v5333 = vsel %vm204, %v5266, 0
      %v5336 = vsel %vm204, %v5267, 0
      %v5339 = vsel %vm204, %v5268, 0
      %v5342 = vsel %vm204, %v5269, 0
      %v5345 = vsel %vm204, %v5270, 0
      %v5348 = vsel %vm204, %v5271, 0
      %v5351 = vsel %vm204, %v5272, 0
      %v5354 = vsel %vm204, %v5273, 0
      %v5357 = vsel %vm204, %v5274, 0
      %v5360 = vsel %vm204, %v5275, 0
      %v5363 = vsel %vm204, %v5276, 0
      %v5366 = vsel %vm204, %v5277, 0
      %v5369 = vsel %vm204, %v5278, 0
      %v5372 = vsel %vm204, %v5279, 0
      %v5375 = vsel %vm204, %v5280, 0
      %v5378 = vsel %vm204, %v5281, 0
      %v5381 = vsel %vm478, %v5283, 0
      %5383 = vmatprep.subr.mxu0 0.0
      %5384 = vmatpush1.msra.mxu0 0.0
      %5385 = vmatprep.subr.mxu0 0.0
      %5386 = vmatpush1.msra.mxu0 0.0
      %5387 = vmatprep.subr.mxu0 0.0
      %5388 = vmatpush1.msra.mxu0 0.0
      %5389 = vmatprep.subr.mxu0 0.0
      %5390 = vmatpush1.msra.mxu0 0.0
      %5391 = vmatprep.subr.mxu0 0.0
      %5392 = vmatpush1.msra.mxu0 0.0
      %5393 = vmatprep.subr.mxu0 0.0
      %5394 = vmatpush1.msra.mxu0 0.0
      %5395 = vmatprep.subr.mxu0 0.0
      %5396 = vmatpush1.msra.mxu0 0.0
      %5397 = vmatprep.subr.mxu0 0.0
      %5398 = vmatpush1.msra.mxu0 0.0
      %5399 = vmatprep.subr.mxu0 0.0
      %5400 = vmatpush1.msra.mxu0 0.0
      %5401 = vmatprep.subr.mxu0 0.0
      %5402 = vmatpush1.msra.mxu0 0.0
      %5403 = vmatprep.subr.mxu0 0.0
      %5404 = vmatpush1.msra.mxu0 0.0
      %5405 = vmatprep.subr.mxu0 0.0
      %5406 = vmatpush1.msra.mxu0 0.0
      %5407 = vmatprep.subr.mxu0 0.0
      %5408 = vmatpush1.msra.mxu0 0.0
      %5409 = vmatprep.subr.mxu0 0.0
      %5410 = vmatpush1.msra.mxu0 0.0
      %5411 = vmatprep.subr.mxu0 0.0
      %5412 = vmatpush1.msra.mxu0 0.0
      %5413 = vmatprep.subr.mxu0 0.0
      %5414 = vmatpush1.msra.mxu0 %v5381
      %5415 = vmatprep.subr.mxu0 0.0
      %5416 = vmatpush2.msra.mxu0 0.0
      %5417 = vmatprep.subr.mxu0 0.0
      %5418 = vmatpush2.msra.mxu0 0.0
      %5419 = vmatprep.subr.mxu0 0.0
      %5420 = vmatpush2.msra.mxu0 0.0
      %5421 = vmatprep.subr.mxu0 0.0
      %5422 = vmatpush2.msra.mxu0 0.0
      %5423 = vmatprep.subr.mxu0 0.0
      %5424 = vmatpush2.msra.mxu0 0.0
      %5425 = vmatprep.subr.mxu0 0.0
      %5426 = vmatpush2.msra.mxu0 0.0
      %5427 = vmatprep.subr.mxu0 0.0
      %5428 = vmatpush2.msra.mxu0 0.0
      %5429 = vmatprep.subr.mxu0 0.0
      %5430 = vmatpush2.msra.mxu0 0.0
      %5431 = vmatprep.subr.mxu0 0.0
      %5432 = vmatpush2.msra.mxu0 0.0
      %5433 = vmatprep.subr.mxu0 0.0
      %5434 = vmatpush2.msra.mxu0 0.0
      %5435 = vmatprep.subr.mxu0 0.0
      %5436 = vmatpush2.msra.mxu0 0.0
      %5437 = vmatprep.subr.mxu0 0.0
      %5438 = vmatpush2.msra.mxu0 0.0
      %5439 = vmatprep.subr.mxu0 0.0
      %5440 = vmatpush2.msra.mxu0 0.0
      %5441 = vmatprep.subr.mxu0 0.0
      %5442 = vmatpush2.msra.mxu0 0.0
      %5443 = vmatprep.subr.mxu0 0.0
      %5444 = vmatpush2.msra.mxu0 0.0
      %5445 = vmatprep.subr.mxu0 0.0
      %5446 = vmatpush2.msra.mxu0 0.0
      %5447 = vmatprep.mubr.f32.mxu0 0.0
      %5448 = vmatmul.mubr.f32.gmra.mxu0 %v5285
      %v5449 = vpop.f32.mrf.mxu0
      %v5450 = vadd.f32 0.0, %v5449
      %v5451 = vpop.f32.mrf.mxu0
      %5452 = vmatprep.mubr.f32.mxu0 0.0
      %5453 = vmatmul.mubr.f32.gmra.mxu0 %v5288
      %v5454 = vpop.f32.mrf.mxu0
      %v5455 = vadd.f32 0.0, %v5454
      %v5456 = vpop.f32.mrf.mxu0
      %5457 = vmatprep.mubr.f32.mxu0 0.0
      %5458 = vmatmul.mubr.f32.gmra.mxu0 %v5291
      %v5459 = vpop.f32.mrf.mxu0
      %v5460 = vadd.f32 0.0, %v5459
      %v5461 = vpop.f32.mrf.mxu0
      %5462 = vmatprep.mubr.f32.mxu0 0.0
      %5463 = vmatmul.mubr.f32.gmra.mxu0 %v5294
      %v5464 = vpop.f32.mrf.mxu0
      %v5465 = vadd.f32 0.0, %v5464
      %v5466 = vpop.f32.mrf.mxu0
      %5467 = vmatprep.mubr.f32.mxu0 0.0
      %5468 = vmatmul.mubr.f32.gmra.mxu0 %v5297
      %v5469 = vpop.f32.mrf.mxu0
      %v5470 = vadd.f32 0.0, %v5469
      %v5471 = vpop.f32.mrf.mxu0
      %5472 = vmatprep.mubr.f32.mxu0 0.0
      %5473 = vmatmul.mubr.f32.gmra.mxu0 %v5300
      %v5474 = vpop.f32.mrf.mxu0
      %v5475 = vadd.f32 0.0, %v5474
      %v5476 = vpop.f32.mrf.mxu0
      %5477 = vmatprep.mubr.f32.mxu0 0.0
      %5478 = vmatmul.mubr.f32.gmra.mxu0 %v5303
      %v5479 = vpop.f32.mrf.mxu0
      %v5480 = vadd.f32 0.0, %v5479
      %v5481 = vpop.f32.mrf.mxu0
      %5482 = vmatprep.mubr.f32.mxu0 0.0
      %5483 = vmatmul.mubr.f32.gmra.mxu0 %v5306
      %v5484 = vpop.f32.mrf.mxu0
      %v5485 = vadd.f32 0.0, %v5484
      %v5486 = vpop.f32.mrf.mxu0
      %5487 = vmatprep.mubr.f32.mxu0 0.0
      %5488 = vmatmul.mubr.f32.gmra.mxu0 %v5309
      %v5489 = vpop.f32.mrf.mxu0
      %v5490 = vadd.f32 0.0, %v5489
      %v5491 = vpop.f32.mrf.mxu0
      %5492 = vmatprep.mubr.f32.mxu0 0.0
      %5493 = vmatmul.mubr.f32.gmra.mxu0 %v5312
      %v5494 = vpop.f32.mrf.mxu0
      %v5495 = vadd.f32 0.0, %v5494
      %v5496 = vpop.f32.mrf.mxu0
      %5497 = vmatprep.mubr.f32.mxu0 0.0
      %5498 = vmatmul.mubr.f32.gmra.mxu0 %v5315
      %v5499 = vpop.f32.mrf.mxu0
      %v5500 = vadd.f32 0.0, %v5499
      %v5501 = vpop.f32.mrf.mxu0
      %5502 = vmatprep.mubr.f32.mxu0 0.0
      %5503 = vmatmul.mubr.f32.gmra.mxu0 %v5318
      %v5504 = vpop.f32.mrf.mxu0
      %v5505 = vadd.f32 0.0, %v5504
      %v5506 = vpop.f32.mrf.mxu0
      %5507 = vmatprep.mubr.f32.mxu0 0.0
      %5508 = vmatmul.mubr.f32.gmra.mxu0 %v5321
      %v5509 = vpop.f32.mrf.mxu0
      %v5510 = vadd.f32 0.0, %v5509
      %v5511 = vpop.f32.mrf.mxu0
      %5512 = vmatprep.mubr.f32.mxu0 0.0
      %5513 = vmatmul.mubr.f32.gmra.mxu0 %v5324
      %v5514 = vpop.f32.mrf.mxu0
      %v5515 = vadd.f32 0.0, %v5514
      %v5516 = vpop.f32.mrf.mxu0
      %5517 = vmatprep.mubr.f32.mxu0 0.0
      %5518 = vmatmul.mubr.f32.gmra.mxu0 %v5327
      %v5519 = vpop.f32.mrf.mxu0
      %v5520 = vadd.f32 0.0, %v5519
      %v5521 = vpop.f32.mrf.mxu0
      %5522 = vmatprep.mubr.f32.mxu0 0.0
      %5523 = vmatmul.mubr.f32.gmra.mxu0 %v5330
      %v5524 = vpop.f32.mrf.mxu0
      %v5525 = vadd.f32 0.0, %v5524
      %v5526 = vpop.f32.mrf.mxu0
      %5527 = vmatprep.mubr.f32.mxu0 0.0
      %5528 = vmatmul.mubr.f32.gmra.mxu0 %v5333
      %v5529 = vpop.f32.mrf.mxu0
      %v5530 = vadd.f32 0.0, %v5529
      %v5531 = vpop.f32.mrf.mxu0
      %5532 = vmatprep.mubr.f32.mxu0 0.0
      %5533 = vmatmul.mubr.f32.gmra.mxu0 %v5336
      %v5534 = vpop.f32.mrf.mxu0
      %v5535 = vadd.f32 0.0, %v5534
      %v5536 = vpop.f32.mrf.mxu0
      %5537 = vmatprep.mubr.f32.mxu0 0.0
      %5538 = vmatmul.mubr.f32.gmra.mxu0 %v5339
      %v5539 = vpop.f32.mrf.mxu0
      %v5540 = vadd.f32 0.0, %v5539
      %v5541 = vpop.f32.mrf.mxu0
      %5542 = vmatprep.mubr.f32.mxu0 0.0
      %5543 = vmatmul.mubr.f32.gmra.mxu0 %v5342
      %v5544 = vpop.f32.mrf.mxu0
      %v5545 = vadd.f32 0.0, %v5544
      %v5546 = vpop.f32.mrf.mxu0
      %5547 = vmatprep.mubr.f32.mxu0 0.0
      %5548 = vmatmul.mubr.f32.gmra.mxu0 %v5345
      %v5549 = vpop.f32.mrf.mxu0
      %v5550 = vadd.f32 0.0, %v5549
      %v5551 = vpop.f32.mrf.mxu0
      %5552 = vmatprep.mubr.f32.mxu0 0.0
      %5553 = vmatmul.mubr.f32.gmra.mxu0 %v5348
      %v5554 = vpop.f32.mrf.mxu0
      %v5555 = vadd.f32 0.0, %v5554
      %v5556 = vpop.f32.mrf.mxu0
      %5557 = vmatprep.mubr.f32.mxu0 0.0
      %5558 = vmatmul.mubr.f32.gmra.mxu0 %v5351
      %v5559 = vpop.f32.mrf.mxu0
      %v5560 = vadd.f32 0.0, %v5559
      %v5561 = vpop.f32.mrf.mxu0
      %5562 = vmatprep.mubr.f32.mxu0 0.0
      %5563 = vmatmul.mubr.f32.gmra.mxu0 %v5354
      %v5564 = vpop.f32.mrf.mxu0
      %v5565 = vadd.f32 0.0, %v5564
      %v5566 = vpop.f32.mrf.mxu0
      %5567 = vmatprep.mubr.f32.mxu0 0.0
      %5568 = vmatmul.mubr.f32.gmra.mxu0 %v5357
      %v5569 = vpop.f32.mrf.mxu0
      %v5570 = vadd.f32 0.0, %v5569
      %v5571 = vpop.f32.mrf.mxu0
      %5572 = vmatprep.mubr.f32.mxu0 0.0
      %5573 = vmatmul.mubr.f32.gmra.mxu0 %v5360
      %v5574 = vpop.f32.mrf.mxu0
      %v5575 = vadd.f32 0.0, %v5574
      %v5576 = vpop.f32.mrf.mxu0
      %5577 = vmatprep.mubr.f32.mxu0 0.0
      %5578 = vmatmul.mubr.f32.gmra.mxu0 %v5363
      %v5579 = vpop.f32.mrf.mxu0
      %v5580 = vadd.f32 0.0, %v5579
      %v5581 = vpop.f32.mrf.mxu0
      %5582 = vmatprep.mubr.f32.mxu0 0.0
      %5583 = vmatmul.mubr.f32.gmra.mxu0 %v5366
      %v5584 = vpop.f32.mrf.mxu0
      %v5585 = vadd.f32 0.0, %v5584
      %v5586 = vpop.f32.mrf.mxu0
      %5587 = vmatprep.mubr.f32.mxu0 0.0
      %5588 = vmatmul.mubr.f32.gmra.mxu0 %v5369
      %v5589 = vpop.f32.mrf.mxu0
      %v5590 = vadd.f32 0.0, %v5589
      %v5591 = vpop.f32.mrf.mxu0
      %5592 = vmatprep.mubr.f32.mxu0 0.0
      %5593 = vmatmul.mubr.f32.gmra.mxu0 %v5372
      %v5594 = vpop.f32.mrf.mxu0
      %v5595 = vadd.f32 0.0, %v5594
      %v5596 = vpop.f32.mrf.mxu0
      %5597 = vmatprep.mubr.f32.mxu0 0.0
      %5598 = vmatmul.mubr.f32.gmra.mxu0 %v5375
      %v5599 = vpop.f32.mrf.mxu0
      %v5600 = vadd.f32 0.0, %v5599
      %v5601 = vpop.f32.mrf.mxu0
      %5602 = vmatprep.mubr.f32.mxu0 0.0
      %5603 = vmatmul.mubr.f32.gmra.mxu0 %v5378
      %v5604 = vpop.f32.mrf.mxu0
      %v5605 = vadd.f32 0.0, %v5604
      %v5606 = vpop.f32.mrf.mxu0
      %5607 = vdwg.mxu0
      %v5608 = vadd.f32 %v5218, %v5450
      %v5609 = vadd.f32 %v5219, %v5455
      %v5610 = vadd.f32 %v5220, %v5460
      %v5611 = vadd.f32 %v5221, %v5465
      %v5612 = vadd.f32 %v5222, %v5470
      %v5613 = vadd.f32 %v5223, %v5475
      %v5614 = vadd.f32 %v5224, %v5480
      %v5615 = vadd.f32 %v5225, %v5485
      %v5616 = vadd.f32 %v5226, %v5490
      %v5617 = vadd.f32 %v5227, %v5495
      %v5618 = vadd.f32 %v5228, %v5500
      %v5619 = vadd.f32 %v5229, %v5505
      %v5620 = vadd.f32 %v5230, %v5510
      %v5621 = vadd.f32 %v5231, %v5515
      %v5622 = vadd.f32 %v5232, %v5520
      %v5623 = vadd.f32 %v5233, %v5525
      %v5624 = vadd.f32 %v5234, %v5530
      %v5625 = vadd.f32 %v5235, %v5535
      %v5626 = vadd.f32 %v5236, %v5540
      %v5627 = vadd.f32 %v5237, %v5545
      %v5628 = vadd.f32 %v5238, %v5550
      %v5629 = vadd.f32 %v5239, %v5555
      %v5630 = vadd.f32 %v5240, %v5560
      %v5631 = vadd.f32 %v5241, %v5565
      %v5632 = vadd.f32 %v5242, %v5570
      %v5633 = vadd.f32 %v5243, %v5575
      %v5634 = vadd.f32 %v5244, %v5580
      %v5635 = vadd.f32 %v5245, %v5585
      %v5636 = vadd.f32 %v5246, %v5590
      %v5637 = vadd.f32 %v5247, %v5595
      %v5638 = vadd.f32 %v5248, %v5600
      %v5639 = vadd.f32 %v5249, %v5605
      %v5640 = vld [vmem:[%s4035 + $0x1] sm:$0xff]
      %v5641 = vld [vmem:[%s4035 + $0x9] sm:$0xff]
      %v5642 = vld [vmem:[%s4035 + $0x19] sm:$0xff]
      %v5643 = vld [vmem:[%s4035 + $0x21] sm:$0xff]
      %v5644 = vld [vmem:[%s4035 + $0x31] sm:$0xff]
      %v5645 = vld [vmem:[%s4035 + $0x39] sm:$0xff]
      %v5646 = vld [vmem:[%s4035 + $0x49] sm:$0xff]
      %v5647 = vld [vmem:[%s4035 + $0x51] sm:$0xff]
      %v5648 = vld [vmem:[%s4035 + $0x61] sm:$0xff]
      %v5649 = vld [vmem:[%s4035 + $0x69] sm:$0xff]
      %v5650 = vld [vmem:[%s4035 + $0x79] sm:$0xff]
      %v5651 = vld [vmem:[%s4035 + $0x81] sm:$0xff]
      %v5652 = vld [vmem:[%s4035 + $0x91] sm:$0xff]
      %v5653 = vld [vmem:[%s4035 + $0x99] sm:$0xff]
      %v5654 = vld [vmem:[%s4035 + $0xa9] sm:$0xff]
      %v5655 = vld [vmem:[%s4035 + $0xb1] sm:$0xff]
      %v5656 = vld [vmem:[%s4035 + $0xc1] sm:$0xff]
      %v5657 = vld [vmem:[%s4035 + $0xc9] sm:$0xff]
      %v5658 = vld [vmem:[%s4035 + $0xd9] sm:$0xff]
      %v5659 = vld [vmem:[%s4035 + $0xe1] sm:$0xff]
      %v5660 = vld [vmem:[%s4035 + $0xf1] sm:$0xff]
      %v5661 = vld [vmem:[%s4035 + $0xf9] sm:$0xff]
      %v5662 = vld [vmem:[%s4035 + $0x109] sm:$0xff]
      %v5663 = vld [vmem:[%s4035 + $0x111] sm:$0xff]
      %v5664 = vld [vmem:[%s4035 + $0x121] sm:$0xff]
      %v5665 = vld [vmem:[%s4035 + $0x129] sm:$0xff]
      %v5666 = vld [vmem:[%s4035 + $0x139] sm:$0xff]
      %v5667 = vld [vmem:[%s4035 + $0x141] sm:$0xff]
      %v5668 = vld [vmem:[%s4035 + $0x151] sm:$0xff]
      %v5669 = vld [vmem:[%s4035 + $0x159] sm:$0xff]
      %v5670 = vld [vmem:[%s4035 + $0x169] sm:$0xff]
      %v5671 = vld [vmem:[%s4035 + $0x171] sm:$0xff]
      %s5672 = scalar_lea.vmem %s2, 16
      %v5673 = vld [vmem:[%s5672] sm:$0xf]
      %v5675 = vsel %vm204, %v5640, 0
      %v5678 = vsel %vm204, %v5641, 0
      %v5681 = vsel %vm204, %v5642, 0
      %v5684 = vsel %vm204, %v5643, 0
      %v5687 = vsel %vm204, %v5644, 0
      %v5690 = vsel %vm204, %v5645, 0
      %v5693 = vsel %vm204, %v5646, 0
      %v5696 = vsel %vm204, %v5647, 0
      %v5699 = vsel %vm204, %v5648, 0
      %v5702 = vsel %vm204, %v5649, 0
      %v5705 = vsel %vm204, %v5650, 0
      %v5708 = vsel %vm204, %v5651, 0
      %v5711 = vsel %vm204, %v5652, 0
      %v5714 = vsel %vm204, %v5653, 0
      %v5717 = vsel %vm204, %v5654, 0
      %v5720 = vsel %vm204, %v5655, 0
      %v5723 = vsel %vm204, %v5656, 0
      %v5726 = vsel %vm204, %v5657, 0
      %v5729 = vsel %vm204, %v5658, 0
      %v5732 = vsel %vm204, %v5659, 0
      %v5735 = vsel %vm204, %v5660, 0
      %v5738 = vsel %vm204, %v5661, 0
      %v5741 = vsel %vm204, %v5662, 0
      %v5744 = vsel %vm204, %v5663, 0
      %v5747 = vsel %vm204, %v5664, 0
      %v5750 = vsel %vm204, %v5665, 0
      %v5753 = vsel %vm204, %v5666, 0
      %v5756 = vsel %vm204, %v5667, 0
      %v5759 = vsel %vm204, %v5668, 0
      %v5762 = vsel %vm204, %v5669, 0
      %v5765 = vsel %vm204, %v5670, 0
      %v5768 = vsel %vm204, %v5671, 0
      %v5771 = vsel %vm478, %v5673, 0
      %5773 = vmatprep.subr.mxu0 0.0
      %5774 = vmatpush1.msra.mxu0 0.0
      %5775 = vmatprep.subr.mxu0 0.0
      %5776 = vmatpush1.msra.mxu0 0.0
      %5777 = vmatprep.subr.mxu0 0.0
      %5778 = vmatpush1.msra.mxu0 0.0
      %5779 = vmatprep.subr.mxu0 0.0
      %5780 = vmatpush1.msra.mxu0 0.0
      %5781 = vmatprep.subr.mxu0 0.0
      %5782 = vmatpush1.msra.mxu0 0.0
      %5783 = vmatprep.subr.mxu0 0.0
      %5784 = vmatpush1.msra.mxu0 0.0
      %5785 = vmatprep.subr.mxu0 0.0
      %5786 = vmatpush1.msra.mxu0 0.0
      %5787 = vmatprep.subr.mxu0 0.0
      %5788 = vmatpush1.msra.mxu0 0.0
      %5789 = vmatprep.subr.mxu0 0.0
      %5790 = vmatpush1.msra.mxu0 0.0
      %5791 = vmatprep.subr.mxu0 0.0
      %5792 = vmatpush1.msra.mxu0 0.0
      %5793 = vmatprep.subr.mxu0 0.0
      %5794 = vmatpush1.msra.mxu0 0.0
      %5795 = vmatprep.subr.mxu0 0.0
      %5796 = vmatpush1.msra.mxu0 0.0
      %5797 = vmatprep.subr.mxu0 0.0
      %5798 = vmatpush1.msra.mxu0 0.0
      %5799 = vmatprep.subr.mxu0 0.0
      %5800 = vmatpush1.msra.mxu0 0.0
      %5801 = vmatprep.subr.mxu0 0.0
      %5802 = vmatpush1.msra.mxu0 0.0
      %5803 = vmatprep.subr.mxu0 0.0
      %5804 = vmatpush1.msra.mxu0 %v5771
      %5805 = vmatprep.subr.mxu0 0.0
      %5806 = vmatpush2.msra.mxu0 0.0
      %5807 = vmatprep.subr.mxu0 0.0
      %5808 = vmatpush2.msra.mxu0 0.0
      %5809 = vmatprep.subr.mxu0 0.0
      %5810 = vmatpush2.msra.mxu0 0.0
      %5811 = vmatprep.subr.mxu0 0.0
      %5812 = vmatpush2.msra.mxu0 0.0
      %5813 = vmatprep.subr.mxu0 0.0
      %5814 = vmatpush2.msra.mxu0 0.0
      %5815 = vmatprep.subr.mxu0 0.0
      %5816 = vmatpush2.msra.mxu0 0.0
      %5817 = vmatprep.subr.mxu0 0.0
      %5818 = vmatpush2.msra.mxu0 0.0
      %5819 = vmatprep.subr.mxu0 0.0
      %5820 = vmatpush2.msra.mxu0 0.0
      %5821 = vmatprep.subr.mxu0 0.0
      %5822 = vmatpush2.msra.mxu0 0.0
      %5823 = vmatprep.subr.mxu0 0.0
      %5824 = vmatpush2.msra.mxu0 0.0
      %5825 = vmatprep.subr.mxu0 0.0
      %5826 = vmatpush2.msra.mxu0 0.0
      %5827 = vmatprep.subr.mxu0 0.0
      %5828 = vmatpush2.msra.mxu0 0.0
      %5829 = vmatprep.subr.mxu0 0.0
      %5830 = vmatpush2.msra.mxu0 0.0
      %5831 = vmatprep.subr.mxu0 0.0
      %5832 = vmatpush2.msra.mxu0 0.0
      %5833 = vmatprep.subr.mxu0 0.0
      %5834 = vmatpush2.msra.mxu0 0.0
      %5835 = vmatprep.subr.mxu0 0.0
      %5836 = vmatpush2.msra.mxu0 0.0
      %5837 = vmatprep.mubr.f32.mxu0 0.0
      %5838 = vmatmul.mubr.f32.gmra.mxu0 %v5675
      %v5839 = vpop.f32.mrf.mxu0
      %v5840 = vadd.f32 0.0, %v5839
      %v5841 = vpop.f32.mrf.mxu0
      %5842 = vmatprep.mubr.f32.mxu0 0.0
      %5843 = vmatmul.mubr.f32.gmra.mxu0 %v5678
      %v5844 = vpop.f32.mrf.mxu0
      %v5845 = vadd.f32 0.0, %v5844
      %v5846 = vpop.f32.mrf.mxu0
      %5847 = vmatprep.mubr.f32.mxu0 0.0
      %5848 = vmatmul.mubr.f32.gmra.mxu0 %v5681
      %v5849 = vpop.f32.mrf.mxu0
      %v5850 = vadd.f32 0.0, %v5849
      %v5851 = vpop.f32.mrf.mxu0
      %5852 = vmatprep.mubr.f32.mxu0 0.0
      %5853 = vmatmul.mubr.f32.gmra.mxu0 %v5684
      %v5854 = vpop.f32.mrf.mxu0
      %v5855 = vadd.f32 0.0, %v5854
      %v5856 = vpop.f32.mrf.mxu0
      %5857 = vmatprep.mubr.f32.mxu0 0.0
      %5858 = vmatmul.mubr.f32.gmra.mxu0 %v5687
      %v5859 = vpop.f32.mrf.mxu0
      %v5860 = vadd.f32 0.0, %v5859
      %v5861 = vpop.f32.mrf.mxu0
      %5862 = vmatprep.mubr.f32.mxu0 0.0
      %5863 = vmatmul.mubr.f32.gmra.mxu0 %v5690
      %v5864 = vpop.f32.mrf.mxu0
      %v5865 = vadd.f32 0.0, %v5864
      %v5866 = vpop.f32.mrf.mxu0
      %5867 = vmatprep.mubr.f32.mxu0 0.0
      %5868 = vmatmul.mubr.f32.gmra.mxu0 %v5693
      %v5869 = vpop.f32.mrf.mxu0
      %v5870 = vadd.f32 0.0, %v5869
      %v5871 = vpop.f32.mrf.mxu0
      %5872 = vmatprep.mubr.f32.mxu0 0.0
      %5873 = vmatmul.mubr.f32.gmra.mxu0 %v5696
      %v5874 = vpop.f32.mrf.mxu0
      %v5875 = vadd.f32 0.0, %v5874
      %v5876 = vpop.f32.mrf.mxu0
      %5877 = vmatprep.mubr.f32.mxu0 0.0
      %5878 = vmatmul.mubr.f32.gmra.mxu0 %v5699
      %v5879 = vpop.f32.mrf.mxu0
      %v5880 = vadd.f32 0.0, %v5879
      %v5881 = vpop.f32.mrf.mxu0
      %5882 = vmatprep.mubr.f32.mxu0 0.0
      %5883 = vmatmul.mubr.f32.gmra.mxu0 %v5702
      %v5884 = vpop.f32.mrf.mxu0
      %v5885 = vadd.f32 0.0, %v5884
      %v5886 = vpop.f32.mrf.mxu0
      %5887 = vmatprep.mubr.f32.mxu0 0.0
      %5888 = vmatmul.mubr.f32.gmra.mxu0 %v5705
      %v5889 = vpop.f32.mrf.mxu0
      %v5890 = vadd.f32 0.0, %v5889
      %v5891 = vpop.f32.mrf.mxu0
      %5892 = vmatprep.mubr.f32.mxu0 0.0
      %5893 = vmatmul.mubr.f32.gmra.mxu0 %v5708
      %v5894 = vpop.f32.mrf.mxu0
      %v5895 = vadd.f32 0.0, %v5894
      %v5896 = vpop.f32.mrf.mxu0
      %5897 = vmatprep.mubr.f32.mxu0 0.0
      %5898 = vmatmul.mubr.f32.gmra.mxu0 %v5711
      %v5899 = vpop.f32.mrf.mxu0
      %v5900 = vadd.f32 0.0, %v5899
      %v5901 = vpop.f32.mrf.mxu0
      %5902 = vmatprep.mubr.f32.mxu0 0.0
      %5903 = vmatmul.mubr.f32.gmra.mxu0 %v5714
      %v5904 = vpop.f32.mrf.mxu0
      %v5905 = vadd.f32 0.0, %v5904
      %v5906 = vpop.f32.mrf.mxu0
      %5907 = vmatprep.mubr.f32.mxu0 0.0
      %5908 = vmatmul.mubr.f32.gmra.mxu0 %v5717
      %v5909 = vpop.f32.mrf.mxu0
      %v5910 = vadd.f32 0.0, %v5909
      %v5911 = vpop.f32.mrf.mxu0
      %5912 = vmatprep.mubr.f32.mxu0 0.0
      %5913 = vmatmul.mubr.f32.gmra.mxu0 %v5720
      %v5914 = vpop.f32.mrf.mxu0
      %v5915 = vadd.f32 0.0, %v5914
      %v5916 = vpop.f32.mrf.mxu0
      %5917 = vmatprep.mubr.f32.mxu0 0.0
      %5918 = vmatmul.mubr.f32.gmra.mxu0 %v5723
      %v5919 = vpop.f32.mrf.mxu0
      %v5920 = vadd.f32 0.0, %v5919
      %v5921 = vpop.f32.mrf.mxu0
      %5922 = vmatprep.mubr.f32.mxu0 0.0
      %5923 = vmatmul.mubr.f32.gmra.mxu0 %v5726
      %v5924 = vpop.f32.mrf.mxu0
      %v5925 = vadd.f32 0.0, %v5924
      %v5926 = vpop.f32.mrf.mxu0
      %5927 = vmatprep.mubr.f32.mxu0 0.0
      %5928 = vmatmul.mubr.f32.gmra.mxu0 %v5729
      %v5929 = vpop.f32.mrf.mxu0
      %v5930 = vadd.f32 0.0, %v5929
      %v5931 = vpop.f32.mrf.mxu0
      %5932 = vmatprep.mubr.f32.mxu0 0.0
      %5933 = vmatmul.mubr.f32.gmra.mxu0 %v5732
      %v5934 = vpop.f32.mrf.mxu0
      %v5935 = vadd.f32 0.0, %v5934
      %v5936 = vpop.f32.mrf.mxu0
      %5937 = vmatprep.mubr.f32.mxu0 0.0
      %5938 = vmatmul.mubr.f32.gmra.mxu0 %v5735
      %v5939 = vpop.f32.mrf.mxu0
      %v5940 = vadd.f32 0.0, %v5939
      %v5941 = vpop.f32.mrf.mxu0
      %5942 = vmatprep.mubr.f32.mxu0 0.0
      %5943 = vmatmul.mubr.f32.gmra.mxu0 %v5738
      %v5944 = vpop.f32.mrf.mxu0
      %v5945 = vadd.f32 0.0, %v5944
      %v5946 = vpop.f32.mrf.mxu0
      %5947 = vmatprep.mubr.f32.mxu0 0.0
      %5948 = vmatmul.mubr.f32.gmra.mxu0 %v5741
      %v5949 = vpop.f32.mrf.mxu0
      %v5950 = vadd.f32 0.0, %v5949
      %v5951 = vpop.f32.mrf.mxu0
      %5952 = vmatprep.mubr.f32.mxu0 0.0
      %5953 = vmatmul.mubr.f32.gmra.mxu0 %v5744
      %v5954 = vpop.f32.mrf.mxu0
      %v5955 = vadd.f32 0.0, %v5954
      %v5956 = vpop.f32.mrf.mxu0
      %5957 = vmatprep.mubr.f32.mxu0 0.0
      %5958 = vmatmul.mubr.f32.gmra.mxu0 %v5747
      %v5959 = vpop.f32.mrf.mxu0
      %v5960 = vadd.f32 0.0, %v5959
      %v5961 = vpop.f32.mrf.mxu0
      %5962 = vmatprep.mubr.f32.mxu0 0.0
      %5963 = vmatmul.mubr.f32.gmra.mxu0 %v5750
      %v5964 = vpop.f32.mrf.mxu0
      %v5965 = vadd.f32 0.0, %v5964
      %v5966 = vpop.f32.mrf.mxu0
      %5967 = vmatprep.mubr.f32.mxu0 0.0
      %5968 = vmatmul.mubr.f32.gmra.mxu0 %v5753
      %v5969 = vpop.f32.mrf.mxu0
      %v5970 = vadd.f32 0.0, %v5969
      %v5971 = vpop.f32.mrf.mxu0
      %5972 = vmatprep.mubr.f32.mxu0 0.0
      %5973 = vmatmul.mubr.f32.gmra.mxu0 %v5756
      %v5974 = vpop.f32.mrf.mxu0
      %v5975 = vadd.f32 0.0, %v5974
      %v5976 = vpop.f32.mrf.mxu0
      %5977 = vmatprep.mubr.f32.mxu0 0.0
      %5978 = vmatmul.mubr.f32.gmra.mxu0 %v5759
      %v5979 = vpop.f32.mrf.mxu0
      %v5980 = vadd.f32 0.0, %v5979
      %v5981 = vpop.f32.mrf.mxu0
      %5982 = vmatprep.mubr.f32.mxu0 0.0
      %5983 = vmatmul.mubr.f32.gmra.mxu0 %v5762
      %v5984 = vpop.f32.mrf.mxu0
      %v5985 = vadd.f32 0.0, %v5984
      %v5986 = vpop.f32.mrf.mxu0
      %5987 = vmatprep.mubr.f32.mxu0 0.0
      %5988 = vmatmul.mubr.f32.gmra.mxu0 %v5765
      %v5989 = vpop.f32.mrf.mxu0
      %v5990 = vadd.f32 0.0, %v5989
      %v5991 = vpop.f32.mrf.mxu0
      %5992 = vmatprep.mubr.f32.mxu0 0.0
      %5993 = vmatmul.mubr.f32.gmra.mxu0 %v5768
      %v5994 = vpop.f32.mrf.mxu0
      %v5995 = vadd.f32 0.0, %v5994
      %v5996 = vpop.f32.mrf.mxu0
      %5997 = vdwg.mxu0
      %v5998 = vadd.f32 %v5608, %v5840
      %v5999 = vadd.f32 %v5609, %v5845
      %v6000 = vadd.f32 %v5610, %v5850
      %v6001 = vadd.f32 %v5611, %v5855
      %v6002 = vadd.f32 %v5612, %v5860
      %v6003 = vadd.f32 %v5613, %v5865
      %v6004 = vadd.f32 %v5614, %v5870
      %v6005 = vadd.f32 %v5615, %v5875
      %v6006 = vadd.f32 %v5616, %v5880
      %v6007 = vadd.f32 %v5617, %v5885
      %v6008 = vadd.f32 %v5618, %v5890
      %v6009 = vadd.f32 %v5619, %v5895
      %v6010 = vadd.f32 %v5620, %v5900
      %v6011 = vadd.f32 %v5621, %v5905
      %v6012 = vadd.f32 %v5622, %v5910
      %v6013 = vadd.f32 %v5623, %v5915
      %v6014 = vadd.f32 %v5624, %v5920
      %v6015 = vadd.f32 %v5625, %v5925
      %v6016 = vadd.f32 %v5626, %v5930
      %v6017 = vadd.f32 %v5627, %v5935
      %v6018 = vadd.f32 %v5628, %v5940
      %v6019 = vadd.f32 %v5629, %v5945
      %v6020 = vadd.f32 %v5630, %v5950
      %v6021 = vadd.f32 %v5631, %v5955
      %v6022 = vadd.f32 %v5632, %v5960
      %v6023 = vadd.f32 %v5633, %v5965
      %v6024 = vadd.f32 %v5634, %v5970
      %v6025 = vadd.f32 %v5635, %v5975
      %v6026 = vadd.f32 %v5636, %v5980
      %v6027 = vadd.f32 %v5637, %v5985
      %v6028 = vadd.f32 %v5638, %v5990
      %v6029 = vadd.f32 %v5639, %v5995
      %v6030 = vld [vmem:[%s4035 + $0x2] sm:$0xff]
      %v6031 = vld [vmem:[%s4035 + $0xa] sm:$0xff]
      %v6032 = vld [vmem:[%s4035 + $0x1a] sm:$0xff]
      %v6033 = vld [vmem:[%s4035 + $0x22] sm:$0xff]
      %v6034 = vld [vmem:[%s4035 + $0x32] sm:$0xff]
      %v6035 = vld [vmem:[%s4035 + $0x3a] sm:$0xff]
      %v6036 = vld [vmem:[%s4035 + $0x4a] sm:$0xff]
      %v6037 = vld [vmem:[%s4035 + $0x52] sm:$0xff]
      %v6038 = vld [vmem:[%s4035 + $0x62] sm:$0xff]
      %v6039 = vld [vmem:[%s4035 + $0x6a] sm:$0xff]
      %v6040 = vld [vmem:[%s4035 + $0x7a] sm:$0xff]
      %v6041 = vld [vmem:[%s4035 + $0x82] sm:$0xff]
      %v6042 = vld [vmem:[%s4035 + $0x92] sm:$0xff]
      %v6043 = vld [vmem:[%s4035 + $0x9a] sm:$0xff]
      %v6044 = vld [vmem:[%s4035 + $0xaa] sm:$0xff]
      %v6045 = vld [vmem:[%s4035 + $0xb2] sm:$0xff]
      %v6046 = vld [vmem:[%s4035 + $0xc2] sm:$0xff]
      %v6047 = vld [vmem:[%s4035 + $0xca] sm:$0xff]
      %v6048 = vld [vmem:[%s4035 + $0xda] sm:$0xff]
      %v6049 = vld [vmem:[%s4035 + $0xe2] sm:$0xff]
      %v6050 = vld [vmem:[%s4035 + $0xf2] sm:$0xff]
      %v6051 = vld [vmem:[%s4035 + $0xfa] sm:$0xff]
      %v6052 = vld [vmem:[%s4035 + $0x10a] sm:$0xff]
      %v6053 = vld [vmem:[%s4035 + $0x112] sm:$0xff]
      %v6054 = vld [vmem:[%s4035 + $0x122] sm:$0xff]
      %v6055 = vld [vmem:[%s4035 + $0x12a] sm:$0xff]
      %v6056 = vld [vmem:[%s4035 + $0x13a] sm:$0xff]
      %v6057 = vld [vmem:[%s4035 + $0x142] sm:$0xff]
      %v6058 = vld [vmem:[%s4035 + $0x152] sm:$0xff]
      %v6059 = vld [vmem:[%s4035 + $0x15a] sm:$0xff]
      %v6060 = vld [vmem:[%s4035 + $0x16a] sm:$0xff]
      %v6061 = vld [vmem:[%s4035 + $0x172] sm:$0xff]
      %s6062 = scalar_lea.vmem %s2, 20
      %v6063 = vld [vmem:[%s6062] sm:$0xf]
      %v6065 = vsel %vm204, %v6030, 0
      %v6068 = vsel %vm204, %v6031, 0
      %v6071 = vsel %vm204, %v6032, 0
      %v6074 = vsel %vm204, %v6033, 0
      %v6077 = vsel %vm204, %v6034, 0
      %v6080 = vsel %vm204, %v6035, 0
      %v6083 = vsel %vm204, %v6036, 0
      %v6086 = vsel %vm204, %v6037, 0
      %v6089 = vsel %vm204, %v6038, 0
      %v6092 = vsel %vm204, %v6039, 0
      %v6095 = vsel %vm204, %v6040, 0
      %v6098 = vsel %vm204, %v6041, 0
      %v6101 = vsel %vm204, %v6042, 0
      %v6104 = vsel %vm204, %v6043, 0
      %v6107 = vsel %vm204, %v6044, 0
      %v6110 = vsel %vm204, %v6045, 0
      %v6113 = vsel %vm204, %v6046, 0
      %v6116 = vsel %vm204, %v6047, 0
      %v6119 = vsel %vm204, %v6048, 0
      %v6122 = vsel %vm204, %v6049, 0
      %v6125 = vsel %vm204, %v6050, 0
      %v6128 = vsel %vm204, %v6051, 0
      %v6131 = vsel %vm204, %v6052, 0
      %v6134 = vsel %vm204, %v6053, 0
      %v6137 = vsel %vm204, %v6054, 0
      %v6140 = vsel %vm204, %v6055, 0
      %v6143 = vsel %vm204, %v6056, 0
      %v6146 = vsel %vm204, %v6057, 0
      %v6149 = vsel %vm204, %v6058, 0
      %v6152 = vsel %vm204, %v6059, 0
      %v6155 = vsel %vm204, %v6060, 0
      %v6158 = vsel %vm204, %v6061, 0
      %v6161 = vsel %vm478, %v6063, 0
      %6163 = vmatprep.subr.mxu0 0.0
      %6164 = vmatpush1.msra.mxu0 0.0
      %6165 = vmatprep.subr.mxu0 0.0
      %6166 = vmatpush1.msra.mxu0 0.0
      %6167 = vmatprep.subr.mxu0 0.0
      %6168 = vmatpush1.msra.mxu0 0.0
      %6169 = vmatprep.subr.mxu0 0.0
      %6170 = vmatpush1.msra.mxu0 0.0
      %6171 = vmatprep.subr.mxu0 0.0
      %6172 = vmatpush1.msra.mxu0 0.0
      %6173 = vmatprep.subr.mxu0 0.0
      %6174 = vmatpush1.msra.mxu0 0.0
      %6175 = vmatprep.subr.mxu0 0.0
      %6176 = vmatpush1.msra.mxu0 0.0
      %6177 = vmatprep.subr.mxu0 0.0
      %6178 = vmatpush1.msra.mxu0 0.0
      %6179 = vmatprep.subr.mxu0 0.0
      %6180 = vmatpush1.msra.mxu0 0.0
      %6181 = vmatprep.subr.mxu0 0.0
      %6182 = vmatpush1.msra.mxu0 0.0
      %6183 = vmatprep.subr.mxu0 0.0
      %6184 = vmatpush1.msra.mxu0 0.0
      %6185 = vmatprep.subr.mxu0 0.0
      %6186 = vmatpush1.msra.mxu0 0.0
      %6187 = vmatprep.subr.mxu0 0.0
      %6188 = vmatpush1.msra.mxu0 0.0
      %6189 = vmatprep.subr.mxu0 0.0
      %6190 = vmatpush1.msra.mxu0 0.0
      %6191 = vmatprep.subr.mxu0 0.0
      %6192 = vmatpush1.msra.mxu0 0.0
      %6193 = vmatprep.subr.mxu0 0.0
      %6194 = vmatpush1.msra.mxu0 %v6161
      %6195 = vmatprep.subr.mxu0 0.0
      %6196 = vmatpush2.msra.mxu0 0.0
      %6197 = vmatprep.subr.mxu0 0.0
      %6198 = vmatpush2.msra.mxu0 0.0
      %6199 = vmatprep.subr.mxu0 0.0
      %6200 = vmatpush2.msra.mxu0 0.0
      %6201 = vmatprep.subr.mxu0 0.0
      %6202 = vmatpush2.msra.mxu0 0.0
      %6203 = vmatprep.subr.mxu0 0.0
      %6204 = vmatpush2.msra.mxu0 0.0
      %6205 = vmatprep.subr.mxu0 0.0
      %6206 = vmatpush2.msra.mxu0 0.0
      %6207 = vmatprep.subr.mxu0 0.0
      %6208 = vmatpush2.msra.mxu0 0.0
      %6209 = vmatprep.subr.mxu0 0.0
      %6210 = vmatpush2.msra.mxu0 0.0
      %6211 = vmatprep.subr.mxu0 0.0
      %6212 = vmatpush2.msra.mxu0 0.0
      %6213 = vmatprep.subr.mxu0 0.0
      %6214 = vmatpush2.msra.mxu0 0.0
      %6215 = vmatprep.subr.mxu0 0.0
      %6216 = vmatpush2.msra.mxu0 0.0
      %6217 = vmatprep.subr.mxu0 0.0
      %6218 = vmatpush2.msra.mxu0 0.0
      %6219 = vmatprep.subr.mxu0 0.0
      %6220 = vmatpush2.msra.mxu0 0.0
      %6221 = vmatprep.subr.mxu0 0.0
      %6222 = vmatpush2.msra.mxu0 0.0
      %6223 = vmatprep.subr.mxu0 0.0
      %6224 = vmatpush2.msra.mxu0 0.0
      %6225 = vmatprep.subr.mxu0 0.0
      %6226 = vmatpush2.msra.mxu0 0.0
      %6227 = vmatprep.mubr.f32.mxu0 0.0
      %6228 = vmatmul.mubr.f32.gmra.mxu0 %v6065
      %v6229 = vpop.f32.mrf.mxu0
      %v6230 = vadd.f32 0.0, %v6229
      %v6231 = vpop.f32.mrf.mxu0
      %6232 = vmatprep.mubr.f32.mxu0 0.0
      %6233 = vmatmul.mubr.f32.gmra.mxu0 %v6068
      %v6234 = vpop.f32.mrf.mxu0
      %v6235 = vadd.f32 0.0, %v6234
      %v6236 = vpop.f32.mrf.mxu0
      %6237 = vmatprep.mubr.f32.mxu0 0.0
      %6238 = vmatmul.mubr.f32.gmra.mxu0 %v6071
      %v6239 = vpop.f32.mrf.mxu0
      %v6240 = vadd.f32 0.0, %v6239
      %v6241 = vpop.f32.mrf.mxu0
      %6242 = vmatprep.mubr.f32.mxu0 0.0
      %6243 = vmatmul.mubr.f32.gmra.mxu0 %v6074
      %v6244 = vpop.f32.mrf.mxu0
      %v6245 = vadd.f32 0.0, %v6244
      %v6246 = vpop.f32.mrf.mxu0
      %6247 = vmatprep.mubr.f32.mxu0 0.0
      %6248 = vmatmul.mubr.f32.gmra.mxu0 %v6077
      %v6249 = vpop.f32.mrf.mxu0
      %v6250 = vadd.f32 0.0, %v6249
      %v6251 = vpop.f32.mrf.mxu0
      %6252 = vmatprep.mubr.f32.mxu0 0.0
      %6253 = vmatmul.mubr.f32.gmra.mxu0 %v6080
      %v6254 = vpop.f32.mrf.mxu0
      %v6255 = vadd.f32 0.0, %v6254
      %v6256 = vpop.f32.mrf.mxu0
      %6257 = vmatprep.mubr.f32.mxu0 0.0
      %6258 = vmatmul.mubr.f32.gmra.mxu0 %v6083
      %v6259 = vpop.f32.mrf.mxu0
      %v6260 = vadd.f32 0.0, %v6259
      %v6261 = vpop.f32.mrf.mxu0
      %6262 = vmatprep.mubr.f32.mxu0 0.0
      %6263 = vmatmul.mubr.f32.gmra.mxu0 %v6086
      %v6264 = vpop.f32.mrf.mxu0
      %v6265 = vadd.f32 0.0, %v6264
      %v6266 = vpop.f32.mrf.mxu0
      %6267 = vmatprep.mubr.f32.mxu0 0.0
      %6268 = vmatmul.mubr.f32.gmra.mxu0 %v6089
      %v6269 = vpop.f32.mrf.mxu0
      %v6270 = vadd.f32 0.0, %v6269
      %v6271 = vpop.f32.mrf.mxu0
      %6272 = vmatprep.mubr.f32.mxu0 0.0
      %6273 = vmatmul.mubr.f32.gmra.mxu0 %v6092
      %v6274 = vpop.f32.mrf.mxu0
      %v6275 = vadd.f32 0.0, %v6274
      %v6276 = vpop.f32.mrf.mxu0
      %6277 = vmatprep.mubr.f32.mxu0 0.0
      %6278 = vmatmul.mubr.f32.gmra.mxu0 %v6095
      %v6279 = vpop.f32.mrf.mxu0
      %v6280 = vadd.f32 0.0, %v6279
      %v6281 = vpop.f32.mrf.mxu0
      %6282 = vmatprep.mubr.f32.mxu0 0.0
      %6283 = vmatmul.mubr.f32.gmra.mxu0 %v6098
      %v6284 = vpop.f32.mrf.mxu0
      %v6285 = vadd.f32 0.0, %v6284
      %v6286 = vpop.f32.mrf.mxu0
      %6287 = vmatprep.mubr.f32.mxu0 0.0
      %6288 = vmatmul.mubr.f32.gmra.mxu0 %v6101
      %v6289 = vpop.f32.mrf.mxu0
      %v6290 = vadd.f32 0.0, %v6289
      %v6291 = vpop.f32.mrf.mxu0
      %6292 = vmatprep.mubr.f32.mxu0 0.0
      %6293 = vmatmul.mubr.f32.gmra.mxu0 %v6104
      %v6294 = vpop.f32.mrf.mxu0
      %v6295 = vadd.f32 0.0, %v6294
      %v6296 = vpop.f32.mrf.mxu0
      %6297 = vmatprep.mubr.f32.mxu0 0.0
      %6298 = vmatmul.mubr.f32.gmra.mxu0 %v6107
      %v6299 = vpop.f32.mrf.mxu0
      %v6300 = vadd.f32 0.0, %v6299
      %v6301 = vpop.f32.mrf.mxu0
      %6302 = vmatprep.mubr.f32.mxu0 0.0
      %6303 = vmatmul.mubr.f32.gmra.mxu0 %v6110
      %v6304 = vpop.f32.mrf.mxu0
      %v6305 = vadd.f32 0.0, %v6304
      %v6306 = vpop.f32.mrf.mxu0
      %6307 = vmatprep.mubr.f32.mxu0 0.0
      %6308 = vmatmul.mubr.f32.gmra.mxu0 %v6113
      %v6309 = vpop.f32.mrf.mxu0
      %v6310 = vadd.f32 0.0, %v6309
      %v6311 = vpop.f32.mrf.mxu0
      %6312 = vmatprep.mubr.f32.mxu0 0.0
      %6313 = vmatmul.mubr.f32.gmra.mxu0 %v6116
      %v6314 = vpop.f32.mrf.mxu0
      %v6315 = vadd.f32 0.0, %v6314
      %v6316 = vpop.f32.mrf.mxu0
      %6317 = vmatprep.mubr.f32.mxu0 0.0
      %6318 = vmatmul.mubr.f32.gmra.mxu0 %v6119
      %v6319 = vpop.f32.mrf.mxu0
      %v6320 = vadd.f32 0.0, %v6319
      %v6321 = vpop.f32.mrf.mxu0
      %6322 = vmatprep.mubr.f32.mxu0 0.0
      %6323 = vmatmul.mubr.f32.gmra.mxu0 %v6122
      %v6324 = vpop.f32.mrf.mxu0
      %v6325 = vadd.f32 0.0, %v6324
      %v6326 = vpop.f32.mrf.mxu0
      %6327 = vmatprep.mubr.f32.mxu0 0.0
      %6328 = vmatmul.mubr.f32.gmra.mxu0 %v6125
      %v6329 = vpop.f32.mrf.mxu0
      %v6330 = vadd.f32 0.0, %v6329
      %v6331 = vpop.f32.mrf.mxu0
      %6332 = vmatprep.mubr.f32.mxu0 0.0
      %6333 = vmatmul.mubr.f32.gmra.mxu0 %v6128
      %v6334 = vpop.f32.mrf.mxu0
      %v6335 = vadd.f32 0.0, %v6334
      %v6336 = vpop.f32.mrf.mxu0
      %6337 = vmatprep.mubr.f32.mxu0 0.0
      %6338 = vmatmul.mubr.f32.gmra.mxu0 %v6131
      %v6339 = vpop.f32.mrf.mxu0
      %v6340 = vadd.f32 0.0, %v6339
      %v6341 = vpop.f32.mrf.mxu0
      %6342 = vmatprep.mubr.f32.mxu0 0.0
      %6343 = vmatmul.mubr.f32.gmra.mxu0 %v6134
      %v6344 = vpop.f32.mrf.mxu0
      %v6345 = vadd.f32 0.0, %v6344
      %v6346 = vpop.f32.mrf.mxu0
      %6347 = vmatprep.mubr.f32.mxu0 0.0
      %6348 = vmatmul.mubr.f32.gmra.mxu0 %v6137
      %v6349 = vpop.f32.mrf.mxu0
      %v6350 = vadd.f32 0.0, %v6349
      %v6351 = vpop.f32.mrf.mxu0
      %6352 = vmatprep.mubr.f32.mxu0 0.0
      %6353 = vmatmul.mubr.f32.gmra.mxu0 %v6140
      %v6354 = vpop.f32.mrf.mxu0
      %v6355 = vadd.f32 0.0, %v6354
      %v6356 = vpop.f32.mrf.mxu0
      %6357 = vmatprep.mubr.f32.mxu0 0.0
      %6358 = vmatmul.mubr.f32.gmra.mxu0 %v6143
      %v6359 = vpop.f32.mrf.mxu0
      %v6360 = vadd.f32 0.0, %v6359
      %v6361 = vpop.f32.mrf.mxu0
      %6362 = vmatprep.mubr.f32.mxu0 0.0
      %6363 = vmatmul.mubr.f32.gmra.mxu0 %v6146
      %v6364 = vpop.f32.mrf.mxu0
      %v6365 = vadd.f32 0.0, %v6364
      %v6366 = vpop.f32.mrf.mxu0
      %6367 = vmatprep.mubr.f32.mxu0 0.0
      %6368 = vmatmul.mubr.f32.gmra.mxu0 %v6149
      %v6369 = vpop.f32.mrf.mxu0
      %v6370 = vadd.f32 0.0, %v6369
      %v6371 = vpop.f32.mrf.mxu0
      %6372 = vmatprep.mubr.f32.mxu0 0.0
      %6373 = vmatmul.mubr.f32.gmra.mxu0 %v6152
      %v6374 = vpop.f32.mrf.mxu0
      %v6375 = vadd.f32 0.0, %v6374
      %v6376 = vpop.f32.mrf.mxu0
      %6377 = vmatprep.mubr.f32.mxu0 0.0
      %6378 = vmatmul.mubr.f32.gmra.mxu0 %v6155
      %v6379 = vpop.f32.mrf.mxu0
      %v6380 = vadd.f32 0.0, %v6379
      %v6381 = vpop.f32.mrf.mxu0
      %6382 = vmatprep.mubr.f32.mxu0 0.0
      %6383 = vmatmul.mubr.f32.gmra.mxu0 %v6158
      %v6384 = vpop.f32.mrf.mxu0
      %v6385 = vadd.f32 0.0, %v6384
      %v6386 = vpop.f32.mrf.mxu0
      %6387 = vdwg.mxu0
      %v6388 = vadd.f32 %v5998, %v6230
      %v6389 = vadd.f32 %v5999, %v6235
      %v6390 = vadd.f32 %v6000, %v6240
      %v6391 = vadd.f32 %v6001, %v6245
      %v6392 = vadd.f32 %v6002, %v6250
      %v6393 = vadd.f32 %v6003, %v6255
      %v6394 = vadd.f32 %v6004, %v6260
      %v6395 = vadd.f32 %v6005, %v6265
      %v6396 = vadd.f32 %v6006, %v6270
      %v6397 = vadd.f32 %v6007, %v6275
      %v6398 = vadd.f32 %v6008, %v6280
      %v6399 = vadd.f32 %v6009, %v6285
      %v6400 = vadd.f32 %v6010, %v6290
      %v6401 = vadd.f32 %v6011, %v6295
      %v6402 = vadd.f32 %v6012, %v6300
      %v6403 = vadd.f32 %v6013, %v6305
      %v6404 = vadd.f32 %v6014, %v6310
      %v6405 = vadd.f32 %v6015, %v6315
      %v6406 = vadd.f32 %v6016, %v6320
      %v6407 = vadd.f32 %v6017, %v6325
      %v6408 = vadd.f32 %v6018, %v6330
      %v6409 = vadd.f32 %v6019, %v6335
      %v6410 = vadd.f32 %v6020, %v6340
      %v6411 = vadd.f32 %v6021, %v6345
      %v6412 = vadd.f32 %v6022, %v6350
      %v6413 = vadd.f32 %v6023, %v6355
      %v6414 = vadd.f32 %v6024, %v6360
      %v6415 = vadd.f32 %v6025, %v6365
      %v6416 = vadd.f32 %v6026, %v6370
      %v6417 = vadd.f32 %v6027, %v6375
      %v6418 = vadd.f32 %v6028, %v6380
      %v6419 = vadd.f32 %v6029, %v6385
      %s6420 = scalar_lea.vmem [#allocation3], 48
      %v6421 = vld [vmem:[%s6420] sm:$0xff]
      %v6422 = vld [vmem:[%s6420 + $0x8] sm:$0xff]
      %v6423 = vld [vmem:[%s6420 + $0x18] sm:$0xff]
      %v6424 = vld [vmem:[%s6420 + $0x20] sm:$0xff]
      %v6425 = vld [vmem:[%s6420 + $0x30] sm:$0xff]
      %v6426 = vld [vmem:[%s6420 + $0x38] sm:$0xff]
      %v6427 = vld [vmem:[%s6420 + $0x48] sm:$0xff]
      %v6428 = vld [vmem:[%s6420 + $0x50] sm:$0xff]
      %v6429 = vld [vmem:[%s6420 + $0x60] sm:$0xff]
      %v6430 = vld [vmem:[%s6420 + $0x68] sm:$0xff]
      %v6431 = vld [vmem:[%s6420 + $0x78] sm:$0xff]
      %v6432 = vld [vmem:[%s6420 + $0x80] sm:$0xff]
      %v6433 = vld [vmem:[%s6420 + $0x90] sm:$0xff]
      %v6434 = vld [vmem:[%s6420 + $0x98] sm:$0xff]
      %v6435 = vld [vmem:[%s6420 + $0xa8] sm:$0xff]
      %v6436 = vld [vmem:[%s6420 + $0xb0] sm:$0xff]
      %v6437 = vld [vmem:[%s6420 + $0xc0] sm:$0xff]
      %v6438 = vld [vmem:[%s6420 + $0xc8] sm:$0xff]
      %v6439 = vld [vmem:[%s6420 + $0xd8] sm:$0xff]
      %v6440 = vld [vmem:[%s6420 + $0xe0] sm:$0xff]
      %v6441 = vld [vmem:[%s6420 + $0xf0] sm:$0xff]
      %v6442 = vld [vmem:[%s6420 + $0xf8] sm:$0xff]
      %v6443 = vld [vmem:[%s6420 + $0x108] sm:$0xff]
      %v6444 = vld [vmem:[%s6420 + $0x110] sm:$0xff]
      %v6445 = vld [vmem:[%s6420 + $0x120] sm:$0xff]
      %v6446 = vld [vmem:[%s6420 + $0x128] sm:$0xff]
      %v6447 = vld [vmem:[%s6420 + $0x138] sm:$0xff]
      %v6448 = vld [vmem:[%s6420 + $0x140] sm:$0xff]
      %v6449 = vld [vmem:[%s6420 + $0x150] sm:$0xff]
      %v6450 = vld [vmem:[%s6420 + $0x158] sm:$0xff]
      %v6451 = vld [vmem:[%s6420 + $0x168] sm:$0xff]
      %v6452 = vld [vmem:[%s6420 + $0x170] sm:$0xff]
      %s6453 = scalar_lea.vmem %s2, 24
      %v6454 = vld [vmem:[%s6453] sm:$0xf]
      %v6456 = vsel %vm204, %v6421, 0
      %v6459 = vsel %vm204, %v6422, 0
      %v6462 = vsel %vm204, %v6423, 0
      %v6465 = vsel %vm204, %v6424, 0
      %v6468 = vsel %vm204, %v6425, 0
      %v6471 = vsel %vm204, %v6426, 0
      %v6474 = vsel %vm204, %v6427, 0
      %v6477 = vsel %vm204, %v6428, 0
      %v6480 = vsel %vm204, %v6429, 0
      %v6483 = vsel %vm204, %v6430, 0
      %v6486 = vsel %vm204, %v6431, 0
      %v6489 = vsel %vm204, %v6432, 0
      %v6492 = vsel %vm204, %v6433, 0
      %v6495 = vsel %vm204, %v6434, 0
      %v6498 = vsel %vm204, %v6435, 0
      %v6501 = vsel %vm204, %v6436, 0
      %v6504 = vsel %vm204, %v6437, 0
      %v6507 = vsel %vm204, %v6438, 0
      %v6510 = vsel %vm204, %v6439, 0
      %v6513 = vsel %vm204, %v6440, 0
      %v6516 = vsel %vm204, %v6441, 0
      %v6519 = vsel %vm204, %v6442, 0
      %v6522 = vsel %vm204, %v6443, 0
      %v6525 = vsel %vm204, %v6444, 0
      %v6528 = vsel %vm204, %v6445, 0
      %v6531 = vsel %vm204, %v6446, 0
      %v6534 = vsel %vm204, %v6447, 0
      %v6537 = vsel %vm204, %v6448, 0
      %v6540 = vsel %vm204, %v6449, 0
      %v6543 = vsel %vm204, %v6450, 0
      %v6546 = vsel %vm204, %v6451, 0
      %v6549 = vsel %vm204, %v6452, 0
      %v6552 = vsel %vm478, %v6454, 0
      %6554 = vmatprep.subr.mxu0 0.0
      %6555 = vmatpush1.msra.mxu0 0.0
      %6556 = vmatprep.subr.mxu0 0.0
      %6557 = vmatpush1.msra.mxu0 0.0
      %6558 = vmatprep.subr.mxu0 0.0
      %6559 = vmatpush1.msra.mxu0 0.0
      %6560 = vmatprep.subr.mxu0 0.0
      %6561 = vmatpush1.msra.mxu0 0.0
      %6562 = vmatprep.subr.mxu0 0.0
      %6563 = vmatpush1.msra.mxu0 0.0
      %6564 = vmatprep.subr.mxu0 0.0
      %6565 = vmatpush1.msra.mxu0 0.0
      %6566 = vmatprep.subr.mxu0 0.0
      %6567 = vmatpush1.msra.mxu0 0.0
      %6568 = vmatprep.subr.mxu0 0.0
      %6569 = vmatpush1.msra.mxu0 0.0
      %6570 = vmatprep.subr.mxu0 0.0
      %6571 = vmatpush1.msra.mxu0 0.0
      %6572 = vmatprep.subr.mxu0 0.0
      %6573 = vmatpush1.msra.mxu0 0.0
      %6574 = vmatprep.subr.mxu0 0.0
      %6575 = vmatpush1.msra.mxu0 0.0
      %6576 = vmatprep.subr.mxu0 0.0
      %6577 = vmatpush1.msra.mxu0 0.0
      %6578 = vmatprep.subr.mxu0 0.0
      %6579 = vmatpush1.msra.mxu0 0.0
      %6580 = vmatprep.subr.mxu0 0.0
      %6581 = vmatpush1.msra.mxu0 0.0
      %6582 = vmatprep.subr.mxu0 0.0
      %6583 = vmatpush1.msra.mxu0 0.0
      %6584 = vmatprep.subr.mxu0 0.0
      %6585 = vmatpush1.msra.mxu0 %v6552
      %6586 = vmatprep.subr.mxu0 0.0
      %6587 = vmatpush2.msra.mxu0 0.0
      %6588 = vmatprep.subr.mxu0 0.0
      %6589 = vmatpush2.msra.mxu0 0.0
      %6590 = vmatprep.subr.mxu0 0.0
      %6591 = vmatpush2.msra.mxu0 0.0
      %6592 = vmatprep.subr.mxu0 0.0
      %6593 = vmatpush2.msra.mxu0 0.0
      %6594 = vmatprep.subr.mxu0 0.0
      %6595 = vmatpush2.msra.mxu0 0.0
      %6596 = vmatprep.subr.mxu0 0.0
      %6597 = vmatpush2.msra.mxu0 0.0
      %6598 = vmatprep.subr.mxu0 0.0
      %6599 = vmatpush2.msra.mxu0 0.0
      %6600 = vmatprep.subr.mxu0 0.0
      %6601 = vmatpush2.msra.mxu0 0.0
      %6602 = vmatprep.subr.mxu0 0.0
      %6603 = vmatpush2.msra.mxu0 0.0
      %6604 = vmatprep.subr.mxu0 0.0
      %6605 = vmatpush2.msra.mxu0 0.0
      %6606 = vmatprep.subr.mxu0 0.0
      %6607 = vmatpush2.msra.mxu0 0.0
      %6608 = vmatprep.subr.mxu0 0.0
      %6609 = vmatpush2.msra.mxu0 0.0
      %6610 = vmatprep.subr.mxu0 0.0
      %6611 = vmatpush2.msra.mxu0 0.0
      %6612 = vmatprep.subr.mxu0 0.0
      %6613 = vmatpush2.msra.mxu0 0.0
      %6614 = vmatprep.subr.mxu0 0.0
      %6615 = vmatpush2.msra.mxu0 0.0
      %6616 = vmatprep.subr.mxu0 0.0
      %6617 = vmatpush2.msra.mxu0 0.0
      %6618 = vmatprep.mubr.f32.mxu0 0.0
      %6619 = vmatmul.mubr.f32.gmra.mxu0 %v6456
      %v6620 = vpop.f32.mrf.mxu0
      %v6621 = vadd.f32 0.0, %v6620
      %v6622 = vpop.f32.mrf.mxu0
      %6623 = vmatprep.mubr.f32.mxu0 0.0
      %6624 = vmatmul.mubr.f32.gmra.mxu0 %v6459
      %v6625 = vpop.f32.mrf.mxu0
      %v6626 = vadd.f32 0.0, %v6625
      %v6627 = vpop.f32.mrf.mxu0
      %6628 = vmatprep.mubr.f32.mxu0 0.0
      %6629 = vmatmul.mubr.f32.gmra.mxu0 %v6462
      %v6630 = vpop.f32.mrf.mxu0
      %v6631 = vadd.f32 0.0, %v6630
      %v6632 = vpop.f32.mrf.mxu0
      %6633 = vmatprep.mubr.f32.mxu0 0.0
      %6634 = vmatmul.mubr.f32.gmra.mxu0 %v6465
      %v6635 = vpop.f32.mrf.mxu0
      %v6636 = vadd.f32 0.0, %v6635
      %v6637 = vpop.f32.mrf.mxu0
      %6638 = vmatprep.mubr.f32.mxu0 0.0
      %6639 = vmatmul.mubr.f32.gmra.mxu0 %v6468
      %v6640 = vpop.f32.mrf.mxu0
      %v6641 = vadd.f32 0.0, %v6640
      %v6642 = vpop.f32.mrf.mxu0
      %6643 = vmatprep.mubr.f32.mxu0 0.0
      %6644 = vmatmul.mubr.f32.gmra.mxu0 %v6471
      %v6645 = vpop.f32.mrf.mxu0
      %v6646 = vadd.f32 0.0, %v6645
      %v6647 = vpop.f32.mrf.mxu0
      %6648 = vmatprep.mubr.f32.mxu0 0.0
      %6649 = vmatmul.mubr.f32.gmra.mxu0 %v6474
      %v6650 = vpop.f32.mrf.mxu0
      %v6651 = vadd.f32 0.0, %v6650
      %v6652 = vpop.f32.mrf.mxu0
      %6653 = vmatprep.mubr.f32.mxu0 0.0
      %6654 = vmatmul.mubr.f32.gmra.mxu0 %v6477
      %v6655 = vpop.f32.mrf.mxu0
      %v6656 = vadd.f32 0.0, %v6655
      %v6657 = vpop.f32.mrf.mxu0
      %6658 = vmatprep.mubr.f32.mxu0 0.0
      %6659 = vmatmul.mubr.f32.gmra.mxu0 %v6480
      %v6660 = vpop.f32.mrf.mxu0
      %v6661 = vadd.f32 0.0, %v6660
      %v6662 = vpop.f32.mrf.mxu0
      %6663 = vmatprep.mubr.f32.mxu0 0.0
      %6664 = vmatmul.mubr.f32.gmra.mxu0 %v6483
      %v6665 = vpop.f32.mrf.mxu0
      %v6666 = vadd.f32 0.0, %v6665
      %v6667 = vpop.f32.mrf.mxu0
      %6668 = vmatprep.mubr.f32.mxu0 0.0
      %6669 = vmatmul.mubr.f32.gmra.mxu0 %v6486
      %v6670 = vpop.f32.mrf.mxu0
      %v6671 = vadd.f32 0.0, %v6670
      %v6672 = vpop.f32.mrf.mxu0
      %6673 = vmatprep.mubr.f32.mxu0 0.0
      %6674 = vmatmul.mubr.f32.gmra.mxu0 %v6489
      %v6675 = vpop.f32.mrf.mxu0
      %v6676 = vadd.f32 0.0, %v6675
      %v6677 = vpop.f32.mrf.mxu0
      %6678 = vmatprep.mubr.f32.mxu0 0.0
      %6679 = vmatmul.mubr.f32.gmra.mxu0 %v6492
      %v6680 = vpop.f32.mrf.mxu0
      %v6681 = vadd.f32 0.0, %v6680
      %v6682 = vpop.f32.mrf.mxu0
      %6683 = vmatprep.mubr.f32.mxu0 0.0
      %6684 = vmatmul.mubr.f32.gmra.mxu0 %v6495
      %v6685 = vpop.f32.mrf.mxu0
      %v6686 = vadd.f32 0.0, %v6685
      %v6687 = vpop.f32.mrf.mxu0
      %6688 = vmatprep.mubr.f32.mxu0 0.0
      %6689 = vmatmul.mubr.f32.gmra.mxu0 %v6498
      %v6690 = vpop.f32.mrf.mxu0
      %v6691 = vadd.f32 0.0, %v6690
      %v6692 = vpop.f32.mrf.mxu0
      %6693 = vmatprep.mubr.f32.mxu0 0.0
      %6694 = vmatmul.mubr.f32.gmra.mxu0 %v6501
      %v6695 = vpop.f32.mrf.mxu0
      %v6696 = vadd.f32 0.0, %v6695
      %v6697 = vpop.f32.mrf.mxu0
      %6698 = vmatprep.mubr.f32.mxu0 0.0
      %6699 = vmatmul.mubr.f32.gmra.mxu0 %v6504
      %v6700 = vpop.f32.mrf.mxu0
      %v6701 = vadd.f32 0.0, %v6700
      %v6702 = vpop.f32.mrf.mxu0
      %6703 = vmatprep.mubr.f32.mxu0 0.0
      %6704 = vmatmul.mubr.f32.gmra.mxu0 %v6507
      %v6705 = vpop.f32.mrf.mxu0
      %v6706 = vadd.f32 0.0, %v6705
      %v6707 = vpop.f32.mrf.mxu0
      %6708 = vmatprep.mubr.f32.mxu0 0.0
      %6709 = vmatmul.mubr.f32.gmra.mxu0 %v6510
      %v6710 = vpop.f32.mrf.mxu0
      %v6711 = vadd.f32 0.0, %v6710
      %v6712 = vpop.f32.mrf.mxu0
      %6713 = vmatprep.mubr.f32.mxu0 0.0
      %6714 = vmatmul.mubr.f32.gmra.mxu0 %v6513
      %v6715 = vpop.f32.mrf.mxu0
      %v6716 = vadd.f32 0.0, %v6715
      %v6717 = vpop.f32.mrf.mxu0
      %6718 = vmatprep.mubr.f32.mxu0 0.0
      %6719 = vmatmul.mubr.f32.gmra.mxu0 %v6516
      %v6720 = vpop.f32.mrf.mxu0
      %v6721 = vadd.f32 0.0, %v6720
      %v6722 = vpop.f32.mrf.mxu0
      %6723 = vmatprep.mubr.f32.mxu0 0.0
      %6724 = vmatmul.mubr.f32.gmra.mxu0 %v6519
      %v6725 = vpop.f32.mrf.mxu0
      %v6726 = vadd.f32 0.0, %v6725
      %v6727 = vpop.f32.mrf.mxu0
      %6728 = vmatprep.mubr.f32.mxu0 0.0
      %6729 = vmatmul.mubr.f32.gmra.mxu0 %v6522
      %v6730 = vpop.f32.mrf.mxu0
      %v6731 = vadd.f32 0.0, %v6730
      %v6732 = vpop.f32.mrf.mxu0
      %6733 = vmatprep.mubr.f32.mxu0 0.0
      %6734 = vmatmul.mubr.f32.gmra.mxu0 %v6525
      %v6735 = vpop.f32.mrf.mxu0
      %v6736 = vadd.f32 0.0, %v6735
      %v6737 = vpop.f32.mrf.mxu0
      %6738 = vmatprep.mubr.f32.mxu0 0.0
      %6739 = vmatmul.mubr.f32.gmra.mxu0 %v6528
      %v6740 = vpop.f32.mrf.mxu0
      %v6741 = vadd.f32 0.0, %v6740
      %v6742 = vpop.f32.mrf.mxu0
      %6743 = vmatprep.mubr.f32.mxu0 0.0
      %6744 = vmatmul.mubr.f32.gmra.mxu0 %v6531
      %v6745 = vpop.f32.mrf.mxu0
      %v6746 = vadd.f32 0.0, %v6745
      %v6747 = vpop.f32.mrf.mxu0
      %6748 = vmatprep.mubr.f32.mxu0 0.0
      %6749 = vmatmul.mubr.f32.gmra.mxu0 %v6534
      %v6750 = vpop.f32.mrf.mxu0
      %v6751 = vadd.f32 0.0, %v6750
      %v6752 = vpop.f32.mrf.mxu0
      %6753 = vmatprep.mubr.f32.mxu0 0.0
      %6754 = vmatmul.mubr.f32.gmra.mxu0 %v6537
      %v6755 = vpop.f32.mrf.mxu0
      %v6756 = vadd.f32 0.0, %v6755
      %v6757 = vpop.f32.mrf.mxu0
      %6758 = vmatprep.mubr.f32.mxu0 0.0
      %6759 = vmatmul.mubr.f32.gmra.mxu0 %v6540
      %v6760 = vpop.f32.mrf.mxu0
      %v6761 = vadd.f32 0.0, %v6760
      %v6762 = vpop.f32.mrf.mxu0
      %6763 = vmatprep.mubr.f32.mxu0 0.0
      %6764 = vmatmul.mubr.f32.gmra.mxu0 %v6543
      %v6765 = vpop.f32.mrf.mxu0
      %v6766 = vadd.f32 0.0, %v6765
      %v6767 = vpop.f32.mrf.mxu0
      %6768 = vmatprep.mubr.f32.mxu0 0.0
      %6769 = vmatmul.mubr.f32.gmra.mxu0 %v6546
      %v6770 = vpop.f32.mrf.mxu0
      %v6771 = vadd.f32 0.0, %v6770
      %v6772 = vpop.f32.mrf.mxu0
      %6773 = vmatprep.mubr.f32.mxu0 0.0
      %6774 = vmatmul.mubr.f32.gmra.mxu0 %v6549
      %v6775 = vpop.f32.mrf.mxu0
      %v6776 = vadd.f32 0.0, %v6775
      %v6777 = vpop.f32.mrf.mxu0
      %6778 = vdwg.mxu0
      %v6779 = vadd.f32 %v6388, %v6621
      %v6780 = vadd.f32 %v6389, %v6626
      %v6781 = vadd.f32 %v6390, %v6631
      %v6782 = vadd.f32 %v6391, %v6636
      %v6783 = vadd.f32 %v6392, %v6641
      %v6784 = vadd.f32 %v6393, %v6646
      %v6785 = vadd.f32 %v6394, %v6651
      %v6786 = vadd.f32 %v6395, %v6656
      %v6787 = vadd.f32 %v6396, %v6661
      %v6788 = vadd.f32 %v6397, %v6666
      %v6789 = vadd.f32 %v6398, %v6671
      %v6790 = vadd.f32 %v6399, %v6676
      %v6791 = vadd.f32 %v6400, %v6681
      %v6792 = vadd.f32 %v6401, %v6686
      %v6793 = vadd.f32 %v6402, %v6691
      %v6794 = vadd.f32 %v6403, %v6696
      %v6795 = vadd.f32 %v6404, %v6701
      %v6796 = vadd.f32 %v6405, %v6706
      %v6797 = vadd.f32 %v6406, %v6711
      %v6798 = vadd.f32 %v6407, %v6716
      %v6799 = vadd.f32 %v6408, %v6721
      %v6800 = vadd.f32 %v6409, %v6726
      %v6801 = vadd.f32 %v6410, %v6731
      %v6802 = vadd.f32 %v6411, %v6736
      %v6803 = vadd.f32 %v6412, %v6741
      %v6804 = vadd.f32 %v6413, %v6746
      %v6805 = vadd.f32 %v6414, %v6751
      %v6806 = vadd.f32 %v6415, %v6756
      %v6807 = vadd.f32 %v6416, %v6761
      %v6808 = vadd.f32 %v6417, %v6766
      %v6809 = vadd.f32 %v6418, %v6771
      %v6810 = vadd.f32 %v6419, %v6776
      %v6811 = vld [vmem:[%s6420 + $0x1] sm:$0xff]
      %v6812 = vld [vmem:[%s6420 + $0x9] sm:$0xff]
      %v6813 = vld [vmem:[%s6420 + $0x19] sm:$0xff]
      %v6814 = vld [vmem:[%s6420 + $0x21] sm:$0xff]
      %v6815 = vld [vmem:[%s6420 + $0x31] sm:$0xff]
      %v6816 = vld [vmem:[%s6420 + $0x39] sm:$0xff]
      %v6817 = vld [vmem:[%s6420 + $0x49] sm:$0xff]
      %v6818 = vld [vmem:[%s6420 + $0x51] sm:$0xff]
      %v6819 = vld [vmem:[%s6420 + $0x61] sm:$0xff]
      %v6820 = vld [vmem:[%s6420 + $0x69] sm:$0xff]
      %v6821 = vld [vmem:[%s6420 + $0x79] sm:$0xff]
      %v6822 = vld [vmem:[%s6420 + $0x81] sm:$0xff]
      %v6823 = vld [vmem:[%s6420 + $0x91] sm:$0xff]
      %v6824 = vld [vmem:[%s6420 + $0x99] sm:$0xff]
      %v6825 = vld [vmem:[%s6420 + $0xa9] sm:$0xff]
      %v6826 = vld [vmem:[%s6420 + $0xb1] sm:$0xff]
      %v6827 = vld [vmem:[%s6420 + $0xc1] sm:$0xff]
      %v6828 = vld [vmem:[%s6420 + $0xc9] sm:$0xff]
      %v6829 = vld [vmem:[%s6420 + $0xd9] sm:$0xff]
      %v6830 = vld [vmem:[%s6420 + $0xe1] sm:$0xff]
      %v6831 = vld [vmem:[%s6420 + $0xf1] sm:$0xff]
      %v6832 = vld [vmem:[%s6420 + $0xf9] sm:$0xff]
      %v6833 = vld [vmem:[%s6420 + $0x109] sm:$0xff]
      %v6834 = vld [vmem:[%s6420 + $0x111] sm:$0xff]
      %v6835 = vld [vmem:[%s6420 + $0x121] sm:$0xff]
      %v6836 = vld [vmem:[%s6420 + $0x129] sm:$0xff]
      %v6837 = vld [vmem:[%s6420 + $0x139] sm:$0xff]
      %v6838 = vld [vmem:[%s6420 + $0x141] sm:$0xff]
      %v6839 = vld [vmem:[%s6420 + $0x151] sm:$0xff]
      %v6840 = vld [vmem:[%s6420 + $0x159] sm:$0xff]
      %v6841 = vld [vmem:[%s6420 + $0x169] sm:$0xff]
      %v6842 = vld [vmem:[%s6420 + $0x171] sm:$0xff]
      %s6843 = scalar_lea.vmem %s2, 28
      %v6844 = vld [vmem:[%s6843] sm:$0xf]
      %v6846 = vsel %vm204, %v6811, 0
      %v6849 = vsel %vm204, %v6812, 0
      %v6852 = vsel %vm204, %v6813, 0
      %v6855 = vsel %vm204, %v6814, 0
      %v6858 = vsel %vm204, %v6815, 0
      %v6861 = vsel %vm204, %v6816, 0
      %v6864 = vsel %vm204, %v6817, 0
      %v6867 = vsel %vm204, %v6818, 0
      %v6870 = vsel %vm204, %v6819, 0
      %v6873 = vsel %vm204, %v6820, 0
      %v6876 = vsel %vm204, %v6821, 0
      %v6879 = vsel %vm204, %v6822, 0
      %v6882 = vsel %vm204, %v6823, 0
      %v6885 = vsel %vm204, %v6824, 0
      %v6888 = vsel %vm204, %v6825, 0
      %v6891 = vsel %vm204, %v6826, 0
      %v6894 = vsel %vm204, %v6827, 0
      %v6897 = vsel %vm204, %v6828, 0
      %v6900 = vsel %vm204, %v6829, 0
      %v6903 = vsel %vm204, %v6830, 0
      %v6906 = vsel %vm204, %v6831, 0
      %v6909 = vsel %vm204, %v6832, 0
      %v6912 = vsel %vm204, %v6833, 0
      %v6915 = vsel %vm204, %v6834, 0
      %v6918 = vsel %vm204, %v6835, 0
      %v6921 = vsel %vm204, %v6836, 0
      %v6924 = vsel %vm204, %v6837, 0
      %v6927 = vsel %vm204, %v6838, 0
      %v6930 = vsel %vm204, %v6839, 0
      %v6933 = vsel %vm204, %v6840, 0
      %v6936 = vsel %vm204, %v6841, 0
      %v6939 = vsel %vm204, %v6842, 0
      %v6942 = vsel %vm478, %v6844, 0
      %6944 = vmatprep.subr.mxu0 0.0
      %6945 = vmatpush1.msra.mxu0 0.0
      %6946 = vmatprep.subr.mxu0 0.0
      %6947 = vmatpush1.msra.mxu0 0.0
      %6948 = vmatprep.subr.mxu0 0.0
      %6949 = vmatpush1.msra.mxu0 0.0
      %6950 = vmatprep.subr.mxu0 0.0
      %6951 = vmatpush1.msra.mxu0 0.0
      %6952 = vmatprep.subr.mxu0 0.0
      %6953 = vmatpush1.msra.mxu0 0.0
      %6954 = vmatprep.subr.mxu0 0.0
      %6955 = vmatpush1.msra.mxu0 0.0
      %6956 = vmatprep.subr.mxu0 0.0
      %6957 = vmatpush1.msra.mxu0 0.0
      %6958 = vmatprep.subr.mxu0 0.0
      %6959 = vmatpush1.msra.mxu0 0.0
      %6960 = vmatprep.subr.mxu0 0.0
      %6961 = vmatpush1.msra.mxu0 0.0
      %6962 = vmatprep.subr.mxu0 0.0
      %6963 = vmatpush1.msra.mxu0 0.0
      %6964 = vmatprep.subr.mxu0 0.0
      %6965 = vmatpush1.msra.mxu0 0.0
      %6966 = vmatprep.subr.mxu0 0.0
      %6967 = vmatpush1.msra.mxu0 0.0
      %6968 = vmatprep.subr.mxu0 0.0
      %6969 = vmatpush1.msra.mxu0 0.0
      %6970 = vmatprep.subr.mxu0 0.0
      %6971 = vmatpush1.msra.mxu0 0.0
      %6972 = vmatprep.subr.mxu0 0.0
      %6973 = vmatpush1.msra.mxu0 0.0
      %6974 = vmatprep.subr.mxu0 0.0
      %6975 = vmatpush1.msra.mxu0 %v6942
      %6976 = vmatprep.subr.mxu0 0.0
      %6977 = vmatpush2.msra.mxu0 0.0
      %6978 = vmatprep.subr.mxu0 0.0
      %6979 = vmatpush2.msra.mxu0 0.0
      %6980 = vmatprep.subr.mxu0 0.0
      %6981 = vmatpush2.msra.mxu0 0.0
      %6982 = vmatprep.subr.mxu0 0.0
      %6983 = vmatpush2.msra.mxu0 0.0
      %6984 = vmatprep.subr.mxu0 0.0
      %6985 = vmatpush2.msra.mxu0 0.0
      %6986 = vmatprep.subr.mxu0 0.0
      %6987 = vmatpush2.msra.mxu0 0.0
      %6988 = vmatprep.subr.mxu0 0.0
      %6989 = vmatpush2.msra.mxu0 0.0
      %6990 = vmatprep.subr.mxu0 0.0
      %6991 = vmatpush2.msra.mxu0 0.0
      %6992 = vmatprep.subr.mxu0 0.0
      %6993 = vmatpush2.msra.mxu0 0.0
      %6994 = vmatprep.subr.mxu0 0.0
      %6995 = vmatpush2.msra.mxu0 0.0
      %6996 = vmatprep.subr.mxu0 0.0
      %6997 = vmatpush2.msra.mxu0 0.0
      %6998 = vmatprep.subr.mxu0 0.0
      %6999 = vmatpush2.msra.mxu0 0.0
      %7000 = vmatprep.subr.mxu0 0.0
      %7001 = vmatpush2.msra.mxu0 0.0
      %7002 = vmatprep.subr.mxu0 0.0
      %7003 = vmatpush2.msra.mxu0 0.0
      %7004 = vmatprep.subr.mxu0 0.0
      %7005 = vmatpush2.msra.mxu0 0.0
      %7006 = vmatprep.subr.mxu0 0.0
      %7007 = vmatpush2.msra.mxu0 0.0
      %7008 = vmatprep.mubr.f32.mxu0 0.0
      %7009 = vmatmul.mubr.f32.gmra.mxu0 %v6846
      %v7010 = vpop.f32.mrf.mxu0
      %v7011 = vadd.f32 0.0, %v7010
      %v7012 = vpop.f32.mrf.mxu0
      %7013 = vmatprep.mubr.f32.mxu0 0.0
      %7014 = vmatmul.mubr.f32.gmra.mxu0 %v6849
      %v7015 = vpop.f32.mrf.mxu0
      %v7016 = vadd.f32 0.0, %v7015
      %v7017 = vpop.f32.mrf.mxu0
      %7018 = vmatprep.mubr.f32.mxu0 0.0
      %7019 = vmatmul.mubr.f32.gmra.mxu0 %v6852
      %v7020 = vpop.f32.mrf.mxu0
      %v7021 = vadd.f32 0.0, %v7020
      %v7022 = vpop.f32.mrf.mxu0
      %7023 = vmatprep.mubr.f32.mxu0 0.0
      %7024 = vmatmul.mubr.f32.gmra.mxu0 %v6855
      %v7025 = vpop.f32.mrf.mxu0
      %v7026 = vadd.f32 0.0, %v7025
      %v7027 = vpop.f32.mrf.mxu0
      %7028 = vmatprep.mubr.f32.mxu0 0.0
      %7029 = vmatmul.mubr.f32.gmra.mxu0 %v6858
      %v7030 = vpop.f32.mrf.mxu0
      %v7031 = vadd.f32 0.0, %v7030
      %v7032 = vpop.f32.mrf.mxu0
      %7033 = vmatprep.mubr.f32.mxu0 0.0
      %7034 = vmatmul.mubr.f32.gmra.mxu0 %v6861
      %v7035 = vpop.f32.mrf.mxu0
      %v7036 = vadd.f32 0.0, %v7035
      %v7037 = vpop.f32.mrf.mxu0
      %7038 = vmatprep.mubr.f32.mxu0 0.0
      %7039 = vmatmul.mubr.f32.gmra.mxu0 %v6864
      %v7040 = vpop.f32.mrf.mxu0
      %v7041 = vadd.f32 0.0, %v7040
      %v7042 = vpop.f32.mrf.mxu0
      %7043 = vmatprep.mubr.f32.mxu0 0.0
      %7044 = vmatmul.mubr.f32.gmra.mxu0 %v6867
      %v7045 = vpop.f32.mrf.mxu0
      %v7046 = vadd.f32 0.0, %v7045
      %v7047 = vpop.f32.mrf.mxu0
      %7048 = vmatprep.mubr.f32.mxu0 0.0
      %7049 = vmatmul.mubr.f32.gmra.mxu0 %v6870
      %v7050 = vpop.f32.mrf.mxu0
      %v7051 = vadd.f32 0.0, %v7050
      %v7052 = vpop.f32.mrf.mxu0
      %7053 = vmatprep.mubr.f32.mxu0 0.0
      %7054 = vmatmul.mubr.f32.gmra.mxu0 %v6873
      %v7055 = vpop.f32.mrf.mxu0
      %v7056 = vadd.f32 0.0, %v7055
      %v7057 = vpop.f32.mrf.mxu0
      %7058 = vmatprep.mubr.f32.mxu0 0.0
      %7059 = vmatmul.mubr.f32.gmra.mxu0 %v6876
      %v7060 = vpop.f32.mrf.mxu0
      %v7061 = vadd.f32 0.0, %v7060
      %v7062 = vpop.f32.mrf.mxu0
      %7063 = vmatprep.mubr.f32.mxu0 0.0
      %7064 = vmatmul.mubr.f32.gmra.mxu0 %v6879
      %v7065 = vpop.f32.mrf.mxu0
      %v7066 = vadd.f32 0.0, %v7065
      %v7067 = vpop.f32.mrf.mxu0
      %7068 = vmatprep.mubr.f32.mxu0 0.0
      %7069 = vmatmul.mubr.f32.gmra.mxu0 %v6882
      %v7070 = vpop.f32.mrf.mxu0
      %v7071 = vadd.f32 0.0, %v7070
      %v7072 = vpop.f32.mrf.mxu0
      %7073 = vmatprep.mubr.f32.mxu0 0.0
      %7074 = vmatmul.mubr.f32.gmra.mxu0 %v6885
      %v7075 = vpop.f32.mrf.mxu0
      %v7076 = vadd.f32 0.0, %v7075
      %v7077 = vpop.f32.mrf.mxu0
      %7078 = vmatprep.mubr.f32.mxu0 0.0
      %7079 = vmatmul.mubr.f32.gmra.mxu0 %v6888
      %v7080 = vpop.f32.mrf.mxu0
      %v7081 = vadd.f32 0.0, %v7080
      %v7082 = vpop.f32.mrf.mxu0
      %7083 = vmatprep.mubr.f32.mxu0 0.0
      %7084 = vmatmul.mubr.f32.gmra.mxu0 %v6891
      %v7085 = vpop.f32.mrf.mxu0
      %v7086 = vadd.f32 0.0, %v7085
      %v7087 = vpop.f32.mrf.mxu0
      %7088 = vmatprep.mubr.f32.mxu0 0.0
      %7089 = vmatmul.mubr.f32.gmra.mxu0 %v6894
      %v7090 = vpop.f32.mrf.mxu0
      %v7091 = vadd.f32 0.0, %v7090
      %v7092 = vpop.f32.mrf.mxu0
      %7093 = vmatprep.mubr.f32.mxu0 0.0
      %7094 = vmatmul.mubr.f32.gmra.mxu0 %v6897
      %v7095 = vpop.f32.mrf.mxu0
      %v7096 = vadd.f32 0.0, %v7095
      %v7097 = vpop.f32.mrf.mxu0
      %7098 = vmatprep.mubr.f32.mxu0 0.0
      %7099 = vmatmul.mubr.f32.gmra.mxu0 %v6900
      %v7100 = vpop.f32.mrf.mxu0
      %v7101 = vadd.f32 0.0, %v7100
      %v7102 = vpop.f32.mrf.mxu0
      %7103 = vmatprep.mubr.f32.mxu0 0.0
      %7104 = vmatmul.mubr.f32.gmra.mxu0 %v6903
      %v7105 = vpop.f32.mrf.mxu0
      %v7106 = vadd.f32 0.0, %v7105
      %v7107 = vpop.f32.mrf.mxu0
      %7108 = vmatprep.mubr.f32.mxu0 0.0
      %7109 = vmatmul.mubr.f32.gmra.mxu0 %v6906
      %v7110 = vpop.f32.mrf.mxu0
      %v7111 = vadd.f32 0.0, %v7110
      %v7112 = vpop.f32.mrf.mxu0
      %7113 = vmatprep.mubr.f32.mxu0 0.0
      %7114 = vmatmul.mubr.f32.gmra.mxu0 %v6909
      %v7115 = vpop.f32.mrf.mxu0
      %v7116 = vadd.f32 0.0, %v7115
      %v7117 = vpop.f32.mrf.mxu0
      %7118 = vmatprep.mubr.f32.mxu0 0.0
      %7119 = vmatmul.mubr.f32.gmra.mxu0 %v6912
      %v7120 = vpop.f32.mrf.mxu0
      %v7121 = vadd.f32 0.0, %v7120
      %v7122 = vpop.f32.mrf.mxu0
      %7123 = vmatprep.mubr.f32.mxu0 0.0
      %7124 = vmatmul.mubr.f32.gmra.mxu0 %v6915
      %v7125 = vpop.f32.mrf.mxu0
      %v7126 = vadd.f32 0.0, %v7125
      %v7127 = vpop.f32.mrf.mxu0
      %7128 = vmatprep.mubr.f32.mxu0 0.0
      %7129 = vmatmul.mubr.f32.gmra.mxu0 %v6918
      %v7130 = vpop.f32.mrf.mxu0
      %v7131 = vadd.f32 0.0, %v7130
      %v7132 = vpop.f32.mrf.mxu0
      %7133 = vmatprep.mubr.f32.mxu0 0.0
      %7134 = vmatmul.mubr.f32.gmra.mxu0 %v6921
      %v7135 = vpop.f32.mrf.mxu0
      %v7136 = vadd.f32 0.0, %v7135
      %v7137 = vpop.f32.mrf.mxu0
      %7138 = vmatprep.mubr.f32.mxu0 0.0
      %7139 = vmatmul.mubr.f32.gmra.mxu0 %v6924
      %v7140 = vpop.f32.mrf.mxu0
      %v7141 = vadd.f32 0.0, %v7140
      %v7142 = vpop.f32.mrf.mxu0
      %7143 = vmatprep.mubr.f32.mxu0 0.0
      %7144 = vmatmul.mubr.f32.gmra.mxu0 %v6927
      %v7145 = vpop.f32.mrf.mxu0
      %v7146 = vadd.f32 0.0, %v7145
      %v7147 = vpop.f32.mrf.mxu0
      %7148 = vmatprep.mubr.f32.mxu0 0.0
      %7149 = vmatmul.mubr.f32.gmra.mxu0 %v6930
      %v7150 = vpop.f32.mrf.mxu0
      %v7151 = vadd.f32 0.0, %v7150
      %v7152 = vpop.f32.mrf.mxu0
      %7153 = vmatprep.mubr.f32.mxu0 0.0
      %7154 = vmatmul.mubr.f32.gmra.mxu0 %v6933
      %v7155 = vpop.f32.mrf.mxu0
      %v7156 = vadd.f32 0.0, %v7155
      %v7157 = vpop.f32.mrf.mxu0
      %7158 = vmatprep.mubr.f32.mxu0 0.0
      %7159 = vmatmul.mubr.f32.gmra.mxu0 %v6936
      %v7160 = vpop.f32.mrf.mxu0
      %v7161 = vadd.f32 0.0, %v7160
      %v7162 = vpop.f32.mrf.mxu0
      %7163 = vmatprep.mubr.f32.mxu0 0.0
      %7164 = vmatmul.mubr.f32.gmra.mxu0 %v6939
      %v7165 = vpop.f32.mrf.mxu0
      %v7166 = vadd.f32 0.0, %v7165
      %v7167 = vpop.f32.mrf.mxu0
      %7168 = vdwg.mxu0
      %v7169 = vadd.f32 %v6779, %v7011
      %v7170 = vadd.f32 %v6780, %v7016
      %v7171 = vadd.f32 %v6781, %v7021
      %v7172 = vadd.f32 %v6782, %v7026
      %v7173 = vadd.f32 %v6783, %v7031
      %v7174 = vadd.f32 %v6784, %v7036
      %v7175 = vadd.f32 %v6785, %v7041
      %v7176 = vadd.f32 %v6786, %v7046
      %v7177 = vadd.f32 %v6787, %v7051
      %v7178 = vadd.f32 %v6788, %v7056
      %v7179 = vadd.f32 %v6789, %v7061
      %v7180 = vadd.f32 %v6790, %v7066
      %v7181 = vadd.f32 %v6791, %v7071
      %v7182 = vadd.f32 %v6792, %v7076
      %v7183 = vadd.f32 %v6793, %v7081
      %v7184 = vadd.f32 %v6794, %v7086
      %v7185 = vadd.f32 %v6795, %v7091
      %v7186 = vadd.f32 %v6796, %v7096
      %v7187 = vadd.f32 %v6797, %v7101
      %v7188 = vadd.f32 %v6798, %v7106
      %v7189 = vadd.f32 %v6799, %v7111
      %v7190 = vadd.f32 %v6800, %v7116
      %v7191 = vadd.f32 %v6801, %v7121
      %v7192 = vadd.f32 %v6802, %v7126
      %v7193 = vadd.f32 %v6803, %v7131
      %v7194 = vadd.f32 %v6804, %v7136
      %v7195 = vadd.f32 %v6805, %v7141
      %v7196 = vadd.f32 %v6806, %v7146
      %v7197 = vadd.f32 %v6807, %v7151
      %v7198 = vadd.f32 %v6808, %v7156
      %v7199 = vadd.f32 %v6809, %v7161
      %v7200 = vadd.f32 %v6810, %v7166
      %v7201 = vld [vmem:[%s6420 + $0x2] sm:$0xff]
      %v7202 = vld [vmem:[%s6420 + $0xa] sm:$0xff]
      %v7203 = vld [vmem:[%s6420 + $0x1a] sm:$0xff]
      %v7204 = vld [vmem:[%s6420 + $0x22] sm:$0xff]
      %v7205 = vld [vmem:[%s6420 + $0x32] sm:$0xff]
      %v7206 = vld [vmem:[%s6420 + $0x3a] sm:$0xff]
      %v7207 = vld [vmem:[%s6420 + $0x4a] sm:$0xff]
      %v7208 = vld [vmem:[%s6420 + $0x52] sm:$0xff]
      %v7209 = vld [vmem:[%s6420 + $0x62] sm:$0xff]
      %v7210 = vld [vmem:[%s6420 + $0x6a] sm:$0xff]
      %v7211 = vld [vmem:[%s6420 + $0x7a] sm:$0xff]
      %v7212 = vld [vmem:[%s6420 + $0x82] sm:$0xff]
      %v7213 = vld [vmem:[%s6420 + $0x92] sm:$0xff]
      %v7214 = vld [vmem:[%s6420 + $0x9a] sm:$0xff]
      %v7215 = vld [vmem:[%s6420 + $0xaa] sm:$0xff]
      %v7216 = vld [vmem:[%s6420 + $0xb2] sm:$0xff]
      %v7217 = vld [vmem:[%s6420 + $0xc2] sm:$0xff]
      %v7218 = vld [vmem:[%s6420 + $0xca] sm:$0xff]
      %v7219 = vld [vmem:[%s6420 + $0xda] sm:$0xff]
      %v7220 = vld [vmem:[%s6420 + $0xe2] sm:$0xff]
      %v7221 = vld [vmem:[%s6420 + $0xf2] sm:$0xff]
      %v7222 = vld [vmem:[%s6420 + $0xfa] sm:$0xff]
      %v7223 = vld [vmem:[%s6420 + $0x10a] sm:$0xff]
      %v7224 = vld [vmem:[%s6420 + $0x112] sm:$0xff]
      %v7225 = vld [vmem:[%s6420 + $0x122] sm:$0xff]
      %v7226 = vld [vmem:[%s6420 + $0x12a] sm:$0xff]
      %v7227 = vld [vmem:[%s6420 + $0x13a] sm:$0xff]
      %v7228 = vld [vmem:[%s6420 + $0x142] sm:$0xff]
      %v7229 = vld [vmem:[%s6420 + $0x152] sm:$0xff]
      %v7230 = vld [vmem:[%s6420 + $0x15a] sm:$0xff]
      %v7231 = vld [vmem:[%s6420 + $0x16a] sm:$0xff]
      %v7232 = vld [vmem:[%s6420 + $0x172] sm:$0xff]
      %s7233 = scalar_lea.vmem %s2, 32
      %v7234 = vld [vmem:[%s7233] sm:$0xf]
      %v7236 = vsel %vm204, %v7201, 0
      %v7239 = vsel %vm204, %v7202, 0
      %v7242 = vsel %vm204, %v7203, 0
      %v7245 = vsel %vm204, %v7204, 0
      %v7248 = vsel %vm204, %v7205, 0
      %v7251 = vsel %vm204, %v7206, 0
      %v7254 = vsel %vm204, %v7207, 0
      %v7257 = vsel %vm204, %v7208, 0
      %v7260 = vsel %vm204, %v7209, 0
      %v7263 = vsel %vm204, %v7210, 0
      %v7266 = vsel %vm204, %v7211, 0
      %v7269 = vsel %vm204, %v7212, 0
      %v7272 = vsel %vm204, %v7213, 0
      %v7275 = vsel %vm204, %v7214, 0
      %v7278 = vsel %vm204, %v7215, 0
      %v7281 = vsel %vm204, %v7216, 0
      %v7284 = vsel %vm204, %v7217, 0
      %v7287 = vsel %vm204, %v7218, 0
      %v7290 = vsel %vm204, %v7219, 0
      %v7293 = vsel %vm204, %v7220, 0
      %v7296 = vsel %vm204, %v7221, 0
      %v7299 = vsel %vm204, %v7222, 0
      %v7302 = vsel %vm204, %v7223, 0
      %v7305 = vsel %vm204, %v7224, 0
      %v7308 = vsel %vm204, %v7225, 0
      %v7311 = vsel %vm204, %v7226, 0
      %v7314 = vsel %vm204, %v7227, 0
      %v7317 = vsel %vm204, %v7228, 0
      %v7320 = vsel %vm204, %v7229, 0
      %v7323 = vsel %vm204, %v7230, 0
      %v7326 = vsel %vm204, %v7231, 0
      %v7329 = vsel %vm204, %v7232, 0
      %v7332 = vsel %vm478, %v7234, 0
      %7334 = vmatprep.subr.mxu0 0.0
      %7335 = vmatpush1.msra.mxu0 0.0
      %7336 = vmatprep.subr.mxu0 0.0
      %7337 = vmatpush1.msra.mxu0 0.0
      %7338 = vmatprep.subr.mxu0 0.0
      %7339 = vmatpush1.msra.mxu0 0.0
      %7340 = vmatprep.subr.mxu0 0.0
      %7341 = vmatpush1.msra.mxu0 0.0
      %7342 = vmatprep.subr.mxu0 0.0
      %7343 = vmatpush1.msra.mxu0 0.0
      %7344 = vmatprep.subr.mxu0 0.0
      %7345 = vmatpush1.msra.mxu0 0.0
      %7346 = vmatprep.subr.mxu0 0.0
      %7347 = vmatpush1.msra.mxu0 0.0
      %7348 = vmatprep.subr.mxu0 0.0
      %7349 = vmatpush1.msra.mxu0 0.0
      %7350 = vmatprep.subr.mxu0 0.0
      %7351 = vmatpush1.msra.mxu0 0.0
      %7352 = vmatprep.subr.mxu0 0.0
      %7353 = vmatpush1.msra.mxu0 0.0
      %7354 = vmatprep.subr.mxu0 0.0
      %7355 = vmatpush1.msra.mxu0 0.0
      %7356 = vmatprep.subr.mxu0 0.0
      %7357 = vmatpush1.msra.mxu0 0.0
      %7358 = vmatprep.subr.mxu0 0.0
      %7359 = vmatpush1.msra.mxu0 0.0
      %7360 = vmatprep.subr.mxu0 0.0
      %7361 = vmatpush1.msra.mxu0 0.0
      %7362 = vmatprep.subr.mxu0 0.0
      %7363 = vmatpush1.msra.mxu0 0.0
      %7364 = vmatprep.subr.mxu0 0.0
      %7365 = vmatpush1.msra.mxu0 %v7332
      %7366 = vmatprep.subr.mxu0 0.0
      %7367 = vmatpush2.msra.mxu0 0.0
      %7368 = vmatprep.subr.mxu0 0.0
      %7369 = vmatpush2.msra.mxu0 0.0
      %7370 = vmatprep.subr.mxu0 0.0
      %7371 = vmatpush2.msra.mxu0 0.0
      %7372 = vmatprep.subr.mxu0 0.0
      %7373 = vmatpush2.msra.mxu0 0.0
      %7374 = vmatprep.subr.mxu0 0.0
      %7375 = vmatpush2.msra.mxu0 0.0
      %7376 = vmatprep.subr.mxu0 0.0
      %7377 = vmatpush2.msra.mxu0 0.0
      %7378 = vmatprep.subr.mxu0 0.0
      %7379 = vmatpush2.msra.mxu0 0.0
      %7380 = vmatprep.subr.mxu0 0.0
      %7381 = vmatpush2.msra.mxu0 0.0
      %7382 = vmatprep.subr.mxu0 0.0
      %7383 = vmatpush2.msra.mxu0 0.0
      %7384 = vmatprep.subr.mxu0 0.0
      %7385 = vmatpush2.msra.mxu0 0.0
      %7386 = vmatprep.subr.mxu0 0.0
      %7387 = vmatpush2.msra.mxu0 0.0
      %7388 = vmatprep.subr.mxu0 0.0
      %7389 = vmatpush2.msra.mxu0 0.0
      %7390 = vmatprep.subr.mxu0 0.0
      %7391 = vmatpush2.msra.mxu0 0.0
      %7392 = vmatprep.subr.mxu0 0.0
      %7393 = vmatpush2.msra.mxu0 0.0
      %7394 = vmatprep.subr.mxu0 0.0
      %7395 = vmatpush2.msra.mxu0 0.0
      %7396 = vmatprep.subr.mxu0 0.0
      %7397 = vmatpush2.msra.mxu0 0.0
      %7398 = vmatprep.mubr.f32.mxu0 0.0
      %7399 = vmatmul.mubr.f32.gmra.mxu0 %v7236
      %v7400 = vpop.f32.mrf.mxu0
      %v7401 = vadd.f32 0.0, %v7400
      %v7402 = vpop.f32.mrf.mxu0
      %7403 = vmatprep.mubr.f32.mxu0 0.0
      %7404 = vmatmul.mubr.f32.gmra.mxu0 %v7239
      %v7405 = vpop.f32.mrf.mxu0
      %v7406 = vadd.f32 0.0, %v7405
      %v7407 = vpop.f32.mrf.mxu0
      %7408 = vmatprep.mubr.f32.mxu0 0.0
      %7409 = vmatmul.mubr.f32.gmra.mxu0 %v7242
      %v7410 = vpop.f32.mrf.mxu0
      %v7411 = vadd.f32 0.0, %v7410
      %v7412 = vpop.f32.mrf.mxu0
      %7413 = vmatprep.mubr.f32.mxu0 0.0
      %7414 = vmatmul.mubr.f32.gmra.mxu0 %v7245
      %v7415 = vpop.f32.mrf.mxu0
      %v7416 = vadd.f32 0.0, %v7415
      %v7417 = vpop.f32.mrf.mxu0
      %7418 = vmatprep.mubr.f32.mxu0 0.0
      %7419 = vmatmul.mubr.f32.gmra.mxu0 %v7248
      %v7420 = vpop.f32.mrf.mxu0
      %v7421 = vadd.f32 0.0, %v7420
      %v7422 = vpop.f32.mrf.mxu0
      %7423 = vmatprep.mubr.f32.mxu0 0.0
      %7424 = vmatmul.mubr.f32.gmra.mxu0 %v7251
      %v7425 = vpop.f32.mrf.mxu0
      %v7426 = vadd.f32 0.0, %v7425
      %v7427 = vpop.f32.mrf.mxu0
      %7428 = vmatprep.mubr.f32.mxu0 0.0
      %7429 = vmatmul.mubr.f32.gmra.mxu0 %v7254
      %v7430 = vpop.f32.mrf.mxu0
      %v7431 = vadd.f32 0.0, %v7430
      %v7432 = vpop.f32.mrf.mxu0
      %7433 = vmatprep.mubr.f32.mxu0 0.0
      %7434 = vmatmul.mubr.f32.gmra.mxu0 %v7257
      %v7435 = vpop.f32.mrf.mxu0
      %v7436 = vadd.f32 0.0, %v7435
      %v7437 = vpop.f32.mrf.mxu0
      %7438 = vmatprep.mubr.f32.mxu0 0.0
      %7439 = vmatmul.mubr.f32.gmra.mxu0 %v7260
      %v7440 = vpop.f32.mrf.mxu0
      %v7441 = vadd.f32 0.0, %v7440
      %v7442 = vpop.f32.mrf.mxu0
      %7443 = vmatprep.mubr.f32.mxu0 0.0
      %7444 = vmatmul.mubr.f32.gmra.mxu0 %v7263
      %v7445 = vpop.f32.mrf.mxu0
      %v7446 = vadd.f32 0.0, %v7445
      %v7447 = vpop.f32.mrf.mxu0
      %7448 = vmatprep.mubr.f32.mxu0 0.0
      %7449 = vmatmul.mubr.f32.gmra.mxu0 %v7266
      %v7450 = vpop.f32.mrf.mxu0
      %v7451 = vadd.f32 0.0, %v7450
      %v7452 = vpop.f32.mrf.mxu0
      %7453 = vmatprep.mubr.f32.mxu0 0.0
      %7454 = vmatmul.mubr.f32.gmra.mxu0 %v7269
      %v7455 = vpop.f32.mrf.mxu0
      %v7456 = vadd.f32 0.0, %v7455
      %v7457 = vpop.f32.mrf.mxu0
      %7458 = vmatprep.mubr.f32.mxu0 0.0
      %7459 = vmatmul.mubr.f32.gmra.mxu0 %v7272
      %v7460 = vpop.f32.mrf.mxu0
      %v7461 = vadd.f32 0.0, %v7460
      %v7462 = vpop.f32.mrf.mxu0
      %7463 = vmatprep.mubr.f32.mxu0 0.0
      %7464 = vmatmul.mubr.f32.gmra.mxu0 %v7275
      %v7465 = vpop.f32.mrf.mxu0
      %v7466 = vadd.f32 0.0, %v7465
      %v7467 = vpop.f32.mrf.mxu0
      %7468 = vmatprep.mubr.f32.mxu0 0.0
      %7469 = vmatmul.mubr.f32.gmra.mxu0 %v7278
      %v7470 = vpop.f32.mrf.mxu0
      %v7471 = vadd.f32 0.0, %v7470
      %v7472 = vpop.f32.mrf.mxu0
      %7473 = vmatprep.mubr.f32.mxu0 0.0
      %7474 = vmatmul.mubr.f32.gmra.mxu0 %v7281
      %v7475 = vpop.f32.mrf.mxu0
      %v7476 = vadd.f32 0.0, %v7475
      %v7477 = vpop.f32.mrf.mxu0
      %7478 = vmatprep.mubr.f32.mxu0 0.0
      %7479 = vmatmul.mubr.f32.gmra.mxu0 %v7284
      %v7480 = vpop.f32.mrf.mxu0
      %v7481 = vadd.f32 0.0, %v7480
      %v7482 = vpop.f32.mrf.mxu0
      %7483 = vmatprep.mubr.f32.mxu0 0.0
      %7484 = vmatmul.mubr.f32.gmra.mxu0 %v7287
      %v7485 = vpop.f32.mrf.mxu0
      %v7486 = vadd.f32 0.0, %v7485
      %v7487 = vpop.f32.mrf.mxu0
      %7488 = vmatprep.mubr.f32.mxu0 0.0
      %7489 = vmatmul.mubr.f32.gmra.mxu0 %v7290
      %v7490 = vpop.f32.mrf.mxu0
      %v7491 = vadd.f32 0.0, %v7490
      %v7492 = vpop.f32.mrf.mxu0
      %7493 = vmatprep.mubr.f32.mxu0 0.0
      %7494 = vmatmul.mubr.f32.gmra.mxu0 %v7293
      %v7495 = vpop.f32.mrf.mxu0
      %v7496 = vadd.f32 0.0, %v7495
      %v7497 = vpop.f32.mrf.mxu0
      %7498 = vmatprep.mubr.f32.mxu0 0.0
      %7499 = vmatmul.mubr.f32.gmra.mxu0 %v7296
      %v7500 = vpop.f32.mrf.mxu0
      %v7501 = vadd.f32 0.0, %v7500
      %v7502 = vpop.f32.mrf.mxu0
      %7503 = vmatprep.mubr.f32.mxu0 0.0
      %7504 = vmatmul.mubr.f32.gmra.mxu0 %v7299
      %v7505 = vpop.f32.mrf.mxu0
      %v7506 = vadd.f32 0.0, %v7505
      %v7507 = vpop.f32.mrf.mxu0
      %7508 = vmatprep.mubr.f32.mxu0 0.0
      %7509 = vmatmul.mubr.f32.gmra.mxu0 %v7302
      %v7510 = vpop.f32.mrf.mxu0
      %v7511 = vadd.f32 0.0, %v7510
      %v7512 = vpop.f32.mrf.mxu0
      %7513 = vmatprep.mubr.f32.mxu0 0.0
      %7514 = vmatmul.mubr.f32.gmra.mxu0 %v7305
      %v7515 = vpop.f32.mrf.mxu0
      %v7516 = vadd.f32 0.0, %v7515
      %v7517 = vpop.f32.mrf.mxu0
      %7518 = vmatprep.mubr.f32.mxu0 0.0
      %7519 = vmatmul.mubr.f32.gmra.mxu0 %v7308
      %v7520 = vpop.f32.mrf.mxu0
      %v7521 = vadd.f32 0.0, %v7520
      %v7522 = vpop.f32.mrf.mxu0
      %7523 = vmatprep.mubr.f32.mxu0 0.0
      %7524 = vmatmul.mubr.f32.gmra.mxu0 %v7311
      %v7525 = vpop.f32.mrf.mxu0
      %v7526 = vadd.f32 0.0, %v7525
      %v7527 = vpop.f32.mrf.mxu0
      %7528 = vmatprep.mubr.f32.mxu0 0.0
      %7529 = vmatmul.mubr.f32.gmra.mxu0 %v7314
      %v7530 = vpop.f32.mrf.mxu0
      %v7531 = vadd.f32 0.0, %v7530
      %v7532 = vpop.f32.mrf.mxu0
      %7533 = vmatprep.mubr.f32.mxu0 0.0
      %7534 = vmatmul.mubr.f32.gmra.mxu0 %v7317
      %v7535 = vpop.f32.mrf.mxu0
      %v7536 = vadd.f32 0.0, %v7535
      %v7537 = vpop.f32.mrf.mxu0
      %7538 = vmatprep.mubr.f32.mxu0 0.0
      %7539 = vmatmul.mubr.f32.gmra.mxu0 %v7320
      %v7540 = vpop.f32.mrf.mxu0
      %v7541 = vadd.f32 0.0, %v7540
      %v7542 = vpop.f32.mrf.mxu0
      %7543 = vmatprep.mubr.f32.mxu0 0.0
      %7544 = vmatmul.mubr.f32.gmra.mxu0 %v7323
      %v7545 = vpop.f32.mrf.mxu0
      %v7546 = vadd.f32 0.0, %v7545
      %v7547 = vpop.f32.mrf.mxu0
      %7548 = vmatprep.mubr.f32.mxu0 0.0
      %7549 = vmatmul.mubr.f32.gmra.mxu0 %v7326
      %v7550 = vpop.f32.mrf.mxu0
      %v7551 = vadd.f32 0.0, %v7550
      %v7552 = vpop.f32.mrf.mxu0
      %7553 = vmatprep.mubr.f32.mxu0 0.0
      %7554 = vmatmul.mubr.f32.gmra.mxu0 %v7329
      %v7555 = vpop.f32.mrf.mxu0
      %v7556 = vadd.f32 0.0, %v7555
      %v7557 = vpop.f32.mrf.mxu0
      %7558 = vdwg.mxu0
      %v7559 = vadd.f32 %v7169, %v7401
      %v7560 = vadd.f32 %v7170, %v7406
      %v7561 = vadd.f32 %v7171, %v7411
      %v7562 = vadd.f32 %v7172, %v7416
      %v7563 = vadd.f32 %v7173, %v7421
      %v7564 = vadd.f32 %v7174, %v7426
      %v7565 = vadd.f32 %v7175, %v7431
      %v7566 = vadd.f32 %v7176, %v7436
      %v7567 = vadd.f32 %v7177, %v7441
      %v7568 = vadd.f32 %v7178, %v7446
      %v7569 = vadd.f32 %v7179, %v7451
      %v7570 = vadd.f32 %v7180, %v7456
      %v7571 = vadd.f32 %v7181, %v7461
      %v7572 = vadd.f32 %v7182, %v7466
      %v7573 = vadd.f32 %v7183, %v7471
      %v7574 = vadd.f32 %v7184, %v7476
      %v7575 = vadd.f32 %v7185, %v7481
      %v7576 = vadd.f32 %v7186, %v7486
      %v7577 = vadd.f32 %v7187, %v7491
      %v7578 = vadd.f32 %v7188, %v7496
      %v7579 = vadd.f32 %v7189, %v7501
      %v7580 = vadd.f32 %v7190, %v7506
      %v7581 = vadd.f32 %v7191, %v7511
      %v7582 = vadd.f32 %v7192, %v7516
      %v7583 = vadd.f32 %v7193, %v7521
      %v7584 = vadd.f32 %v7194, %v7526
      %v7585 = vadd.f32 %v7195, %v7531
      %v7586 = vadd.f32 %v7196, %v7536
      %v7587 = vadd.f32 %v7197, %v7541
      %v7588 = vadd.f32 %v7198, %v7546
      %v7589 = vadd.f32 %v7199, %v7551
      %v7590 = vadd.f32 %v7200, %v7556
      %v7591 = vsel %vm204, %v7559, 0.0
      %v7592 = vsel %vm204, %v7560, 0.0
      %v7593 = vadd.f32 %v7591, %v7592
      %v7594 = vsel %vm204, %v7561, 0.0
      %v7595 = vadd.f32 %v7593, %v7594
      %v7596 = vsel %vm204, %v7562, 0.0
      %v7597 = vadd.f32 %v7595, %v7596
      %v7598 = vsel %vm204, %v7563, 0.0
      %v7599 = vadd.f32 %v7597, %v7598
      %v7600 = vsel %vm204, %v7564, 0.0
      %v7601 = vadd.f32 %v7599, %v7600
      %v7602 = vsel %vm204, %v7565, 0.0
      %v7603 = vadd.f32 %v7601, %v7602
      %v7604 = vsel %vm204, %v7566, 0.0
      %v7605 = vadd.f32 %v7603, %v7604
      %v7606 = vsel %vm204, %v7567, 0.0
      %v7607 = vadd.f32 %v7605, %v7606
      %v7608 = vsel %vm204, %v7568, 0.0
      %v7609 = vadd.f32 %v7607, %v7608
      %v7610 = vsel %vm204, %v7569, 0.0
      %v7611 = vadd.f32 %v7609, %v7610
      %v7612 = vsel %vm204, %v7570, 0.0
      %v7613 = vadd.f32 %v7611, %v7612
      %v7614 = vsel %vm204, %v7571, 0.0
      %v7615 = vadd.f32 %v7613, %v7614
      %v7616 = vsel %vm204, %v7572, 0.0
      %v7617 = vadd.f32 %v7615, %v7616
      %v7618 = vsel %vm204, %v7573, 0.0
      %v7619 = vadd.f32 %v7617, %v7618
      %v7620 = vsel %vm204, %v7574, 0.0
      %v7621 = vadd.f32 %v7619, %v7620
      %v7622 = vsel %vm204, %v7575, 0.0
      %v7623 = vadd.f32 %v7621, %v7622
      %v7624 = vsel %vm204, %v7576, 0.0
      %v7625 = vadd.f32 %v7623, %v7624
      %v7626 = vsel %vm204, %v7577, 0.0
      %v7627 = vadd.f32 %v7625, %v7626
      %v7628 = vsel %vm204, %v7578, 0.0
      %v7629 = vadd.f32 %v7627, %v7628
      %v7630 = vsel %vm204, %v7579, 0.0
      %v7631 = vadd.f32 %v7629, %v7630
      %v7632 = vsel %vm204, %v7580, 0.0
      %v7633 = vadd.f32 %v7631, %v7632
      %v7634 = vsel %vm204, %v7581, 0.0
      %v7635 = vadd.f32 %v7633, %v7634
      %v7636 = vsel %vm204, %v7582, 0.0
      %v7637 = vadd.f32 %v7635, %v7636
      %v7638 = vsel %vm204, %v7583, 0.0
      %v7639 = vadd.f32 %v7637, %v7638
      %v7640 = vsel %vm204, %v7584, 0.0
      %v7641 = vadd.f32 %v7639, %v7640
      %v7642 = vsel %vm204, %v7585, 0.0
      %v7643 = vadd.f32 %v7641, %v7642
      %v7644 = vsel %vm204, %v7586, 0.0
      %v7645 = vadd.f32 %v7643, %v7644
      %v7646 = vsel %vm204, %v7587, 0.0
      %v7647 = vadd.f32 %v7645, %v7646
      %v7648 = vsel %vm204, %v7588, 0.0
      %v7649 = vadd.f32 %v7647, %v7648
      %v7650 = vsel %vm204, %v7589, 0.0
      %v7651 = vadd.f32 %v7649, %v7650
      %v7652 = vsel %vm204, %v7590, 0.0
      %v7653 = vadd.f32 %v7651, %v7652
      %v7654 = vrot.slane %v7653, 4
      %v7655 = vadd.f32 %v7653, %v7654
      %v7656 = vrot.slane %v7655, 2
      %v7657 = vadd.f32 %v7655, %v7656
      %v7658 = vrot.slane %v7657, 1
      %v7659 = vadd.f32 %v7657, %v7658
      %v7660 = vmul.f32 %v7659, %v3831
      %v7661 = vmul.f32 %v7559, %v7559
      %v7662 = vmul.f32 %v7560, %v7560
      %v7663 = vmul.f32 %v7561, %v7561
      %v7664 = vmul.f32 %v7562, %v7562
      %v7665 = vmul.f32 %v7563, %v7563
      %v7666 = vmul.f32 %v7564, %v7564
      %v7667 = vmul.f32 %v7565, %v7565
      %v7668 = vmul.f32 %v7566, %v7566
      %v7669 = vmul.f32 %v7567, %v7567
      %v7670 = vmul.f32 %v7568, %v7568
      %v7671 = vmul.f32 %v7569, %v7569
      %v7672 = vmul.f32 %v7570, %v7570
      %v7673 = vmul.f32 %v7571, %v7571
      %v7674 = vmul.f32 %v7572, %v7572
      %v7675 = vmul.f32 %v7573, %v7573
      %v7676 = vmul.f32 %v7574, %v7574
      %v7677 = vmul.f32 %v7575, %v7575
      %v7678 = vmul.f32 %v7576, %v7576
      %v7679 = vmul.f32 %v7577, %v7577
      %v7680 = vmul.f32 %v7578, %v7578
      %v7681 = vmul.f32 %v7579, %v7579
      %v7682 = vmul.f32 %v7580, %v7580
      %v7683 = vmul.f32 %v7581, %v7581
      %v7684 = vmul.f32 %v7582, %v7582
      %v7685 = vmul.f32 %v7583, %v7583
      %v7686 = vmul.f32 %v7584, %v7584
      %v7687 = vmul.f32 %v7585, %v7585
      %v7688 = vmul.f32 %v7586, %v7586
      %v7689 = vmul.f32 %v7587, %v7587
      %v7690 = vmul.f32 %v7588, %v7588
      %v7691 = vmul.f32 %v7589, %v7589
      %v7692 = vmul.f32 %v7590, %v7590
      %v7693 = vsel %vm204, %v7661, 0.0
      %v7694 = vsel %vm204, %v7662, 0.0
      %v7695 = vadd.f32 %v7693, %v7694
      %v7696 = vsel %vm204, %v7663, 0.0
      %v7697 = vadd.f32 %v7695, %v7696
      %v7698 = vsel %vm204, %v7664, 0.0
      %v7699 = vadd.f32 %v7697, %v7698
      %v7700 = vsel %vm204, %v7665, 0.0
      %v7701 = vadd.f32 %v7699, %v7700
      %v7702 = vsel %vm204, %v7666, 0.0
      %v7703 = vadd.f32 %v7701, %v7702
      %v7704 = vsel %vm204, %v7667, 0.0
      %v7705 = vadd.f32 %v7703, %v7704
      %v7706 = vsel %vm204, %v7668, 0.0
      %v7707 = vadd.f32 %v7705, %v7706
      %v7708 = vsel %vm204, %v7669, 0.0
      %v7709 = vadd.f32 %v7707, %v7708
      %v7710 = vsel %vm204, %v7670, 0.0
      %v7711 = vadd.f32 %v7709, %v7710
      %v7712 = vsel %vm204, %v7671, 0.0
      %v7713 = vadd.f32 %v7711, %v7712
      %v7714 = vsel %vm204, %v7672, 0.0
      %v7715 = vadd.f32 %v7713, %v7714
      %v7716 = vsel %vm204, %v7673, 0.0
      %v7717 = vadd.f32 %v7715, %v7716
      %v7718 = vsel %vm204, %v7674, 0.0
      %v7719 = vadd.f32 %v7717, %v7718
      %v7720 = vsel %vm204, %v7675, 0.0
      %v7721 = vadd.f32 %v7719, %v7720
      %v7722 = vsel %vm204, %v7676, 0.0
      %v7723 = vadd.f32 %v7721, %v7722
      %v7724 = vsel %vm204, %v7677, 0.0
      %v7725 = vadd.f32 %v7723, %v7724
      %v7726 = vsel %vm204, %v7678, 0.0
      %v7727 = vadd.f32 %v7725, %v7726
      %v7728 = vsel %vm204, %v7679, 0.0
      %v7729 = vadd.f32 %v7727, %v7728
      %v7730 = vsel %vm204, %v7680, 0.0
      %v7731 = vadd.f32 %v7729, %v7730
      %v7732 = vsel %vm204, %v7681, 0.0
      %v7733 = vadd.f32 %v7731, %v7732
      %v7734 = vsel %vm204, %v7682, 0.0
      %v7735 = vadd.f32 %v7733, %v7734
      %v7736 = vsel %vm204, %v7683, 0.0
      %v7737 = vadd.f32 %v7735, %v7736
      %v7738 = vsel %vm204, %v7684, 0.0
      %v7739 = vadd.f32 %v7737, %v7738
      %v7740 = vsel %vm204, %v7685, 0.0
      %v7741 = vadd.f32 %v7739, %v7740
      %v7742 = vsel %vm204, %v7686, 0.0
      %v7743 = vadd.f32 %v7741, %v7742
      %v7744 = vsel %vm204, %v7687, 0.0
      %v7745 = vadd.f32 %v7743, %v7744
      %v7746 = vsel %vm204, %v7688, 0.0
      %v7747 = vadd.f32 %v7745, %v7746
      %v7748 = vsel %vm204, %v7689, 0.0
      %v7749 = vadd.f32 %v7747, %v7748
      %v7750 = vsel %vm204, %v7690, 0.0
      %v7751 = vadd.f32 %v7749, %v7750
      %v7752 = vsel %vm204, %v7691, 0.0
      %v7753 = vadd.f32 %v7751, %v7752
      %v7754 = vsel %vm204, %v7692, 0.0
      %v7755 = vadd.f32 %v7753, %v7754
      %v7756 = vrot.slane %v7755, 4
      %v7757 = vadd.f32 %v7755, %v7756
      %v7758 = vrot.slane %v7757, 2
      %v7759 = vadd.f32 %v7757, %v7758
      %v7760 = vrot.slane %v7759, 1
      %v7761 = vadd.f32 %v7759, %v7760
      %v7762 = vmul.f32 %v7761, %v3831
      %v7763 = vmul.f32 %v7660, %v7660
      %v7764 = vsub.f32 %v7762, %v7763
      %v7765 = vsub.f32 %v7559, %v7660
      %v7766 = vsub.f32 %v7560, %v7660
      %v7767 = vsub.f32 %v7561, %v7660
      %v7768 = vsub.f32 %v7562, %v7660
      %v7769 = vsub.f32 %v7563, %v7660
      %v7770 = vsub.f32 %v7564, %v7660
      %v7771 = vsub.f32 %v7565, %v7660
      %v7772 = vsub.f32 %v7566, %v7660
      %v7773 = vsub.f32 %v7567, %v7660
      %v7774 = vsub.f32 %v7568, %v7660
      %v7775 = vsub.f32 %v7569, %v7660
      %v7776 = vsub.f32 %v7570, %v7660
      %v7777 = vsub.f32 %v7571, %v7660
      %v7778 = vsub.f32 %v7572, %v7660
      %v7779 = vsub.f32 %v7573, %v7660
      %v7780 = vsub.f32 %v7574, %v7660
      %v7781 = vsub.f32 %v7575, %v7660
      %v7782 = vsub.f32 %v7576, %v7660
      %v7783 = vsub.f32 %v7577, %v7660
      %v7784 = vsub.f32 %v7578, %v7660
      %v7785 = vsub.f32 %v7579, %v7660
      %v7786 = vsub.f32 %v7580, %v7660
      %v7787 = vsub.f32 %v7581, %v7660
      %v7788 = vsub.f32 %v7582, %v7660
      %v7789 = vsub.f32 %v7583, %v7660
      %v7790 = vsub.f32 %v7584, %v7660
      %v7791 = vsub.f32 %v7585, %v7660
      %v7792 = vsub.f32 %v7586, %v7660
      %v7793 = vsub.f32 %v7587, %v7660
      %v7794 = vsub.f32 %v7588, %v7660
      %v7795 = vsub.f32 %v7589, %v7660
      %v7796 = vsub.f32 %v7590, %v7660
      %v7797 = vadd.f32 %v7764, 1e-05
      %v7798 = vrsqrt.pop %v7797
      %v7799 = vmul.f32 %v7765, %v7798
      %v7800 = vmul.f32 %v7766, %v7798
      %v7801 = vmul.f32 %v7767, %v7798
      %v7802 = vmul.f32 %v7768, %v7798
      %v7803 = vmul.f32 %v7769, %v7798
      %v7804 = vmul.f32 %v7770, %v7798
      %v7805 = vmul.f32 %v7771, %v7798
      %v7806 = vmul.f32 %v7772, %v7798
      %v7807 = vmul.f32 %v7773, %v7798
      %v7808 = vmul.f32 %v7774, %v7798
      %v7809 = vmul.f32 %v7775, %v7798
      %v7810 = vmul.f32 %v7776, %v7798
      %v7811 = vmul.f32 %v7777, %v7798
      %v7812 = vmul.f32 %v7778, %v7798
      %v7813 = vmul.f32 %v7779, %v7798
      %v7814 = vmul.f32 %v7780, %v7798
      %v7815 = vmul.f32 %v7781, %v7798
      %v7816 = vmul.f32 %v7782, %v7798
      %v7817 = vmul.f32 %v7783, %v7798
      %v7818 = vmul.f32 %v7784, %v7798
      %v7819 = vmul.f32 %v7785, %v7798
      %v7820 = vmul.f32 %v7786, %v7798
      %v7821 = vmul.f32 %v7787, %v7798
      %v7822 = vmul.f32 %v7788, %v7798
      %v7823 = vmul.f32 %v7789, %v7798
      %v7824 = vmul.f32 %v7790, %v7798
      %v7825 = vmul.f32 %v7791, %v7798
      %v7826 = vmul.f32 %v7792, %v7798
      %v7827 = vmul.f32 %v7793, %v7798
      %v7828 = vmul.f32 %v7794, %v7798
      %v7829 = vmul.f32 %v7795, %v7798
      %v7830 = vmul.f32 %v7796, %v7798
      %v7831 = vadd.f32 %v171, %v7799
      %v7832 = vadd.f32 %v172, %v7800
      %v7833 = vadd.f32 %v173, %v7801
      %v7834 = vadd.f32 %v174, %v7802
      %v7835 = vadd.f32 %v175, %v7803
      %v7836 = vadd.f32 %v176, %v7804
      %v7837 = vadd.f32 %v177, %v7805
      %v7838 = vadd.f32 %v178, %v7806
      %v7839 = vadd.f32 %v179, %v7807
      %v7840 = vadd.f32 %v180, %v7808
      %v7841 = vadd.f32 %v181, %v7809
      %v7842 = vadd.f32 %v182, %v7810
      %v7843 = vadd.f32 %v183, %v7811
      %v7844 = vadd.f32 %v184, %v7812
      %v7845 = vadd.f32 %v185, %v7813
      %v7846 = vadd.f32 %v186, %v7814
      %v7847 = vadd.f32 %v187, %v7815
      %v7848 = vadd.f32 %v188, %v7816
      %v7849 = vadd.f32 %v189, %v7817
      %v7850 = vadd.f32 %v190, %v7818
      %v7851 = vadd.f32 %v191, %v7819
      %v7852 = vadd.f32 %v192, %v7820
      %v7853 = vadd.f32 %v193, %v7821
      %v7854 = vadd.f32 %v194, %v7822
      %v7855 = vadd.f32 %v195, %v7823
      %v7856 = vadd.f32 %v196, %v7824
      %v7857 = vadd.f32 %v197, %v7825
      %v7858 = vadd.f32 %v198, %v7826
      %v7859 = vadd.f32 %v199, %v7827
      %v7860 = vadd.f32 %v200, %v7828
      %v7861 = vadd.f32 %v201, %v7829
      %v7862 = vadd.f32 %v202, %v7830
      %7863 = vst.msk [vmem:[%s170] sm:$0xff] %vm204, %v7831
      %7864 = vst.msk [vmem:[%s170 + $0x8] sm:$0xff] %vm204, %v7832
      %7865 = vst.msk [vmem:[%s170 + $0x10] sm:$0xff] %vm204, %v7833
      %7866 = vst.msk [vmem:[%s170 + $0x18] sm:$0xff] %vm204, %v7834
      %7867 = vst.msk [vmem:[%s170 + $0x20] sm:$0xff] %vm204, %v7835
      %7868 = vst.msk [vmem:[%s170 + $0x28] sm:$0xff] %vm204, %v7836
      %7869 = vst.msk [vmem:[%s170 + $0x30] sm:$0xff] %vm204, %v7837
      %7870 = vst.msk [vmem:[%s170 + $0x38] sm:$0xff] %vm204, %v7838
      %7871 = vst.msk [vmem:[%s170 + $0x40] sm:$0xff] %vm204, %v7839
      %7872 = vst.msk [vmem:[%s170 + $0x48] sm:$0xff] %vm204, %v7840
      %7873 = vst.msk [vmem:[%s170 + $0x50] sm:$0xff] %vm204, %v7841
      %7874 = vst.msk [vmem:[%s170 + $0x58] sm:$0xff] %vm204, %v7842
      %7875 = vst.msk [vmem:[%s170 + $0x60] sm:$0xff] %vm204, %v7843
      %7876 = vst.msk [vmem:[%s170 + $0x68] sm:$0xff] %vm204, %v7844
      %7877 = vst.msk [vmem:[%s170 + $0x70] sm:$0xff] %vm204, %v7845
      %7878 = vst.msk [vmem:[%s170 + $0x78] sm:$0xff] %vm204, %v7846
      %7879 = vst.msk [vmem:[%s170 + $0x80] sm:$0xff] %vm204, %v7847
      %7880 = vst.msk [vmem:[%s170 + $0x88] sm:$0xff] %vm204, %v7848
      %7881 = vst.msk [vmem:[%s170 + $0x90] sm:$0xff] %vm204, %v7849
      %7882 = vst.msk [vmem:[%s170 + $0x98] sm:$0xff] %vm204, %v7850
      %7883 = vst.msk [vmem:[%s170 + $0xa0] sm:$0xff] %vm204, %v7851
      %7884 = vst.msk [vmem:[%s170 + $0xa8] sm:$0xff] %vm204, %v7852
      %7885 = vst.msk [vmem:[%s170 + $0xb0] sm:$0xff] %vm204, %v7853
      %7886 = vst.msk [vmem:[%s170 + $0xb8] sm:$0xff] %vm204, %v7854
      %7887 = vst.msk [vmem:[%s170 + $0xc0] sm:$0xff] %vm204, %v7855
      %7888 = vst.msk [vmem:[%s170 + $0xc8] sm:$0xff] %vm204, %v7856
      %7889 = vst.msk [vmem:[%s170 + $0xd0] sm:$0xff] %vm204, %v7857
      %7890 = vst.msk [vmem:[%s170 + $0xd8] sm:$0xff] %vm204, %v7858
      %7891 = vst.msk [vmem:[%s170 + $0xe0] sm:$0xff] %vm204, %v7859
      %7892 = vst.msk [vmem:[%s170 + $0xe8] sm:$0xff] %vm204, %v7860
      %7893 = vst.msk [vmem:[%s170 + $0xf0] sm:$0xff] %vm204, %v7861
      %7894 = vst.msk [vmem:[%s170 + $0xf8] sm:$0xff] %vm204, %v7862
      %p7895 = scmp.lt.s32.totalorder %s14, 1
      %s7896 = scalar_select %p7895, %s14, 1
      %s7897 = smul.addr %s7896, 32
      %s7898 = smul.addr %s7897, 8
      %s7899 = scalar_lea.vmem %s3, %s7898
      // Predicated region
      $region33: #{residual_block.1} parent=31 // pred_check
        %p7900 = pneg %p100
      $region34: #{residual_block.1} parent=31 // pred_check_branch
        %7902 = sbr.rel (%p7900) target = $region36
      $region35: #{residual_block.1} parent=31 // pred_region
        _
      $region36: #{residual_block.1} parent=31 // pred_fallthru
        _
    $region32: #{residual_block.1} parent=5 // pred_fallthru
      _
    %p7903 = scmp.le.s32.totalorder 2, %s9
    // Predicated region
    $region37: #{residual_block.1} parent=5 // pred_check
      %p7904 = pneg %p7903
    $region38: #{residual_block.1} parent=5 // pred_check_branch
      %7906 = sbr.rel (%p7904) target = $region40
    $region39: #{residual_block.1} parent=5 // pred_region
      %s7907 = ssub.s32 %s9, 2
      // Predicated region
      $region41: #{residual_block.1} parent=39 // pred_check
        %p7908 = pneg %p106
      $region42: #{residual_block.1} parent=39 // pred_check_branch
        %7910 = sbr.rel (%p7908) target = $region44
      $region43: #{residual_block.1} parent=39 // pred_region
        %p7911 = scmp.lt.s32.totalorder %s15, 1
        %s7912 = scalar_select %p7911, %s15, 1
        %s7913 = smul.addr %s7912, 32
        %s7914 = smul.addr %s7913, 8
        %s7915 = scalar_lea.vmem %s3, %s7914
      $region44: #{residual_block.1} parent=39 // pred_fallthru
        _
    $region40: #{residual_block.1} parent=5 // pred_fallthru
      _
  $region6: #{residual_block.1} parent=0 // loop_footer
    %s13 = sadd.s32 1, %s9
  $region7: #{residual_block.1} parent=0 // loop_footer_branch
    %8 = sbr.rel target = $region3
  $region8: #{residual_block.1} parent=0 // loop_exit
    _

</llo_original>
